<compile_context>
chip_gen: v6e
topology: v6e:2x2x1
jax: 0.10.0
libtpu: 0.0.40
codegen_flags: <defaults>
</compile_context>

<pallas_src>
import math

import jax
import jax.numpy as jnp
from jax.experimental import pallas as pl
from jax.experimental.pallas import tpu as pltpu  # noqa: F401  (TPU backend)

# ----------------------------- config -------------------------------------
B = 2                      # batch (== targets.size(0))
B2 = 2 * B                 # image stream count (image0 ++ image1)
C_IMG, H_IMG, W_IMG = 3, 16, 16
PATCH = 8
PATCH_DIM = C_IMG * PATCH * PATCH               # 192
N_PATCH = (H_IMG // PATCH) * (W_IMG // PATCH)   # 4
V_TOK = N_PATCH + 1                             # 5  (CLS + patches)
T_VIS = B2 * V_TOK                              # 20 image token rows
VISION_WIDTH = 48                               # != HIDDEN  -> "large" path
HIDDEN = 32
N_HEADS = 4                                     # text / fusion heads
V_HEADS = 4                                     # vision heads
L_TEXT = 8
T_TXT = B * L_TEXT                              # 16 text token rows
VOCAB = 64
FFN = 64
V_FFN = 96
EPS_BERT = 1e-12
EPS_CLIP = 1e-5
NEG_BLOCK = -1e9                                # block-structure additive mask


# -------------- packed-parameter slab layout (static constants) -------------
# weight slab: each (fan_in, fan_out) matrix occupies rows [r, r+fan_in),
# lanes [0, fan_out), zero padded to 128 lanes.  All fan_ins are multiples of
# 8, so every row offset is sublane-aligned.
W_SPECS = [
    ("patch",     PATCH_DIM,    VISION_WIDTH),
    ("vis_q",     VISION_WIDTH, VISION_WIDTH),
    ("vis_k",     VISION_WIDTH, VISION_WIDTH),
    ("vis_v",     VISION_WIDTH, VISION_WIDTH),
    ("vis_o",     VISION_WIDTH, VISION_WIDTH),
    ("vis_mlp1",  VISION_WIDTH, V_FFN),
    ("vis_mlp2",  V_FFN,        VISION_WIDTH),
    ("visn_fc",   VISION_WIDTH, HIDDEN),
    ("txt_qkv",   HIDDEN,       3 * HIDDEN),
    ("txt_o",     HIDDEN,       HIDDEN),
    ("txt_ffn1",  HIDDEN,       FFN),
    ("txt_ffn2",  FFN,          HIDDEN),
    ("fus_s_qkv", HIDDEN,       3 * HIDDEN),
    ("fus_s_o",   HIDDEN,       HIDDEN),
    ("fus_cq",    HIDDEN,       HIDDEN),
    ("fus_ckv",   HIDDEN,       2 * HIDDEN),
    ("fus_co",    HIDDEN,       HIDDEN),
    ("fus_ffn1",  HIDDEN,       FFN),
    ("fus_ffn2",  FFN,          HIDDEN),
    ("cls1",      HIDDEN,       HIDDEN),
    ("cls2",      HIDDEN,       2),
]


def _layout_w(specs):
    off, r = {}, 0
    for name, fi, fo in specs:
        off[name] = (r, fi, fo)
        r += fi
    return off, ((r + 7) // 8) * 8


W_OFF, W_ROWS = _layout_w(W_SPECS)

# vector slab: one row per LN gamma/beta or bias vector, zero padded to 128
V_SPECS = [
    ("ln_pre_g", VISION_WIDTH), ("ln_pre_b", VISION_WIDTH),
    ("vis_ln1_g", VISION_WIDTH), ("vis_ln1_b", VISION_WIDTH),
    ("vis_q_b", VISION_WIDTH), ("vis_k_b", VISION_WIDTH), ("vis_v_b", VISION_WIDTH),
    ("vis_o_b", VISION_WIDTH),
    ("vis_ln2_g", VISION_WIDTH), ("vis_ln2_b", VISION_WIDTH),
    ("vis_mlp1_b", V_FFN), ("vis_mlp2_b", VISION_WIDTH),
    ("visn_fc_b", HIDDEN), ("visn_ln_g", HIDDEN), ("visn_ln_b", HIDDEN),
    ("emb_ln_g", HIDDEN), ("emb_ln_b", HIDDEN),
    ("txt_qkv_b", 3 * HIDDEN), ("txt_o_b", HIDDEN),
    ("txt_aln_g", HIDDEN), ("txt_aln_b", HIDDEN),
    ("txt_ffn1_b", FFN), ("txt_ffn2_b", HIDDEN),
    ("txt_fln_g", HIDDEN), ("txt_fln_b", HIDDEN),
    ("fus_s_qkv_b", 3 * HIDDEN), ("fus_s_o_b", HIDDEN),
    ("fus_sln_g", HIDDEN), ("fus_sln_b", HIDDEN),
    ("fus_cq_b", HIDDEN), ("fus_ckv_b", 2 * HIDDEN), ("fus_co_b", HIDDEN),
    ("fus_cln_g", HIDDEN), ("fus_cln_b", HIDDEN),
    ("fus_ffn1_b", FFN), ("fus_ffn2_b", HIDDEN),
    ("fus_fln_g", HIDDEN), ("fus_fln_b", HIDDEN),
    ("cls1_b", HIDDEN), ("cls2_b", 2),
]
V_ROW = {name: i for i, (name, _) in enumerate(V_SPECS)}
V_DIM = {name: d for name, d in V_SPECS}
V_ROWS = ((len(V_SPECS) + 7) // 8) * 8


def _wread(ref, name, full=False):
    r, fi, fo = W_OFF[name]
    if full:
        return ref[r:r + fi, :]            # full 128 lanes (zero padded)
    return ref[r:r + fi, 0:fo]


def _vread(ref, name, full=False):
    r = V_ROW[name]
    if full:
        return ref[r:r + 1, :]
    return ref[r:r + 1, 0:V_DIM[name]]


# ----------------------- in-kernel math helpers -----------------------------
def _dot(a, b):
    return jnp.dot(a, b, preferred_element_type=jnp.float32)


def _ln(x, g, b, eps):
    mu = jnp.mean(x, axis=-1, keepdims=True)
    var = jnp.mean(jnp.square(x - mu), axis=-1, keepdims=True)
    return (x - mu) * jax.lax.rsqrt(var + eps) * g + b


def _gelu(x):
    # TODO(synk): PyTorch nn.GELU defaults to exact erf (CLIP uses QuickGELU);
    # the tanh approximation is used here for Mosaic-friendly lowering.
    return jax.nn.gelu(x, approximate=True)


def _ffn(x, w1, b1, w2, b2):
    h = _gelu(_dot(x, w1) + b1)
    return _dot(h, w2) + b2


def _mha(q, k, v, o_w, o_b, heads, add_mask):
    """Slab-wide multi-head attention.

    q: (Tq, D), k/v: (Tk, D), add_mask: (Tq, Tk) additive mask encoding both
    the per-stream block structure and any key padding.  The head concat is
    folded into the output projection by accumulating ctx_h @ o_w[lo:hi, :]."""
    D = q.shape[-1]
    dh = D // heads
    scale = 1.0 / math.sqrt(dh)
    out = None
    for h in range(heads):
        lo, hi = h * dh, (h + 1) * dh
        s = jax.lax.dot_general(q[:, lo:hi], k[:, lo:hi],
                                (((1,), (1,)), ((), ())),
                                preferred_element_type=jnp.float32) * scale
        s = s + add_mask
        s = s - jnp.max(s, axis=-1, keepdims=True)
        e = jnp.exp(s)
        p = e * pl.reciprocal(jnp.sum(e, axis=-1, keepdims=True), approx=True)
        ctx = _dot(p, v[:, lo:hi])                                   # (Tq, dh)
        part = _dot(ctx, o_w[lo:hi, :])                              # (Tq, D)
        out = part if out is None else out + part
    return out + o_b


# --------------------------- the fused kernel -------------------------------
def _albef_kernel(tok_feat_ref, tok_addon_ref, text_emb_ref, onehot_ref,
                  vis_mask_ref, txt_mask_ref, cross_mask_ref,
                  wslab_ref, vslab_ref, out_ref):
    W = lambda name, **kw: _wread(wslab_ref, name, **kw)   # noqa: E731
    V = lambda name, **kw: _vread(vslab_ref, name, **kw)   # noqa: E731

    # ---- vision: patch embed (conv bias folded into addon) + pre-LN block ----
    x = _dot(tok_feat_ref[...], W("patch")) + tok_addon_ref[...]      # (T_VIS, 48)
    x = _ln(x, V("ln_pre_g"), V("ln_pre_b"), EPS_CLIP)

    h = _ln(x, V("vis_ln1_g"), V("vis_ln1_b"), EPS_CLIP)
    q = _dot(h, W("vis_q")) + V("vis_q_b")                            # unpacked QKV
    k = _dot(h, W("vis_k")) + V("vis_k_b")
    v = _dot(h, W("vis_v")) + V("vis_v_b")
    x = x + _mha(q, k, v, W("vis_o"), V("vis_o_b"), V_HEADS, vis_mask_ref[...])
    h = _ln(x, V("vis_ln2_g"), V("vis_ln2_b"), EPS_CLIP)
    x = x + _ffn(h, W("vis_mlp1"), V("vis_mlp1_b"), W("vis_mlp2"), V("vis_mlp2_b"))

    # "large" path: visn_fc -> LayerNorm (dropout == identity)
    vis = _dot(x, W("visn_fc")) + V("visn_fc_b")
    vis = _ln(vis, V("visn_ln_g"), V("visn_ln_b"), EPS_BERT)          # (T_VIS, 32)

    # ---- text-mode BERT layer (self-attention only, post-LN) ----------------
    txt_mask = txt_mask_ref[...]                                      # (T_TXT, T_TXT)
    t = _ln(text_emb_ref[...], V("emb_ln_g"), V("emb_ln_b"), EPS_BERT)
    qkv = _dot(t, W("txt_qkv")) + V("txt_qkv_b")                      # (T_TXT, 96)
    a = _mha(qkv[:, 0:HIDDEN], qkv[:, HIDDEN:2 * HIDDEN], qkv[:, 2 * HIDDEN:3 * HIDDEN],
             W("txt_o"), V("txt_o_b"), N_HEADS, txt_mask)
    t = _ln(t + a, V("txt_aln_g"), V("txt_aln_b"), EPS_BERT)
    f = _ffn(t, W("txt_ffn1"), V("txt_ffn1_b"), W("txt_ffn2"), V("txt_ffn2_b"))
    t = _ln(t + f, V("txt_fln_g"), V("txt_fln_b"), EPS_BERT)

    # ---- fusion-mode layer: self-attn, cross-attn to image tokens, FFN ------
    qkv = _dot(t, W("fus_s_qkv")) + V("fus_s_qkv_b")
    a = _mha(qkv[:, 0:HIDDEN], qkv[:, HIDDEN:2 * HIDDEN], qkv[:, 2 * HIDDEN:3 * HIDDEN],
             W("fus_s_o"), V("fus_s_o_b"), N_HEADS, txt_mask)
    t = _ln(t + a, V("fus_sln_g"), V("fus_sln_b"), EPS_BERT)

    # TODO(synk): xbert's dual-stream cross-attention (separate per-image
    # encoder states) is approximated by cross-attending to the concatenated
    # [image0 ; image1] token slab with shared weights.
    cq = _dot(t, W("fus_cq")) + V("fus_cq_b")                         # (T_TXT, 32)
    ckv = _dot(vis, W("fus_ckv")) + V("fus_ckv_b")                    # (T_VIS, 64)
    c = _mha(cq, ckv[:, 0:HIDDEN], ckv[:, HIDDEN:2 * HIDDEN],
             W("fus_co"), V("fus_co_b"), N_HEADS, cross_mask_ref[...])
    t = _ln(t + c, V("fus_cln_g"), V("fus_cln_b"), EPS_BERT)
    f = _ffn(t, W("fus_ffn1"), V("fus_ffn1_b"), W("fus_ffn2"), V("fus_ffn2_b"))
    t = _ln(t + f, V("fus_fln_g"), V("fus_fln_b"), EPS_BERT)          # (T_TXT, 32)

    # ---- cls head + cross-entropy (train=True branch) ------------------------
    # Applied to the whole text slab (only rows b*L_TEXT are the [CLS]
    # positions; the rest is discarded) so everything stays slab-wide and the
    # result is one lane-dense (T_TXT, 128) store.  cls2 weight/bias are read
    # with their full 128-lane zero padding, so logits lanes 2: are exactly 0.
    p1 = jnp.maximum(_dot(t, W("cls1")) + V("cls1_b"), 0.0)           # (T_TXT, 32)
    logits = _dot(p1, W("cls2", full=True)) + V("cls2_b", full=True)  # (T_TXT, 128)

    z = logits[:, 0:2]
    zmax = jnp.max(z, axis=-1, keepdims=True)
    lse = jnp.log(jnp.sum(jnp.exp(z - zmax), axis=-1, keepdims=True)) + zmax  # (T_TXT, 1)
    oh = onehot_ref[...]                              # one-hot targets on CLS rows, else 0
    row_is_cls = jnp.sum(oh, axis=-1, keepdims=True)  # 1.0 on CLS rows, 0.0 elsewhere
    nll = row_is_cls * lse - jnp.sum(oh * logits, axis=-1, keepdims=True)     # (T_TXT, 1)
    loss = jnp.sum(nll, axis=0, keepdims=True) * (1.0 / B)                    # (1, 1)

    # pack the loss into lane 2 of row 0 (which is exactly 0 in `logits`) so
    # the whole result goes out as a single unmasked full-tile store.
    ri = jax.lax.broadcasted_iota(jnp.int32, (T_TXT, 128), 0)
    ci = jax.lax.broadcasted_iota(jnp.int32, (T_TXT, 128), 1)
    loss_slot = ((ri == 0) & (ci == 2)).astype(jnp.float32)
    out_ref[...] = logits + loss * loss_slot


# ----------------------------- parameters ----------------------------------
def init_params(seed=42):
    key = jax.random.PRNGKey(seed)
    keys = iter(jax.random.split(key, 256))
    p = {}

    def xavier(fi, fo):
        lim = math.sqrt(6.0 / (fi + fo))
        return jax.random.uniform(next(keys), (fi, fo), jnp.float32, -lim, lim)

    def normal(shape, std=0.02):
        return std * jax.random.normal(next(keys), shape, jnp.float32)

    def linear(name, fi, fo):
        p[name + "_w"] = xavier(fi, fo)
        p[name + "_b"] = jnp.zeros((fo,), jnp.float32)

    def ln(gname, bname, d):
        p[gname] = jnp.ones((d,), jnp.float32)
        p[bname] = jnp.zeros((d,), jnp.float32)

    # CLIP-ish visual encoder (1 pre-LN transformer block, skip_last_layer)
    linear("patch", PATCH_DIM, VISION_WIDTH)
    p["cls_token"] = normal((VISION_WIDTH,))
    p["vis_pos"] = normal((V_TOK, VISION_WIDTH))
    ln("ln_pre_g", "ln_pre_b", VISION_WIDTH)
    ln("vis_ln1_g", "vis_ln1_b", VISION_WIDTH)
    linear("vis_q", VISION_WIDTH, VISION_WIDTH)
    linear("vis_k", VISION_WIDTH, VISION_WIDTH)
    linear("vis_v", VISION_WIDTH, VISION_WIDTH)
    linear("vis_o", VISION_WIDTH, VISION_WIDTH)
    ln("vis_ln2_g", "vis_ln2_b", VISION_WIDTH)
    linear("vis_mlp1", VISION_WIDTH, V_FFN)
    linear("vis_mlp2", V_FFN, VISION_WIDTH)

    # "large" projection path (vision_width != hidden)
    linear("visn_fc", VISION_WIDTH, HIDDEN)
    ln("visn_ln_g", "visn_ln_b", HIDDEN)

    # BERT text embeddings
    p["word_emb"] = normal((VOCAB, HIDDEN))
    p["pos_emb"] = normal((L_TEXT, HIDDEN))
    p["type_emb"] = normal((2, HIDDEN))
    ln("emb_ln_g", "emb_ln_b", HIDDEN)

    # text (self-attention-only) layer: q/k/v are 3 independent xavier
    # Linear(d,d) (PyTorch init semantics), stored packed (96 <= 128 lanes)
    p["txt_qkv_w"] = jnp.concatenate([xavier(HIDDEN, HIDDEN) for _ in range(3)], axis=1)
    p["txt_qkv_b"] = jnp.zeros((3 * HIDDEN,), jnp.float32)
    linear("txt_o", HIDDEN, HIDDEN)
    ln("txt_aln_g", "txt_aln_b", HIDDEN)
    linear("txt_ffn1", HIDDEN, FFN)
    linear("txt_ffn2", FFN, HIDDEN)
    ln("txt_fln_g", "txt_fln_b", HIDDEN)

    # fusion layer (self + cross attention)
    p["fus_s_qkv_w"] = jnp.concatenate([xavier(HIDDEN, HIDDEN) for _ in range(3)], axis=1)
    p["fus_s_qkv_b"] = jnp.zeros((3 * HIDDEN,), jnp.float32)
    linear("fus_s_o", HIDDEN, HIDDEN)
    ln("fus_sln_g", "fus_sln_b", HIDDEN)
    linear("fus_cq", HIDDEN, HIDDEN)
    p["fus_ckv_w"] = jnp.concatenate([xavier(HIDDEN, HIDDEN) for _ in range(2)], axis=1)
    p["fus_ckv_b"] = jnp.zeros((2 * HIDDEN,), jnp.float32)
    linear("fus_co", HIDDEN, HIDDEN)
    ln("fus_cln_g", "fus_cln_b", HIDDEN)
    linear("fus_ffn1", HIDDEN, FFN)
    linear("fus_ffn2", FFN, HIDDEN)
    ln("fus_fln_g", "fus_fln_b", HIDDEN)

    # cls_head: Linear -> ReLU -> Linear(2)
    linear("cls1", HIDDEN, HIDDEN)
    linear("cls2", HIDDEN, 2)
    return p


def pack_params(p):
    """Pack weights/vectors into the two lane-padded slabs + static aux arrays."""
    wslab = jnp.zeros((W_ROWS, 128), jnp.float32)
    for name, fi, fo in W_SPECS:
        r = W_OFF[name][0]
        wslab = wslab.at[r:r + fi, 0:fo].set(p[name + "_w"])

    vslab = jnp.zeros((V_ROWS, 128), jnp.float32)
    for name, d in V_SPECS:
        vslab = vslab.at[V_ROW[name], 0:d].set(p[name])

    # per-token additive rows: CLS row = cls_token + pos[0]; patch rows get
    # pos[i] + patch conv bias (the conv bias is folded here so the kernel's
    # patch matmul needs no bias add or CLS masking).
    addon = jnp.concatenate(
        [(p["cls_token"] + p["vis_pos"][0])[None, :],
         p["vis_pos"][1:] + p["patch_b"][None, :]], axis=0)           # (V_TOK, Dv)
    tok_addon = jnp.tile(addon, (B2, 1))                              # (T_VIS, Dv)

    # static additive block masks (per-stream self-attn, per-text-batch cross)
    vs = jnp.arange(T_VIS) // V_TOK
    vis_mask = jnp.where(vs[:, None] == vs[None, :], 0.0, NEG_BLOCK).astype(jnp.float32)
    tb = jnp.arange(T_TXT) // L_TEXT
    txt_block = jnp.where(tb[:, None] == tb[None, :], 0.0, NEG_BLOCK).astype(jnp.float32)
    ib = jnp.arange(T_VIS) // (2 * V_TOK)
    cross_mask = jnp.where(tb[:, None] == ib[None, :], 0.0, NEG_BLOCK).astype(jnp.float32)

    return dict(wslab=wslab, vslab=vslab, tok_addon=tok_addon,
                vis_mask=vis_mask, txt_block=txt_block, cross_mask=cross_mask,
                word_emb=p["word_emb"], pos_emb=p["pos_emb"], type_emb=p["type_emb"])


# ----------------------------- forward (glue) -------------------------------
def albef_forward(packed, image0, image1, input_ids, attn_mask, targets):
    # interleave image streams so the kernel's image-token slab is grouped per
    # text batch: [img0_b0, img1_b0, img0_b1, img1_b1]; each stream's vision
    # encoding is independent, so the reorder is pure layout plumbing.
    imgs = jnp.stack([image0, image1], axis=1).reshape(B2, C_IMG, H_IMG, W_IMG)
    x = imgs.reshape(B2, C_IMG, H_IMG // PATCH, PATCH, W_IMG // PATCH, PATCH)
    x = x.transpose(0, 2, 4, 1, 3, 5).reshape(B2, N_PATCH, PATCH_DIM)
    tok_feat = jnp.concatenate(
        [jnp.zeros((B2, 1, PATCH_DIM), jnp.float32), x], axis=1
    ).reshape(T_VIS, PATCH_DIM)                    # CLS rows carry zero features

    # BERT text embeddings (gathers stay in XLA glue)
    pos_ids = jnp.arange(L_TEXT)
    emb = (packed["word_emb"][input_ids]
           + packed["pos_emb"][pos_ids][None]
           + packed["type_emb"][0][None, None])
    text_emb = emb.reshape(T_TXT, HIDDEN)

    # additive text mask: block-diagonal (per batch) + key padding, BERT style
    key_pad = (1.0 - attn_mask.astype(jnp.float32)).reshape(1, T_TXT) * (-10000.0)
    txt_mask = packed["txt_block"] + key_pad                           # (T_TXT, T_TXT)

    # 128-lane one-hot targets placed on the [CLS] rows of the text slab
    onehot = jax.nn.one_hot(targets, 128, dtype=jnp.float32)           # (B, 128)
    onehot_all = jnp.zeros((T_TXT, 128), jnp.float32).at[::L_TEXT].set(onehot)

    out = pl.pallas_call(
        _albef_kernel,
        out_shape=jax.ShapeDtypeStruct((T_TXT, 128), jnp.float32),
    )(tok_feat, packed["tok_addon"], text_emb, onehot_all,
      packed["vis_mask"], txt_mask, packed["cross_mask"],
      packed["wslab"], packed["vslab"])

    # train=True branch: F.cross_entropy(prediction, targets); outputs = None
    prediction = out[::L_TEXT, 0:2]                # (B, 2) logits at the CLS rows
    loss = out[0, 2]                               # loss packed into lane 2 of row 0
    return loss, prediction


# ----------------------------- main ----------------------------------------
if __name__ == "__main__":
    params = init_params(42)
    packed = pack_params(params)

    key = jax.random.PRNGKey(0)
    k0, k1, k2, k3 = jax.random.split(key, 4)
    image0 = jax.random.normal(k0, (B, C_IMG, H_IMG, W_IMG), jnp.float32)
    image1 = jax.random.normal(k1, (B, C_IMG, H_IMG, W_IMG), jnp.float32)
    input_ids = jax.random.randint(k2, (B, L_TEXT), 0, VOCAB)
    attn_mask = jnp.ones((B, L_TEXT), jnp.int32)
    targets = jax.random.randint(k3, (B,), 0, 2)

    loss, prediction = jax.jit(albef_forward)(
        packed, image0, image1, input_ids, attn_mask, targets)
    jax.block_until_ready((loss, prediction))
    assert prediction.shape == (B, 2)
    assert loss.shape == ()
    assert bool(jnp.isfinite(loss))
    print("KERNEL_OK")
</pallas_src>

<mosaic_0001>
module attributes {stable_mosaic.version = 11 : i64} {
  func.func @_albef_kernel(%arg0: memref<20x192xf32, #tpu.memory_space<vmem>>, %arg1: memref<20x48xf32, #tpu.memory_space<vmem>>, %arg2: memref<16x32xf32, #tpu.memory_space<vmem>>, %arg3: memref<16x128xf32, #tpu.memory_space<vmem>>, %arg4: memref<20x20xf32, #tpu.memory_space<vmem>>, %arg5: memref<16x16xf32, #tpu.memory_space<vmem>>, %arg6: memref<16x20xf32, #tpu.memory_space<vmem>>, %arg7: memref<1056x128xf32, #tpu.memory_space<vmem>>, %arg8: memref<40x128xf32, #tpu.memory_space<vmem>>, %arg9: memref<16x128xf32, #tpu.memory_space<vmem>>) attributes {dimension_semantics = [], scalar_prefetch = 0 : i64, scratch_operands = 0 : i64, tpu.core_type = #tpu.core_type<tc>} {
    %c0 = arith.constant 0 : index
    %c0_0 = arith.constant 0 : index
    %0 = vector.load %arg0[%c0, %c0_0] : memref<20x192xf32, #tpu.memory_space<vmem>>, vector<20x192xf32>
    %c0_1 = arith.constant 0 : index
    %c0_2 = arith.constant 0 : index
    %1 = vector.load %arg7[%c0_1, %c0_2] : memref<1056x128xf32, #tpu.memory_space<vmem>>, vector<192x48xf32>
    %cst = arith.constant dense<0.000000e+00> : vector<20x48xf32>
    %2 = tpu.matmul %0, %1, %cst {dimension_numbers = #tpu.dot_dimension_numbers<[1], [0], [0], [1], [0, 0, 1, 1], [], []>} : vector<20x192xf32>, vector<192x48xf32>, vector<20x48xf32> -> vector<20x48xf32>
    %c0_3 = arith.constant 0 : index
    %c0_4 = arith.constant 0 : index
    %3 = vector.load %arg1[%c0_3, %c0_4] : memref<20x48xf32, #tpu.memory_space<vmem>>, vector<20x48xf32>
    %4 = arith.addf %2, %3 : vector<20x48xf32>
    %c0_5 = arith.constant 0 : index
    %c0_6 = arith.constant 0 : index
    %5 = vector.load %arg8[%c0_5, %c0_6] : memref<40x128xf32, #tpu.memory_space<vmem>>, vector<1x48xf32>
    %c1 = arith.constant 1 : index
    %c0_7 = arith.constant 0 : index
    %6 = vector.load %arg8[%c1, %c0_7] : memref<40x128xf32, #tpu.memory_space<vmem>>, vector<1x48xf32>
    %cst_8 = arith.constant dense<0.000000e+00> : vector<20xf32>
    %7 = vector.multi_reduction <add>, %4, %cst_8 [1] : vector<20x48xf32> to vector<20xf32>
    %8 = vector.shape_cast %7 : vector<20xf32> to vector<20x1xf32>
    %cst_9 = arith.constant 4.800000e+01 : f32
    %9 = vector.broadcast %cst_9 : f32 to vector<20x1xf32>
    %10 = arith.divf %8, %9 : vector<20x1xf32>
    %11 = vector.broadcast %10 : vector<20x1xf32> to vector<20x48xf32>
    %12 = arith.subf %4, %11 : vector<20x48xf32>
    %13 = arith.mulf %12, %12 : vector<20x48xf32>
    %cst_10 = arith.constant dense<0.000000e+00> : vector<20xf32>
    %14 = vector.multi_reduction <add>, %13, %cst_10 [1] : vector<20x48xf32> to vector<20xf32>
    %15 = vector.shape_cast %14 : vector<20xf32> to vector<20x1xf32>
    %cst_11 = arith.constant 4.800000e+01 : f32
    %16 = vector.broadcast %cst_11 : f32 to vector<20x1xf32>
    %17 = arith.divf %15, %16 : vector<20x1xf32>
    %18 = vector.broadcast %10 : vector<20x1xf32> to vector<20x48xf32>
    %19 = arith.subf %4, %18 : vector<20x48xf32>
    %cst_12 = arith.constant 9.99999974E-6 : f32
    %20 = vector.broadcast %cst_12 : f32 to vector<20x1xf32>
    %21 = arith.addf %17, %20 : vector<20x1xf32>
    %22 = math.rsqrt %21 : vector<20x1xf32>
    %23 = vector.broadcast %22 : vector<20x1xf32> to vector<20x48xf32>
    %24 = arith.mulf %19, %23 : vector<20x48xf32>
    %25 = vector.broadcast %5 : vector<1x48xf32> to vector<20x48xf32>
    %26 = arith.mulf %24, %25 : vector<20x48xf32>
    %27 = vector.broadcast %6 : vector<1x48xf32> to vector<20x48xf32>
    %28 = arith.addf %26, %27 : vector<20x48xf32>
    %c2 = arith.constant 2 : index
    %c0_13 = arith.constant 0 : index
    %29 = vector.load %arg8[%c2, %c0_13] : memref<40x128xf32, #tpu.memory_space<vmem>>, vector<1x48xf32>
    %c3 = arith.constant 3 : index
    %c0_14 = arith.constant 0 : index
    %30 = vector.load %arg8[%c3, %c0_14] : memref<40x128xf32, #tpu.memory_space<vmem>>, vector<1x48xf32>
    %cst_15 = arith.constant dense<0.000000e+00> : vector<20xf32>
    %31 = vector.multi_reduction <add>, %28, %cst_15 [1] : vector<20x48xf32> to vector<20xf32>
    %32 = vector.shape_cast %31 : vector<20xf32> to vector<20x1xf32>
    %cst_16 = arith.constant 4.800000e+01 : f32
    %33 = vector.broadcast %cst_16 : f32 to vector<20x1xf32>
    %34 = arith.divf %32, %33 : vector<20x1xf32>
    %35 = vector.broadcast %34 : vector<20x1xf32> to vector<20x48xf32>
    %36 = arith.subf %28, %35 : vector<20x48xf32>
    %37 = arith.mulf %36, %36 : vector<20x48xf32>
    %cst_17 = arith.constant dense<0.000000e+00> : vector<20xf32>
    %38 = vector.multi_reduction <add>, %37, %cst_17 [1] : vector<20x48xf32> to vector<20xf32>
    %39 = vector.shape_cast %38 : vector<20xf32> to vector<20x1xf32>
    %cst_18 = arith.constant 4.800000e+01 : f32
    %40 = vector.broadcast %cst_18 : f32 to vector<20x1xf32>
    %41 = arith.divf %39, %40 : vector<20x1xf32>
    %42 = vector.broadcast %34 : vector<20x1xf32> to vector<20x48xf32>
    %43 = arith.subf %28, %42 : vector<20x48xf32>
    %cst_19 = arith.constant 9.99999974E-6 : f32
    %44 = vector.broadcast %cst_19 : f32 to vector<20x1xf32>
    %45 = arith.addf %41, %44 : vector<20x1xf32>
    %46 = math.rsqrt %45 : vector<20x1xf32>
    %47 = vector.broadcast %46 : vector<20x1xf32> to vector<20x48xf32>
    %48 = arith.mulf %43, %47 : vector<20x48xf32>
    %49 = vector.broadcast %29 : vector<1x48xf32> to vector<20x48xf32>
    %50 = arith.mulf %48, %49 : vector<20x48xf32>
    %51 = vector.broadcast %30 : vector<1x48xf32> to vector<20x48xf32>
    %52 = arith.addf %50, %51 : vector<20x48xf32>
    %c192 = arith.constant 192 : index
    %c0_20 = arith.constant 0 : index
    %53 = vector.load %arg7[%c192, %c0_20] : memref<1056x128xf32, #tpu.memory_space<vmem>>, vector<48x48xf32>
    %cst_21 = arith.constant dense<0.000000e+00> : vector<20x48xf32>
    %54 = tpu.matmul %52, %53, %cst_21 {dimension_numbers = #tpu.dot_dimension_numbers<[1], [0], [0], [1], [0, 0, 1, 1], [], []>} : vector<20x48xf32>, vector<48x48xf32>, vector<20x48xf32> -> vector<20x48xf32>
    %c4 = arith.constant 4 : index
    %c0_22 = arith.constant 0 : index
    %55 = vector.load %arg8[%c4, %c0_22] : memref<40x128xf32, #tpu.memory_space<vmem>>, vector<1x48xf32>
    %56 = vector.broadcast %55 : vector<1x48xf32> to vector<20x48xf32>
    %57 = arith.addf %54, %56 : vector<20x48xf32>
    %c240 = arith.constant 240 : index
    %c0_23 = arith.constant 0 : index
    %58 = vector.load %arg7[%c240, %c0_23] : memref<1056x128xf32, #tpu.memory_space<vmem>>, vector<48x48xf32>
    %cst_24 = arith.constant dense<0.000000e+00> : vector<20x48xf32>
    %59 = tpu.matmul %52, %58, %cst_24 {dimension_numbers = #tpu.dot_dimension_numbers<[1], [0], [0], [1], [0, 0, 1, 1], [], []>} : vector<20x48xf32>, vector<48x48xf32>, vector<20x48xf32> -> vector<20x48xf32>
    %c5 = arith.constant 5 : index
    %c0_25 = arith.constant 0 : index
    %60 = vector.load %arg8[%c5, %c0_25] : memref<40x128xf32, #tpu.memory_space<vmem>>, vector<1x48xf32>
    %61 = vector.broadcast %60 : vector<1x48xf32> to vector<20x48xf32>
    %62 = arith.addf %59, %61 : vector<20x48xf32>
    %c288 = arith.constant 288 : index
    %c0_26 = arith.constant 0 : index
    %63 = vector.load %arg7[%c288, %c0_26] : memref<1056x128xf32, #tpu.memory_space<vmem>>, vector<48x48xf32>
    %cst_27 = arith.constant dense<0.000000e+00> : vector<20x48xf32>
    %64 = tpu.matmul %52, %63, %cst_27 {dimension_numbers = #tpu.dot_dimension_numbers<[1], [0], [0], [1], [0, 0, 1, 1], [], []>} : vector<20x48xf32>, vector<48x48xf32>, vector<20x48xf32> -> vector<20x48xf32>
    %c6 = arith.constant 6 : index
    %c0_28 = arith.constant 0 : index
    %65 = vector.load %arg8[%c6, %c0_28] : memref<40x128xf32, #tpu.memory_space<vmem>>, vector<1x48xf32>
    %66 = vector.broadcast %65 : vector<1x48xf32> to vector<20x48xf32>
    %67 = arith.addf %64, %66 : vector<20x48xf32>
    %c336 = arith.constant 336 : index
    %c0_29 = arith.constant 0 : index
    %68 = vector.load %arg7[%c336, %c0_29] : memref<1056x128xf32, #tpu.memory_space<vmem>>, vector<48x48xf32>
    %c7 = arith.constant 7 : index
    %c0_30 = arith.constant 0 : index
    %69 = vector.load %arg8[%c7, %c0_30] : memref<40x128xf32, #tpu.memory_space<vmem>>, vector<1x48xf32>
    %c0_31 = arith.constant 0 : index
    %c0_32 = arith.constant 0 : index
    %70 = vector.load %arg4[%c0_31, %c0_32] : memref<20x20xf32, #tpu.memory_space<vmem>>, vector<20x20xf32>
    %71 = vector.extract_strided_slice %57 {offsets = [0, 0], sizes = [20, 12], strides = [1, 1]} : vector<20x48xf32> to vector<20x12xf32>
    %72 = vector.extract_strided_slice %62 {offsets = [0, 0], sizes = [20, 12], strides = [1, 1]} : vector<20x48xf32> to vector<20x12xf32>
    %cst_33 = arith.constant dense<0.000000e+00> : vector<20x20xf32>
    %73 = tpu.matmul %71, %72, %cst_33 {dimension_numbers = #tpu.dot_dimension_numbers<[1], [1], [0], [0], [0, 0, 1, 0], [], []>} : vector<20x12xf32>, vector<20x12xf32>, vector<20x20xf32> -> vector<20x20xf32>
    %cst_34 = arith.constant 0.288675129 : f32
    %74 = vector.broadcast %cst_34 : f32 to vector<20x20xf32>
    %75 = arith.mulf %73, %74 : vector<20x20xf32>
    %76 = arith.addf %75, %70 : vector<20x20xf32>
    %cst_35 = arith.constant dense<0xFF800000> : vector<20xf32>
    %77 = vector.multi_reduction <maximumf>, %76, %cst_35 [1] : vector<20x20xf32> to vector<20xf32>
    %78 = vector.shape_cast %77 : vector<20xf32> to vector<20x1xf32>
    %79 = vector.broadcast %78 : vector<20x1xf32> to vector<20x20xf32>
    %80 = arith.subf %76, %79 : vector<20x20xf32>
    %81 = math.exp %80 : vector<20x20xf32>
    %cst_36 = arith.constant dense<0.000000e+00> : vector<20xf32>
    %82 = vector.multi_reduction <add>, %81, %cst_36 [1] : vector<20x20xf32> to vector<20xf32>
    %83 = vector.shape_cast %82 : vector<20xf32> to vector<20x1xf32>
    %84 = tpu.reciprocal %83 {approx = true} : vector<20x1xf32> -> vector<20x1xf32>
    %85 = vector.broadcast %84 : vector<20x1xf32> to vector<20x20xf32>
    %86 = arith.mulf %81, %85 : vector<20x20xf32>
    %87 = vector.extract_strided_slice %67 {offsets = [0, 0], sizes = [20, 12], strides = [1, 1]} : vector<20x48xf32> to vector<20x12xf32>
    %cst_37 = arith.constant dense<0.000000e+00> : vector<20x12xf32>
    %88 = tpu.matmul %86, %87, %cst_37 {dimension_numbers = #tpu.dot_dimension_numbers<[1], [0], [0], [1], [0, 0, 1, 1], [], []>} : vector<20x20xf32>, vector<20x12xf32>, vector<20x12xf32> -> vector<20x12xf32>
    %89 = vector.extract_strided_slice %68 {offsets = [0, 0], sizes = [12, 48], strides = [1, 1]} : vector<48x48xf32> to vector<12x48xf32>
    %cst_38 = arith.constant dense<0.000000e+00> : vector<20x48xf32>
    %90 = tpu.matmul %88, %89, %cst_38 {dimension_numbers = #tpu.dot_dimension_numbers<[1], [0], [0], [1], [0, 0, 1, 1], [], []>} : vector<20x12xf32>, vector<12x48xf32>, vector<20x48xf32> -> vector<20x48xf32>
    %91 = vector.extract_strided_slice %57 {offsets = [0, 12], sizes = [20, 12], strides = [1, 1]} : vector<20x48xf32> to vector<20x12xf32>
    %92 = vector.extract_strided_slice %62 {offsets = [0, 12], sizes = [20, 12], strides = [1, 1]} : vector<20x48xf32> to vector<20x12xf32>
    %cst_39 = arith.constant dense<0.000000e+00> : vector<20x20xf32>
    %93 = tpu.matmul %91, %92, %cst_39 {dimension_numbers = #tpu.dot_dimension_numbers<[1], [1], [0], [0], [0, 0, 1, 0], [], []>} : vector<20x12xf32>, vector<20x12xf32>, vector<20x20xf32> -> vector<20x20xf32>
    %cst_40 = arith.constant 0.288675129 : f32
    %94 = vector.broadcast %cst_40 : f32 to vector<20x20xf32>
    %95 = arith.mulf %93, %94 : vector<20x20xf32>
    %96 = arith.addf %95, %70 : vector<20x20xf32>
    %cst_41 = arith.constant dense<0xFF800000> : vector<20xf32>
    %97 = vector.multi_reduction <maximumf>, %96, %cst_41 [1] : vector<20x20xf32> to vector<20xf32>
    %98 = vector.shape_cast %97 : vector<20xf32> to vector<20x1xf32>
    %99 = vector.broadcast %98 : vector<20x1xf32> to vector<20x20xf32>
    %100 = arith.subf %96, %99 : vector<20x20xf32>
    %101 = math.exp %100 : vector<20x20xf32>
    %cst_42 = arith.constant dense<0.000000e+00> : vector<20xf32>
    %102 = vector.multi_reduction <add>, %101, %cst_42 [1] : vector<20x20xf32> to vector<20xf32>
    %103 = vector.shape_cast %102 : vector<20xf32> to vector<20x1xf32>
    %104 = tpu.reciprocal %103 {approx = true} : vector<20x1xf32> -> vector<20x1xf32>
    %105 = vector.broadcast %104 : vector<20x1xf32> to vector<20x20xf32>
    %106 = arith.mulf %101, %105 : vector<20x20xf32>
    %107 = vector.extract_strided_slice %67 {offsets = [0, 12], sizes = [20, 12], strides = [1, 1]} : vector<20x48xf32> to vector<20x12xf32>
    %cst_43 = arith.constant dense<0.000000e+00> : vector<20x12xf32>
    %108 = tpu.matmul %106, %107, %cst_43 {dimension_numbers = #tpu.dot_dimension_numbers<[1], [0], [0], [1], [0, 0, 1, 1], [], []>} : vector<20x20xf32>, vector<20x12xf32>, vector<20x12xf32> -> vector<20x12xf32>
    %109 = vector.extract_strided_slice %68 {offsets = [12, 0], sizes = [12, 48], strides = [1, 1]} : vector<48x48xf32> to vector<12x48xf32>
    %cst_44 = arith.constant dense<0.000000e+00> : vector<20x48xf32>
    %110 = tpu.matmul %108, %109, %cst_44 {dimension_numbers = #tpu.dot_dimension_numbers<[1], [0], [0], [1], [0, 0, 1, 1], [], []>} : vector<20x12xf32>, vector<12x48xf32>, vector<20x48xf32> -> vector<20x48xf32>
    %111 = arith.addf %90, %110 : vector<20x48xf32>
    %112 = vector.extract_strided_slice %57 {offsets = [0, 24], sizes = [20, 12], strides = [1, 1]} : vector<20x48xf32> to vector<20x12xf32>
    %113 = vector.extract_strided_slice %62 {offsets = [0, 24], sizes = [20, 12], strides = [1, 1]} : vector<20x48xf32> to vector<20x12xf32>
    %cst_45 = arith.constant dense<0.000000e+00> : vector<20x20xf32>
    %114 = tpu.matmul %112, %113, %cst_45 {dimension_numbers = #tpu.dot_dimension_numbers<[1], [1], [0], [0], [0, 0, 1, 0], [], []>} : vector<20x12xf32>, vector<20x12xf32>, vector<20x20xf32> -> vector<20x20xf32>
    %cst_46 = arith.constant 0.288675129 : f32
    %115 = vector.broadcast %cst_46 : f32 to vector<20x20xf32>
    %116 = arith.mulf %114, %115 : vector<20x20xf32>
    %117 = arith.addf %116, %70 : vector<20x20xf32>
    %cst_47 = arith.constant dense<0xFF800000> : vector<20xf32>
    %118 = vector.multi_reduction <maximumf>, %117, %cst_47 [1] : vector<20x20xf32> to vector<20xf32>
    %119 = vector.shape_cast %118 : vector<20xf32> to vector<20x1xf32>
    %120 = vector.broadcast %119 : vector<20x1xf32> to vector<20x20xf32>
    %121 = arith.subf %117, %120 : vector<20x20xf32>
    %122 = math.exp %121 : vector<20x20xf32>
    %cst_48 = arith.constant dense<0.000000e+00> : vector<20xf32>
    %123 = vector.multi_reduction <add>, %122, %cst_48 [1] : vector<20x20xf32> to vector<20xf32>
    %124 = vector.shape_cast %123 : vector<20xf32> to vector<20x1xf32>
    %125 = tpu.reciprocal %124 {approx = true} : vector<20x1xf32> -> vector<20x1xf32>
    %126 = vector.broadcast %125 : vector<20x1xf32> to vector<20x20xf32>
    %127 = arith.mulf %122, %126 : vector<20x20xf32>
    %128 = vector.extract_strided_slice %67 {offsets = [0, 24], sizes = [20, 12], strides = [1, 1]} : vector<20x48xf32> to vector<20x12xf32>
    %cst_49 = arith.constant dense<0.000000e+00> : vector<20x12xf32>
    %129 = tpu.matmul %127, %128, %cst_49 {dimension_numbers = #tpu.dot_dimension_numbers<[1], [0], [0], [1], [0, 0, 1, 1], [], []>} : vector<20x20xf32>, vector<20x12xf32>, vector<20x12xf32> -> vector<20x12xf32>
    %130 = vector.extract_strided_slice %68 {offsets = [24, 0], sizes = [12, 48], strides = [1, 1]} : vector<48x48xf32> to vector<12x48xf32>
    %cst_50 = arith.constant dense<0.000000e+00> : vector<20x48xf32>
    %131 = tpu.matmul %129, %130, %cst_50 {dimension_numbers = #tpu.dot_dimension_numbers<[1], [0], [0], [1], [0, 0, 1, 1], [], []>} : vector<20x12xf32>, vector<12x48xf32>, vector<20x48xf32> -> vector<20x48xf32>
    %132 = arith.addf %111, %131 : vector<20x48xf32>
    %133 = vector.extract_strided_slice %57 {offsets = [0, 36], sizes = [20, 12], strides = [1, 1]} : vector<20x48xf32> to vector<20x12xf32>
    %134 = vector.extract_strided_slice %62 {offsets = [0, 36], sizes = [20, 12], strides = [1, 1]} : vector<20x48xf32> to vector<20x12xf32>
    %cst_51 = arith.constant dense<0.000000e+00> : vector<20x20xf32>
    %135 = tpu.matmul %133, %134, %cst_51 {dimension_numbers = #tpu.dot_dimension_numbers<[1], [1], [0], [0], [0, 0, 1, 0], [], []>} : vector<20x12xf32>, vector<20x12xf32>, vector<20x20xf32> -> vector<20x20xf32>
    %cst_52 = arith.constant 0.288675129 : f32
    %136 = vector.broadcast %cst_52 : f32 to vector<20x20xf32>
    %137 = arith.mulf %135, %136 : vector<20x20xf32>
    %138 = arith.addf %137, %70 : vector<20x20xf32>
    %cst_53 = arith.constant dense<0xFF800000> : vector<20xf32>
    %139 = vector.multi_reduction <maximumf>, %138, %cst_53 [1] : vector<20x20xf32> to vector<20xf32>
    %140 = vector.shape_cast %139 : vector<20xf32> to vector<20x1xf32>
    %141 = vector.broadcast %140 : vector<20x1xf32> to vector<20x20xf32>
    %142 = arith.subf %138, %141 : vector<20x20xf32>
    %143 = math.exp %142 : vector<20x20xf32>
    %cst_54 = arith.constant dense<0.000000e+00> : vector<20xf32>
    %144 = vector.multi_reduction <add>, %143, %cst_54 [1] : vector<20x20xf32> to vector<20xf32>
    %145 = vector.shape_cast %144 : vector<20xf32> to vector<20x1xf32>
    %146 = tpu.reciprocal %145 {approx = true} : vector<20x1xf32> -> vector<20x1xf32>
    %147 = vector.broadcast %146 : vector<20x1xf32> to vector<20x20xf32>
    %148 = arith.mulf %143, %147 : vector<20x20xf32>
    %149 = vector.extract_strided_slice %67 {offsets = [0, 36], sizes = [20, 12], strides = [1, 1]} : vector<20x48xf32> to vector<20x12xf32>
    %cst_55 = arith.constant dense<0.000000e+00> : vector<20x12xf32>
    %150 = tpu.matmul %148, %149, %cst_55 {dimension_numbers = #tpu.dot_dimension_numbers<[1], [0], [0], [1], [0, 0, 1, 1], [], []>} : vector<20x20xf32>, vector<20x12xf32>, vector<20x12xf32> -> vector<20x12xf32>
    %151 = vector.extract_strided_slice %68 {offsets = [36, 0], sizes = [12, 48], strides = [1, 1]} : vector<48x48xf32> to vector<12x48xf32>
    %cst_56 = arith.constant dense<0.000000e+00> : vector<20x48xf32>
    %152 = tpu.matmul %150, %151, %cst_56 {dimension_numbers = #tpu.dot_dimension_numbers<[1], [0], [0], [1], [0, 0, 1, 1], [], []>} : vector<20x12xf32>, vector<12x48xf32>, vector<20x48xf32> -> vector<20x48xf32>
    %153 = arith.addf %132, %152 : vector<20x48xf32>
    %154 = vector.broadcast %69 : vector<1x48xf32> to vector<20x48xf32>
    %155 = arith.addf %153, %154 : vector<20x48xf32>
    %156 = arith.addf %28, %155 : vector<20x48xf32>
    %c8 = arith.constant 8 : index
    %c0_57 = arith.constant 0 : index
    %157 = vector.load %arg8[%c8, %c0_57] : memref<40x128xf32, #tpu.memory_space<vmem>>, vector<1x48xf32>
    %c9 = arith.constant 9 : index
    %c0_58 = arith.constant 0 : index
    %158 = vector.load %arg8[%c9, %c0_58] : memref<40x128xf32, #tpu.memory_space<vmem>>, vector<1x48xf32>
    %cst_59 = arith.constant dense<0.000000e+00> : vector<20xf32>
    %159 = vector.multi_reduction <add>, %156, %cst_59 [1] : vector<20x48xf32> to vector<20xf32>
    %160 = vector.shape_cast %159 : vector<20xf32> to vector<20x1xf32>
    %cst_60 = arith.constant 4.800000e+01 : f32
    %161 = vector.broadcast %cst_60 : f32 to vector<20x1xf32>
    %162 = arith.divf %160, %161 : vector<20x1xf32>
    %163 = vector.broadcast %162 : vector<20x1xf32> to vector<20x48xf32>
    %164 = arith.subf %156, %163 : vector<20x48xf32>
    %165 = arith.mulf %164, %164 : vector<20x48xf32>
    %cst_61 = arith.constant dense<0.000000e+00> : vector<20xf32>
    %166 = vector.multi_reduction <add>, %165, %cst_61 [1] : vector<20x48xf32> to vector<20xf32>
    %167 = vector.shape_cast %166 : vector<20xf32> to vector<20x1xf32>
    %cst_62 = arith.constant 4.800000e+01 : f32
    %168 = vector.broadcast %cst_62 : f32 to vector<20x1xf32>
    %169 = arith.divf %167, %168 : vector<20x1xf32>
    %170 = vector.broadcast %162 : vector<20x1xf32> to vector<20x48xf32>
    %171 = arith.subf %156, %170 : vector<20x48xf32>
    %cst_63 = arith.constant 9.99999974E-6 : f32
    %172 = vector.broadcast %cst_63 : f32 to vector<20x1xf32>
    %173 = arith.addf %169, %172 : vector<20x1xf32>
    %174 = math.rsqrt %173 : vector<20x1xf32>
    %175 = vector.broadcast %174 : vector<20x1xf32> to vector<20x48xf32>
    %176 = arith.mulf %171, %175 : vector<20x48xf32>
    %177 = vector.broadcast %157 : vector<1x48xf32> to vector<20x48xf32>
    %178 = arith.mulf %176, %177 : vector<20x48xf32>
    %179 = vector.broadcast %158 : vector<1x48xf32> to vector<20x48xf32>
    %180 = arith.addf %178, %179 : vector<20x48xf32>
    %c384 = arith.constant 384 : index
    %c0_64 = arith.constant 0 : index
    %181 = vector.load %arg7[%c384, %c0_64] : memref<1056x128xf32, #tpu.memory_space<vmem>>, vector<48x96xf32>
    %c10 = arith.constant 10 : index
    %c0_65 = arith.constant 0 : index
    %182 = vector.load %arg8[%c10, %c0_65] : memref<40x128xf32, #tpu.memory_space<vmem>>, vector<1x96xf32>
    %c432 = arith.constant 432 : index
    %c0_66 = arith.constant 0 : index
    %183 = vector.load %arg7[%c432, %c0_66] : memref<1056x128xf32, #tpu.memory_space<vmem>>, vector<96x48xf32>
    %c11 = arith.constant 11 : index
    %c0_67 = arith.constant 0 : index
    %184 = vector.load %arg8[%c11, %c0_67] : memref<40x128xf32, #tpu.memory_space<vmem>>, vector<1x48xf32>
    %cst_68 = arith.constant dense<0.000000e+00> : vector<20x96xf32>
    %185 = tpu.matmul %180, %181, %cst_68 {dimension_numbers = #tpu.dot_dimension_numbers<[1], [0], [0], [1], [0, 0, 1, 1], [], []>} : vector<20x48xf32>, vector<48x96xf32>, vector<20x96xf32> -> vector<20x96xf32>
    %186 = vector.broadcast %182 : vector<1x96xf32> to vector<20x96xf32>
    %187 = arith.addf %185, %186 : vector<20x96xf32>
    %188 = arith.mulf %187, %187 : vector<20x96xf32>
    %189 = arith.mulf %187, %188 : vector<20x96xf32>
    %cst_69 = arith.constant 4.471500e-02 : f32
    %190 = vector.broadcast %cst_69 : f32 to vector<20x96xf32>
    %191 = arith.mulf %190, %189 : vector<20x96xf32>
    %192 = arith.addf %187, %191 : vector<20x96xf32>
    %cst_70 = arith.constant 0.797884583 : f32
    %193 = vector.broadcast %cst_70 : f32 to vector<20x96xf32>
    %194 = arith.mulf %193, %192 : vector<20x96xf32>
    %195 = math.tanh %194 : vector<20x96xf32>
    %cst_71 = arith.constant 1.000000e+00 : f32
    %196 = vector.broadcast %cst_71 : f32 to vector<20x96xf32>
    %197 = arith.addf %196, %195 : vector<20x96xf32>
    %cst_72 = arith.constant 5.000000e-01 : f32
    %198 = vector.broadcast %cst_72 : f32 to vector<20x96xf32>
    %199 = arith.mulf %198, %197 : vector<20x96xf32>
    %200 = arith.mulf %187, %199 : vector<20x96xf32>
    %cst_73 = arith.constant dense<0.000000e+00> : vector<20x48xf32>
    %201 = tpu.matmul %200, %183, %cst_73 {dimension_numbers = #tpu.dot_dimension_numbers<[1], [0], [0], [1], [0, 0, 1, 1], [], []>} : vector<20x96xf32>, vector<96x48xf32>, vector<20x48xf32> -> vector<20x48xf32>
    %202 = vector.broadcast %184 : vector<1x48xf32> to vector<20x48xf32>
    %203 = arith.addf %201, %202 : vector<20x48xf32>
    %204 = arith.addf %156, %203 : vector<20x48xf32>
    %c528 = arith.constant 528 : index
    %c0_74 = arith.constant 0 : index
    %205 = vector.load %arg7[%c528, %c0_74] : memref<1056x128xf32, #tpu.memory_space<vmem>>, vector<48x32xf32>
    %cst_75 = arith.constant dense<0.000000e+00> : vector<20x32xf32>
    %206 = tpu.matmul %204, %205, %cst_75 {dimension_numbers = #tpu.dot_dimension_numbers<[1], [0], [0], [1], [0, 0, 1, 1], [], []>} : vector<20x48xf32>, vector<48x32xf32>, vector<20x32xf32> -> vector<20x32xf32>
    %c12 = arith.constant 12 : index
    %c0_76 = arith.constant 0 : index
    %207 = vector.load %arg8[%c12, %c0_76] : memref<40x128xf32, #tpu.memory_space<vmem>>, vector<1x32xf32>
    %208 = vector.broadcast %207 : vector<1x32xf32> to vector<20x32xf32>
    %209 = arith.addf %206, %208 : vector<20x32xf32>
    %c13 = arith.constant 13 : index
    %c0_77 = arith.constant 0 : index
    %210 = vector.load %arg8[%c13, %c0_77] : memref<40x128xf32, #tpu.memory_space<vmem>>, vector<1x32xf32>
    %c14 = arith.constant 14 : index
    %c0_78 = arith.constant 0 : index
    %211 = vector.load %arg8[%c14, %c0_78] : memref<40x128xf32, #tpu.memory_space<vmem>>, vector<1x32xf32>
    %cst_79 = arith.constant dense<0.000000e+00> : vector<20xf32>
    %212 = vector.multi_reduction <add>, %209, %cst_79 [1] : vector<20x32xf32> to vector<20xf32>
    %213 = vector.shape_cast %212 : vector<20xf32> to vector<20x1xf32>
    %cst_80 = arith.constant 3.200000e+01 : f32
    %214 = vector.broadcast %cst_80 : f32 to vector<20x1xf32>
    %215 = arith.divf %213, %214 : vector<20x1xf32>
    %216 = vector.broadcast %215 : vector<20x1xf32> to vector<20x32xf32>
    %217 = arith.subf %209, %216 : vector<20x32xf32>
    %218 = arith.mulf %217, %217 : vector<20x32xf32>
    %cst_81 = arith.constant dense<0.000000e+00> : vector<20xf32>
    %219 = vector.multi_reduction <add>, %218, %cst_81 [1] : vector<20x32xf32> to vector<20xf32>
    %220 = vector.shape_cast %219 : vector<20xf32> to vector<20x1xf32>
    %cst_82 = arith.constant 3.200000e+01 : f32
    %221 = vector.broadcast %cst_82 : f32 to vector<20x1xf32>
    %222 = arith.divf %220, %221 : vector<20x1xf32>
    %223 = vector.broadcast %215 : vector<20x1xf32> to vector<20x32xf32>
    %224 = arith.subf %209, %223 : vector<20x32xf32>
    %cst_83 = arith.constant 9.99999996E-13 : f32
    %225 = vector.broadcast %cst_83 : f32 to vector<20x1xf32>
    %226 = arith.addf %222, %225 : vector<20x1xf32>
    %227 = math.rsqrt %226 : vector<20x1xf32>
    %228 = vector.broadcast %227 : vector<20x1xf32> to vector<20x32xf32>
    %229 = arith.mulf %224, %228 : vector<20x32xf32>
    %230 = vector.broadcast %210 : vector<1x32xf32> to vector<20x32xf32>
    %231 = arith.mulf %229, %230 : vector<20x32xf32>
    %232 = vector.broadcast %211 : vector<1x32xf32> to vector<20x32xf32>
    %233 = arith.addf %231, %232 : vector<20x32xf32>
    %c0_84 = arith.constant 0 : index
    %c0_85 = arith.constant 0 : index
    %234 = vector.load %arg5[%c0_84, %c0_85] : memref<16x16xf32, #tpu.memory_space<vmem>>, vector<16x16xf32>
    %c0_86 = arith.constant 0 : index
    %c0_87 = arith.constant 0 : index
    %235 = vector.load %arg2[%c0_86, %c0_87] : memref<16x32xf32, #tpu.memory_space<vmem>>, vector<16x32xf32>
    %c15 = arith.constant 15 : index
    %c0_88 = arith.constant 0 : index
    %236 = vector.load %arg8[%c15, %c0_88] : memref<40x128xf32, #tpu.memory_space<vmem>>, vector<1x32xf32>
    %c16 = arith.constant 16 : index
    %c0_89 = arith.constant 0 : index
    %237 = vector.load %arg8[%c16, %c0_89] : memref<40x128xf32, #tpu.memory_space<vmem>>, vector<1x32xf32>
    %cst_90 = arith.constant dense<0.000000e+00> : vector<16xf32>
    %238 = vector.multi_reduction <add>, %235, %cst_90 [1] : vector<16x32xf32> to vector<16xf32>
    %239 = vector.shape_cast %238 : vector<16xf32> to vector<16x1xf32>
    %cst_91 = arith.constant 3.200000e+01 : f32
    %240 = vector.broadcast %cst_91 : f32 to vector<16x1xf32>
    %241 = arith.divf %239, %240 : vector<16x1xf32>
    %242 = vector.broadcast %241 : vector<16x1xf32> to vector<16x32xf32>
    %243 = arith.subf %235, %242 : vector<16x32xf32>
    %244 = arith.mulf %243, %243 : vector<16x32xf32>
    %cst_92 = arith.constant dense<0.000000e+00> : vector<16xf32>
    %245 = vector.multi_reduction <add>, %244, %cst_92 [1] : vector<16x32xf32> to vector<16xf32>
    %246 = vector.shape_cast %245 : vector<16xf32> to vector<16x1xf32>
    %cst_93 = arith.constant 3.200000e+01 : f32
    %247 = vector.broadcast %cst_93 : f32 to vector<16x1xf32>
    %248 = arith.divf %246, %247 : vector<16x1xf32>
    %249 = vector.broadcast %241 : vector<16x1xf32> to vector<16x32xf32>
    %250 = arith.subf %235, %249 : vector<16x32xf32>
    %cst_94 = arith.constant 9.99999996E-13 : f32
    %251 = vector.broadcast %cst_94 : f32 to vector<16x1xf32>
    %252 = arith.addf %248, %251 : vector<16x1xf32>
    %253 = math.rsqrt %252 : vector<16x1xf32>
    %254 = vector.broadcast %253 : vector<16x1xf32> to vector<16x32xf32>
    %255 = arith.mulf %250, %254 : vector<16x32xf32>
    %256 = vector.broadcast %236 : vector<1x32xf32> to vector<16x32xf32>
    %257 = arith.mulf %255, %256 : vector<16x32xf32>
    %258 = vector.broadcast %237 : vector<1x32xf32> to vector<16x32xf32>
    %259 = arith.addf %257, %258 : vector<16x32xf32>
    %c576 = arith.constant 576 : index
    %c0_95 = arith.constant 0 : index
    %260 = vector.load %arg7[%c576, %c0_95] : memref<1056x128xf32, #tpu.memory_space<vmem>>, vector<32x96xf32>
    %cst_96 = arith.constant dense<0.000000e+00> : vector<16x96xf32>
    %261 = tpu.matmul %259, %260, %cst_96 {dimension_numbers = #tpu.dot_dimension_numbers<[1], [0], [0], [1], [0, 0, 1, 1], [], []>} : vector<16x32xf32>, vector<32x96xf32>, vector<16x96xf32> -> vector<16x96xf32>
    %c17 = arith.constant 17 : index
    %c0_97 = arith.constant 0 : index
    %262 = vector.load %arg8[%c17, %c0_97] : memref<40x128xf32, #tpu.memory_space<vmem>>, vector<1x96xf32>
    %263 = vector.broadcast %262 : vector<1x96xf32> to vector<16x96xf32>
    %264 = arith.addf %261, %263 : vector<16x96xf32>
    %265 = vector.extract_strided_slice %264 {offsets = [0, 0], sizes = [16, 32], strides = [1, 1]} : vector<16x96xf32> to vector<16x32xf32>
    %266 = vector.extract_strided_slice %264 {offsets = [0, 32], sizes = [16, 32], strides = [1, 1]} : vector<16x96xf32> to vector<16x32xf32>
    %267 = vector.extract_strided_slice %264 {offsets = [0, 64], sizes = [16, 32], strides = [1, 1]} : vector<16x96xf32> to vector<16x32xf32>
    %c608 = arith.constant 608 : index
    %c0_98 = arith.constant 0 : index
    %268 = vector.load %arg7[%c608, %c0_98] : memref<1056x128xf32, #tpu.memory_space<vmem>>, vector<32x32xf32>
    %c18 = arith.constant 18 : index
    %c0_99 = arith.constant 0 : index
    %269 = vector.load %arg8[%c18, %c0_99] : memref<40x128xf32, #tpu.memory_space<vmem>>, vector<1x32xf32>
    %270 = vector.extract_strided_slice %265 {offsets = [0, 0], sizes = [16, 8], strides = [1, 1]} : vector<16x32xf32> to vector<16x8xf32>
    %271 = vector.extract_strided_slice %266 {offsets = [0, 0], sizes = [16, 8], strides = [1, 1]} : vector<16x32xf32> to vector<16x8xf32>
    %cst_100 = arith.constant dense<0.000000e+00> : vector<16x16xf32>
    %272 = tpu.matmul %270, %271, %cst_100 {dimension_numbers = #tpu.dot_dimension_numbers<[1], [1], [0], [0], [0, 0, 1, 0], [], []>} : vector<16x8xf32>, vector<16x8xf32>, vector<16x16xf32> -> vector<16x16xf32>
    %cst_101 = arith.constant 0.353553385 : f32
    %273 = vector.broadcast %cst_101 : f32 to vector<16x16xf32>
    %274 = arith.mulf %272, %273 : vector<16x16xf32>
    %275 = arith.addf %274, %234 : vector<16x16xf32>
    %cst_102 = arith.constant dense<0xFF800000> : vector<16xf32>
    %276 = vector.multi_reduction <maximumf>, %275, %cst_102 [1] : vector<16x16xf32> to vector<16xf32>
    %277 = vector.shape_cast %276 : vector<16xf32> to vector<16x1xf32>
    %278 = vector.broadcast %277 : vector<16x1xf32> to vector<16x16xf32>
    %279 = arith.subf %275, %278 : vector<16x16xf32>
    %280 = math.exp %279 : vector<16x16xf32>
    %cst_103 = arith.constant dense<0.000000e+00> : vector<16xf32>
    %281 = vector.multi_reduction <add>, %280, %cst_103 [1] : vector<16x16xf32> to vector<16xf32>
    %282 = vector.shape_cast %281 : vector<16xf32> to vector<16x1xf32>
    %283 = tpu.reciprocal %282 {approx = true} : vector<16x1xf32> -> vector<16x1xf32>
    %284 = vector.broadcast %283 : vector<16x1xf32> to vector<16x16xf32>
    %285 = arith.mulf %280, %284 : vector<16x16xf32>
    %286 = vector.extract_strided_slice %267 {offsets = [0, 0], sizes = [16, 8], strides = [1, 1]} : vector<16x32xf32> to vector<16x8xf32>
    %cst_104 = arith.constant dense<0.000000e+00> : vector<16x8xf32>
    %287 = tpu.matmul %285, %286, %cst_104 {dimension_numbers = #tpu.dot_dimension_numbers<[1], [0], [0], [1], [0, 0, 1, 1], [], []>} : vector<16x16xf32>, vector<16x8xf32>, vector<16x8xf32> -> vector<16x8xf32>
    %288 = vector.extract_strided_slice %268 {offsets = [0, 0], sizes = [8, 32], strides = [1, 1]} : vector<32x32xf32> to vector<8x32xf32>
    %cst_105 = arith.constant dense<0.000000e+00> : vector<16x32xf32>
    %289 = tpu.matmul %287, %288, %cst_105 {dimension_numbers = #tpu.dot_dimension_numbers<[1], [0], [0], [1], [0, 0, 1, 1], [], []>} : vector<16x8xf32>, vector<8x32xf32>, vector<16x32xf32> -> vector<16x32xf32>
    %290 = vector.extract_strided_slice %265 {offsets = [0, 8], sizes = [16, 8], strides = [1, 1]} : vector<16x32xf32> to vector<16x8xf32>
    %291 = vector.extract_strided_slice %266 {offsets = [0, 8], sizes = [16, 8], strides = [1, 1]} : vector<16x32xf32> to vector<16x8xf32>
    %cst_106 = arith.constant dense<0.000000e+00> : vector<16x16xf32>
    %292 = tpu.matmul %290, %291, %cst_106 {dimension_numbers = #tpu.dot_dimension_numbers<[1], [1], [0], [0], [0, 0, 1, 0], [], []>} : vector<16x8xf32>, vector<16x8xf32>, vector<16x16xf32> -> vector<16x16xf32>
    %cst_107 = arith.constant 0.353553385 : f32
    %293 = vector.broadcast %cst_107 : f32 to vector<16x16xf32>
    %294 = arith.mulf %292, %293 : vector<16x16xf32>
    %295 = arith.addf %294, %234 : vector<16x16xf32>
    %cst_108 = arith.constant dense<0xFF800000> : vector<16xf32>
    %296 = vector.multi_reduction <maximumf>, %295, %cst_108 [1] : vector<16x16xf32> to vector<16xf32>
    %297 = vector.shape_cast %296 : vector<16xf32> to vector<16x1xf32>
    %298 = vector.broadcast %297 : vector<16x1xf32> to vector<16x16xf32>
    %299 = arith.subf %295, %298 : vector<16x16xf32>
    %300 = math.exp %299 : vector<16x16xf32>
    %cst_109 = arith.constant dense<0.000000e+00> : vector<16xf32>
    %301 = vector.multi_reduction <add>, %300, %cst_109 [1] : vector<16x16xf32> to vector<16xf32>
    %302 = vector.shape_cast %301 : vector<16xf32> to vector<16x1xf32>
    %303 = tpu.reciprocal %302 {approx = true} : vector<16x1xf32> -> vector<16x1xf32>
    %304 = vector.broadcast %303 : vector<16x1xf32> to vector<16x16xf32>
    %305 = arith.mulf %300, %304 : vector<16x16xf32>
    %306 = vector.extract_strided_slice %267 {offsets = [0, 8], sizes = [16, 8], strides = [1, 1]} : vector<16x32xf32> to vector<16x8xf32>
    %cst_110 = arith.constant dense<0.000000e+00> : vector<16x8xf32>
    %307 = tpu.matmul %305, %306, %cst_110 {dimension_numbers = #tpu.dot_dimension_numbers<[1], [0], [0], [1], [0, 0, 1, 1], [], []>} : vector<16x16xf32>, vector<16x8xf32>, vector<16x8xf32> -> vector<16x8xf32>
    %308 = vector.extract_strided_slice %268 {offsets = [8, 0], sizes = [8, 32], strides = [1, 1]} : vector<32x32xf32> to vector<8x32xf32>
    %cst_111 = arith.constant dense<0.000000e+00> : vector<16x32xf32>
    %309 = tpu.matmul %307, %308, %cst_111 {dimension_numbers = #tpu.dot_dimension_numbers<[1], [0], [0], [1], [0, 0, 1, 1], [], []>} : vector<16x8xf32>, vector<8x32xf32>, vector<16x32xf32> -> vector<16x32xf32>
    %310 = arith.addf %289, %309 : vector<16x32xf32>
    %311 = vector.extract_strided_slice %265 {offsets = [0, 16], sizes = [16, 8], strides = [1, 1]} : vector<16x32xf32> to vector<16x8xf32>
    %312 = vector.extract_strided_slice %266 {offsets = [0, 16], sizes = [16, 8], strides = [1, 1]} : vector<16x32xf32> to vector<16x8xf32>
    %cst_112 = arith.constant dense<0.000000e+00> : vector<16x16xf32>
    %313 = tpu.matmul %311, %312, %cst_112 {dimension_numbers = #tpu.dot_dimension_numbers<[1], [1], [0], [0], [0, 0, 1, 0], [], []>} : vector<16x8xf32>, vector<16x8xf32>, vector<16x16xf32> -> vector<16x16xf32>
    %cst_113 = arith.constant 0.353553385 : f32
    %314 = vector.broadcast %cst_113 : f32 to vector<16x16xf32>
    %315 = arith.mulf %313, %314 : vector<16x16xf32>
    %316 = arith.addf %315, %234 : vector<16x16xf32>
    %cst_114 = arith.constant dense<0xFF800000> : vector<16xf32>
    %317 = vector.multi_reduction <maximumf>, %316, %cst_114 [1] : vector<16x16xf32> to vector<16xf32>
    %318 = vector.shape_cast %317 : vector<16xf32> to vector<16x1xf32>
    %319 = vector.broadcast %318 : vector<16x1xf32> to vector<16x16xf32>
    %320 = arith.subf %316, %319 : vector<16x16xf32>
    %321 = math.exp %320 : vector<16x16xf32>
    %cst_115 = arith.constant dense<0.000000e+00> : vector<16xf32>
    %322 = vector.multi_reduction <add>, %321, %cst_115 [1] : vector<16x16xf32> to vector<16xf32>
    %323 = vector.shape_cast %322 : vector<16xf32> to vector<16x1xf32>
    %324 = tpu.reciprocal %323 {approx = true} : vector<16x1xf32> -> vector<16x1xf32>
    %325 = vector.broadcast %324 : vector<16x1xf32> to vector<16x16xf32>
    %326 = arith.mulf %321, %325 : vector<16x16xf32>
    %327 = vector.extract_strided_slice %267 {offsets = [0, 16], sizes = [16, 8], strides = [1, 1]} : vector<16x32xf32> to vector<16x8xf32>
    %cst_116 = arith.constant dense<0.000000e+00> : vector<16x8xf32>
    %328 = tpu.matmul %326, %327, %cst_116 {dimension_numbers = #tpu.dot_dimension_numbers<[1], [0], [0], [1], [0, 0, 1, 1], [], []>} : vector<16x16xf32>, vector<16x8xf32>, vector<16x8xf32> -> vector<16x8xf32>
    %329 = vector.extract_strided_slice %268 {offsets = [16, 0], sizes = [8, 32], strides = [1, 1]} : vector<32x32xf32> to vector<8x32xf32>
    %cst_117 = arith.constant dense<0.000000e+00> : vector<16x32xf32>
    %330 = tpu.matmul %328, %329, %cst_117 {dimension_numbers = #tpu.dot_dimension_numbers<[1], [0], [0], [1], [0, 0, 1, 1], [], []>} : vector<16x8xf32>, vector<8x32xf32>, vector<16x32xf32> -> vector<16x32xf32>
    %331 = arith.addf %310, %330 : vector<16x32xf32>
    %332 = vector.extract_strided_slice %265 {offsets = [0, 24], sizes = [16, 8], strides = [1, 1]} : vector<16x32xf32> to vector<16x8xf32>
    %333 = vector.extract_strided_slice %266 {offsets = [0, 24], sizes = [16, 8], strides = [1, 1]} : vector<16x32xf32> to vector<16x8xf32>
    %cst_118 = arith.constant dense<0.000000e+00> : vector<16x16xf32>
    %334 = tpu.matmul %332, %333, %cst_118 {dimension_numbers = #tpu.dot_dimension_numbers<[1], [1], [0], [0], [0, 0, 1, 0], [], []>} : vector<16x8xf32>, vector<16x8xf32>, vector<16x16xf32> -> vector<16x16xf32>
    %cst_119 = arith.constant 0.353553385 : f32
    %335 = vector.broadcast %cst_119 : f32 to vector<16x16xf32>
    %336 = arith.mulf %334, %335 : vector<16x16xf32>
    %337 = arith.addf %336, %234 : vector<16x16xf32>
    %cst_120 = arith.constant dense<0xFF800000> : vector<16xf32>
    %338 = vector.multi_reduction <maximumf>, %337, %cst_120 [1] : vector<16x16xf32> to vector<16xf32>
    %339 = vector.shape_cast %338 : vector<16xf32> to vector<16x1xf32>
    %340 = vector.broadcast %339 : vector<16x1xf32> to vector<16x16xf32>
    %341 = arith.subf %337, %340 : vector<16x16xf32>
    %342 = math.exp %341 : vector<16x16xf32>
    %cst_121 = arith.constant dense<0.000000e+00> : vector<16xf32>
    %343 = vector.multi_reduction <add>, %342, %cst_121 [1] : vector<16x16xf32> to vector<16xf32>
    %344 = vector.shape_cast %343 : vector<16xf32> to vector<16x1xf32>
    %345 = tpu.reciprocal %344 {approx = true} : vector<16x1xf32> -> vector<16x1xf32>
    %346 = vector.broadcast %345 : vector<16x1xf32> to vector<16x16xf32>
    %347 = arith.mulf %342, %346 : vector<16x16xf32>
    %348 = vector.extract_strided_slice %267 {offsets = [0, 24], sizes = [16, 8], strides = [1, 1]} : vector<16x32xf32> to vector<16x8xf32>
    %cst_122 = arith.constant dense<0.000000e+00> : vector<16x8xf32>
    %349 = tpu.matmul %347, %348, %cst_122 {dimension_numbers = #tpu.dot_dimension_numbers<[1], [0], [0], [1], [0, 0, 1, 1], [], []>} : vector<16x16xf32>, vector<16x8xf32>, vector<16x8xf32> -> vector<16x8xf32>
    %350 = vector.extract_strided_slice %268 {offsets = [24, 0], sizes = [8, 32], strides = [1, 1]} : vector<32x32xf32> to vector<8x32xf32>
    %cst_123 = arith.constant dense<0.000000e+00> : vector<16x32xf32>
    %351 = tpu.matmul %349, %350, %cst_123 {dimension_numbers = #tpu.dot_dimension_numbers<[1], [0], [0], [1], [0, 0, 1, 1], [], []>} : vector<16x8xf32>, vector<8x32xf32>, vector<16x32xf32> -> vector<16x32xf32>
    %352 = arith.addf %331, %351 : vector<16x32xf32>
    %353 = vector.broadcast %269 : vector<1x32xf32> to vector<16x32xf32>
    %354 = arith.addf %352, %353 : vector<16x32xf32>
    %355 = arith.addf %259, %354 : vector<16x32xf32>
    %c19 = arith.constant 19 : index
    %c0_124 = arith.constant 0 : index
    %356 = vector.load %arg8[%c19, %c0_124] : memref<40x128xf32, #tpu.memory_space<vmem>>, vector<1x32xf32>
    %c20 = arith.constant 20 : index
    %c0_125 = arith.constant 0 : index
    %357 = vector.load %arg8[%c20, %c0_125] : memref<40x128xf32, #tpu.memory_space<vmem>>, vector<1x32xf32>
    %cst_126 = arith.constant dense<0.000000e+00> : vector<16xf32>
    %358 = vector.multi_reduction <add>, %355, %cst_126 [1] : vector<16x32xf32> to vector<16xf32>
    %359 = vector.shape_cast %358 : vector<16xf32> to vector<16x1xf32>
    %cst_127 = arith.constant 3.200000e+01 : f32
    %360 = vector.broadcast %cst_127 : f32 to vector<16x1xf32>
    %361 = arith.divf %359, %360 : vector<16x1xf32>
    %362 = vector.broadcast %361 : vector<16x1xf32> to vector<16x32xf32>
    %363 = arith.subf %355, %362 : vector<16x32xf32>
    %364 = arith.mulf %363, %363 : vector<16x32xf32>
    %cst_128 = arith.constant dense<0.000000e+00> : vector<16xf32>
    %365 = vector.multi_reduction <add>, %364, %cst_128 [1] : vector<16x32xf32> to vector<16xf32>
    %366 = vector.shape_cast %365 : vector<16xf32> to vector<16x1xf32>
    %cst_129 = arith.constant 3.200000e+01 : f32
    %367 = vector.broadcast %cst_129 : f32 to vector<16x1xf32>
    %368 = arith.divf %366, %367 : vector<16x1xf32>
    %369 = vector.broadcast %361 : vector<16x1xf32> to vector<16x32xf32>
    %370 = arith.subf %355, %369 : vector<16x32xf32>
    %cst_130 = arith.constant 9.99999996E-13 : f32
    %371 = vector.broadcast %cst_130 : f32 to vector<16x1xf32>
    %372 = arith.addf %368, %371 : vector<16x1xf32>
    %373 = math.rsqrt %372 : vector<16x1xf32>
    %374 = vector.broadcast %373 : vector<16x1xf32> to vector<16x32xf32>
    %375 = arith.mulf %370, %374 : vector<16x32xf32>
    %376 = vector.broadcast %356 : vector<1x32xf32> to vector<16x32xf32>
    %377 = arith.mulf %375, %376 : vector<16x32xf32>
    %378 = vector.broadcast %357 : vector<1x32xf32> to vector<16x32xf32>
    %379 = arith.addf %377, %378 : vector<16x32xf32>
    %c640 = arith.constant 640 : index
    %c0_131 = arith.constant 0 : index
    %380 = vector.load %arg7[%c640, %c0_131] : memref<1056x128xf32, #tpu.memory_space<vmem>>, vector<32x64xf32>
    %c21 = arith.constant 21 : index
    %c0_132 = arith.constant 0 : index
    %381 = vector.load %arg8[%c21, %c0_132] : memref<40x128xf32, #tpu.memory_space<vmem>>, vector<1x64xf32>
    %c672 = arith.constant 672 : index
    %c0_133 = arith.constant 0 : index
    %382 = vector.load %arg7[%c672, %c0_133] : memref<1056x128xf32, #tpu.memory_space<vmem>>, vector<64x32xf32>
    %c22 = arith.constant 22 : index
    %c0_134 = arith.constant 0 : index
    %383 = vector.load %arg8[%c22, %c0_134] : memref<40x128xf32, #tpu.memory_space<vmem>>, vector<1x32xf32>
    %cst_135 = arith.constant dense<0.000000e+00> : vector<16x64xf32>
    %384 = tpu.matmul %379, %380, %cst_135 {dimension_numbers = #tpu.dot_dimension_numbers<[1], [0], [0], [1], [0, 0, 1, 1], [], []>} : vector<16x32xf32>, vector<32x64xf32>, vector<16x64xf32> -> vector<16x64xf32>
    %385 = vector.broadcast %381 : vector<1x64xf32> to vector<16x64xf32>
    %386 = arith.addf %384, %385 : vector<16x64xf32>
    %387 = arith.mulf %386, %386 : vector<16x64xf32>
    %388 = arith.mulf %386, %387 : vector<16x64xf32>
    %cst_136 = arith.constant 4.471500e-02 : f32
    %389 = vector.broadcast %cst_136 : f32 to vector<16x64xf32>
    %390 = arith.mulf %389, %388 : vector<16x64xf32>
    %391 = arith.addf %386, %390 : vector<16x64xf32>
    %cst_137 = arith.constant 0.797884583 : f32
    %392 = vector.broadcast %cst_137 : f32 to vector<16x64xf32>
    %393 = arith.mulf %392, %391 : vector<16x64xf32>
    %394 = math.tanh %393 : vector<16x64xf32>
    %cst_138 = arith.constant 1.000000e+00 : f32
    %395 = vector.broadcast %cst_138 : f32 to vector<16x64xf32>
    %396 = arith.addf %395, %394 : vector<16x64xf32>
    %cst_139 = arith.constant 5.000000e-01 : f32
    %397 = vector.broadcast %cst_139 : f32 to vector<16x64xf32>
    %398 = arith.mulf %397, %396 : vector<16x64xf32>
    %399 = arith.mulf %386, %398 : vector<16x64xf32>
    %cst_140 = arith.constant dense<0.000000e+00> : vector<16x32xf32>
    %400 = tpu.matmul %399, %382, %cst_140 {dimension_numbers = #tpu.dot_dimension_numbers<[1], [0], [0], [1], [0, 0, 1, 1], [], []>} : vector<16x64xf32>, vector<64x32xf32>, vector<16x32xf32> -> vector<16x32xf32>
    %401 = vector.broadcast %383 : vector<1x32xf32> to vector<16x32xf32>
    %402 = arith.addf %400, %401 : vector<16x32xf32>
    %403 = arith.addf %379, %402 : vector<16x32xf32>
    %c23 = arith.constant 23 : index
    %c0_141 = arith.constant 0 : index
    %404 = vector.load %arg8[%c23, %c0_141] : memref<40x128xf32, #tpu.memory_space<vmem>>, vector<1x32xf32>
    %c24 = arith.constant 24 : index
    %c0_142 = arith.constant 0 : index
    %405 = vector.load %arg8[%c24, %c0_142] : memref<40x128xf32, #tpu.memory_space<vmem>>, vector<1x32xf32>
    %cst_143 = arith.constant dense<0.000000e+00> : vector<16xf32>
    %406 = vector.multi_reduction <add>, %403, %cst_143 [1] : vector<16x32xf32> to vector<16xf32>
    %407 = vector.shape_cast %406 : vector<16xf32> to vector<16x1xf32>
    %cst_144 = arith.constant 3.200000e+01 : f32
    %408 = vector.broadcast %cst_144 : f32 to vector<16x1xf32>
    %409 = arith.divf %407, %408 : vector<16x1xf32>
    %410 = vector.broadcast %409 : vector<16x1xf32> to vector<16x32xf32>
    %411 = arith.subf %403, %410 : vector<16x32xf32>
    %412 = arith.mulf %411, %411 : vector<16x32xf32>
    %cst_145 = arith.constant dense<0.000000e+00> : vector<16xf32>
    %413 = vector.multi_reduction <add>, %412, %cst_145 [1] : vector<16x32xf32> to vector<16xf32>
    %414 = vector.shape_cast %413 : vector<16xf32> to vector<16x1xf32>
    %cst_146 = arith.constant 3.200000e+01 : f32
    %415 = vector.broadcast %cst_146 : f32 to vector<16x1xf32>
    %416 = arith.divf %414, %415 : vector<16x1xf32>
    %417 = vector.broadcast %409 : vector<16x1xf32> to vector<16x32xf32>
    %418 = arith.subf %403, %417 : vector<16x32xf32>
    %cst_147 = arith.constant 9.99999996E-13 : f32
    %419 = vector.broadcast %cst_147 : f32 to vector<16x1xf32>
    %420 = arith.addf %416, %419 : vector<16x1xf32>
    %421 = math.rsqrt %420 : vector<16x1xf32>
    %422 = vector.broadcast %421 : vector<16x1xf32> to vector<16x32xf32>
    %423 = arith.mulf %418, %422 : vector<16x32xf32>
    %424 = vector.broadcast %404 : vector<1x32xf32> to vector<16x32xf32>
    %425 = arith.mulf %423, %424 : vector<16x32xf32>
    %426 = vector.broadcast %405 : vector<1x32xf32> to vector<16x32xf32>
    %427 = arith.addf %425, %426 : vector<16x32xf32>
    %c736 = arith.constant 736 : index
    %c0_148 = arith.constant 0 : index
    %428 = vector.load %arg7[%c736, %c0_148] : memref<1056x128xf32, #tpu.memory_space<vmem>>, vector<32x96xf32>
    %cst_149 = arith.constant dense<0.000000e+00> : vector<16x96xf32>
    %429 = tpu.matmul %427, %428, %cst_149 {dimension_numbers = #tpu.dot_dimension_numbers<[1], [0], [0], [1], [0, 0, 1, 1], [], []>} : vector<16x32xf32>, vector<32x96xf32>, vector<16x96xf32> -> vector<16x96xf32>
    %c25 = arith.constant 25 : index
    %c0_150 = arith.constant 0 : index
    %430 = vector.load %arg8[%c25, %c0_150] : memref<40x128xf32, #tpu.memory_space<vmem>>, vector<1x96xf32>
    %431 = vector.broadcast %430 : vector<1x96xf32> to vector<16x96xf32>
    %432 = arith.addf %429, %431 : vector<16x96xf32>
    %433 = vector.extract_strided_slice %432 {offsets = [0, 0], sizes = [16, 32], strides = [1, 1]} : vector<16x96xf32> to vector<16x32xf32>
    %434 = vector.extract_strided_slice %432 {offsets = [0, 32], sizes = [16, 32], strides = [1, 1]} : vector<16x96xf32> to vector<16x32xf32>
    %435 = vector.extract_strided_slice %432 {offsets = [0, 64], sizes = [16, 32], strides = [1, 1]} : vector<16x96xf32> to vector<16x32xf32>
    %c768 = arith.constant 768 : index
    %c0_151 = arith.constant 0 : index
    %436 = vector.load %arg7[%c768, %c0_151] : memref<1056x128xf32, #tpu.memory_space<vmem>>, vector<32x32xf32>
    %c26 = arith.constant 26 : index
    %c0_152 = arith.constant 0 : index
    %437 = vector.load %arg8[%c26, %c0_152] : memref<40x128xf32, #tpu.memory_space<vmem>>, vector<1x32xf32>
    %438 = vector.extract_strided_slice %433 {offsets = [0, 0], sizes = [16, 8], strides = [1, 1]} : vector<16x32xf32> to vector<16x8xf32>
    %439 = vector.extract_strided_slice %434 {offsets = [0, 0], sizes = [16, 8], strides = [1, 1]} : vector<16x32xf32> to vector<16x8xf32>
    %cst_153 = arith.constant dense<0.000000e+00> : vector<16x16xf32>
    %440 = tpu.matmul %438, %439, %cst_153 {dimension_numbers = #tpu.dot_dimension_numbers<[1], [1], [0], [0], [0, 0, 1, 0], [], []>} : vector<16x8xf32>, vector<16x8xf32>, vector<16x16xf32> -> vector<16x16xf32>
    %cst_154 = arith.constant 0.353553385 : f32
    %441 = vector.broadcast %cst_154 : f32 to vector<16x16xf32>
    %442 = arith.mulf %440, %441 : vector<16x16xf32>
    %443 = arith.addf %442, %234 : vector<16x16xf32>
    %cst_155 = arith.constant dense<0xFF800000> : vector<16xf32>
    %444 = vector.multi_reduction <maximumf>, %443, %cst_155 [1] : vector<16x16xf32> to vector<16xf32>
    %445 = vector.shape_cast %444 : vector<16xf32> to vector<16x1xf32>
    %446 = vector.broadcast %445 : vector<16x1xf32> to vector<16x16xf32>
    %447 = arith.subf %443, %446 : vector<16x16xf32>
    %448 = math.exp %447 : vector<16x16xf32>
    %cst_156 = arith.constant dense<0.000000e+00> : vector<16xf32>
    %449 = vector.multi_reduction <add>, %448, %cst_156 [1] : vector<16x16xf32> to vector<16xf32>
    %450 = vector.shape_cast %449 : vector<16xf32> to vector<16x1xf32>
    %451 = tpu.reciprocal %450 {approx = true} : vector<16x1xf32> -> vector<16x1xf32>
    %452 = vector.broadcast %451 : vector<16x1xf32> to vector<16x16xf32>
    %453 = arith.mulf %448, %452 : vector<16x16xf32>
    %454 = vector.extract_strided_slice %435 {offsets = [0, 0], sizes = [16, 8], strides = [1, 1]} : vector<16x32xf32> to vector<16x8xf32>
    %cst_157 = arith.constant dense<0.000000e+00> : vector<16x8xf32>
    %455 = tpu.matmul %453, %454, %cst_157 {dimension_numbers = #tpu.dot_dimension_numbers<[1], [0], [0], [1], [0, 0, 1, 1], [], []>} : vector<16x16xf32>, vector<16x8xf32>, vector<16x8xf32> -> vector<16x8xf32>
    %456 = vector.extract_strided_slice %436 {offsets = [0, 0], sizes = [8, 32], strides = [1, 1]} : vector<32x32xf32> to vector<8x32xf32>
    %cst_158 = arith.constant dense<0.000000e+00> : vector<16x32xf32>
    %457 = tpu.matmul %455, %456, %cst_158 {dimension_numbers = #tpu.dot_dimension_numbers<[1], [0], [0], [1], [0, 0, 1, 1], [], []>} : vector<16x8xf32>, vector<8x32xf32>, vector<16x32xf32> -> vector<16x32xf32>
    %458 = vector.extract_strided_slice %433 {offsets = [0, 8], sizes = [16, 8], strides = [1, 1]} : vector<16x32xf32> to vector<16x8xf32>
    %459 = vector.extract_strided_slice %434 {offsets = [0, 8], sizes = [16, 8], strides = [1, 1]} : vector<16x32xf32> to vector<16x8xf32>
    %cst_159 = arith.constant dense<0.000000e+00> : vector<16x16xf32>
    %460 = tpu.matmul %458, %459, %cst_159 {dimension_numbers = #tpu.dot_dimension_numbers<[1], [1], [0], [0], [0, 0, 1, 0], [], []>} : vector<16x8xf32>, vector<16x8xf32>, vector<16x16xf32> -> vector<16x16xf32>
    %cst_160 = arith.constant 0.353553385 : f32
    %461 = vector.broadcast %cst_160 : f32 to vector<16x16xf32>
    %462 = arith.mulf %460, %461 : vector<16x16xf32>
    %463 = arith.addf %462, %234 : vector<16x16xf32>
    %cst_161 = arith.constant dense<0xFF800000> : vector<16xf32>
    %464 = vector.multi_reduction <maximumf>, %463, %cst_161 [1] : vector<16x16xf32> to vector<16xf32>
    %465 = vector.shape_cast %464 : vector<16xf32> to vector<16x1xf32>
    %466 = vector.broadcast %465 : vector<16x1xf32> to vector<16x16xf32>
    %467 = arith.subf %463, %466 : vector<16x16xf32>
    %468 = math.exp %467 : vector<16x16xf32>
    %cst_162 = arith.constant dense<0.000000e+00> : vector<16xf32>
    %469 = vector.multi_reduction <add>, %468, %cst_162 [1] : vector<16x16xf32> to vector<16xf32>
    %470 = vector.shape_cast %469 : vector<16xf32> to vector<16x1xf32>
    %471 = tpu.reciprocal %470 {approx = true} : vector<16x1xf32> -> vector<16x1xf32>
    %472 = vector.broadcast %471 : vector<16x1xf32> to vector<16x16xf32>
    %473 = arith.mulf %468, %472 : vector<16x16xf32>
    %474 = vector.extract_strided_slice %435 {offsets = [0, 8], sizes = [16, 8], strides = [1, 1]} : vector<16x32xf32> to vector<16x8xf32>
    %cst_163 = arith.constant dense<0.000000e+00> : vector<16x8xf32>
    %475 = tpu.matmul %473, %474, %cst_163 {dimension_numbers = #tpu.dot_dimension_numbers<[1], [0], [0], [1], [0, 0, 1, 1], [], []>} : vector<16x16xf32>, vector<16x8xf32>, vector<16x8xf32> -> vector<16x8xf32>
    %476 = vector.extract_strided_slice %436 {offsets = [8, 0], sizes = [8, 32], strides = [1, 1]} : vector<32x32xf32> to vector<8x32xf32>
    %cst_164 = arith.constant dense<0.000000e+00> : vector<16x32xf32>
    %477 = tpu.matmul %475, %476, %cst_164 {dimension_numbers = #tpu.dot_dimension_numbers<[1], [0], [0], [1], [0, 0, 1, 1], [], []>} : vector<16x8xf32>, vector<8x32xf32>, vector<16x32xf32> -> vector<16x32xf32>
    %478 = arith.addf %457, %477 : vector<16x32xf32>
    %479 = vector.extract_strided_slice %433 {offsets = [0, 16], sizes = [16, 8], strides = [1, 1]} : vector<16x32xf32> to vector<16x8xf32>
    %480 = vector.extract_strided_slice %434 {offsets = [0, 16], sizes = [16, 8], strides = [1, 1]} : vector<16x32xf32> to vector<16x8xf32>
    %cst_165 = arith.constant dense<0.000000e+00> : vector<16x16xf32>
    %481 = tpu.matmul %479, %480, %cst_165 {dimension_numbers = #tpu.dot_dimension_numbers<[1], [1], [0], [0], [0, 0, 1, 0], [], []>} : vector<16x8xf32>, vector<16x8xf32>, vector<16x16xf32> -> vector<16x16xf32>
    %cst_166 = arith.constant 0.353553385 : f32
    %482 = vector.broadcast %cst_166 : f32 to vector<16x16xf32>
    %483 = arith.mulf %481, %482 : vector<16x16xf32>
    %484 = arith.addf %483, %234 : vector<16x16xf32>
    %cst_167 = arith.constant dense<0xFF800000> : vector<16xf32>
    %485 = vector.multi_reduction <maximumf>, %484, %cst_167 [1] : vector<16x16xf32> to vector<16xf32>
    %486 = vector.shape_cast %485 : vector<16xf32> to vector<16x1xf32>
    %487 = vector.broadcast %486 : vector<16x1xf32> to vector<16x16xf32>
    %488 = arith.subf %484, %487 : vector<16x16xf32>
    %489 = math.exp %488 : vector<16x16xf32>
    %cst_168 = arith.constant dense<0.000000e+00> : vector<16xf32>
    %490 = vector.multi_reduction <add>, %489, %cst_168 [1] : vector<16x16xf32> to vector<16xf32>
    %491 = vector.shape_cast %490 : vector<16xf32> to vector<16x1xf32>
    %492 = tpu.reciprocal %491 {approx = true} : vector<16x1xf32> -> vector<16x1xf32>
    %493 = vector.broadcast %492 : vector<16x1xf32> to vector<16x16xf32>
    %494 = arith.mulf %489, %493 : vector<16x16xf32>
    %495 = vector.extract_strided_slice %435 {offsets = [0, 16], sizes = [16, 8], strides = [1, 1]} : vector<16x32xf32> to vector<16x8xf32>
    %cst_169 = arith.constant dense<0.000000e+00> : vector<16x8xf32>
    %496 = tpu.matmul %494, %495, %cst_169 {dimension_numbers = #tpu.dot_dimension_numbers<[1], [0], [0], [1], [0, 0, 1, 1], [], []>} : vector<16x16xf32>, vector<16x8xf32>, vector<16x8xf32> -> vector<16x8xf32>
    %497 = vector.extract_strided_slice %436 {offsets = [16, 0], sizes = [8, 32], strides = [1, 1]} : vector<32x32xf32> to vector<8x32xf32>
    %cst_170 = arith.constant dense<0.000000e+00> : vector<16x32xf32>
    %498 = tpu.matmul %496, %497, %cst_170 {dimension_numbers = #tpu.dot_dimension_numbers<[1], [0], [0], [1], [0, 0, 1, 1], [], []>} : vector<16x8xf32>, vector<8x32xf32>, vector<16x32xf32> -> vector<16x32xf32>
    %499 = arith.addf %478, %498 : vector<16x32xf32>
    %500 = vector.extract_strided_slice %433 {offsets = [0, 24], sizes = [16, 8], strides = [1, 1]} : vector<16x32xf32> to vector<16x8xf32>
    %501 = vector.extract_strided_slice %434 {offsets = [0, 24], sizes = [16, 8], strides = [1, 1]} : vector<16x32xf32> to vector<16x8xf32>
    %cst_171 = arith.constant dense<0.000000e+00> : vector<16x16xf32>
    %502 = tpu.matmul %500, %501, %cst_171 {dimension_numbers = #tpu.dot_dimension_numbers<[1], [1], [0], [0], [0, 0, 1, 0], [], []>} : vector<16x8xf32>, vector<16x8xf32>, vector<16x16xf32> -> vector<16x16xf32>
    %cst_172 = arith.constant 0.353553385 : f32
    %503 = vector.broadcast %cst_172 : f32 to vector<16x16xf32>
    %504 = arith.mulf %502, %503 : vector<16x16xf32>
    %505 = arith.addf %504, %234 : vector<16x16xf32>
    %cst_173 = arith.constant dense<0xFF800000> : vector<16xf32>
    %506 = vector.multi_reduction <maximumf>, %505, %cst_173 [1] : vector<16x16xf32> to vector<16xf32>
    %507 = vector.shape_cast %506 : vector<16xf32> to vector<16x1xf32>
    %508 = vector.broadcast %507 : vector<16x1xf32> to vector<16x16xf32>
    %509 = arith.subf %505, %508 : vector<16x16xf32>
    %510 = math.exp %509 : vector<16x16xf32>
    %cst_174 = arith.constant dense<0.000000e+00> : vector<16xf32>
    %511 = vector.multi_reduction <add>, %510, %cst_174 [1] : vector<16x16xf32> to vector<16xf32>
    %512 = vector.shape_cast %511 : vector<16xf32> to vector<16x1xf32>
    %513 = tpu.reciprocal %512 {approx = true} : vector<16x1xf32> -> vector<16x1xf32>
    %514 = vector.broadcast %513 : vector<16x1xf32> to vector<16x16xf32>
    %515 = arith.mulf %510, %514 : vector<16x16xf32>
    %516 = vector.extract_strided_slice %435 {offsets = [0, 24], sizes = [16, 8], strides = [1, 1]} : vector<16x32xf32> to vector<16x8xf32>
    %cst_175 = arith.constant dense<0.000000e+00> : vector<16x8xf32>
    %517 = tpu.matmul %515, %516, %cst_175 {dimension_numbers = #tpu.dot_dimension_numbers<[1], [0], [0], [1], [0, 0, 1, 1], [], []>} : vector<16x16xf32>, vector<16x8xf32>, vector<16x8xf32> -> vector<16x8xf32>
    %518 = vector.extract_strided_slice %436 {offsets = [24, 0], sizes = [8, 32], strides = [1, 1]} : vector<32x32xf32> to vector<8x32xf32>
    %cst_176 = arith.constant dense<0.000000e+00> : vector<16x32xf32>
    %519 = tpu.matmul %517, %518, %cst_176 {dimension_numbers = #tpu.dot_dimension_numbers<[1], [0], [0], [1], [0, 0, 1, 1], [], []>} : vector<16x8xf32>, vector<8x32xf32>, vector<16x32xf32> -> vector<16x32xf32>
    %520 = arith.addf %499, %519 : vector<16x32xf32>
    %521 = vector.broadcast %437 : vector<1x32xf32> to vector<16x32xf32>
    %522 = arith.addf %520, %521 : vector<16x32xf32>
    %523 = arith.addf %427, %522 : vector<16x32xf32>
    %c27 = arith.constant 27 : index
    %c0_177 = arith.constant 0 : index
    %524 = vector.load %arg8[%c27, %c0_177] : memref<40x128xf32, #tpu.memory_space<vmem>>, vector<1x32xf32>
    %c28 = arith.constant 28 : index
    %c0_178 = arith.constant 0 : index
    %525 = vector.load %arg8[%c28, %c0_178] : memref<40x128xf32, #tpu.memory_space<vmem>>, vector<1x32xf32>
    %cst_179 = arith.constant dense<0.000000e+00> : vector<16xf32>
    %526 = vector.multi_reduction <add>, %523, %cst_179 [1] : vector<16x32xf32> to vector<16xf32>
    %527 = vector.shape_cast %526 : vector<16xf32> to vector<16x1xf32>
    %cst_180 = arith.constant 3.200000e+01 : f32
    %528 = vector.broadcast %cst_180 : f32 to vector<16x1xf32>
    %529 = arith.divf %527, %528 : vector<16x1xf32>
    %530 = vector.broadcast %529 : vector<16x1xf32> to vector<16x32xf32>
    %531 = arith.subf %523, %530 : vector<16x32xf32>
    %532 = arith.mulf %531, %531 : vector<16x32xf32>
    %cst_181 = arith.constant dense<0.000000e+00> : vector<16xf32>
    %533 = vector.multi_reduction <add>, %532, %cst_181 [1] : vector<16x32xf32> to vector<16xf32>
    %534 = vector.shape_cast %533 : vector<16xf32> to vector<16x1xf32>
    %cst_182 = arith.constant 3.200000e+01 : f32
    %535 = vector.broadcast %cst_182 : f32 to vector<16x1xf32>
    %536 = arith.divf %534, %535 : vector<16x1xf32>
    %537 = vector.broadcast %529 : vector<16x1xf32> to vector<16x32xf32>
    %538 = arith.subf %523, %537 : vector<16x32xf32>
    %cst_183 = arith.constant 9.99999996E-13 : f32
    %539 = vector.broadcast %cst_183 : f32 to vector<16x1xf32>
    %540 = arith.addf %536, %539 : vector<16x1xf32>
    %541 = math.rsqrt %540 : vector<16x1xf32>
    %542 = vector.broadcast %541 : vector<16x1xf32> to vector<16x32xf32>
    %543 = arith.mulf %538, %542 : vector<16x32xf32>
    %544 = vector.broadcast %524 : vector<1x32xf32> to vector<16x32xf32>
    %545 = arith.mulf %543, %544 : vector<16x32xf32>
    %546 = vector.broadcast %525 : vector<1x32xf32> to vector<16x32xf32>
    %547 = arith.addf %545, %546 : vector<16x32xf32>
    %c800 = arith.constant 800 : index
    %c0_184 = arith.constant 0 : index
    %548 = vector.load %arg7[%c800, %c0_184] : memref<1056x128xf32, #tpu.memory_space<vmem>>, vector<32x32xf32>
    %cst_185 = arith.constant dense<0.000000e+00> : vector<16x32xf32>
    %549 = tpu.matmul %547, %548, %cst_185 {dimension_numbers = #tpu.dot_dimension_numbers<[1], [0], [0], [1], [0, 0, 1, 1], [], []>} : vector<16x32xf32>, vector<32x32xf32>, vector<16x32xf32> -> vector<16x32xf32>
    %c29 = arith.constant 29 : index
    %c0_186 = arith.constant 0 : index
    %550 = vector.load %arg8[%c29, %c0_186] : memref<40x128xf32, #tpu.memory_space<vmem>>, vector<1x32xf32>
    %551 = vector.broadcast %550 : vector<1x32xf32> to vector<16x32xf32>
    %552 = arith.addf %549, %551 : vector<16x32xf32>
    %c832 = arith.constant 832 : index
    %c0_187 = arith.constant 0 : index
    %553 = vector.load %arg7[%c832, %c0_187] : memref<1056x128xf32, #tpu.memory_space<vmem>>, vector<32x64xf32>
    %cst_188 = arith.constant dense<0.000000e+00> : vector<20x64xf32>
    %554 = tpu.matmul %233, %553, %cst_188 {dimension_numbers = #tpu.dot_dimension_numbers<[1], [0], [0], [1], [0, 0, 1, 1], [], []>} : vector<20x32xf32>, vector<32x64xf32>, vector<20x64xf32> -> vector<20x64xf32>
    %c30 = arith.constant 30 : index
    %c0_189 = arith.constant 0 : index
    %555 = vector.load %arg8[%c30, %c0_189] : memref<40x128xf32, #tpu.memory_space<vmem>>, vector<1x64xf32>
    %556 = vector.broadcast %555 : vector<1x64xf32> to vector<20x64xf32>
    %557 = arith.addf %554, %556 : vector<20x64xf32>
    %558 = vector.extract_strided_slice %557 {offsets = [0, 0], sizes = [20, 32], strides = [1, 1]} : vector<20x64xf32> to vector<20x32xf32>
    %559 = vector.extract_strided_slice %557 {offsets = [0, 32], sizes = [20, 32], strides = [1, 1]} : vector<20x64xf32> to vector<20x32xf32>
    %c864 = arith.constant 864 : index
    %c0_190 = arith.constant 0 : index
    %560 = vector.load %arg7[%c864, %c0_190] : memref<1056x128xf32, #tpu.memory_space<vmem>>, vector<32x32xf32>
    %c31 = arith.constant 31 : index
    %c0_191 = arith.constant 0 : index
    %561 = vector.load %arg8[%c31, %c0_191] : memref<40x128xf32, #tpu.memory_space<vmem>>, vector<1x32xf32>
    %c0_192 = arith.constant 0 : index
    %c0_193 = arith.constant 0 : index
    %562 = vector.load %arg6[%c0_192, %c0_193] : memref<16x20xf32, #tpu.memory_space<vmem>>, vector<16x20xf32>
    %563 = vector.extract_strided_slice %552 {offsets = [0, 0], sizes = [16, 8], strides = [1, 1]} : vector<16x32xf32> to vector<16x8xf32>
    %564 = vector.extract_strided_slice %558 {offsets = [0, 0], sizes = [20, 8], strides = [1, 1]} : vector<20x32xf32> to vector<20x8xf32>
    %cst_194 = arith.constant dense<0.000000e+00> : vector<16x20xf32>
    %565 = tpu.matmul %563, %564, %cst_194 {dimension_numbers = #tpu.dot_dimension_numbers<[1], [1], [0], [0], [0, 0, 1, 0], [], []>} : vector<16x8xf32>, vector<20x8xf32>, vector<16x20xf32> -> vector<16x20xf32>
    %cst_195 = arith.constant 0.353553385 : f32
    %566 = vector.broadcast %cst_195 : f32 to vector<16x20xf32>
    %567 = arith.mulf %565, %566 : vector<16x20xf32>
    %568 = arith.addf %567, %562 : vector<16x20xf32>
    %cst_196 = arith.constant dense<0xFF800000> : vector<16xf32>
    %569 = vector.multi_reduction <maximumf>, %568, %cst_196 [1] : vector<16x20xf32> to vector<16xf32>
    %570 = vector.shape_cast %569 : vector<16xf32> to vector<16x1xf32>
    %571 = vector.broadcast %570 : vector<16x1xf32> to vector<16x20xf32>
    %572 = arith.subf %568, %571 : vector<16x20xf32>
    %573 = math.exp %572 : vector<16x20xf32>
    %cst_197 = arith.constant dense<0.000000e+00> : vector<16xf32>
    %574 = vector.multi_reduction <add>, %573, %cst_197 [1] : vector<16x20xf32> to vector<16xf32>
    %575 = vector.shape_cast %574 : vector<16xf32> to vector<16x1xf32>
    %576 = tpu.reciprocal %575 {approx = true} : vector<16x1xf32> -> vector<16x1xf32>
    %577 = vector.broadcast %576 : vector<16x1xf32> to vector<16x20xf32>
    %578 = arith.mulf %573, %577 : vector<16x20xf32>
    %579 = vector.extract_strided_slice %559 {offsets = [0, 0], sizes = [20, 8], strides = [1, 1]} : vector<20x32xf32> to vector<20x8xf32>
    %cst_198 = arith.constant dense<0.000000e+00> : vector<16x8xf32>
    %580 = tpu.matmul %578, %579, %cst_198 {dimension_numbers = #tpu.dot_dimension_numbers<[1], [0], [0], [1], [0, 0, 1, 1], [], []>} : vector<16x20xf32>, vector<20x8xf32>, vector<16x8xf32> -> vector<16x8xf32>
    %581 = vector.extract_strided_slice %560 {offsets = [0, 0], sizes = [8, 32], strides = [1, 1]} : vector<32x32xf32> to vector<8x32xf32>
    %cst_199 = arith.constant dense<0.000000e+00> : vector<16x32xf32>
    %582 = tpu.matmul %580, %581, %cst_199 {dimension_numbers = #tpu.dot_dimension_numbers<[1], [0], [0], [1], [0, 0, 1, 1], [], []>} : vector<16x8xf32>, vector<8x32xf32>, vector<16x32xf32> -> vector<16x32xf32>
    %583 = vector.extract_strided_slice %552 {offsets = [0, 8], sizes = [16, 8], strides = [1, 1]} : vector<16x32xf32> to vector<16x8xf32>
    %584 = vector.extract_strided_slice %558 {offsets = [0, 8], sizes = [20, 8], strides = [1, 1]} : vector<20x32xf32> to vector<20x8xf32>
    %cst_200 = arith.constant dense<0.000000e+00> : vector<16x20xf32>
    %585 = tpu.matmul %583, %584, %cst_200 {dimension_numbers = #tpu.dot_dimension_numbers<[1], [1], [0], [0], [0, 0, 1, 0], [], []>} : vector<16x8xf32>, vector<20x8xf32>, vector<16x20xf32> -> vector<16x20xf32>
    %cst_201 = arith.constant 0.353553385 : f32
    %586 = vector.broadcast %cst_201 : f32 to vector<16x20xf32>
    %587 = arith.mulf %585, %586 : vector<16x20xf32>
    %588 = arith.addf %587, %562 : vector<16x20xf32>
    %cst_202 = arith.constant dense<0xFF800000> : vector<16xf32>
    %589 = vector.multi_reduction <maximumf>, %588, %cst_202 [1] : vector<16x20xf32> to vector<16xf32>
    %590 = vector.shape_cast %589 : vector<16xf32> to vector<16x1xf32>
    %591 = vector.broadcast %590 : vector<16x1xf32> to vector<16x20xf32>
    %592 = arith.subf %588, %591 : vector<16x20xf32>
    %593 = math.exp %592 : vector<16x20xf32>
    %cst_203 = arith.constant dense<0.000000e+00> : vector<16xf32>
    %594 = vector.multi_reduction <add>, %593, %cst_203 [1] : vector<16x20xf32> to vector<16xf32>
    %595 = vector.shape_cast %594 : vector<16xf32> to vector<16x1xf32>
    %596 = tpu.reciprocal %595 {approx = true} : vector<16x1xf32> -> vector<16x1xf32>
    %597 = vector.broadcast %596 : vector<16x1xf32> to vector<16x20xf32>
    %598 = arith.mulf %593, %597 : vector<16x20xf32>
    %599 = vector.extract_strided_slice %559 {offsets = [0, 8], sizes = [20, 8], strides = [1, 1]} : vector<20x32xf32> to vector<20x8xf32>
    %cst_204 = arith.constant dense<0.000000e+00> : vector<16x8xf32>
    %600 = tpu.matmul %598, %599, %cst_204 {dimension_numbers = #tpu.dot_dimension_numbers<[1], [0], [0], [1], [0, 0, 1, 1], [], []>} : vector<16x20xf32>, vector<20x8xf32>, vector<16x8xf32> -> vector<16x8xf32>
    %601 = vector.extract_strided_slice %560 {offsets = [8, 0], sizes = [8, 32], strides = [1, 1]} : vector<32x32xf32> to vector<8x32xf32>
    %cst_205 = arith.constant dense<0.000000e+00> : vector<16x32xf32>
    %602 = tpu.matmul %600, %601, %cst_205 {dimension_numbers = #tpu.dot_dimension_numbers<[1], [0], [0], [1], [0, 0, 1, 1], [], []>} : vector<16x8xf32>, vector<8x32xf32>, vector<16x32xf32> -> vector<16x32xf32>
    %603 = arith.addf %582, %602 : vector<16x32xf32>
    %604 = vector.extract_strided_slice %552 {offsets = [0, 16], sizes = [16, 8], strides = [1, 1]} : vector<16x32xf32> to vector<16x8xf32>
    %605 = vector.extract_strided_slice %558 {offsets = [0, 16], sizes = [20, 8], strides = [1, 1]} : vector<20x32xf32> to vector<20x8xf32>
    %cst_206 = arith.constant dense<0.000000e+00> : vector<16x20xf32>
    %606 = tpu.matmul %604, %605, %cst_206 {dimension_numbers = #tpu.dot_dimension_numbers<[1], [1], [0], [0], [0, 0, 1, 0], [], []>} : vector<16x8xf32>, vector<20x8xf32>, vector<16x20xf32> -> vector<16x20xf32>
    %cst_207 = arith.constant 0.353553385 : f32
    %607 = vector.broadcast %cst_207 : f32 to vector<16x20xf32>
    %608 = arith.mulf %606, %607 : vector<16x20xf32>
    %609 = arith.addf %608, %562 : vector<16x20xf32>
    %cst_208 = arith.constant dense<0xFF800000> : vector<16xf32>
    %610 = vector.multi_reduction <maximumf>, %609, %cst_208 [1] : vector<16x20xf32> to vector<16xf32>
    %611 = vector.shape_cast %610 : vector<16xf32> to vector<16x1xf32>
    %612 = vector.broadcast %611 : vector<16x1xf32> to vector<16x20xf32>
    %613 = arith.subf %609, %612 : vector<16x20xf32>
    %614 = math.exp %613 : vector<16x20xf32>
    %cst_209 = arith.constant dense<0.000000e+00> : vector<16xf32>
    %615 = vector.multi_reduction <add>, %614, %cst_209 [1] : vector<16x20xf32> to vector<16xf32>
    %616 = vector.shape_cast %615 : vector<16xf32> to vector<16x1xf32>
    %617 = tpu.reciprocal %616 {approx = true} : vector<16x1xf32> -> vector<16x1xf32>
    %618 = vector.broadcast %617 : vector<16x1xf32> to vector<16x20xf32>
    %619 = arith.mulf %614, %618 : vector<16x20xf32>
    %620 = vector.extract_strided_slice %559 {offsets = [0, 16], sizes = [20, 8], strides = [1, 1]} : vector<20x32xf32> to vector<20x8xf32>
    %cst_210 = arith.constant dense<0.000000e+00> : vector<16x8xf32>
    %621 = tpu.matmul %619, %620, %cst_210 {dimension_numbers = #tpu.dot_dimension_numbers<[1], [0], [0], [1], [0, 0, 1, 1], [], []>} : vector<16x20xf32>, vector<20x8xf32>, vector<16x8xf32> -> vector<16x8xf32>
    %622 = vector.extract_strided_slice %560 {offsets = [16, 0], sizes = [8, 32], strides = [1, 1]} : vector<32x32xf32> to vector<8x32xf32>
    %cst_211 = arith.constant dense<0.000000e+00> : vector<16x32xf32>
    %623 = tpu.matmul %621, %622, %cst_211 {dimension_numbers = #tpu.dot_dimension_numbers<[1], [0], [0], [1], [0, 0, 1, 1], [], []>} : vector<16x8xf32>, vector<8x32xf32>, vector<16x32xf32> -> vector<16x32xf32>
    %624 = arith.addf %603, %623 : vector<16x32xf32>
    %625 = vector.extract_strided_slice %552 {offsets = [0, 24], sizes = [16, 8], strides = [1, 1]} : vector<16x32xf32> to vector<16x8xf32>
    %626 = vector.extract_strided_slice %558 {offsets = [0, 24], sizes = [20, 8], strides = [1, 1]} : vector<20x32xf32> to vector<20x8xf32>
    %cst_212 = arith.constant dense<0.000000e+00> : vector<16x20xf32>
    %627 = tpu.matmul %625, %626, %cst_212 {dimension_numbers = #tpu.dot_dimension_numbers<[1], [1], [0], [0], [0, 0, 1, 0], [], []>} : vector<16x8xf32>, vector<20x8xf32>, vector<16x20xf32> -> vector<16x20xf32>
    %cst_213 = arith.constant 0.353553385 : f32
    %628 = vector.broadcast %cst_213 : f32 to vector<16x20xf32>
    %629 = arith.mulf %627, %628 : vector<16x20xf32>
    %630 = arith.addf %629, %562 : vector<16x20xf32>
    %cst_214 = arith.constant dense<0xFF800000> : vector<16xf32>
    %631 = vector.multi_reduction <maximumf>, %630, %cst_214 [1] : vector<16x20xf32> to vector<16xf32>
    %632 = vector.shape_cast %631 : vector<16xf32> to vector<16x1xf32>
    %633 = vector.broadcast %632 : vector<16x1xf32> to vector<16x20xf32>
    %634 = arith.subf %630, %633 : vector<16x20xf32>
    %635 = math.exp %634 : vector<16x20xf32>
    %cst_215 = arith.constant dense<0.000000e+00> : vector<16xf32>
    %636 = vector.multi_reduction <add>, %635, %cst_215 [1] : vector<16x20xf32> to vector<16xf32>
    %637 = vector.shape_cast %636 : vector<16xf32> to vector<16x1xf32>
    %638 = tpu.reciprocal %637 {approx = true} : vector<16x1xf32> -> vector<16x1xf32>
    %639 = vector.broadcast %638 : vector<16x1xf32> to vector<16x20xf32>
    %640 = arith.mulf %635, %639 : vector<16x20xf32>
    %641 = vector.extract_strided_slice %559 {offsets = [0, 24], sizes = [20, 8], strides = [1, 1]} : vector<20x32xf32> to vector<20x8xf32>
    %cst_216 = arith.constant dense<0.000000e+00> : vector<16x8xf32>
    %642 = tpu.matmul %640, %641, %cst_216 {dimension_numbers = #tpu.dot_dimension_numbers<[1], [0], [0], [1], [0, 0, 1, 1], [], []>} : vector<16x20xf32>, vector<20x8xf32>, vector<16x8xf32> -> vector<16x8xf32>
    %643 = vector.extract_strided_slice %560 {offsets = [24, 0], sizes = [8, 32], strides = [1, 1]} : vector<32x32xf32> to vector<8x32xf32>
    %cst_217 = arith.constant dense<0.000000e+00> : vector<16x32xf32>
    %644 = tpu.matmul %642, %643, %cst_217 {dimension_numbers = #tpu.dot_dimension_numbers<[1], [0], [0], [1], [0, 0, 1, 1], [], []>} : vector<16x8xf32>, vector<8x32xf32>, vector<16x32xf32> -> vector<16x32xf32>
    %645 = arith.addf %624, %644 : vector<16x32xf32>
    %646 = vector.broadcast %561 : vector<1x32xf32> to vector<16x32xf32>
    %647 = arith.addf %645, %646 : vector<16x32xf32>
    %648 = arith.addf %547, %647 : vector<16x32xf32>
    %c32 = arith.constant 32 : index
    %c0_218 = arith.constant 0 : index
    %649 = vector.load %arg8[%c32, %c0_218] : memref<40x128xf32, #tpu.memory_space<vmem>>, vector<1x32xf32>
    %c33 = arith.constant 33 : index
    %c0_219 = arith.constant 0 : index
    %650 = vector.load %arg8[%c33, %c0_219] : memref<40x128xf32, #tpu.memory_space<vmem>>, vector<1x32xf32>
    %cst_220 = arith.constant dense<0.000000e+00> : vector<16xf32>
    %651 = vector.multi_reduction <add>, %648, %cst_220 [1] : vector<16x32xf32> to vector<16xf32>
    %652 = vector.shape_cast %651 : vector<16xf32> to vector<16x1xf32>
    %cst_221 = arith.constant 3.200000e+01 : f32
    %653 = vector.broadcast %cst_221 : f32 to vector<16x1xf32>
    %654 = arith.divf %652, %653 : vector<16x1xf32>
    %655 = vector.broadcast %654 : vector<16x1xf32> to vector<16x32xf32>
    %656 = arith.subf %648, %655 : vector<16x32xf32>
    %657 = arith.mulf %656, %656 : vector<16x32xf32>
    %cst_222 = arith.constant dense<0.000000e+00> : vector<16xf32>
    %658 = vector.multi_reduction <add>, %657, %cst_222 [1] : vector<16x32xf32> to vector<16xf32>
    %659 = vector.shape_cast %658 : vector<16xf32> to vector<16x1xf32>
    %cst_223 = arith.constant 3.200000e+01 : f32
    %660 = vector.broadcast %cst_223 : f32 to vector<16x1xf32>
    %661 = arith.divf %659, %660 : vector<16x1xf32>
    %662 = vector.broadcast %654 : vector<16x1xf32> to vector<16x32xf32>
    %663 = arith.subf %648, %662 : vector<16x32xf32>
    %cst_224 = arith.constant 9.99999996E-13 : f32
    %664 = vector.broadcast %cst_224 : f32 to vector<16x1xf32>
    %665 = arith.addf %661, %664 : vector<16x1xf32>
    %666 = math.rsqrt %665 : vector<16x1xf32>
    %667 = vector.broadcast %666 : vector<16x1xf32> to vector<16x32xf32>
    %668 = arith.mulf %663, %667 : vector<16x32xf32>
    %669 = vector.broadcast %649 : vector<1x32xf32> to vector<16x32xf32>
    %670 = arith.mulf %668, %669 : vector<16x32xf32>
    %671 = vector.broadcast %650 : vector<1x32xf32> to vector<16x32xf32>
    %672 = arith.addf %670, %671 : vector<16x32xf32>
    %c896 = arith.constant 896 : index
    %c0_225 = arith.constant 0 : index
    %673 = vector.load %arg7[%c896, %c0_225] : memref<1056x128xf32, #tpu.memory_space<vmem>>, vector<32x64xf32>
    %c34 = arith.constant 34 : index
    %c0_226 = arith.constant 0 : index
    %674 = vector.load %arg8[%c34, %c0_226] : memref<40x128xf32, #tpu.memory_space<vmem>>, vector<1x64xf32>
    %c928 = arith.constant 928 : index
    %c0_227 = arith.constant 0 : index
    %675 = vector.load %arg7[%c928, %c0_227] : memref<1056x128xf32, #tpu.memory_space<vmem>>, vector<64x32xf32>
    %c35 = arith.constant 35 : index
    %c0_228 = arith.constant 0 : index
    %676 = vector.load %arg8[%c35, %c0_228] : memref<40x128xf32, #tpu.memory_space<vmem>>, vector<1x32xf32>
    %cst_229 = arith.constant dense<0.000000e+00> : vector<16x64xf32>
    %677 = tpu.matmul %672, %673, %cst_229 {dimension_numbers = #tpu.dot_dimension_numbers<[1], [0], [0], [1], [0, 0, 1, 1], [], []>} : vector<16x32xf32>, vector<32x64xf32>, vector<16x64xf32> -> vector<16x64xf32>
    %678 = vector.broadcast %674 : vector<1x64xf32> to vector<16x64xf32>
    %679 = arith.addf %677, %678 : vector<16x64xf32>
    %680 = arith.mulf %679, %679 : vector<16x64xf32>
    %681 = arith.mulf %679, %680 : vector<16x64xf32>
    %cst_230 = arith.constant 4.471500e-02 : f32
    %682 = vector.broadcast %cst_230 : f32 to vector<16x64xf32>
    %683 = arith.mulf %682, %681 : vector<16x64xf32>
    %684 = arith.addf %679, %683 : vector<16x64xf32>
    %cst_231 = arith.constant 0.797884583 : f32
    %685 = vector.broadcast %cst_231 : f32 to vector<16x64xf32>
    %686 = arith.mulf %685, %684 : vector<16x64xf32>
    %687 = math.tanh %686 : vector<16x64xf32>
    %cst_232 = arith.constant 1.000000e+00 : f32
    %688 = vector.broadcast %cst_232 : f32 to vector<16x64xf32>
    %689 = arith.addf %688, %687 : vector<16x64xf32>
    %cst_233 = arith.constant 5.000000e-01 : f32
    %690 = vector.broadcast %cst_233 : f32 to vector<16x64xf32>
    %691 = arith.mulf %690, %689 : vector<16x64xf32>
    %692 = arith.mulf %679, %691 : vector<16x64xf32>
    %cst_234 = arith.constant dense<0.000000e+00> : vector<16x32xf32>
    %693 = tpu.matmul %692, %675, %cst_234 {dimension_numbers = #tpu.dot_dimension_numbers<[1], [0], [0], [1], [0, 0, 1, 1], [], []>} : vector<16x64xf32>, vector<64x32xf32>, vector<16x32xf32> -> vector<16x32xf32>
    %694 = vector.broadcast %676 : vector<1x32xf32> to vector<16x32xf32>
    %695 = arith.addf %693, %694 : vector<16x32xf32>
    %696 = arith.addf %672, %695 : vector<16x32xf32>
    %c36 = arith.constant 36 : index
    %c0_235 = arith.constant 0 : index
    %697 = vector.load %arg8[%c36, %c0_235] : memref<40x128xf32, #tpu.memory_space<vmem>>, vector<1x32xf32>
    %c37 = arith.constant 37 : index
    %c0_236 = arith.constant 0 : index
    %698 = vector.load %arg8[%c37, %c0_236] : memref<40x128xf32, #tpu.memory_space<vmem>>, vector<1x32xf32>
    %cst_237 = arith.constant dense<0.000000e+00> : vector<16xf32>
    %699 = vector.multi_reduction <add>, %696, %cst_237 [1] : vector<16x32xf32> to vector<16xf32>
    %700 = vector.shape_cast %699 : vector<16xf32> to vector<16x1xf32>
    %cst_238 = arith.constant 3.200000e+01 : f32
    %701 = vector.broadcast %cst_238 : f32 to vector<16x1xf32>
    %702 = arith.divf %700, %701 : vector<16x1xf32>
    %703 = vector.broadcast %702 : vector<16x1xf32> to vector<16x32xf32>
    %704 = arith.subf %696, %703 : vector<16x32xf32>
    %705 = arith.mulf %704, %704 : vector<16x32xf32>
    %cst_239 = arith.constant dense<0.000000e+00> : vector<16xf32>
    %706 = vector.multi_reduction <add>, %705, %cst_239 [1] : vector<16x32xf32> to vector<16xf32>
    %707 = vector.shape_cast %706 : vector<16xf32> to vector<16x1xf32>
    %cst_240 = arith.constant 3.200000e+01 : f32
    %708 = vector.broadcast %cst_240 : f32 to vector<16x1xf32>
    %709 = arith.divf %707, %708 : vector<16x1xf32>
    %710 = vector.broadcast %702 : vector<16x1xf32> to vector<16x32xf32>
    %711 = arith.subf %696, %710 : vector<16x32xf32>
    %cst_241 = arith.constant 9.99999996E-13 : f32
    %712 = vector.broadcast %cst_241 : f32 to vector<16x1xf32>
    %713 = arith.addf %709, %712 : vector<16x1xf32>
    %714 = math.rsqrt %713 : vector<16x1xf32>
    %715 = vector.broadcast %714 : vector<16x1xf32> to vector<16x32xf32>
    %716 = arith.mulf %711, %715 : vector<16x32xf32>
    %717 = vector.broadcast %697 : vector<1x32xf32> to vector<16x32xf32>
    %718 = arith.mulf %716, %717 : vector<16x32xf32>
    %719 = vector.broadcast %698 : vector<1x32xf32> to vector<16x32xf32>
    %720 = arith.addf %718, %719 : vector<16x32xf32>
    %c992 = arith.constant 992 : index
    %c0_242 = arith.constant 0 : index
    %721 = vector.load %arg7[%c992, %c0_242] : memref<1056x128xf32, #tpu.memory_space<vmem>>, vector<32x32xf32>
    %cst_243 = arith.constant dense<0.000000e+00> : vector<16x32xf32>
    %722 = tpu.matmul %720, %721, %cst_243 {dimension_numbers = #tpu.dot_dimension_numbers<[1], [0], [0], [1], [0, 0, 1, 1], [], []>} : vector<16x32xf32>, vector<32x32xf32>, vector<16x32xf32> -> vector<16x32xf32>
    %c38 = arith.constant 38 : index
    %c0_244 = arith.constant 0 : index
    %723 = vector.load %arg8[%c38, %c0_244] : memref<40x128xf32, #tpu.memory_space<vmem>>, vector<1x32xf32>
    %724 = vector.broadcast %723 : vector<1x32xf32> to vector<16x32xf32>
    %725 = arith.addf %722, %724 : vector<16x32xf32>
    %cst_245 = arith.constant 0.000000e+00 : f32
    %726 = vector.broadcast %cst_245 : f32 to vector<16x32xf32>
    %727 = arith.maximumf %725, %726 : vector<16x32xf32>
    %c1024 = arith.constant 1024 : index
    %c0_246 = arith.constant 0 : index
    %728 = vector.load %arg7[%c1024, %c0_246] : memref<1056x128xf32, #tpu.memory_space<vmem>>, vector<32x128xf32>
    %cst_247 = arith.constant dense<0.000000e+00> : vector<16x128xf32>
    %729 = tpu.matmul %727, %728, %cst_247 {dimension_numbers = #tpu.dot_dimension_numbers<[1], [0], [0], [1], [0, 0, 1, 1], [], []>} : vector<16x32xf32>, vector<32x128xf32>, vector<16x128xf32> -> vector<16x128xf32>
    %c39 = arith.constant 39 : index
    %c0_248 = arith.constant 0 : index
    %730 = vector.load %arg8[%c39, %c0_248] : memref<40x128xf32, #tpu.memory_space<vmem>>, vector<1x128xf32>
    %731 = vector.broadcast %730 : vector<1x128xf32> to vector<16x128xf32>
    %732 = arith.addf %729, %731 : vector<16x128xf32>
    %733 = vector.extract_strided_slice %732 {offsets = [0, 0], sizes = [16, 2], strides = [1, 1]} : vector<16x128xf32> to vector<16x2xf32>
    %cst_249 = arith.constant dense<0xFF800000> : vector<16xf32>
    %734 = vector.multi_reduction <maximumf>, %733, %cst_249 [1] : vector<16x2xf32> to vector<16xf32>
    %735 = vector.shape_cast %734 : vector<16xf32> to vector<16x1xf32>
    %736 = vector.broadcast %735 : vector<16x1xf32> to vector<16x2xf32>
    %737 = arith.subf %733, %736 : vector<16x2xf32>
    %738 = math.exp %737 : vector<16x2xf32>
    %cst_250 = arith.constant dense<0.000000e+00> : vector<16xf32>
    %739 = vector.multi_reduction <add>, %738, %cst_250 [1] : vector<16x2xf32> to vector<16xf32>
    %740 = vector.shape_cast %739 : vector<16xf32> to vector<16x1xf32>
    %741 = math.log %740 : vector<16x1xf32>
    %742 = arith.addf %741, %735 : vector<16x1xf32>
    %c0_251 = arith.constant 0 : index
    %c0_252 = arith.constant 0 : index
    %743 = vector.load %arg3[%c0_251, %c0_252] : memref<16x128xf32, #tpu.memory_space<vmem>>, vector<16x128xf32>
    %cst_253 = arith.constant dense<0.000000e+00> : vector<16xf32>
    %744 = vector.multi_reduction <add>, %743, %cst_253 [1] : vector<16x128xf32> to vector<16xf32>
    %745 = vector.shape_cast %744 : vector<16xf32> to vector<16x1xf32>
    %746 = arith.mulf %745, %742 : vector<16x1xf32>
    %747 = arith.mulf %743, %732 : vector<16x128xf32>
    %cst_254 = arith.constant dense<0.000000e+00> : vector<16xf32>
    %748 = vector.multi_reduction <add>, %747, %cst_254 [1] : vector<16x128xf32> to vector<16xf32>
    %749 = vector.shape_cast %748 : vector<16xf32> to vector<16x1xf32>
    %750 = arith.subf %746, %749 : vector<16x1xf32>
    %cst_255 = arith.constant dense<0.000000e+00> : vector<1xf32>
    %751 = vector.multi_reduction <add>, %750, %cst_255 [0] : vector<16x1xf32> to vector<1xf32>
    %752 = vector.shape_cast %751 : vector<1xf32> to vector<1x1xf32>
    %cst_256 = arith.constant 5.000000e-01 : f32
    %753 = vector.broadcast %cst_256 : f32 to vector<1x1xf32>
    %754 = arith.mulf %752, %753 : vector<1x1xf32>
    %755 = tpu.iota {dimensions = array<i32: 0>} : vector<16x128xi32>
    %756 = tpu.iota {dimensions = array<i32: 1>} : vector<16x128xi32>
    %c0_i32 = arith.constant 0 : i32
    %757 = vector.broadcast %c0_i32 : i32 to vector<16x128xi32>
    %758 = arith.cmpi eq, %755, %757 : vector<16x128xi32>
    %c2_i32 = arith.constant 2 : i32
    %759 = vector.broadcast %c2_i32 : i32 to vector<16x128xi32>
    %760 = arith.cmpi eq, %756, %759 : vector<16x128xi32>
    %761 = arith.andi %758, %760 : vector<16x128xi1>
    %762 = arith.extui %761 : vector<16x128xi1> to vector<16x128xi32>
    %763 = arith.sitofp %762 : vector<16x128xi32> to vector<16x128xf32>
    %764 = vector.broadcast %754 : vector<1x1xf32> to vector<16x128xf32>
    %765 = arith.mulf %764, %763 : vector<16x128xf32>
    %766 = arith.addf %732, %765 : vector<16x128xf32>
    %c0_257 = arith.constant 0 : index
    %c0_258 = arith.constant 0 : index
    %767 = vector.load %arg9[%c0_257, %c0_258] : memref<16x128xf32, #tpu.memory_space<vmem>>, vector<16x128xf32>
    tpu.vector_store %arg9[%c0_257, %c0_258], %766 {strides = array<i32>} : memref<16x128xf32, #tpu.memory_space<vmem>>, vector<16x128xf32>,
    return
  }
}

</mosaic_0001>

<llo_original>
// kernel: albef_forward.1
$region0: #{albef_forward.1}
  #allocation0 [shape = 'u32[]', space=smem, size = 0x4, offset = 0x4, fixed_abs, tag = 'smem constant byte address 0x4 - core index']
  #allocation1 [shape = 'u32[144,128]{1,0:T(1,128)}', space=vmem, size = 0x12000, scoped, tag = 'internal scratch']
  %s0 = inlined_call_operand.vmem [shape: f32[20,192], index: 0, kind: input, shape index: {}]
  %s1 = inlined_call_operand.vmem [shape: f32[20,48], index: 1, kind: input, shape index: {}]
  %s2 = inlined_call_operand.vmem [shape: f32[16,32], index: 2, kind: input, shape index: {}]
  %s3 = inlined_call_operand.vmem [shape: f32[16,128], index: 3, kind: input, shape index: {}]
  %s4 = inlined_call_operand.vmem [shape: f32[20,20], index: 4, kind: input, shape index: {}]
  %s5 = inlined_call_operand.vmem [shape: f32[16,16], index: 5, kind: input, shape index: {}]
  %s6 = inlined_call_operand.vmem [shape: f32[16,20], index: 6, kind: input, shape index: {}]
  %s7 = inlined_call_operand.vmem [shape: f32[1056,128], index: 7, kind: input, shape index: {}]
  %s8 = inlined_call_operand.vmem [shape: f32[40,128], index: 8, kind: input, shape index: {}]
  %s9 = inlined_call_operand.vmem [shape: f32[16,128], index: 9, kind: output, shape index: {}]
  %s10 = sld [smem:[#allocation0]]
  $region46: #{albef_forward.1} parent=0
    _
  %s12 = ssub.s32 1, %s10
  %s13 = scalar_select 0, %s12, %s10
  // Predicated region
  $region2: #{albef_forward.1} parent=0 // pred_check
    _
  $region3: #{albef_forward.1} parent=0 // pred_check_branch
    %15 = sbr.rel (0) target = $region5
  $region4: #{albef_forward.1} parent=0 // pred_region
    _
  $region5: #{albef_forward.1} parent=0 // pred_fallthru
    _
  // Predicated region
  $region6: #{albef_forward.1} parent=0 // pred_check
    _
  $region7: #{albef_forward.1} parent=0 // pred_check_branch
    %17 = sbr.rel (0) target = $region9
  $region8: #{albef_forward.1} parent=0 // pred_region
    _
  $region9: #{albef_forward.1} parent=0 // pred_fallthru
    _
  // Predicated region
  $region10: #{albef_forward.1} parent=0 // pred_check
    _
  $region11: #{albef_forward.1} parent=0 // pred_check_branch
    %19 = sbr.rel (0) target = $region13
  $region12: #{albef_forward.1} parent=0 // pred_region
    _
  $region13: #{albef_forward.1} parent=0 // pred_fallthru
    _
  // Predicated region
  $region14: #{albef_forward.1} parent=0 // pred_check
    _
  $region15: #{albef_forward.1} parent=0 // pred_check_branch
    %21 = sbr.rel (0) target = $region17
  $region16: #{albef_forward.1} parent=0 // pred_region
    _
  $region17: #{albef_forward.1} parent=0 // pred_fallthru
    _
  // Predicated region
  $region18: #{albef_forward.1} parent=0 // pred_check
    _
  $region19: #{albef_forward.1} parent=0 // pred_check_branch
    %23 = sbr.rel (0) target = $region21
  $region20: #{albef_forward.1} parent=0 // pred_region
    _
  $region21: #{albef_forward.1} parent=0 // pred_fallthru
    _
  // Predicated region
  $region22: #{albef_forward.1} parent=0 // pred_check
    _
  $region23: #{albef_forward.1} parent=0 // pred_check_branch
    %25 = sbr.rel (0) target = $region25
  $region24: #{albef_forward.1} parent=0 // pred_region
    _
  $region25: #{albef_forward.1} parent=0 // pred_fallthru
    _
  // Predicated region
  $region26: #{albef_forward.1} parent=0 // pred_check
    _
  $region27: #{albef_forward.1} parent=0 // pred_check_branch
    %27 = sbr.rel (0) target = $region29
  $region28: #{albef_forward.1} parent=0 // pred_region
    _
  $region29: #{albef_forward.1} parent=0 // pred_fallthru
    _
  // Predicated region
  $region30: #{albef_forward.1} parent=0 // pred_check
    _
  $region31: #{albef_forward.1} parent=0 // pred_check_branch
    %29 = sbr.rel (0) target = $region33
  $region32: #{albef_forward.1} parent=0 // pred_region
    _
  $region33: #{albef_forward.1} parent=0 // pred_fallthru
    _
  // Predicated region
  $region34: #{albef_forward.1} parent=0 // pred_check
    _
  $region35: #{albef_forward.1} parent=0 // pred_check_branch
    %31 = sbr.rel (0) target = $region37
  $region36: #{albef_forward.1} parent=0 // pred_region
    _
  $region37: #{albef_forward.1} parent=0 // pred_fallthru
    _
  %v32 = vld [vmem:[%s0] sm:$0xff]
  %v33 = vld [vmem:[%s0 + $0x8] sm:$0xff]
  %v34 = vld [vmem:[%s0 + $0x10] sm:$0xff]
  %v35 = vld [vmem:[%s0 + $0x18] sm:$0xff]
  %v36 = vld [vmem:[%s0 + $0x20] sm:$0xf]
  %v37 = vld [vmem:[%s0 + $0x28] sm:$0xf]
  %v38 = vld [vmem:[%s7] sm:$0xff]
  %v39 = vld [vmem:[%s7 + $0x8] sm:$0xff]
  %v40 = vld [vmem:[%s7 + $0x10] sm:$0xff]
  %v41 = vld [vmem:[%s7 + $0x18] sm:$0xff]
  %v42 = vld [vmem:[%s7 + $0x20] sm:$0xff]
  %v43 = vld [vmem:[%s7 + $0x28] sm:$0xff]
  %v44 = vld [vmem:[%s7 + $0x30] sm:$0xff]
  %v45 = vld [vmem:[%s7 + $0x38] sm:$0xff]
  %v46 = vld [vmem:[%s7 + $0x40] sm:$0xff]
  %v47 = vld [vmem:[%s7 + $0x48] sm:$0xff]
  %v48 = vld [vmem:[%s7 + $0x50] sm:$0xff]
  %v49 = vld [vmem:[%s7 + $0x58] sm:$0xff]
  %v50 = vld [vmem:[%s7 + $0x60] sm:$0xff]
  %v51 = vld [vmem:[%s7 + $0x68] sm:$0xff]
  %v52 = vld [vmem:[%s7 + $0x70] sm:$0xff]
  %v53 = vld [vmem:[%s7 + $0x78] sm:$0xff]
  %v54 = vld [vmem:[%s7 + $0x80] sm:$0xff]
  %v55 = vld [vmem:[%s7 + $0x88] sm:$0xff]
  %v56 = vld [vmem:[%s7 + $0x90] sm:$0xff]
  %v57 = vld [vmem:[%s7 + $0x98] sm:$0xff]
  %v58 = vld [vmem:[%s7 + $0xa0] sm:$0xff]
  %v59 = vld [vmem:[%s7 + $0xa8] sm:$0xff]
  %v60 = vld [vmem:[%s7 + $0xb0] sm:$0xff]
  %v61 = vld [vmem:[%s7 + $0xb8] sm:$0xff]
  %v62 = vld [vmem:[%s1] sm:$0xff]
  %v63 = vld [vmem:[%s1 + $0x8] sm:$0xff]
  %v64 = vld [vmem:[%s1 + $0x10] sm:$0xf]
  %vm65 = vcmask 523264
  %v67 = vsel %vm65, %v33, 0
  %v70 = vsel %vm65, %v35, 0
  %v73 = vsel %vm65, %v37, 0
  %75 = vmatprep.subr.mxu0 0.0
  %76 = vmatpush1.msra.mxu0 %v53
  %77 = vmatprep.subr.mxu0 0.0
  %78 = vmatpush1.msra.mxu0 %v52
  %79 = vmatprep.subr.mxu0 0.0
  %80 = vmatpush1.msra.mxu0 %v51
  %81 = vmatprep.subr.mxu0 0.0
  %82 = vmatpush1.msra.mxu0 %v50
  %83 = vmatprep.subr.mxu0 0.0
  %84 = vmatpush1.msra.mxu0 %v49
  %85 = vmatprep.subr.mxu0 0.0
  %86 = vmatpush1.msra.mxu0 %v48
  %87 = vmatprep.subr.mxu0 0.0
  %88 = vmatpush1.msra.mxu0 %v47
  %89 = vmatprep.subr.mxu0 0.0
  %90 = vmatpush1.msra.mxu0 %v46
  %91 = vmatprep.subr.mxu0 0.0
  %92 = vmatpush1.msra.mxu0 %v45
  %93 = vmatprep.subr.mxu0 0.0
  %94 = vmatpush1.msra.mxu0 %v44
  %95 = vmatprep.subr.mxu0 0.0
  %96 = vmatpush1.msra.mxu0 %v43
  %97 = vmatprep.subr.mxu0 0.0
  %98 = vmatpush1.msra.mxu0 %v42
  %99 = vmatprep.subr.mxu0 0.0
  %100 = vmatpush1.msra.mxu0 %v41
  %101 = vmatprep.subr.mxu0 0.0
  %102 = vmatpush1.msra.mxu0 %v40
  %103 = vmatprep.subr.mxu0 0.0
  %104 = vmatpush1.msra.mxu0 %v39
  %105 = vmatprep.subr.mxu0 0.0
  %106 = vmatpush1.msra.mxu0 %v38
  %107 = vmatprep.subr.mxu0 0.0
  %108 = vmatpush2.msra.mxu0 0.0
  %109 = vmatprep.subr.mxu0 0.0
  %110 = vmatpush2.msra.mxu0 0.0
  %111 = vmatprep.subr.mxu0 0.0
  %112 = vmatpush2.msra.mxu0 0.0
  %113 = vmatprep.subr.mxu0 0.0
  %114 = vmatpush2.msra.mxu0 0.0
  %115 = vmatprep.subr.mxu0 0.0
  %116 = vmatpush2.msra.mxu0 0.0
  %117 = vmatprep.subr.mxu0 0.0
  %118 = vmatpush2.msra.mxu0 0.0
  %119 = vmatprep.subr.mxu0 0.0
  %120 = vmatpush2.msra.mxu0 0.0
  %121 = vmatprep.subr.mxu0 0.0
  %122 = vmatpush2.msra.mxu0 0.0
  %123 = vmatprep.subr.mxu0 0.0
  %124 = vmatpush2.msra.mxu0 %v61
  %125 = vmatprep.subr.mxu0 0.0
  %126 = vmatpush2.msra.mxu0 %v60
  %127 = vmatprep.subr.mxu0 0.0
  %128 = vmatpush2.msra.mxu0 %v59
  %129 = vmatprep.subr.mxu0 0.0
  %130 = vmatpush2.msra.mxu0 %v58
  %131 = vmatprep.subr.mxu0 0.0
  %132 = vmatpush2.msra.mxu0 %v57
  %133 = vmatprep.subr.mxu0 0.0
  %134 = vmatpush2.msra.mxu0 %v56
  %135 = vmatprep.subr.mxu0 0.0
  %136 = vmatpush2.msra.mxu0 %v55
  %137 = vmatprep.subr.mxu0 0.0
  %138 = vmatpush2.msra.mxu0 %v54
  %139 = vmatprep.mubr.f32.mxu0 %v67
  %140 = vmatmul.mubr.f32.gmra.mxu0 %v32
  %v141 = vpop.f32.mrf.mxu0
  %v142 = vadd.f32 %v62, %v141
  %v143 = vpop.f32.mrf.mxu0
  %144 = vmatprep.mubr.f32.mxu0 %v70
  %145 = vmatmul.mubr.f32.gmra.mxu0 %v34
  %v146 = vpop.f32.mrf.mxu0
  %v147 = vadd.f32 %v63, %v146
  %v148 = vpop.f32.mrf.mxu0
  %149 = vmatprep.mubr.f32.mxu0 %v73
  %150 = vmatmul.mubr.f32.gmra.mxu0 %v36
  %v151 = vpop.f32.mrf.mxu0
  %v152 = vadd.f32 %v64, %v151
  %v153 = vpop.f32.mrf.mxu0
  %154 = vdwg.mxu0
  %v155 = vld [vmem:[%s8] sm:$0x1]
  %v156 = vld [vmem:[%s8 + $0x1] sm:$0x1]
  %vm157 = vcmask 392192
  %v158 = vsel %vm157, %v142, 0.0
  %159 = vadd.xlane.f32.xlu0 %v158
  %v160 = vpop.xlane.xlu0 %159
  %v161 = vsel %vm157, %v147, 0.0
  %162 = vadd.xlane.f32.xlu0 %v161
  %v163 = vpop.xlane.xlu0 %162
  %vm164 = vcmask 388096
  %v165 = vsel %vm164, %v152, 0.0
  %166 = vadd.xlane.f32.xlu0 %v165
  %v167 = vpop.xlane.xlu0 %166
  %v168 = vrcp.pop 48.0
  %v169 = vmul.f32 %v160, %v168
  %v170 = vmul.f32 %v163, %v168
  %v171 = vmul.f32 %v167, %v168
  %v172 = vsub.f32 %v142, %v169
  %v173 = vsub.f32 %v147, %v170
  %v174 = vsub.f32 %v152, %v171
  %v175 = vmul.f32 %v172, %v172
  %v176 = vmul.f32 %v173, %v173
  %v177 = vmul.f32 %v174, %v174
  %v178 = vsel %vm157, %v175, 0.0
  %179 = vadd.xlane.f32.xlu0 %v178
  %v180 = vpop.xlane.xlu0 %179
  %v181 = vsel %vm157, %v176, 0.0
  %182 = vadd.xlane.f32.xlu0 %v181
  %v183 = vpop.xlane.xlu0 %182
  %v184 = vsel %vm164, %v177, 0.0
  %185 = vadd.xlane.f32.xlu0 %v184
  %v186 = vpop.xlane.xlu0 %185
  %v187 = vmul.f32 %v180, %v168
  %v188 = vmul.f32 %v183, %v168
  %v189 = vmul.f32 %v186, %v168
  %v190 = vadd.f32 %v187, 1e-05
  %v191 = vadd.f32 %v188, 1e-05
  %v192 = vadd.f32 %v189, 1e-05
  %v193 = vrsqrt.pop %v190
  %v194 = vrsqrt.pop %v191
  %v195 = vrsqrt.pop %v192
  %v196 = vmul.f32 %v172, %v193
  %v197 = vmul.f32 %v173, %v194
  %v198 = vmul.f32 %v174, %v195
  %v199 = vlaneseq
  %v200 = vshrl.u32 %v199, 7
  %v201 = vsub.s32 0, %v200
  %v202 = vrot.slane %v155, %v201
  %v203 = vmul.f32 %v196, %v202
  %v204 = vmul.f32 %v197, %v202
  %v205 = vmul.f32 %v198, %v202
  %v206 = vlaneseq
  %v207 = vshrl.u32 %v206, 7
  %v208 = vsub.s32 0, %v207
  %v209 = vrot.slane %v156, %v208
  %v210 = vadd.f32 %v203, %v209
  %v211 = vadd.f32 %v204, %v209
  %v212 = vadd.f32 %v205, %v209
  %v213 = vld [vmem:[%s8 + $0x2] sm:$0x1]
  %v214 = vld [vmem:[%s8 + $0x3] sm:$0x1]
  %v215 = vsel %vm157, %v210, 0.0
  %216 = vadd.xlane.f32.xlu0 %v215
  %v217 = vpop.xlane.xlu0 %216
  %v218 = vsel %vm157, %v211, 0.0
  %219 = vadd.xlane.f32.xlu0 %v218
  %v220 = vpop.xlane.xlu0 %219
  %v221 = vsel %vm164, %v212, 0.0
  %222 = vadd.xlane.f32.xlu0 %v221
  %v223 = vpop.xlane.xlu0 %222
  %v224 = vmul.f32 %v217, %v168
  %v225 = vmul.f32 %v220, %v168
  %v226 = vmul.f32 %v223, %v168
  %v227 = vsub.f32 %v210, %v224
  %v228 = vsub.f32 %v211, %v225
  %v229 = vsub.f32 %v212, %v226
  %v230 = vmul.f32 %v227, %v227
  %v231 = vmul.f32 %v228, %v228
  %v232 = vmul.f32 %v229, %v229
  %v233 = vsel %vm157, %v230, 0.0
  %234 = vadd.xlane.f32.xlu0 %v233
  %v235 = vpop.xlane.xlu0 %234
  %v236 = vsel %vm157, %v231, 0.0
  %237 = vadd.xlane.f32.xlu0 %v236
  %v238 = vpop.xlane.xlu0 %237
  %v239 = vsel %vm164, %v232, 0.0
  %240 = vadd.xlane.f32.xlu0 %v239
  %v241 = vpop.xlane.xlu0 %240
  %v242 = vmul.f32 %v235, %v168
  %v243 = vmul.f32 %v238, %v168
  %v244 = vmul.f32 %v241, %v168
  %v245 = vadd.f32 %v242, 1e-05
  %v246 = vadd.f32 %v243, 1e-05
  %v247 = vadd.f32 %v244, 1e-05
  %v248 = vrsqrt.pop %v245
  %v249 = vrsqrt.pop %v246
  %v250 = vrsqrt.pop %v247
  %v251 = vmul.f32 %v227, %v248
  %v252 = vmul.f32 %v228, %v249
  %v253 = vmul.f32 %v229, %v250
  %v254 = vlaneseq
  %v255 = vshrl.u32 %v254, 7
  %v256 = vsub.s32 0, %v255
  %v257 = vrot.slane %v213, %v256
  %v258 = vmul.f32 %v251, %v257
  %v259 = vmul.f32 %v252, %v257
  %v260 = vmul.f32 %v253, %v257
  %v261 = vlaneseq
  %v262 = vshrl.u32 %v261, 7
  %v263 = vsub.s32 0, %v262
  %v264 = vrot.slane %v214, %v263
  %v265 = vadd.f32 %v258, %v264
  %v266 = vadd.f32 %v259, %v264
  %v267 = vadd.f32 %v260, %v264
  %v268 = vld [vmem:[%s7 + $0xc0] sm:$0xff]
  %v269 = vld [vmem:[%s7 + $0xc8] sm:$0xff]
  %v270 = vld [vmem:[%s7 + $0xd0] sm:$0xff]
  %v271 = vld [vmem:[%s7 + $0xd8] sm:$0xff]
  %v272 = vld [vmem:[%s7 + $0xe0] sm:$0xff]
  %v273 = vld [vmem:[%s7 + $0xe8] sm:$0xff]
  %v274 = vld [vmem:[%s8 + $0x4] sm:$0x1]
  %v275 = vlaneseq
  %v276 = vshrl.u32 %v275, 7
  %v277 = vsub.s32 0, %v276
  %v278 = vrot.slane %v274, %v277
  %v280 = vsel %vm157, %v265, 0
  %v283 = vsel %vm157, %v266, 0
  %v286 = vsel %vm157, %v267, 0
  %288 = vmatprep.subr.mxu0 0.0
  %289 = vmatpush1.msra.mxu0 0.0
  %290 = vmatprep.subr.mxu0 0.0
  %291 = vmatpush1.msra.mxu0 0.0
  %292 = vmatprep.subr.mxu0 0.0
  %293 = vmatpush1.msra.mxu0 0.0
  %294 = vmatprep.subr.mxu0 0.0
  %295 = vmatpush1.msra.mxu0 0.0
  %296 = vmatprep.subr.mxu0 0.0
  %297 = vmatpush1.msra.mxu0 0.0
  %298 = vmatprep.subr.mxu0 0.0
  %299 = vmatpush1.msra.mxu0 0.0
  %300 = vmatprep.subr.mxu0 0.0
  %301 = vmatpush1.msra.mxu0 0.0
  %302 = vmatprep.subr.mxu0 0.0
  %303 = vmatpush1.msra.mxu0 0.0
  %304 = vmatprep.subr.mxu0 0.0
  %305 = vmatpush1.msra.mxu0 0.0
  %306 = vmatprep.subr.mxu0 0.0
  %307 = vmatpush1.msra.mxu0 0.0
  %308 = vmatprep.subr.mxu0 0.0
  %309 = vmatpush1.msra.mxu0 %v273
  %310 = vmatprep.subr.mxu0 0.0
  %311 = vmatpush1.msra.mxu0 %v272
  %312 = vmatprep.subr.mxu0 0.0
  %313 = vmatpush1.msra.mxu0 %v271
  %314 = vmatprep.subr.mxu0 0.0
  %315 = vmatpush1.msra.mxu0 %v270
  %316 = vmatprep.subr.mxu0 0.0
  %317 = vmatpush1.msra.mxu0 %v269
  %318 = vmatprep.subr.mxu0 0.0
  %319 = vmatpush1.msra.mxu0 %v268
  %320 = vmatprep.subr.mxu0 0.0
  %321 = vmatpush2.msra.mxu0 0.0
  %322 = vmatprep.subr.mxu0 0.0
  %323 = vmatpush2.msra.mxu0 0.0
  %324 = vmatprep.subr.mxu0 0.0
  %325 = vmatpush2.msra.mxu0 0.0
  %326 = vmatprep.subr.mxu0 0.0
  %327 = vmatpush2.msra.mxu0 0.0
  %328 = vmatprep.subr.mxu0 0.0
  %329 = vmatpush2.msra.mxu0 0.0
  %330 = vmatprep.subr.mxu0 0.0
  %331 = vmatpush2.msra.mxu0 0.0
  %332 = vmatprep.subr.mxu0 0.0
  %333 = vmatpush2.msra.mxu0 0.0
  %334 = vmatprep.subr.mxu0 0.0
  %335 = vmatpush2.msra.mxu0 0.0
  %336 = vmatprep.subr.mxu0 0.0
  %337 = vmatpush2.msra.mxu0 0.0
  %338 = vmatprep.subr.mxu0 0.0
  %339 = vmatpush2.msra.mxu0 0.0
  %340 = vmatprep.subr.mxu0 0.0
  %341 = vmatpush2.msra.mxu0 0.0
  %342 = vmatprep.subr.mxu0 0.0
  %343 = vmatpush2.msra.mxu0 0.0
  %344 = vmatprep.subr.mxu0 0.0
  %345 = vmatpush2.msra.mxu0 0.0
  %346 = vmatprep.subr.mxu0 0.0
  %347 = vmatpush2.msra.mxu0 0.0
  %348 = vmatprep.subr.mxu0 0.0
  %349 = vmatpush2.msra.mxu0 0.0
  %350 = vmatprep.subr.mxu0 0.0
  %351 = vmatpush2.msra.mxu0 0.0
  %352 = vmatprep.mubr.f32.mxu0 0.0
  %353 = vmatmul.mubr.f32.gmra.mxu0 %v280
  %v354 = vpop.f32.mrf.mxu0
  %v355 = vadd.f32 %v278, %v354
  %v356 = vpop.f32.mrf.mxu0
  %357 = vmatprep.mubr.f32.mxu0 0.0
  %358 = vmatmul.mubr.f32.gmra.mxu0 %v283
  %v359 = vpop.f32.mrf.mxu0
  %v360 = vadd.f32 %v278, %v359
  %v361 = vpop.f32.mrf.mxu0
  %362 = vmatprep.mubr.f32.mxu0 0.0
  %363 = vmatmul.mubr.f32.gmra.mxu0 %v286
  %v364 = vpop.f32.mrf.mxu0
  %v365 = vadd.f32 %v278, %v364
  %v366 = vpop.f32.mrf.mxu0
  %367 = vdwg.mxu0
  %v368 = vld [vmem:[%s7 + $0xf0] sm:$0xff]
  %v369 = vld [vmem:[%s7 + $0xf8] sm:$0xff]
  %v370 = vld [vmem:[%s7 + $0x100] sm:$0xff]
  %v371 = vld [vmem:[%s7 + $0x108] sm:$0xff]
  %v372 = vld [vmem:[%s7 + $0x110] sm:$0xff]
  %v373 = vld [vmem:[%s7 + $0x118] sm:$0xff]
  %v374 = vld [vmem:[%s8 + $0x5] sm:$0x1]
  %v375 = vlaneseq
  %v376 = vshrl.u32 %v375, 7
  %v377 = vsub.s32 0, %v376
  %v378 = vrot.slane %v374, %v377
  %379 = vmatprep.subr.mxu0 0.0
  %380 = vmatpush1.msra.mxu0 0.0
  %381 = vmatprep.subr.mxu0 0.0
  %382 = vmatpush1.msra.mxu0 0.0
  %383 = vmatprep.subr.mxu0 0.0
  %384 = vmatpush1.msra.mxu0 0.0
  %385 = vmatprep.subr.mxu0 0.0
  %386 = vmatpush1.msra.mxu0 0.0
  %387 = vmatprep.subr.mxu0 0.0
  %388 = vmatpush1.msra.mxu0 0.0
  %389 = vmatprep.subr.mxu0 0.0
  %390 = vmatpush1.msra.mxu0 0.0
  %391 = vmatprep.subr.mxu0 0.0
  %392 = vmatpush1.msra.mxu0 0.0
  %393 = vmatprep.subr.mxu0 0.0
  %394 = vmatpush1.msra.mxu0 0.0
  %395 = vmatprep.subr.mxu0 0.0
  %396 = vmatpush1.msra.mxu0 0.0
  %397 = vmatprep.subr.mxu0 0.0
  %398 = vmatpush1.msra.mxu0 0.0
  %399 = vmatprep.subr.mxu0 0.0
  %400 = vmatpush1.msra.mxu0 %v373
  %401 = vmatprep.subr.mxu0 0.0
  %402 = vmatpush1.msra.mxu0 %v372
  %403 = vmatprep.subr.mxu0 0.0
  %404 = vmatpush1.msra.mxu0 %v371
  %405 = vmatprep.subr.mxu0 0.0
  %406 = vmatpush1.msra.mxu0 %v370
  %407 = vmatprep.subr.mxu0 0.0
  %408 = vmatpush1.msra.mxu0 %v369
  %409 = vmatprep.subr.mxu0 0.0
  %410 = vmatpush1.msra.mxu0 %v368
  %411 = vmatprep.subr.mxu0 0.0
  %412 = vmatpush2.msra.mxu0 0.0
  %413 = vmatprep.subr.mxu0 0.0
  %414 = vmatpush2.msra.mxu0 0.0
  %415 = vmatprep.subr.mxu0 0.0
  %416 = vmatpush2.msra.mxu0 0.0
  %417 = vmatprep.subr.mxu0 0.0
  %418 = vmatpush2.msra.mxu0 0.0
  %419 = vmatprep.subr.mxu0 0.0
  %420 = vmatpush2.msra.mxu0 0.0
  %421 = vmatprep.subr.mxu0 0.0
  %422 = vmatpush2.msra.mxu0 0.0
  %423 = vmatprep.subr.mxu0 0.0
  %424 = vmatpush2.msra.mxu0 0.0
  %425 = vmatprep.subr.mxu0 0.0
  %426 = vmatpush2.msra.mxu0 0.0
  %427 = vmatprep.subr.mxu0 0.0
  %428 = vmatpush2.msra.mxu0 0.0
  %429 = vmatprep.subr.mxu0 0.0
  %430 = vmatpush2.msra.mxu0 0.0
  %431 = vmatprep.subr.mxu0 0.0
  %432 = vmatpush2.msra.mxu0 0.0
  %433 = vmatprep.subr.mxu0 0.0
  %434 = vmatpush2.msra.mxu0 0.0
  %435 = vmatprep.subr.mxu0 0.0
  %436 = vmatpush2.msra.mxu0 0.0
  %437 = vmatprep.subr.mxu0 0.0
  %438 = vmatpush2.msra.mxu0 0.0
  %439 = vmatprep.subr.mxu0 0.0
  %440 = vmatpush2.msra.mxu0 0.0
  %441 = vmatprep.subr.mxu0 0.0
  %442 = vmatpush2.msra.mxu0 0.0
  %443 = vmatprep.mubr.f32.mxu0 0.0
  %444 = vmatmul.mubr.f32.gmra.mxu0 %v280
  %v445 = vpop.f32.mrf.mxu0
  %v446 = vadd.f32 %v378, %v445
  %v447 = vpop.f32.mrf.mxu0
  %448 = vmatprep.mubr.f32.mxu0 0.0
  %449 = vmatmul.mubr.f32.gmra.mxu0 %v283
  %v450 = vpop.f32.mrf.mxu0
  %v451 = vadd.f32 %v378, %v450
  %v452 = vpop.f32.mrf.mxu0
  %453 = vmatprep.mubr.f32.mxu0 0.0
  %454 = vmatmul.mubr.f32.gmra.mxu0 %v286
  %v455 = vpop.f32.mrf.mxu0
  %v456 = vadd.f32 %v378, %v455
  %v457 = vpop.f32.mrf.mxu0
  %458 = vdwg.mxu0
  %v459 = vld [vmem:[%s7 + $0x120] sm:$0xff]
  %v460 = vld [vmem:[%s7 + $0x128] sm:$0xff]
  %v461 = vld [vmem:[%s7 + $0x130] sm:$0xff]
  %v462 = vld [vmem:[%s7 + $0x138] sm:$0xff]
  %v463 = vld [vmem:[%s7 + $0x140] sm:$0xff]
  %v464 = vld [vmem:[%s7 + $0x148] sm:$0xff]
  %v465 = vld [vmem:[%s8 + $0x6] sm:$0x1]
  %v466 = vlaneseq
  %v467 = vshrl.u32 %v466, 7
  %v468 = vsub.s32 0, %v467
  %v469 = vrot.slane %v465, %v468
  %470 = vmatprep.subr.mxu0 0.0
  %471 = vmatpush1.msra.mxu0 0.0
  %472 = vmatprep.subr.mxu0 0.0
  %473 = vmatpush1.msra.mxu0 0.0
  %474 = vmatprep.subr.mxu0 0.0
  %475 = vmatpush1.msra.mxu0 0.0
  %476 = vmatprep.subr.mxu0 0.0
  %477 = vmatpush1.msra.mxu0 0.0
  %478 = vmatprep.subr.mxu0 0.0
  %479 = vmatpush1.msra.mxu0 0.0
  %480 = vmatprep.subr.mxu0 0.0
  %481 = vmatpush1.msra.mxu0 0.0
  %482 = vmatprep.subr.mxu0 0.0
  %483 = vmatpush1.msra.mxu0 0.0
  %484 = vmatprep.subr.mxu0 0.0
  %485 = vmatpush1.msra.mxu0 0.0
  %486 = vmatprep.subr.mxu0 0.0
  %487 = vmatpush1.msra.mxu0 0.0
  %488 = vmatprep.subr.mxu0 0.0
  %489 = vmatpush1.msra.mxu0 0.0
  %490 = vmatprep.subr.mxu0 0.0
  %491 = vmatpush1.msra.mxu0 %v464
  %492 = vmatprep.subr.mxu0 0.0
  %493 = vmatpush1.msra.mxu0 %v463
  %494 = vmatprep.subr.mxu0 0.0
  %495 = vmatpush1.msra.mxu0 %v462
  %496 = vmatprep.subr.mxu0 0.0
  %497 = vmatpush1.msra.mxu0 %v461
  %498 = vmatprep.subr.mxu0 0.0
  %499 = vmatpush1.msra.mxu0 %v460
  %500 = vmatprep.subr.mxu0 0.0
  %501 = vmatpush1.msra.mxu0 %v459
  %502 = vmatprep.subr.mxu0 0.0
  %503 = vmatpush2.msra.mxu0 0.0
  %504 = vmatprep.subr.mxu0 0.0
  %505 = vmatpush2.msra.mxu0 0.0
  %506 = vmatprep.subr.mxu0 0.0
  %507 = vmatpush2.msra.mxu0 0.0
  %508 = vmatprep.subr.mxu0 0.0
  %509 = vmatpush2.msra.mxu0 0.0
  %510 = vmatprep.subr.mxu0 0.0
  %511 = vmatpush2.msra.mxu0 0.0
  %512 = vmatprep.subr.mxu0 0.0
  %513 = vmatpush2.msra.mxu0 0.0
  %514 = vmatprep.subr.mxu0 0.0
  %515 = vmatpush2.msra.mxu0 0.0
  %516 = vmatprep.subr.mxu0 0.0
  %517 = vmatpush2.msra.mxu0 0.0
  %518 = vmatprep.subr.mxu0 0.0
  %519 = vmatpush2.msra.mxu0 0.0
  %520 = vmatprep.subr.mxu0 0.0
  %521 = vmatpush2.msra.mxu0 0.0
  %522 = vmatprep.subr.mxu0 0.0
  %523 = vmatpush2.msra.mxu0 0.0
  %524 = vmatprep.subr.mxu0 0.0
  %525 = vmatpush2.msra.mxu0 0.0
  %526 = vmatprep.subr.mxu0 0.0
  %527 = vmatpush2.msra.mxu0 0.0
  %528 = vmatprep.subr.mxu0 0.0
  %529 = vmatpush2.msra.mxu0 0.0
  %530 = vmatprep.subr.mxu0 0.0
  %531 = vmatpush2.msra.mxu0 0.0
  %532 = vmatprep.subr.mxu0 0.0
  %533 = vmatpush2.msra.mxu0 0.0
  %534 = vmatprep.mubr.f32.mxu0 0.0
  %535 = vmatmul.mubr.f32.gmra.mxu0 %v280
  %v536 = vpop.f32.mrf.mxu0
  %v537 = vadd.f32 %v469, %v536
  %v538 = vpop.f32.mrf.mxu0
  %539 = vmatprep.mubr.f32.mxu0 0.0
  %540 = vmatmul.mubr.f32.gmra.mxu0 %v283
  %v541 = vpop.f32.mrf.mxu0
  %v542 = vadd.f32 %v469, %v541
  %v543 = vpop.f32.mrf.mxu0
  %544 = vmatprep.mubr.f32.mxu0 0.0
  %545 = vmatmul.mubr.f32.gmra.mxu0 %v286
  %v546 = vpop.f32.mrf.mxu0
  %v547 = vadd.f32 %v469, %v546
  %v548 = vpop.f32.mrf.mxu0
  %549 = vdwg.mxu0
  %v550 = vld [vmem:[%s7 + $0x150] sm:$0xff]
  %v551 = vld [vmem:[%s7 + $0x158] sm:$0xff]
  %v552 = vld [vmem:[%s7 + $0x160] sm:$0xff]
  %v553 = vld [vmem:[%s7 + $0x168] sm:$0xff]
  %v554 = vld [vmem:[%s7 + $0x170] sm:$0xff]
  %v555 = vld [vmem:[%s7 + $0x178] sm:$0xff]
  %v556 = vld [vmem:[%s8 + $0x7] sm:$0x1]
  %v557 = vld [vmem:[%s4] sm:$0xff]
  %v558 = vld [vmem:[%s4 + $0x8] sm:$0xff]
  %v559 = vld [vmem:[%s4 + $0x10] sm:$0xf]
  %vm560 = vcmask 97280
  %v562 = vsel %vm560, %v355, 0
  %v565 = vsel %vm560, %v360, 0
  %v568 = vsel %vm560, %v365, 0
  %v571 = vsel %vm560, %v446, 0
  %v574 = vsel %vm560, %v451, 0
  %v577 = vsel %vm560, %v456, 0
  %579 = vmatprep.subr.mxu0 0.0
  %580 = vmatpush1.xpose.msra.mxu0 0.0
  %581 = vmatprep.subr.mxu0 0.0
  %582 = vmatpush1.xpose.msra.mxu0 0.0
  %583 = vmatprep.subr.mxu0 0.0
  %584 = vmatpush1.xpose.msra.mxu0 0.0
  %585 = vmatprep.subr.mxu0 0.0
  %586 = vmatpush1.xpose.msra.mxu0 0.0
  %587 = vmatprep.subr.mxu0 0.0
  %588 = vmatpush1.xpose.msra.mxu0 0.0
  %589 = vmatprep.subr.mxu0 0.0
  %590 = vmatpush1.xpose.msra.mxu0 0.0
  %591 = vmatprep.subr.mxu0 0.0
  %592 = vmatpush1.xpose.msra.mxu0 0.0
  %593 = vmatprep.subr.mxu0 0.0
  %594 = vmatpush1.xpose.msra.mxu0 0.0
  %595 = vmatprep.subr.mxu0 0.0
  %596 = vmatpush1.xpose.msra.mxu0 0.0
  %597 = vmatprep.subr.mxu0 0.0
  %598 = vmatpush1.xpose.msra.mxu0 0.0
  %599 = vmatprep.subr.mxu0 0.0
  %600 = vmatpush1.xpose.msra.mxu0 0.0
  %601 = vmatprep.subr.mxu0 0.0
  %602 = vmatpush1.xpose.msra.mxu0 0.0
  %603 = vmatprep.subr.mxu0 0.0
  %604 = vmatpush1.xpose.msra.mxu0 0.0
  %605 = vmatprep.subr.mxu0 0.0
  %606 = vmatpush1.xpose.msra.mxu0 %v577
  %607 = vmatprep.subr.mxu0 0.0
  %608 = vmatpush1.xpose.msra.mxu0 %v574
  %609 = vmatprep.subr.mxu0 0.0
  %610 = vmatpush1.xpose.msra.mxu0 %v571
  %611 = vmatprep.subr.mxu0 0.0
  %612 = vmatpush2.xpose.msra.mxu0 0.0
  %613 = vmatprep.subr.mxu0 0.0
  %614 = vmatpush2.xpose.msra.mxu0 0.0
  %615 = vmatprep.subr.mxu0 0.0
  %616 = vmatpush2.xpose.msra.mxu0 0.0
  %617 = vmatprep.subr.mxu0 0.0
  %618 = vmatpush2.xpose.msra.mxu0 0.0
  %619 = vmatprep.subr.mxu0 0.0
  %620 = vmatpush2.xpose.msra.mxu0 0.0
  %621 = vmatprep.subr.mxu0 0.0
  %622 = vmatpush2.xpose.msra.mxu0 0.0
  %623 = vmatprep.subr.mxu0 0.0
  %624 = vmatpush2.xpose.msra.mxu0 0.0
  %625 = vmatprep.subr.mxu0 0.0
  %626 = vmatpush2.xpose.msra.mxu0 0.0
  %627 = vmatprep.subr.mxu0 0.0
  %628 = vmatpush2.xpose.msra.mxu0 0.0
  %629 = vmatprep.subr.mxu0 0.0
  %630 = vmatpush2.xpose.msra.mxu0 0.0
  %631 = vmatprep.subr.mxu0 0.0
  %632 = vmatpush2.xpose.msra.mxu0 0.0
  %633 = vmatprep.subr.mxu0 0.0
  %634 = vmatpush2.xpose.msra.mxu0 0.0
  %635 = vmatprep.subr.mxu0 0.0
  %636 = vmatpush2.xpose.msra.mxu0 0.0
  %637 = vmatprep.subr.mxu0 0.0
  %638 = vmatpush2.xpose.msra.mxu0 0.0
  %639 = vmatprep.subr.mxu0 0.0
  %640 = vmatpush2.xpose.msra.mxu0 0.0
  %641 = vmatprep.subr.mxu0 0.0
  %642 = vmatpush2.xpose.msra.mxu0 0.0
  %643 = vmatprep.mubr.f32.mxu0 0.0
  %644 = vmatmul.mubr.f32.gmra.mxu0 %v562
  %v645 = vpop.f32.mrf.mxu0
  %v646 = vadd.f32 0.0, %v645
  %v647 = vpop.f32.mrf.mxu0
  %648 = vmatprep.mubr.f32.mxu0 0.0
  %649 = vmatmul.mubr.f32.gmra.mxu0 %v565
  %v650 = vpop.f32.mrf.mxu0
  %v651 = vadd.f32 0.0, %v650
  %v652 = vpop.f32.mrf.mxu0
  %653 = vmatprep.mubr.f32.mxu0 0.0
  %654 = vmatmul.mubr.f32.gmra.mxu0 %v568
  %v655 = vpop.f32.mrf.mxu0
  %v656 = vadd.f32 0.0, %v655
  %v657 = vpop.f32.mrf.mxu0
  %658 = vdwg.mxu0
  %v659 = vmul.f32 %v646, 0.28867513
  %v660 = vmul.f32 %v651, 0.28867513
  %v661 = vmul.f32 %v656, 0.28867513
  %v662 = vadd.f32 %v659, %v557
  %v663 = vadd.f32 %v660, %v558
  %v664 = vadd.f32 %v661, %v559
  %vm665 = vcmask 162816
  %v666 = vsel %vm665, %v662, -inf
  %667 = vmax.xlane.f32.xlu0 %v666
  %v668 = vpop.xlane.xlu0 %667
  %v669 = vsel %vm665, %v663, -inf
  %670 = vmax.xlane.f32.xlu0 %v669
  %v671 = vpop.xlane.xlu0 %670
  %vm672 = vcmask 158720
  %v673 = vsel %vm672, %v664, -inf
  %674 = vmax.xlane.f32.xlu0 %v673
  %v675 = vpop.xlane.xlu0 %674
  %v676 = vsub.f32 %v662, %v668
  %v677 = vsub.f32 %v663, %v671
  %v678 = vsub.f32 %v664, %v675
  %v679 = vmul.f32 %v676, 1.442695
  %v680 = vpow.pop %v679
  %v681 = vmul.f32 %v677, 1.442695
  %v682 = vpow.pop %v681
  %v683 = vmul.f32 %v678, 1.442695
  %v684 = vpow.pop %v683
  %v685 = vsel %vm665, %v680, 0.0
  %686 = vadd.xlane.f32.xlu0 %v685
  %v687 = vpop.xlane.xlu0 %686
  %v688 = vsel %vm665, %v682, 0.0
  %689 = vadd.xlane.f32.xlu0 %v688
  %v690 = vpop.xlane.xlu0 %689
  %v691 = vsel %vm672, %v684, 0.0
  %692 = vadd.xlane.f32.xlu0 %v691
  %v693 = vpop.xlane.xlu0 %692
  %v694 = vrcp.pop %v687
  %v695 = vrcp.pop %v690
  %v696 = vrcp.pop %v693
  %v697 = vmul.f32 %v680, %v694
  %v698 = vmul.f32 %v682, %v695
  %v699 = vmul.f32 %v684, %v696
  %v701 = vsel %vm665, %v697, 0
  %v704 = vsel %vm665, %v698, 0
  %v707 = vsel %vm665, %v699, 0
  %vm709 = vcmask 1043456
  %v711 = vsel %vm709, %v547, 0
  %713 = vmatprep.subr.mxu0 0.0
  %714 = vmatpush1.msra.mxu0 0.0
  %715 = vmatprep.subr.mxu0 0.0
  %716 = vmatpush1.msra.mxu0 0.0
  %717 = vmatprep.subr.mxu0 0.0
  %718 = vmatpush1.msra.mxu0 0.0
  %719 = vmatprep.subr.mxu0 0.0
  %720 = vmatpush1.msra.mxu0 0.0
  %721 = vmatprep.subr.mxu0 0.0
  %722 = vmatpush1.msra.mxu0 0.0
  %723 = vmatprep.subr.mxu0 0.0
  %724 = vmatpush1.msra.mxu0 0.0
  %725 = vmatprep.subr.mxu0 0.0
  %726 = vmatpush1.msra.mxu0 0.0
  %727 = vmatprep.subr.mxu0 0.0
  %728 = vmatpush1.msra.mxu0 0.0
  %729 = vmatprep.subr.mxu0 0.0
  %730 = vmatpush1.msra.mxu0 0.0
  %731 = vmatprep.subr.mxu0 0.0
  %732 = vmatpush1.msra.mxu0 0.0
  %733 = vmatprep.subr.mxu0 0.0
  %734 = vmatpush1.msra.mxu0 0.0
  %735 = vmatprep.subr.mxu0 0.0
  %736 = vmatpush1.msra.mxu0 0.0
  %737 = vmatprep.subr.mxu0 0.0
  %738 = vmatpush1.msra.mxu0 0.0
  %739 = vmatprep.subr.mxu0 0.0
  %740 = vmatpush1.msra.mxu0 %v711
  %741 = vmatprep.subr.mxu0 0.0
  %742 = vmatpush1.msra.mxu0 %v542
  %743 = vmatprep.subr.mxu0 0.0
  %744 = vmatpush1.msra.mxu0 %v537
  %745 = vmatprep.subr.mxu0 0.0
  %746 = vmatpush2.msra.mxu0 0.0
  %747 = vmatprep.subr.mxu0 0.0
  %748 = vmatpush2.msra.mxu0 0.0
  %749 = vmatprep.subr.mxu0 0.0
  %750 = vmatpush2.msra.mxu0 0.0
  %751 = vmatprep.subr.mxu0 0.0
  %752 = vmatpush2.msra.mxu0 0.0
  %753 = vmatprep.subr.mxu0 0.0
  %754 = vmatpush2.msra.mxu0 0.0
  %755 = vmatprep.subr.mxu0 0.0
  %756 = vmatpush2.msra.mxu0 0.0
  %757 = vmatprep.subr.mxu0 0.0
  %758 = vmatpush2.msra.mxu0 0.0
  %759 = vmatprep.subr.mxu0 0.0
  %760 = vmatpush2.msra.mxu0 0.0
  %761 = vmatprep.subr.mxu0 0.0
  %762 = vmatpush2.msra.mxu0 0.0
  %763 = vmatprep.subr.mxu0 0.0
  %764 = vmatpush2.msra.mxu0 0.0
  %765 = vmatprep.subr.mxu0 0.0
  %766 = vmatpush2.msra.mxu0 0.0
  %767 = vmatprep.subr.mxu0 0.0
  %768 = vmatpush2.msra.mxu0 0.0
  %769 = vmatprep.subr.mxu0 0.0
  %770 = vmatpush2.msra.mxu0 0.0
  %771 = vmatprep.subr.mxu0 0.0
  %772 = vmatpush2.msra.mxu0 0.0
  %773 = vmatprep.subr.mxu0 0.0
  %774 = vmatpush2.msra.mxu0 0.0
  %775 = vmatprep.subr.mxu0 0.0
  %776 = vmatpush2.msra.mxu0 0.0
  %777 = vmatprep.mubr.f32.mxu0 0.0
  %778 = vmatmul.mubr.f32.gmra.mxu0 %v701
  %v779 = vpop.f32.mrf.mxu0
  %v780 = vadd.f32 0.0, %v779
  %v781 = vpop.f32.mrf.mxu0
  %782 = vmatprep.mubr.f32.mxu0 0.0
  %783 = vmatmul.mubr.f32.gmra.mxu0 %v704
  %v784 = vpop.f32.mrf.mxu0
  %v785 = vadd.f32 0.0, %v784
  %v786 = vpop.f32.mrf.mxu0
  %787 = vmatprep.mubr.f32.mxu0 0.0
  %788 = vmatmul.mubr.f32.gmra.mxu0 %v707
  %v789 = vpop.f32.mrf.mxu0
  %v790 = vadd.f32 0.0, %v789
  %v791 = vpop.f32.mrf.mxu0
  %792 = vdwg.mxu0
  %793 = vrot.lane.b32.xlu0 %v355, 116
  %v794 = vpop.permute.xlu0 %793
  %795 = vrot.lane.b32.xlu0 %v360, 116
  %v796 = vpop.permute.xlu0 %795
  %797 = vrot.lane.b32.xlu0 %v365, 116
  %v798 = vpop.permute.xlu0 %797
  %799 = vrot.lane.b32.xlu0 %v446, 116
  %v800 = vpop.permute.xlu0 %799
  %801 = vrot.lane.b32.xlu0 %v451, 116
  %v802 = vpop.permute.xlu0 %801
  %803 = vrot.lane.b32.xlu0 %v456, 116
  %v804 = vpop.permute.xlu0 %803
  %v805 = vsel %vm560, %v794, 0
  %v807 = vsel %vm560, %v796, 0
  %v809 = vsel %vm560, %v798, 0
  %v811 = vsel %vm560, %v800, 0
  %v813 = vsel %vm560, %v802, 0
  %v815 = vsel %vm560, %v804, 0
  %817 = vmatprep.subr.mxu0 0.0
  %818 = vmatpush1.xpose.msra.mxu0 0.0
  %819 = vmatprep.subr.mxu0 0.0
  %820 = vmatpush1.xpose.msra.mxu0 0.0
  %821 = vmatprep.subr.mxu0 0.0
  %822 = vmatpush1.xpose.msra.mxu0 0.0
  %823 = vmatprep.subr.mxu0 0.0
  %824 = vmatpush1.xpose.msra.mxu0 0.0
  %825 = vmatprep.subr.mxu0 0.0
  %826 = vmatpush1.xpose.msra.mxu0 0.0
  %827 = vmatprep.subr.mxu0 0.0
  %828 = vmatpush1.xpose.msra.mxu0 0.0
  %829 = vmatprep.subr.mxu0 0.0
  %830 = vmatpush1.xpose.msra.mxu0 0.0
  %831 = vmatprep.subr.mxu0 0.0
  %832 = vmatpush1.xpose.msra.mxu0 0.0
  %833 = vmatprep.subr.mxu0 0.0
  %834 = vmatpush1.xpose.msra.mxu0 0.0
  %835 = vmatprep.subr.mxu0 0.0
  %836 = vmatpush1.xpose.msra.mxu0 0.0
  %837 = vmatprep.subr.mxu0 0.0
  %838 = vmatpush1.xpose.msra.mxu0 0.0
  %839 = vmatprep.subr.mxu0 0.0
  %840 = vmatpush1.xpose.msra.mxu0 0.0
  %841 = vmatprep.subr.mxu0 0.0
  %842 = vmatpush1.xpose.msra.mxu0 0.0
  %843 = vmatprep.subr.mxu0 0.0
  %844 = vmatpush1.xpose.msra.mxu0 %v815
  %845 = vmatprep.subr.mxu0 0.0
  %846 = vmatpush1.xpose.msra.mxu0 %v813
  %847 = vmatprep.subr.mxu0 0.0
  %848 = vmatpush1.xpose.msra.mxu0 %v811
  %849 = vmatprep.subr.mxu0 0.0
  %850 = vmatpush2.xpose.msra.mxu0 0.0
  %851 = vmatprep.subr.mxu0 0.0
  %852 = vmatpush2.xpose.msra.mxu0 0.0
  %853 = vmatprep.subr.mxu0 0.0
  %854 = vmatpush2.xpose.msra.mxu0 0.0
  %855 = vmatprep.subr.mxu0 0.0
  %856 = vmatpush2.xpose.msra.mxu0 0.0
  %857 = vmatprep.subr.mxu0 0.0
  %858 = vmatpush2.xpose.msra.mxu0 0.0
  %859 = vmatprep.subr.mxu0 0.0
  %860 = vmatpush2.xpose.msra.mxu0 0.0
  %861 = vmatprep.subr.mxu0 0.0
  %862 = vmatpush2.xpose.msra.mxu0 0.0
  %863 = vmatprep.subr.mxu0 0.0
  %864 = vmatpush2.xpose.msra.mxu0 0.0
  %865 = vmatprep.subr.mxu0 0.0
  %866 = vmatpush2.xpose.msra.mxu0 0.0
  %867 = vmatprep.subr.mxu0 0.0
  %868 = vmatpush2.xpose.msra.mxu0 0.0
  %869 = vmatprep.subr.mxu0 0.0
  %870 = vmatpush2.xpose.msra.mxu0 0.0
  %871 = vmatprep.subr.mxu0 0.0
  %872 = vmatpush2.xpose.msra.mxu0 0.0
  %873 = vmatprep.subr.mxu0 0.0
  %874 = vmatpush2.xpose.msra.mxu0 0.0
  %875 = vmatprep.subr.mxu0 0.0
  %876 = vmatpush2.xpose.msra.mxu0 0.0
  %877 = vmatprep.subr.mxu0 0.0
  %878 = vmatpush2.xpose.msra.mxu0 0.0
  %879 = vmatprep.subr.mxu0 0.0
  %880 = vmatpush2.xpose.msra.mxu0 0.0
  %881 = vmatprep.mubr.f32.mxu0 0.0
  %882 = vmatmul.mubr.f32.gmra.mxu0 %v805
  %v883 = vpop.f32.mrf.mxu0
  %v884 = vadd.f32 0.0, %v883
  %v885 = vpop.f32.mrf.mxu0
  %886 = vmatprep.mubr.f32.mxu0 0.0
  %887 = vmatmul.mubr.f32.gmra.mxu0 %v807
  %v888 = vpop.f32.mrf.mxu0
  %v889 = vadd.f32 0.0, %v888
  %v890 = vpop.f32.mrf.mxu0
  %891 = vmatprep.mubr.f32.mxu0 0.0
  %892 = vmatmul.mubr.f32.gmra.mxu0 %v809
  %v893 = vpop.f32.mrf.mxu0
  %v894 = vadd.f32 0.0, %v893
  %v895 = vpop.f32.mrf.mxu0
  %896 = vdwg.mxu0
  %v897 = vmul.f32 %v884, 0.28867513
  %v898 = vmul.f32 %v889, 0.28867513
  %v899 = vmul.f32 %v894, 0.28867513
  %v900 = vadd.f32 %v897, %v557
  %v901 = vadd.f32 %v898, %v558
  %v902 = vadd.f32 %v899, %v559
  %v903 = vsel %vm665, %v900, -inf
  %904 = vmax.xlane.f32.xlu0 %v903
  %v905 = vpop.xlane.xlu0 %904
  %v906 = vsel %vm665, %v901, -inf
  %907 = vmax.xlane.f32.xlu0 %v906
  %v908 = vpop.xlane.xlu0 %907
  %v909 = vsel %vm672, %v902, -inf
  %910 = vmax.xlane.f32.xlu0 %v909
  %v911 = vpop.xlane.xlu0 %910
  %v912 = vsub.f32 %v900, %v905
  %v913 = vsub.f32 %v901, %v908
  %v914 = vsub.f32 %v902, %v911
  %v915 = vmul.f32 %v912, 1.442695
  %v916 = vpow.pop %v915
  %v917 = vmul.f32 %v913, 1.442695
  %v918 = vpow.pop %v917
  %v919 = vmul.f32 %v914, 1.442695
  %v920 = vpow.pop %v919
  %v921 = vsel %vm665, %v916, 0.0
  %922 = vadd.xlane.f32.xlu0 %v921
  %v923 = vpop.xlane.xlu0 %922
  %v924 = vsel %vm665, %v918, 0.0
  %925 = vadd.xlane.f32.xlu0 %v924
  %v926 = vpop.xlane.xlu0 %925
  %v927 = vsel %vm672, %v920, 0.0
  %928 = vadd.xlane.f32.xlu0 %v927
  %v929 = vpop.xlane.xlu0 %928
  %v930 = vrcp.pop %v923
  %v931 = vrcp.pop %v926
  %v932 = vrcp.pop %v929
  %v933 = vmul.f32 %v916, %v930
  %v934 = vmul.f32 %v918, %v931
  %v935 = vmul.f32 %v920, %v932
  %938 = vrot.lane.b32.xlu0 %v537, 116
  %v939 = vpop.permute.xlu0 %938
  %940 = vrot.lane.b32.xlu0 %v542, 116
  %v941 = vpop.permute.xlu0 %940
  %942 = vrot.lane.b32.xlu0 %v547, 116
  %v943 = vpop.permute.xlu0 %942
  %v947 = vsel %vm665, %v933, 0
  %v950 = vsel %vm665, %v934, 0
  %v953 = vsel %vm665, %v935, 0
  %v955 = vsel %vm709, %v943, 0
  %957 = vmatprep.subr.mxu0 0.0
  %958 = vmatpush1.msra.mxu0 0.0
  %959 = vmatprep.subr.mxu0 0.0
  %960 = vmatpush1.msra.mxu0 0.0
  %961 = vmatprep.subr.mxu0 0.0
  %962 = vmatpush1.msra.mxu0 0.0
  %963 = vmatprep.subr.mxu0 0.0
  %964 = vmatpush1.msra.mxu0 0.0
  %965 = vmatprep.subr.mxu0 0.0
  %966 = vmatpush1.msra.mxu0 0.0
  %967 = vmatprep.subr.mxu0 0.0
  %968 = vmatpush1.msra.mxu0 0.0
  %969 = vmatprep.subr.mxu0 0.0
  %970 = vmatpush1.msra.mxu0 0.0
  %971 = vmatprep.subr.mxu0 0.0
  %972 = vmatpush1.msra.mxu0 0.0
  %973 = vmatprep.subr.mxu0 0.0
  %974 = vmatpush1.msra.mxu0 0.0
  %975 = vmatprep.subr.mxu0 0.0
  %976 = vmatpush1.msra.mxu0 0.0
  %977 = vmatprep.subr.mxu0 0.0
  %978 = vmatpush1.msra.mxu0 0.0
  %979 = vmatprep.subr.mxu0 0.0
  %980 = vmatpush1.msra.mxu0 0.0
  %981 = vmatprep.subr.mxu0 0.0
  %982 = vmatpush1.msra.mxu0 0.0
  %983 = vmatprep.subr.mxu0 0.0
  %984 = vmatpush1.msra.mxu0 %v955
  %985 = vmatprep.subr.mxu0 0.0
  %986 = vmatpush1.msra.mxu0 %v941
  %987 = vmatprep.subr.mxu0 0.0
  %988 = vmatpush1.msra.mxu0 %v939
  %989 = vmatprep.subr.mxu0 0.0
  %990 = vmatpush2.msra.mxu0 0.0
  %991 = vmatprep.subr.mxu0 0.0
  %992 = vmatpush2.msra.mxu0 0.0
  %993 = vmatprep.subr.mxu0 0.0
  %994 = vmatpush2.msra.mxu0 0.0
  %995 = vmatprep.subr.mxu0 0.0
  %996 = vmatpush2.msra.mxu0 0.0
  %997 = vmatprep.subr.mxu0 0.0
  %998 = vmatpush2.msra.mxu0 0.0
  %999 = vmatprep.subr.mxu0 0.0
  %1000 = vmatpush2.msra.mxu0 0.0
  %1001 = vmatprep.subr.mxu0 0.0
  %1002 = vmatpush2.msra.mxu0 0.0
  %1003 = vmatprep.subr.mxu0 0.0
  %1004 = vmatpush2.msra.mxu0 0.0
  %1005 = vmatprep.subr.mxu0 0.0
  %1006 = vmatpush2.msra.mxu0 0.0
  %1007 = vmatprep.subr.mxu0 0.0
  %1008 = vmatpush2.msra.mxu0 0.0
  %1009 = vmatprep.subr.mxu0 0.0
  %1010 = vmatpush2.msra.mxu0 0.0
  %1011 = vmatprep.subr.mxu0 0.0
  %1012 = vmatpush2.msra.mxu0 0.0
  %1013 = vmatprep.subr.mxu0 0.0
  %1014 = vmatpush2.msra.mxu0 0.0
  %1015 = vmatprep.subr.mxu0 0.0
  %1016 = vmatpush2.msra.mxu0 0.0
  %1017 = vmatprep.subr.mxu0 0.0
  %1018 = vmatpush2.msra.mxu0 0.0
  %1019 = vmatprep.subr.mxu0 0.0
  %1020 = vmatpush2.msra.mxu0 0.0
  %1021 = vmatprep.mubr.f32.mxu0 0.0
  %1022 = vmatmul.mubr.f32.gmra.mxu0 %v947
  %v1023 = vpop.f32.mrf.mxu0
  %v1024 = vadd.f32 0.0, %v1023
  %v1025 = vpop.f32.mrf.mxu0
  %1026 = vmatprep.mubr.f32.mxu0 0.0
  %1027 = vmatmul.mubr.f32.gmra.mxu0 %v950
  %v1028 = vpop.f32.mrf.mxu0
  %v1029 = vadd.f32 0.0, %v1028
  %v1030 = vpop.f32.mrf.mxu0
  %1031 = vmatprep.mubr.f32.mxu0 0.0
  %1032 = vmatmul.mubr.f32.gmra.mxu0 %v953
  %v1033 = vpop.f32.mrf.mxu0
  %v1034 = vadd.f32 0.0, %v1033
  %v1035 = vpop.f32.mrf.mxu0
  %1036 = vdwg.mxu0
  %v1039 = vrot.slane %v551, 4
  %v1040 = vrot.slane %v552, 4
  %v1041 = vsel %vm709, %v1039, %v1040
  %v1044 = vsel %vm560, %v1024, 0
  %v1047 = vsel %vm560, %v1029, 0
  %v1050 = vsel %vm560, %v1034, 0
  %v1052 = vsel %vm709, %v1040, 0
  %1054 = vmatprep.subr.mxu0 0.0
  %1055 = vmatpush1.msra.mxu0 0.0
  %1056 = vmatprep.subr.mxu0 0.0
  %1057 = vmatpush1.msra.mxu0 0.0
  %1058 = vmatprep.subr.mxu0 0.0
  %1059 = vmatpush1.msra.mxu0 0.0
  %1060 = vmatprep.subr.mxu0 0.0
  %1061 = vmatpush1.msra.mxu0 0.0
  %1062 = vmatprep.subr.mxu0 0.0
  %1063 = vmatpush1.msra.mxu0 0.0
  %1064 = vmatprep.subr.mxu0 0.0
  %1065 = vmatpush1.msra.mxu0 0.0
  %1066 = vmatprep.subr.mxu0 0.0
  %1067 = vmatpush1.msra.mxu0 0.0
  %1068 = vmatprep.subr.mxu0 0.0
  %1069 = vmatpush1.msra.mxu0 0.0
  %1070 = vmatprep.subr.mxu0 0.0
  %1071 = vmatpush1.msra.mxu0 0.0
  %1072 = vmatprep.subr.mxu0 0.0
  %1073 = vmatpush1.msra.mxu0 0.0
  %1074 = vmatprep.subr.mxu0 0.0
  %1075 = vmatpush1.msra.mxu0 0.0
  %1076 = vmatprep.subr.mxu0 0.0
  %1077 = vmatpush1.msra.mxu0 0.0
  %1078 = vmatprep.subr.mxu0 0.0
  %1079 = vmatpush1.msra.mxu0 0.0
  %1080 = vmatprep.subr.mxu0 0.0
  %1081 = vmatpush1.msra.mxu0 0.0
  %1082 = vmatprep.subr.mxu0 0.0
  %1083 = vmatpush1.msra.mxu0 %v1052
  %1084 = vmatprep.subr.mxu0 0.0
  %1085 = vmatpush1.msra.mxu0 %v1041
  %1086 = vmatprep.subr.mxu0 0.0
  %1087 = vmatpush2.msra.mxu0 0.0
  %1088 = vmatprep.subr.mxu0 0.0
  %1089 = vmatpush2.msra.mxu0 0.0
  %1090 = vmatprep.subr.mxu0 0.0
  %1091 = vmatpush2.msra.mxu0 0.0
  %1092 = vmatprep.subr.mxu0 0.0
  %1093 = vmatpush2.msra.mxu0 0.0
  %1094 = vmatprep.subr.mxu0 0.0
  %1095 = vmatpush2.msra.mxu0 0.0
  %1096 = vmatprep.subr.mxu0 0.0
  %1097 = vmatpush2.msra.mxu0 0.0
  %1098 = vmatprep.subr.mxu0 0.0
  %1099 = vmatpush2.msra.mxu0 0.0
  %1100 = vmatprep.subr.mxu0 0.0
  %1101 = vmatpush2.msra.mxu0 0.0
  %1102 = vmatprep.subr.mxu0 0.0
  %1103 = vmatpush2.msra.mxu0 0.0
  %1104 = vmatprep.subr.mxu0 0.0
  %1105 = vmatpush2.msra.mxu0 0.0
  %1106 = vmatprep.subr.mxu0 0.0
  %1107 = vmatpush2.msra.mxu0 0.0
  %1108 = vmatprep.subr.mxu0 0.0
  %1109 = vmatpush2.msra.mxu0 0.0
  %1110 = vmatprep.subr.mxu0 0.0
  %1111 = vmatpush2.msra.mxu0 0.0
  %1112 = vmatprep.subr.mxu0 0.0
  %1113 = vmatpush2.msra.mxu0 0.0
  %1114 = vmatprep.subr.mxu0 0.0
  %1115 = vmatpush2.msra.mxu0 0.0
  %1116 = vmatprep.subr.mxu0 0.0
  %1117 = vmatpush2.msra.mxu0 0.0
  %1118 = vmatprep.mubr.f32.mxu0 0.0
  %1119 = vmatmul.mubr.f32.gmra.mxu0 %v1044
  %v1120 = vpop.f32.mrf.mxu0
  %v1121 = vadd.f32 0.0, %v1120
  %v1122 = vpop.f32.mrf.mxu0
  %1123 = vmatprep.mubr.f32.mxu0 0.0
  %1124 = vmatmul.mubr.f32.gmra.mxu0 %v1047
  %v1125 = vpop.f32.mrf.mxu0
  %v1126 = vadd.f32 0.0, %v1125
  %v1127 = vpop.f32.mrf.mxu0
  %1128 = vmatprep.mubr.f32.mxu0 0.0
  %1129 = vmatmul.mubr.f32.gmra.mxu0 %v1050
  %v1130 = vpop.f32.mrf.mxu0
  %v1131 = vadd.f32 0.0, %v1130
  %v1132 = vpop.f32.mrf.mxu0
  %1133 = vdwg.mxu0
  %v1135 = vsel %vm560, %v780, 0
  %v1138 = vsel %vm560, %v785, 0
  %v1141 = vsel %vm560, %v790, 0
  %v1143 = vsel %vm709, %v551, 0
  %1145 = vmatprep.subr.mxu0 0.0
  %1146 = vmatpush1.msra.mxu0 0.0
  %1147 = vmatprep.subr.mxu0 0.0
  %1148 = vmatpush1.msra.mxu0 0.0
  %1149 = vmatprep.subr.mxu0 0.0
  %1150 = vmatpush1.msra.mxu0 0.0
  %1151 = vmatprep.subr.mxu0 0.0
  %1152 = vmatpush1.msra.mxu0 0.0
  %1153 = vmatprep.subr.mxu0 0.0
  %1154 = vmatpush1.msra.mxu0 0.0
  %1155 = vmatprep.subr.mxu0 0.0
  %1156 = vmatpush1.msra.mxu0 0.0
  %1157 = vmatprep.subr.mxu0 0.0
  %1158 = vmatpush1.msra.mxu0 0.0
  %1159 = vmatprep.subr.mxu0 0.0
  %1160 = vmatpush1.msra.mxu0 0.0
  %1161 = vmatprep.subr.mxu0 0.0
  %1162 = vmatpush1.msra.mxu0 0.0
  %1163 = vmatprep.subr.mxu0 0.0
  %1164 = vmatpush1.msra.mxu0 0.0
  %1165 = vmatprep.subr.mxu0 0.0
  %1166 = vmatpush1.msra.mxu0 0.0
  %1167 = vmatprep.subr.mxu0 0.0
  %1168 = vmatpush1.msra.mxu0 0.0
  %1169 = vmatprep.subr.mxu0 0.0
  %1170 = vmatpush1.msra.mxu0 0.0
  %1171 = vmatprep.subr.mxu0 0.0
  %1172 = vmatpush1.msra.mxu0 0.0
  %1173 = vmatprep.subr.mxu0 0.0
  %1174 = vmatpush1.msra.mxu0 %v1143
  %1175 = vmatprep.subr.mxu0 0.0
  %1176 = vmatpush1.msra.mxu0 %v550
  %1177 = vmatprep.subr.mxu0 0.0
  %1178 = vmatpush2.msra.mxu0 0.0
  %1179 = vmatprep.subr.mxu0 0.0
  %1180 = vmatpush2.msra.mxu0 0.0
  %1181 = vmatprep.subr.mxu0 0.0
  %1182 = vmatpush2.msra.mxu0 0.0
  %1183 = vmatprep.subr.mxu0 0.0
  %1184 = vmatpush2.msra.mxu0 0.0
  %1185 = vmatprep.subr.mxu0 0.0
  %1186 = vmatpush2.msra.mxu0 0.0
  %1187 = vmatprep.subr.mxu0 0.0
  %1188 = vmatpush2.msra.mxu0 0.0
  %1189 = vmatprep.subr.mxu0 0.0
  %1190 = vmatpush2.msra.mxu0 0.0
  %1191 = vmatprep.subr.mxu0 0.0
  %1192 = vmatpush2.msra.mxu0 0.0
  %1193 = vmatprep.subr.mxu0 0.0
  %1194 = vmatpush2.msra.mxu0 0.0
  %1195 = vmatprep.subr.mxu0 0.0
  %1196 = vmatpush2.msra.mxu0 0.0
  %1197 = vmatprep.subr.mxu0 0.0
  %1198 = vmatpush2.msra.mxu0 0.0
  %1199 = vmatprep.subr.mxu0 0.0
  %1200 = vmatpush2.msra.mxu0 0.0
  %1201 = vmatprep.subr.mxu0 0.0
  %1202 = vmatpush2.msra.mxu0 0.0
  %1203 = vmatprep.subr.mxu0 0.0
  %1204 = vmatpush2.msra.mxu0 0.0
  %1205 = vmatprep.subr.mxu0 0.0
  %1206 = vmatpush2.msra.mxu0 0.0
  %1207 = vmatprep.subr.mxu0 0.0
  %1208 = vmatpush2.msra.mxu0 0.0
  %1209 = vmatprep.mubr.f32.mxu0 0.0
  %1210 = vmatmul.mubr.f32.gmra.mxu0 %v1135
  %v1211 = vpop.f32.mrf.mxu0
  %v1212 = vadd.f32 %v1121, %v1211
  %v1213 = vpop.f32.mrf.mxu0
  %1214 = vmatprep.mubr.f32.mxu0 0.0
  %1215 = vmatmul.mubr.f32.gmra.mxu0 %v1138
  %v1216 = vpop.f32.mrf.mxu0
  %v1217 = vadd.f32 %v1126, %v1216
  %v1218 = vpop.f32.mrf.mxu0
  %1219 = vmatprep.mubr.f32.mxu0 0.0
  %1220 = vmatmul.mubr.f32.gmra.mxu0 %v1141
  %v1221 = vpop.f32.mrf.mxu0
  %v1222 = vadd.f32 %v1131, %v1221
  %v1223 = vpop.f32.mrf.mxu0
  %1224 = vdwg.mxu0
  %1225 = vrot.lane.b32.xlu0 %v355, 104
  %v1226 = vpop.permute.xlu0 %1225
  %1227 = vrot.lane.b32.xlu0 %v360, 104
  %v1228 = vpop.permute.xlu0 %1227
  %1229 = vrot.lane.b32.xlu0 %v365, 104
  %v1230 = vpop.permute.xlu0 %1229
  %1231 = vrot.lane.b32.xlu0 %v446, 104
  %v1232 = vpop.permute.xlu0 %1231
  %1233 = vrot.lane.b32.xlu0 %v451, 104
  %v1234 = vpop.permute.xlu0 %1233
  %1235 = vrot.lane.b32.xlu0 %v456, 104
  %v1236 = vpop.permute.xlu0 %1235
  %v1237 = vsel %vm560, %v1226, 0
  %v1239 = vsel %vm560, %v1228, 0
  %v1241 = vsel %vm560, %v1230, 0
  %v1243 = vsel %vm560, %v1232, 0
  %v1245 = vsel %vm560, %v1234, 0
  %v1247 = vsel %vm560, %v1236, 0
  %1249 = vmatprep.subr.mxu0 0.0
  %1250 = vmatpush1.xpose.msra.mxu0 0.0
  %1251 = vmatprep.subr.mxu0 0.0
  %1252 = vmatpush1.xpose.msra.mxu0 0.0
  %1253 = vmatprep.subr.mxu0 0.0
  %1254 = vmatpush1.xpose.msra.mxu0 0.0
  %1255 = vmatprep.subr.mxu0 0.0
  %1256 = vmatpush1.xpose.msra.mxu0 0.0
  %1257 = vmatprep.subr.mxu0 0.0
  %1258 = vmatpush1.xpose.msra.mxu0 0.0
  %1259 = vmatprep.subr.mxu0 0.0
  %1260 = vmatpush1.xpose.msra.mxu0 0.0
  %1261 = vmatprep.subr.mxu0 0.0
  %1262 = vmatpush1.xpose.msra.mxu0 0.0
  %1263 = vmatprep.subr.mxu0 0.0
  %1264 = vmatpush1.xpose.msra.mxu0 0.0
  %1265 = vmatprep.subr.mxu0 0.0
  %1266 = vmatpush1.xpose.msra.mxu0 0.0
  %1267 = vmatprep.subr.mxu0 0.0
  %1268 = vmatpush1.xpose.msra.mxu0 0.0
  %1269 = vmatprep.subr.mxu0 0.0
  %1270 = vmatpush1.xpose.msra.mxu0 0.0
  %1271 = vmatprep.subr.mxu0 0.0
  %1272 = vmatpush1.xpose.msra.mxu0 0.0
  %1273 = vmatprep.subr.mxu0 0.0
  %1274 = vmatpush1.xpose.msra.mxu0 0.0
  %1275 = vmatprep.subr.mxu0 0.0
  %1276 = vmatpush1.xpose.msra.mxu0 %v1247
  %1277 = vmatprep.subr.mxu0 0.0
  %1278 = vmatpush1.xpose.msra.mxu0 %v1245
  %1279 = vmatprep.subr.mxu0 0.0
  %1280 = vmatpush1.xpose.msra.mxu0 %v1243
  %1281 = vmatprep.subr.mxu0 0.0
  %1282 = vmatpush2.xpose.msra.mxu0 0.0
  %1283 = vmatprep.subr.mxu0 0.0
  %1284 = vmatpush2.xpose.msra.mxu0 0.0
  %1285 = vmatprep.subr.mxu0 0.0
  %1286 = vmatpush2.xpose.msra.mxu0 0.0
  %1287 = vmatprep.subr.mxu0 0.0
  %1288 = vmatpush2.xpose.msra.mxu0 0.0
  %1289 = vmatprep.subr.mxu0 0.0
  %1290 = vmatpush2.xpose.msra.mxu0 0.0
  %1291 = vmatprep.subr.mxu0 0.0
  %1292 = vmatpush2.xpose.msra.mxu0 0.0
  %1293 = vmatprep.subr.mxu0 0.0
  %1294 = vmatpush2.xpose.msra.mxu0 0.0
  %1295 = vmatprep.subr.mxu0 0.0
  %1296 = vmatpush2.xpose.msra.mxu0 0.0
  %1297 = vmatprep.subr.mxu0 0.0
  %1298 = vmatpush2.xpose.msra.mxu0 0.0
  %1299 = vmatprep.subr.mxu0 0.0
  %1300 = vmatpush2.xpose.msra.mxu0 0.0
  %1301 = vmatprep.subr.mxu0 0.0
  %1302 = vmatpush2.xpose.msra.mxu0 0.0
  %1303 = vmatprep.subr.mxu0 0.0
  %1304 = vmatpush2.xpose.msra.mxu0 0.0
  %1305 = vmatprep.subr.mxu0 0.0
  %1306 = vmatpush2.xpose.msra.mxu0 0.0
  %1307 = vmatprep.subr.mxu0 0.0
  %1308 = vmatpush2.xpose.msra.mxu0 0.0
  %1309 = vmatprep.subr.mxu0 0.0
  %1310 = vmatpush2.xpose.msra.mxu0 0.0
  %1311 = vmatprep.subr.mxu0 0.0
  %1312 = vmatpush2.xpose.msra.mxu0 0.0
  %1313 = vmatprep.mubr.f32.mxu0 0.0
  %1314 = vmatmul.mubr.f32.gmra.mxu0 %v1237
  %v1315 = vpop.f32.mrf.mxu0
  %v1316 = vadd.f32 0.0, %v1315
  %v1317 = vpop.f32.mrf.mxu0
  %1318 = vmatprep.mubr.f32.mxu0 0.0
  %1319 = vmatmul.mubr.f32.gmra.mxu0 %v1239
  %v1320 = vpop.f32.mrf.mxu0
  %v1321 = vadd.f32 0.0, %v1320
  %v1322 = vpop.f32.mrf.mxu0
  %1323 = vmatprep.mubr.f32.mxu0 0.0
  %1324 = vmatmul.mubr.f32.gmra.mxu0 %v1241
  %v1325 = vpop.f32.mrf.mxu0
  %v1326 = vadd.f32 0.0, %v1325
  %v1327 = vpop.f32.mrf.mxu0
  %1328 = vdwg.mxu0
  %v1329 = vmul.f32 %v1316, 0.28867513
  %v1330 = vmul.f32 %v1321, 0.28867513
  %v1331 = vmul.f32 %v1326, 0.28867513
  %v1332 = vadd.f32 %v1329, %v557
  %v1333 = vadd.f32 %v1330, %v558
  %v1334 = vadd.f32 %v1331, %v559
  %v1335 = vsel %vm665, %v1332, -inf
  %1336 = vmax.xlane.f32.xlu0 %v1335
  %v1337 = vpop.xlane.xlu0 %1336
  %v1338 = vsel %vm665, %v1333, -inf
  %1339 = vmax.xlane.f32.xlu0 %v1338
  %v1340 = vpop.xlane.xlu0 %1339
  %v1341 = vsel %vm672, %v1334, -inf
  %1342 = vmax.xlane.f32.xlu0 %v1341
  %v1343 = vpop.xlane.xlu0 %1342
  %v1344 = vsub.f32 %v1332, %v1337
  %v1345 = vsub.f32 %v1333, %v1340
  %v1346 = vsub.f32 %v1334, %v1343
  %v1347 = vmul.f32 %v1344, 1.442695
  %v1348 = vpow.pop %v1347
  %v1349 = vmul.f32 %v1345, 1.442695
  %v1350 = vpow.pop %v1349
  %v1351 = vmul.f32 %v1346, 1.442695
  %v1352 = vpow.pop %v1351
  %v1353 = vsel %vm665, %v1348, 0.0
  %1354 = vadd.xlane.f32.xlu0 %v1353
  %v1355 = vpop.xlane.xlu0 %1354
  %v1356 = vsel %vm665, %v1350, 0.0
  %1357 = vadd.xlane.f32.xlu0 %v1356
  %v1358 = vpop.xlane.xlu0 %1357
  %v1359 = vsel %vm672, %v1352, 0.0
  %1360 = vadd.xlane.f32.xlu0 %v1359
  %v1361 = vpop.xlane.xlu0 %1360
  %v1362 = vrcp.pop %v1355
  %v1363 = vrcp.pop %v1358
  %v1364 = vrcp.pop %v1361
  %v1365 = vmul.f32 %v1348, %v1362
  %v1366 = vmul.f32 %v1350, %v1363
  %v1367 = vmul.f32 %v1352, %v1364
  %1368 = vrot.lane.b32.xlu0 %v537, 104
  %v1369 = vpop.permute.xlu0 %1368
  %1370 = vrot.lane.b32.xlu0 %v542, 104
  %v1371 = vpop.permute.xlu0 %1370
  %1372 = vrot.lane.b32.xlu0 %v547, 104
  %v1373 = vpop.permute.xlu0 %1372
  %v1377 = vsel %vm665, %v1365, 0
  %v1380 = vsel %vm665, %v1366, 0
  %v1383 = vsel %vm665, %v1367, 0
  %v1385 = vsel %vm709, %v1373, 0
  %1387 = vmatprep.subr.mxu0 0.0
  %1388 = vmatpush1.msra.mxu0 0.0
  %1389 = vmatprep.subr.mxu0 0.0
  %1390 = vmatpush1.msra.mxu0 0.0
  %1391 = vmatprep.subr.mxu0 0.0
  %1392 = vmatpush1.msra.mxu0 0.0
  %1393 = vmatprep.subr.mxu0 0.0
  %1394 = vmatpush1.msra.mxu0 0.0
  %1395 = vmatprep.subr.mxu0 0.0
  %1396 = vmatpush1.msra.mxu0 0.0
  %1397 = vmatprep.subr.mxu0 0.0
  %1398 = vmatpush1.msra.mxu0 0.0
  %1399 = vmatprep.subr.mxu0 0.0
  %1400 = vmatpush1.msra.mxu0 0.0
  %1401 = vmatprep.subr.mxu0 0.0
  %1402 = vmatpush1.msra.mxu0 0.0
  %1403 = vmatprep.subr.mxu0 0.0
  %1404 = vmatpush1.msra.mxu0 0.0
  %1405 = vmatprep.subr.mxu0 0.0
  %1406 = vmatpush1.msra.mxu0 0.0
  %1407 = vmatprep.subr.mxu0 0.0
  %1408 = vmatpush1.msra.mxu0 0.0
  %1409 = vmatprep.subr.mxu0 0.0
  %1410 = vmatpush1.msra.mxu0 0.0
  %1411 = vmatprep.subr.mxu0 0.0
  %1412 = vmatpush1.msra.mxu0 0.0
  %1413 = vmatprep.subr.mxu0 0.0
  %1414 = vmatpush1.msra.mxu0 %v1385
  %1415 = vmatprep.subr.mxu0 0.0
  %1416 = vmatpush1.msra.mxu0 %v1371
  %1417 = vmatprep.subr.mxu0 0.0
  %1418 = vmatpush1.msra.mxu0 %v1369
  %1419 = vmatprep.subr.mxu0 0.0
  %1420 = vmatpush2.msra.mxu0 0.0
  %1421 = vmatprep.subr.mxu0 0.0
  %1422 = vmatpush2.msra.mxu0 0.0
  %1423 = vmatprep.subr.mxu0 0.0
  %1424 = vmatpush2.msra.mxu0 0.0
  %1425 = vmatprep.subr.mxu0 0.0
  %1426 = vmatpush2.msra.mxu0 0.0
  %1427 = vmatprep.subr.mxu0 0.0
  %1428 = vmatpush2.msra.mxu0 0.0
  %1429 = vmatprep.subr.mxu0 0.0
  %1430 = vmatpush2.msra.mxu0 0.0
  %1431 = vmatprep.subr.mxu0 0.0
  %1432 = vmatpush2.msra.mxu0 0.0
  %1433 = vmatprep.subr.mxu0 0.0
  %1434 = vmatpush2.msra.mxu0 0.0
  %1435 = vmatprep.subr.mxu0 0.0
  %1436 = vmatpush2.msra.mxu0 0.0
  %1437 = vmatprep.subr.mxu0 0.0
  %1438 = vmatpush2.msra.mxu0 0.0
  %1439 = vmatprep.subr.mxu0 0.0
  %1440 = vmatpush2.msra.mxu0 0.0
  %1441 = vmatprep.subr.mxu0 0.0
  %1442 = vmatpush2.msra.mxu0 0.0
  %1443 = vmatprep.subr.mxu0 0.0
  %1444 = vmatpush2.msra.mxu0 0.0
  %1445 = vmatprep.subr.mxu0 0.0
  %1446 = vmatpush2.msra.mxu0 0.0
  %1447 = vmatprep.subr.mxu0 0.0
  %1448 = vmatpush2.msra.mxu0 0.0
  %1449 = vmatprep.subr.mxu0 0.0
  %1450 = vmatpush2.msra.mxu0 0.0
  %1451 = vmatprep.mubr.f32.mxu0 0.0
  %1452 = vmatmul.mubr.f32.gmra.mxu0 %v1377
  %v1453 = vpop.f32.mrf.mxu0
  %v1454 = vadd.f32 0.0, %v1453
  %v1455 = vpop.f32.mrf.mxu0
  %1456 = vmatprep.mubr.f32.mxu0 0.0
  %1457 = vmatmul.mubr.f32.gmra.mxu0 %v1380
  %v1458 = vpop.f32.mrf.mxu0
  %v1459 = vadd.f32 0.0, %v1458
  %v1460 = vpop.f32.mrf.mxu0
  %1461 = vmatprep.mubr.f32.mxu0 0.0
  %1462 = vmatmul.mubr.f32.gmra.mxu0 %v1383
  %v1463 = vpop.f32.mrf.mxu0
  %v1464 = vadd.f32 0.0, %v1463
  %v1465 = vpop.f32.mrf.mxu0
  %1466 = vdwg.mxu0
  %v1468 = vsel %vm560, %v1454, 0
  %v1471 = vsel %vm560, %v1459, 0
  %v1474 = vsel %vm560, %v1464, 0
  %v1477 = vsel %vm709, %v554, 0
  %1479 = vmatprep.subr.mxu0 0.0
  %1480 = vmatpush1.msra.mxu0 0.0
  %1481 = vmatprep.subr.mxu0 0.0
  %1482 = vmatpush1.msra.mxu0 0.0
  %1483 = vmatprep.subr.mxu0 0.0
  %1484 = vmatpush1.msra.mxu0 0.0
  %1485 = vmatprep.subr.mxu0 0.0
  %1486 = vmatpush1.msra.mxu0 0.0
  %1487 = vmatprep.subr.mxu0 0.0
  %1488 = vmatpush1.msra.mxu0 0.0
  %1489 = vmatprep.subr.mxu0 0.0
  %1490 = vmatpush1.msra.mxu0 0.0
  %1491 = vmatprep.subr.mxu0 0.0
  %1492 = vmatpush1.msra.mxu0 0.0
  %1493 = vmatprep.subr.mxu0 0.0
  %1494 = vmatpush1.msra.mxu0 0.0
  %1495 = vmatprep.subr.mxu0 0.0
  %1496 = vmatpush1.msra.mxu0 0.0
  %1497 = vmatprep.subr.mxu0 0.0
  %1498 = vmatpush1.msra.mxu0 0.0
  %1499 = vmatprep.subr.mxu0 0.0
  %1500 = vmatpush1.msra.mxu0 0.0
  %1501 = vmatprep.subr.mxu0 0.0
  %1502 = vmatpush1.msra.mxu0 0.0
  %1503 = vmatprep.subr.mxu0 0.0
  %1504 = vmatpush1.msra.mxu0 0.0
  %1505 = vmatprep.subr.mxu0 0.0
  %1506 = vmatpush1.msra.mxu0 0.0
  %1507 = vmatprep.subr.mxu0 0.0
  %1508 = vmatpush1.msra.mxu0 %v1477
  %1509 = vmatprep.subr.mxu0 0.0
  %1510 = vmatpush1.msra.mxu0 %v553
  %1511 = vmatprep.subr.mxu0 0.0
  %1512 = vmatpush2.msra.mxu0 0.0
  %1513 = vmatprep.subr.mxu0 0.0
  %1514 = vmatpush2.msra.mxu0 0.0
  %1515 = vmatprep.subr.mxu0 0.0
  %1516 = vmatpush2.msra.mxu0 0.0
  %1517 = vmatprep.subr.mxu0 0.0
  %1518 = vmatpush2.msra.mxu0 0.0
  %1519 = vmatprep.subr.mxu0 0.0
  %1520 = vmatpush2.msra.mxu0 0.0
  %1521 = vmatprep.subr.mxu0 0.0
  %1522 = vmatpush2.msra.mxu0 0.0
  %1523 = vmatprep.subr.mxu0 0.0
  %1524 = vmatpush2.msra.mxu0 0.0
  %1525 = vmatprep.subr.mxu0 0.0
  %1526 = vmatpush2.msra.mxu0 0.0
  %1527 = vmatprep.subr.mxu0 0.0
  %1528 = vmatpush2.msra.mxu0 0.0
  %1529 = vmatprep.subr.mxu0 0.0
  %1530 = vmatpush2.msra.mxu0 0.0
  %1531 = vmatprep.subr.mxu0 0.0
  %1532 = vmatpush2.msra.mxu0 0.0
  %1533 = vmatprep.subr.mxu0 0.0
  %1534 = vmatpush2.msra.mxu0 0.0
  %1535 = vmatprep.subr.mxu0 0.0
  %1536 = vmatpush2.msra.mxu0 0.0
  %1537 = vmatprep.subr.mxu0 0.0
  %1538 = vmatpush2.msra.mxu0 0.0
  %1539 = vmatprep.subr.mxu0 0.0
  %1540 = vmatpush2.msra.mxu0 0.0
  %1541 = vmatprep.subr.mxu0 0.0
  %1542 = vmatpush2.msra.mxu0 0.0
  %1543 = vmatprep.mubr.f32.mxu0 0.0
  %1544 = vmatmul.mubr.f32.gmra.mxu0 %v1468
  %v1545 = vpop.f32.mrf.mxu0
  %v1546 = vadd.f32 0.0, %v1545
  %v1547 = vpop.f32.mrf.mxu0
  %1548 = vmatprep.mubr.f32.mxu0 0.0
  %1549 = vmatmul.mubr.f32.gmra.mxu0 %v1471
  %v1550 = vpop.f32.mrf.mxu0
  %v1551 = vadd.f32 0.0, %v1550
  %v1552 = vpop.f32.mrf.mxu0
  %1553 = vmatprep.mubr.f32.mxu0 0.0
  %1554 = vmatmul.mubr.f32.gmra.mxu0 %v1474
  %v1555 = vpop.f32.mrf.mxu0
  %v1556 = vadd.f32 0.0, %v1555
  %v1557 = vpop.f32.mrf.mxu0
  %1558 = vdwg.mxu0
  %v1559 = vadd.f32 %v1212, %v1546
  %v1560 = vadd.f32 %v1217, %v1551
  %v1561 = vadd.f32 %v1222, %v1556
  %1562 = vrot.lane.b32.xlu0 %v355, 92
  %v1563 = vpop.permute.xlu0 %1562
  %1564 = vrot.lane.b32.xlu0 %v360, 92
  %v1565 = vpop.permute.xlu0 %1564
  %1566 = vrot.lane.b32.xlu0 %v365, 92
  %v1567 = vpop.permute.xlu0 %1566
  %1568 = vrot.lane.b32.xlu0 %v446, 92
  %v1569 = vpop.permute.xlu0 %1568
  %1570 = vrot.lane.b32.xlu0 %v451, 92
  %v1571 = vpop.permute.xlu0 %1570
  %1572 = vrot.lane.b32.xlu0 %v456, 92
  %v1573 = vpop.permute.xlu0 %1572
  %v1574 = vsel %vm560, %v1563, 0
  %v1576 = vsel %vm560, %v1565, 0
  %v1578 = vsel %vm560, %v1567, 0
  %v1580 = vsel %vm560, %v1569, 0
  %v1582 = vsel %vm560, %v1571, 0
  %v1584 = vsel %vm560, %v1573, 0
  %1586 = vmatprep.subr.mxu0 0.0
  %1587 = vmatpush1.xpose.msra.mxu0 0.0
  %1588 = vmatprep.subr.mxu0 0.0
  %1589 = vmatpush1.xpose.msra.mxu0 0.0
  %1590 = vmatprep.subr.mxu0 0.0
  %1591 = vmatpush1.xpose.msra.mxu0 0.0
  %1592 = vmatprep.subr.mxu0 0.0
  %1593 = vmatpush1.xpose.msra.mxu0 0.0
  %1594 = vmatprep.subr.mxu0 0.0
  %1595 = vmatpush1.xpose.msra.mxu0 0.0
  %1596 = vmatprep.subr.mxu0 0.0
  %1597 = vmatpush1.xpose.msra.mxu0 0.0
  %1598 = vmatprep.subr.mxu0 0.0
  %1599 = vmatpush1.xpose.msra.mxu0 0.0
  %1600 = vmatprep.subr.mxu0 0.0
  %1601 = vmatpush1.xpose.msra.mxu0 0.0
  %1602 = vmatprep.subr.mxu0 0.0
  %1603 = vmatpush1.xpose.msra.mxu0 0.0
  %1604 = vmatprep.subr.mxu0 0.0
  %1605 = vmatpush1.xpose.msra.mxu0 0.0
  %1606 = vmatprep.subr.mxu0 0.0
  %1607 = vmatpush1.xpose.msra.mxu0 0.0
  %1608 = vmatprep.subr.mxu0 0.0
  %1609 = vmatpush1.xpose.msra.mxu0 0.0
  %1610 = vmatprep.subr.mxu0 0.0
  %1611 = vmatpush1.xpose.msra.mxu0 0.0
  %1612 = vmatprep.subr.mxu0 0.0
  %1613 = vmatpush1.xpose.msra.mxu0 %v1584
  %1614 = vmatprep.subr.mxu0 0.0
  %1615 = vmatpush1.xpose.msra.mxu0 %v1582
  %1616 = vmatprep.subr.mxu0 0.0
  %1617 = vmatpush1.xpose.msra.mxu0 %v1580
  %1618 = vmatprep.subr.mxu0 0.0
  %1619 = vmatpush2.xpose.msra.mxu0 0.0
  %1620 = vmatprep.subr.mxu0 0.0
  %1621 = vmatpush2.xpose.msra.mxu0 0.0
  %1622 = vmatprep.subr.mxu0 0.0
  %1623 = vmatpush2.xpose.msra.mxu0 0.0
  %1624 = vmatprep.subr.mxu0 0.0
  %1625 = vmatpush2.xpose.msra.mxu0 0.0
  %1626 = vmatprep.subr.mxu0 0.0
  %1627 = vmatpush2.xpose.msra.mxu0 0.0
  %1628 = vmatprep.subr.mxu0 0.0
  %1629 = vmatpush2.xpose.msra.mxu0 0.0
  %1630 = vmatprep.subr.mxu0 0.0
  %1631 = vmatpush2.xpose.msra.mxu0 0.0
  %1632 = vmatprep.subr.mxu0 0.0
  %1633 = vmatpush2.xpose.msra.mxu0 0.0
  %1634 = vmatprep.subr.mxu0 0.0
  %1635 = vmatpush2.xpose.msra.mxu0 0.0
  %1636 = vmatprep.subr.mxu0 0.0
  %1637 = vmatpush2.xpose.msra.mxu0 0.0
  %1638 = vmatprep.subr.mxu0 0.0
  %1639 = vmatpush2.xpose.msra.mxu0 0.0
  %1640 = vmatprep.subr.mxu0 0.0
  %1641 = vmatpush2.xpose.msra.mxu0 0.0
  %1642 = vmatprep.subr.mxu0 0.0
  %1643 = vmatpush2.xpose.msra.mxu0 0.0
  %1644 = vmatprep.subr.mxu0 0.0
  %1645 = vmatpush2.xpose.msra.mxu0 0.0
  %1646 = vmatprep.subr.mxu0 0.0
  %1647 = vmatpush2.xpose.msra.mxu0 0.0
  %1648 = vmatprep.subr.mxu0 0.0
  %1649 = vmatpush2.xpose.msra.mxu0 0.0
  %1650 = vmatprep.mubr.f32.mxu0 0.0
  %1651 = vmatmul.mubr.f32.gmra.mxu0 %v1574
  %v1652 = vpop.f32.mrf.mxu0
  %v1653 = vadd.f32 0.0, %v1652
  %v1654 = vpop.f32.mrf.mxu0
  %1655 = vmatprep.mubr.f32.mxu0 0.0
  %1656 = vmatmul.mubr.f32.gmra.mxu0 %v1576
  %v1657 = vpop.f32.mrf.mxu0
  %v1658 = vadd.f32 0.0, %v1657
  %v1659 = vpop.f32.mrf.mxu0
  %1660 = vmatprep.mubr.f32.mxu0 0.0
  %1661 = vmatmul.mubr.f32.gmra.mxu0 %v1578
  %v1662 = vpop.f32.mrf.mxu0
  %v1663 = vadd.f32 0.0, %v1662
  %v1664 = vpop.f32.mrf.mxu0
  %1665 = vdwg.mxu0
  %v1666 = vmul.f32 %v1653, 0.28867513
  %v1667 = vmul.f32 %v1658, 0.28867513
  %v1668 = vmul.f32 %v1663, 0.28867513
  %v1669 = vadd.f32 %v1666, %v557
  %v1670 = vadd.f32 %v1667, %v558
  %v1671 = vadd.f32 %v1668, %v559
  %v1672 = vsel %vm665, %v1669, -inf
  %1673 = vmax.xlane.f32.xlu0 %v1672
  %v1674 = vpop.xlane.xlu0 %1673
  %v1675 = vsel %vm665, %v1670, -inf
  %1676 = vmax.xlane.f32.xlu0 %v1675
  %v1677 = vpop.xlane.xlu0 %1676
  %v1678 = vsel %vm672, %v1671, -inf
  %1679 = vmax.xlane.f32.xlu0 %v1678
  %v1680 = vpop.xlane.xlu0 %1679
  %v1681 = vsub.f32 %v1669, %v1674
  %v1682 = vsub.f32 %v1670, %v1677
  %v1683 = vsub.f32 %v1671, %v1680
  %v1684 = vmul.f32 %v1681, 1.442695
  %v1685 = vpow.pop %v1684
  %v1686 = vmul.f32 %v1682, 1.442695
  %v1687 = vpow.pop %v1686
  %v1688 = vmul.f32 %v1683, 1.442695
  %v1689 = vpow.pop %v1688
  %v1690 = vsel %vm665, %v1685, 0.0
  %1691 = vadd.xlane.f32.xlu0 %v1690
  %v1692 = vpop.xlane.xlu0 %1691
  %v1693 = vsel %vm665, %v1687, 0.0
  %1694 = vadd.xlane.f32.xlu0 %v1693
  %v1695 = vpop.xlane.xlu0 %1694
  %v1696 = vsel %vm672, %v1689, 0.0
  %1697 = vadd.xlane.f32.xlu0 %v1696
  %v1698 = vpop.xlane.xlu0 %1697
  %v1699 = vrcp.pop %v1692
  %v1700 = vrcp.pop %v1695
  %v1701 = vrcp.pop %v1698
  %v1702 = vmul.f32 %v1685, %v1699
  %v1703 = vmul.f32 %v1687, %v1700
  %v1704 = vmul.f32 %v1689, %v1701
  %1705 = vrot.lane.b32.xlu0 %v537, 92
  %v1706 = vpop.permute.xlu0 %1705
  %1707 = vrot.lane.b32.xlu0 %v542, 92
  %v1708 = vpop.permute.xlu0 %1707
  %1709 = vrot.lane.b32.xlu0 %v547, 92
  %v1710 = vpop.permute.xlu0 %1709
  %v1714 = vsel %vm665, %v1702, 0
  %v1717 = vsel %vm665, %v1703, 0
  %v1720 = vsel %vm665, %v1704, 0
  %v1722 = vsel %vm709, %v1710, 0
  %1724 = vmatprep.subr.mxu0 0.0
  %1725 = vmatpush1.msra.mxu0 0.0
  %1726 = vmatprep.subr.mxu0 0.0
  %1727 = vmatpush1.msra.mxu0 0.0
  %1728 = vmatprep.subr.mxu0 0.0
  %1729 = vmatpush1.msra.mxu0 0.0
  %1730 = vmatprep.subr.mxu0 0.0
  %1731 = vmatpush1.msra.mxu0 0.0
  %1732 = vmatprep.subr.mxu0 0.0
  %1733 = vmatpush1.msra.mxu0 0.0
  %1734 = vmatprep.subr.mxu0 0.0
  %1735 = vmatpush1.msra.mxu0 0.0
  %1736 = vmatprep.subr.mxu0 0.0
  %1737 = vmatpush1.msra.mxu0 0.0
  %1738 = vmatprep.subr.mxu0 0.0
  %1739 = vmatpush1.msra.mxu0 0.0
  %1740 = vmatprep.subr.mxu0 0.0
  %1741 = vmatpush1.msra.mxu0 0.0
  %1742 = vmatprep.subr.mxu0 0.0
  %1743 = vmatpush1.msra.mxu0 0.0
  %1744 = vmatprep.subr.mxu0 0.0
  %1745 = vmatpush1.msra.mxu0 0.0
  %1746 = vmatprep.subr.mxu0 0.0
  %1747 = vmatpush1.msra.mxu0 0.0
  %1748 = vmatprep.subr.mxu0 0.0
  %1749 = vmatpush1.msra.mxu0 0.0
  %1750 = vmatprep.subr.mxu0 0.0
  %1751 = vmatpush1.msra.mxu0 %v1722
  %1752 = vmatprep.subr.mxu0 0.0
  %1753 = vmatpush1.msra.mxu0 %v1708
  %1754 = vmatprep.subr.mxu0 0.0
  %1755 = vmatpush1.msra.mxu0 %v1706
  %1756 = vmatprep.subr.mxu0 0.0
  %1757 = vmatpush2.msra.mxu0 0.0
  %1758 = vmatprep.subr.mxu0 0.0
  %1759 = vmatpush2.msra.mxu0 0.0
  %1760 = vmatprep.subr.mxu0 0.0
  %1761 = vmatpush2.msra.mxu0 0.0
  %1762 = vmatprep.subr.mxu0 0.0
  %1763 = vmatpush2.msra.mxu0 0.0
  %1764 = vmatprep.subr.mxu0 0.0
  %1765 = vmatpush2.msra.mxu0 0.0
  %1766 = vmatprep.subr.mxu0 0.0
  %1767 = vmatpush2.msra.mxu0 0.0
  %1768 = vmatprep.subr.mxu0 0.0
  %1769 = vmatpush2.msra.mxu0 0.0
  %1770 = vmatprep.subr.mxu0 0.0
  %1771 = vmatpush2.msra.mxu0 0.0
  %1772 = vmatprep.subr.mxu0 0.0
  %1773 = vmatpush2.msra.mxu0 0.0
  %1774 = vmatprep.subr.mxu0 0.0
  %1775 = vmatpush2.msra.mxu0 0.0
  %1776 = vmatprep.subr.mxu0 0.0
  %1777 = vmatpush2.msra.mxu0 0.0
  %1778 = vmatprep.subr.mxu0 0.0
  %1779 = vmatpush2.msra.mxu0 0.0
  %1780 = vmatprep.subr.mxu0 0.0
  %1781 = vmatpush2.msra.mxu0 0.0
  %1782 = vmatprep.subr.mxu0 0.0
  %1783 = vmatpush2.msra.mxu0 0.0
  %1784 = vmatprep.subr.mxu0 0.0
  %1785 = vmatpush2.msra.mxu0 0.0
  %1786 = vmatprep.subr.mxu0 0.0
  %1787 = vmatpush2.msra.mxu0 0.0
  %1788 = vmatprep.mubr.f32.mxu0 0.0
  %1789 = vmatmul.mubr.f32.gmra.mxu0 %v1714
  %v1790 = vpop.f32.mrf.mxu0
  %v1791 = vadd.f32 0.0, %v1790
  %v1792 = vpop.f32.mrf.mxu0
  %1793 = vmatprep.mubr.f32.mxu0 0.0
  %1794 = vmatmul.mubr.f32.gmra.mxu0 %v1717
  %v1795 = vpop.f32.mrf.mxu0
  %v1796 = vadd.f32 0.0, %v1795
  %v1797 = vpop.f32.mrf.mxu0
  %1798 = vmatprep.mubr.f32.mxu0 0.0
  %1799 = vmatmul.mubr.f32.gmra.mxu0 %v1720
  %v1800 = vpop.f32.mrf.mxu0
  %v1801 = vadd.f32 0.0, %v1800
  %v1802 = vpop.f32.mrf.mxu0
  %1803 = vdwg.mxu0
  %v1805 = vrot.slane %v554, 4
  %v1806 = vrot.slane %v555, 4
  %v1807 = vsel %vm709, %v1805, %v1806
  %v1810 = vsel %vm560, %v1791, 0
  %v1813 = vsel %vm560, %v1796, 0
  %v1816 = vsel %vm560, %v1801, 0
  %v1818 = vsel %vm709, %v1806, 0
  %1820 = vmatprep.subr.mxu0 0.0
  %1821 = vmatpush1.msra.mxu0 0.0
  %1822 = vmatprep.subr.mxu0 0.0
  %1823 = vmatpush1.msra.mxu0 0.0
  %1824 = vmatprep.subr.mxu0 0.0
  %1825 = vmatpush1.msra.mxu0 0.0
  %1826 = vmatprep.subr.mxu0 0.0
  %1827 = vmatpush1.msra.mxu0 0.0
  %1828 = vmatprep.subr.mxu0 0.0
  %1829 = vmatpush1.msra.mxu0 0.0
  %1830 = vmatprep.subr.mxu0 0.0
  %1831 = vmatpush1.msra.mxu0 0.0
  %1832 = vmatprep.subr.mxu0 0.0
  %1833 = vmatpush1.msra.mxu0 0.0
  %1834 = vmatprep.subr.mxu0 0.0
  %1835 = vmatpush1.msra.mxu0 0.0
  %1836 = vmatprep.subr.mxu0 0.0
  %1837 = vmatpush1.msra.mxu0 0.0
  %1838 = vmatprep.subr.mxu0 0.0
  %1839 = vmatpush1.msra.mxu0 0.0
  %1840 = vmatprep.subr.mxu0 0.0
  %1841 = vmatpush1.msra.mxu0 0.0
  %1842 = vmatprep.subr.mxu0 0.0
  %1843 = vmatpush1.msra.mxu0 0.0
  %1844 = vmatprep.subr.mxu0 0.0
  %1845 = vmatpush1.msra.mxu0 0.0
  %1846 = vmatprep.subr.mxu0 0.0
  %1847 = vmatpush1.msra.mxu0 0.0
  %1848 = vmatprep.subr.mxu0 0.0
  %1849 = vmatpush1.msra.mxu0 %v1818
  %1850 = vmatprep.subr.mxu0 0.0
  %1851 = vmatpush1.msra.mxu0 %v1807
  %1852 = vmatprep.subr.mxu0 0.0
  %1853 = vmatpush2.msra.mxu0 0.0
  %1854 = vmatprep.subr.mxu0 0.0
  %1855 = vmatpush2.msra.mxu0 0.0
  %1856 = vmatprep.subr.mxu0 0.0
  %1857 = vmatpush2.msra.mxu0 0.0
  %1858 = vmatprep.subr.mxu0 0.0
  %1859 = vmatpush2.msra.mxu0 0.0
  %1860 = vmatprep.subr.mxu0 0.0
  %1861 = vmatpush2.msra.mxu0 0.0
  %1862 = vmatprep.subr.mxu0 0.0
  %1863 = vmatpush2.msra.mxu0 0.0
  %1864 = vmatprep.subr.mxu0 0.0
  %1865 = vmatpush2.msra.mxu0 0.0
  %1866 = vmatprep.subr.mxu0 0.0
  %1867 = vmatpush2.msra.mxu0 0.0
  %1868 = vmatprep.subr.mxu0 0.0
  %1869 = vmatpush2.msra.mxu0 0.0
  %1870 = vmatprep.subr.mxu0 0.0
  %1871 = vmatpush2.msra.mxu0 0.0
  %1872 = vmatprep.subr.mxu0 0.0
  %1873 = vmatpush2.msra.mxu0 0.0
  %1874 = vmatprep.subr.mxu0 0.0
  %1875 = vmatpush2.msra.mxu0 0.0
  %1876 = vmatprep.subr.mxu0 0.0
  %1877 = vmatpush2.msra.mxu0 0.0
  %1878 = vmatprep.subr.mxu0 0.0
  %1879 = vmatpush2.msra.mxu0 0.0
  %1880 = vmatprep.subr.mxu0 0.0
  %1881 = vmatpush2.msra.mxu0 0.0
  %1882 = vmatprep.subr.mxu0 0.0
  %1883 = vmatpush2.msra.mxu0 0.0
  %1884 = vmatprep.mubr.f32.mxu0 0.0
  %1885 = vmatmul.mubr.f32.gmra.mxu0 %v1810
  %v1886 = vpop.f32.mrf.mxu0
  %v1887 = vadd.f32 0.0, %v1886
  %v1888 = vpop.f32.mrf.mxu0
  %1889 = vmatprep.mubr.f32.mxu0 0.0
  %1890 = vmatmul.mubr.f32.gmra.mxu0 %v1813
  %v1891 = vpop.f32.mrf.mxu0
  %v1892 = vadd.f32 0.0, %v1891
  %v1893 = vpop.f32.mrf.mxu0
  %1894 = vmatprep.mubr.f32.mxu0 0.0
  %1895 = vmatmul.mubr.f32.gmra.mxu0 %v1816
  %v1896 = vpop.f32.mrf.mxu0
  %v1897 = vadd.f32 0.0, %v1896
  %v1898 = vpop.f32.mrf.mxu0
  %1899 = vdwg.mxu0
  %v1900 = vadd.f32 %v1559, %v1887
  %v1901 = vadd.f32 %v1560, %v1892
  %v1902 = vadd.f32 %v1561, %v1897
  %v1903 = vlaneseq
  %v1904 = vshrl.u32 %v1903, 7
  %v1905 = vsub.s32 0, %v1904
  %v1906 = vrot.slane %v556, %v1905
  %v1907 = vadd.f32 %v1900, %v1906
  %v1908 = vadd.f32 %v1901, %v1906
  %v1909 = vadd.f32 %v1902, %v1906
  %v1910 = vadd.f32 %v210, %v1907
  %v1911 = vadd.f32 %v211, %v1908
  %v1912 = vadd.f32 %v212, %v1909
  %v1913 = vld [vmem:[%s8 + $0x8] sm:$0x1]
  %v1914 = vld [vmem:[%s8 + $0x9] sm:$0x1]
  %v1915 = vsel %vm157, %v1910, 0.0
  %1916 = vadd.xlane.f32.xlu0 %v1915
  %v1917 = vpop.xlane.xlu0 %1916
  %v1918 = vsel %vm157, %v1911, 0.0
  %1919 = vadd.xlane.f32.xlu0 %v1918
  %v1920 = vpop.xlane.xlu0 %1919
  %v1921 = vsel %vm164, %v1912, 0.0
  %1922 = vadd.xlane.f32.xlu0 %v1921
  %v1923 = vpop.xlane.xlu0 %1922
  %v1924 = vmul.f32 %v1917, %v168
  %v1925 = vmul.f32 %v1920, %v168
  %v1926 = vmul.f32 %v1923, %v168
  %v1927 = vsub.f32 %v1910, %v1924
  %v1928 = vsub.f32 %v1911, %v1925
  %v1929 = vsub.f32 %v1912, %v1926
  %v1930 = vmul.f32 %v1927, %v1927
  %v1931 = vmul.f32 %v1928, %v1928
  %v1932 = vmul.f32 %v1929, %v1929
  %v1933 = vsel %vm157, %v1930, 0.0
  %1934 = vadd.xlane.f32.xlu0 %v1933
  %v1935 = vpop.xlane.xlu0 %1934
  %v1936 = vsel %vm157, %v1931, 0.0
  %1937 = vadd.xlane.f32.xlu0 %v1936
  %v1938 = vpop.xlane.xlu0 %1937
  %v1939 = vsel %vm164, %v1932, 0.0
  %1940 = vadd.xlane.f32.xlu0 %v1939
  %v1941 = vpop.xlane.xlu0 %1940
  %v1942 = vmul.f32 %v1935, %v168
  %v1943 = vmul.f32 %v1938, %v168
  %v1944 = vmul.f32 %v1941, %v168
  %v1945 = vadd.f32 %v1942, 1e-05
  %v1946 = vadd.f32 %v1943, 1e-05
  %v1947 = vadd.f32 %v1944, 1e-05
  %v1948 = vrsqrt.pop %v1945
  %v1949 = vrsqrt.pop %v1946
  %v1950 = vrsqrt.pop %v1947
  %v1951 = vmul.f32 %v1927, %v1948
  %v1952 = vmul.f32 %v1928, %v1949
  %v1953 = vmul.f32 %v1929, %v1950
  %v1954 = vlaneseq
  %v1955 = vshrl.u32 %v1954, 7
  %v1956 = vsub.s32 0, %v1955
  %v1957 = vrot.slane %v1913, %v1956
  %v1958 = vmul.f32 %v1951, %v1957
  %v1959 = vmul.f32 %v1952, %v1957
  %v1960 = vmul.f32 %v1953, %v1957
  %v1961 = vlaneseq
  %v1962 = vshrl.u32 %v1961, 7
  %v1963 = vsub.s32 0, %v1962
  %v1964 = vrot.slane %v1914, %v1963
  %v1965 = vadd.f32 %v1958, %v1964
  %v1966 = vadd.f32 %v1959, %v1964
  %v1967 = vadd.f32 %v1960, %v1964
  %v1968 = vld [vmem:[%s7 + $0x180] sm:$0xff]
  %v1969 = vld [vmem:[%s7 + $0x188] sm:$0xff]
  %v1970 = vld [vmem:[%s7 + $0x190] sm:$0xff]
  %v1971 = vld [vmem:[%s7 + $0x198] sm:$0xff]
  %v1972 = vld [vmem:[%s7 + $0x1a0] sm:$0xff]
  %v1973 = vld [vmem:[%s7 + $0x1a8] sm:$0xff]
  %v1974 = vld [vmem:[%s8 + $0xa] sm:$0x1]
  %v1975 = vld [vmem:[%s7 + $0x1b0] sm:$0xff]
  %v1976 = vld [vmem:[%s7 + $0x1b8] sm:$0xff]
  %v1977 = vld [vmem:[%s7 + $0x1c0] sm:$0xff]
  %v1978 = vld [vmem:[%s7 + $0x1c8] sm:$0xff]
  %v1979 = vld [vmem:[%s7 + $0x1d0] sm:$0xff]
  %v1980 = vld [vmem:[%s7 + $0x1d8] sm:$0xff]
  %v1981 = vld [vmem:[%s7 + $0x1e0] sm:$0xff]
  %v1982 = vld [vmem:[%s7 + $0x1e8] sm:$0xff]
  %v1983 = vld [vmem:[%s7 + $0x1f0] sm:$0xff]
  %v1984 = vld [vmem:[%s7 + $0x1f8] sm:$0xff]
  %v1985 = vld [vmem:[%s7 + $0x200] sm:$0xff]
  %v1986 = vld [vmem:[%s7 + $0x208] sm:$0xff]
  %v1987 = vld [vmem:[%s8 + $0xb] sm:$0x1]
  %v1988 = vlaneseq
  %v1989 = vshrl.u32 %v1988, 7
  %v1990 = vsub.s32 0, %v1989
  %v1991 = vrot.slane %v1974, %v1990
  %v1993 = vsel %vm157, %v1965, 0
  %v1996 = vsel %vm157, %v1966, 0
  %v1999 = vsel %vm157, %v1967, 0
  %2001 = vmatprep.subr.mxu0 0.0
  %2002 = vmatpush1.msra.mxu0 0.0
  %2003 = vmatprep.subr.mxu0 0.0
  %2004 = vmatpush1.msra.mxu0 0.0
  %2005 = vmatprep.subr.mxu0 0.0
  %2006 = vmatpush1.msra.mxu0 0.0
  %2007 = vmatprep.subr.mxu0 0.0
  %2008 = vmatpush1.msra.mxu0 0.0
  %2009 = vmatprep.subr.mxu0 0.0
  %2010 = vmatpush1.msra.mxu0 0.0
  %2011 = vmatprep.subr.mxu0 0.0
  %2012 = vmatpush1.msra.mxu0 0.0
  %2013 = vmatprep.subr.mxu0 0.0
  %2014 = vmatpush1.msra.mxu0 0.0
  %2015 = vmatprep.subr.mxu0 0.0
  %2016 = vmatpush1.msra.mxu0 0.0
  %2017 = vmatprep.subr.mxu0 0.0
  %2018 = vmatpush1.msra.mxu0 0.0
  %2019 = vmatprep.subr.mxu0 0.0
  %2020 = vmatpush1.msra.mxu0 0.0
  %2021 = vmatprep.subr.mxu0 0.0
  %2022 = vmatpush1.msra.mxu0 %v1973
  %2023 = vmatprep.subr.mxu0 0.0
  %2024 = vmatpush1.msra.mxu0 %v1972
  %2025 = vmatprep.subr.mxu0 0.0
  %2026 = vmatpush1.msra.mxu0 %v1971
  %2027 = vmatprep.subr.mxu0 0.0
  %2028 = vmatpush1.msra.mxu0 %v1970
  %2029 = vmatprep.subr.mxu0 0.0
  %2030 = vmatpush1.msra.mxu0 %v1969
  %2031 = vmatprep.subr.mxu0 0.0
  %2032 = vmatpush1.msra.mxu0 %v1968
  %2033 = vmatprep.subr.mxu0 0.0
  %2034 = vmatpush2.msra.mxu0 0.0
  %2035 = vmatprep.subr.mxu0 0.0
  %2036 = vmatpush2.msra.mxu0 0.0
  %2037 = vmatprep.subr.mxu0 0.0
  %2038 = vmatpush2.msra.mxu0 0.0
  %2039 = vmatprep.subr.mxu0 0.0
  %2040 = vmatpush2.msra.mxu0 0.0
  %2041 = vmatprep.subr.mxu0 0.0
  %2042 = vmatpush2.msra.mxu0 0.0
  %2043 = vmatprep.subr.mxu0 0.0
  %2044 = vmatpush2.msra.mxu0 0.0
  %2045 = vmatprep.subr.mxu0 0.0
  %2046 = vmatpush2.msra.mxu0 0.0
  %2047 = vmatprep.subr.mxu0 0.0
  %2048 = vmatpush2.msra.mxu0 0.0
  %2049 = vmatprep.subr.mxu0 0.0
  %2050 = vmatpush2.msra.mxu0 0.0
  %2051 = vmatprep.subr.mxu0 0.0
  %2052 = vmatpush2.msra.mxu0 0.0
  %2053 = vmatprep.subr.mxu0 0.0
  %2054 = vmatpush2.msra.mxu0 0.0
  %2055 = vmatprep.subr.mxu0 0.0
  %2056 = vmatpush2.msra.mxu0 0.0
  %2057 = vmatprep.subr.mxu0 0.0
  %2058 = vmatpush2.msra.mxu0 0.0
  %2059 = vmatprep.subr.mxu0 0.0
  %2060 = vmatpush2.msra.mxu0 0.0
  %2061 = vmatprep.subr.mxu0 0.0
  %2062 = vmatpush2.msra.mxu0 0.0
  %2063 = vmatprep.subr.mxu0 0.0
  %2064 = vmatpush2.msra.mxu0 0.0
  %2065 = vmatprep.mubr.f32.mxu0 0.0
  %2066 = vmatmul.mubr.f32.gmra.mxu0 %v1993
  %v2067 = vpop.f32.mrf.mxu0
  %v2068 = vadd.f32 %v1991, %v2067
  %v2069 = vpop.f32.mrf.mxu0
  %2070 = vmatprep.mubr.f32.mxu0 0.0
  %2071 = vmatmul.mubr.f32.gmra.mxu0 %v1996
  %v2072 = vpop.f32.mrf.mxu0
  %v2073 = vadd.f32 %v1991, %v2072
  %v2074 = vpop.f32.mrf.mxu0
  %2075 = vmatprep.mubr.f32.mxu0 0.0
  %2076 = vmatmul.mubr.f32.gmra.mxu0 %v1999
  %v2077 = vpop.f32.mrf.mxu0
  %v2078 = vadd.f32 %v1991, %v2077
  %v2079 = vpop.f32.mrf.mxu0
  %2080 = vdwg.mxu0
  %v2081 = vmul.f32 %v2068, %v2068
  %v2082 = vmul.f32 %v2073, %v2073
  %v2083 = vmul.f32 %v2078, %v2078
  %v2084 = vmul.f32 %v2068, %v2081
  %v2085 = vmul.f32 %v2073, %v2082
  %v2086 = vmul.f32 %v2078, %v2083
  %v2087 = vmul.f32 %v2084, 0.044715
  %v2088 = vmul.f32 %v2085, 0.044715
  %v2089 = vmul.f32 %v2086, 0.044715
  %v2090 = vadd.f32 %v2068, %v2087
  %v2091 = vadd.f32 %v2073, %v2088
  %v2092 = vadd.f32 %v2078, %v2089
  %v2093 = vmul.f32 %v2090, 0.7978846
  %v2094 = vmul.f32 %v2091, 0.7978846
  %v2095 = vmul.f32 %v2092, 0.7978846
  %v2096 = vtanh.pop %v2093
  %v2097 = vtanh.pop %v2094
  %v2098 = vtanh.pop %v2095
  %v2099 = vadd.f32 %v2096, 1.0
  %v2100 = vadd.f32 %v2097, 1.0
  %v2101 = vadd.f32 %v2098, 1.0
  %v2102 = vmul.f32 %v2099, 0.5
  %v2103 = vmul.f32 %v2100, 0.5
  %v2104 = vmul.f32 %v2101, 0.5
  %v2105 = vmul.f32 %v2068, %v2102
  %v2106 = vmul.f32 %v2073, %v2103
  %v2107 = vmul.f32 %v2078, %v2104
  %v2108 = vlaneseq
  %v2109 = vshrl.u32 %v2108, 7
  %v2110 = vsub.s32 0, %v2109
  %v2111 = vrot.slane %v1987, %v2110
  %vm2112 = vcmask 785408
  %v2114 = vsel %vm2112, %v2105, 0
  %v2117 = vsel %vm2112, %v2106, 0
  %v2120 = vsel %vm2112, %v2107, 0
  %2122 = vmatprep.subr.mxu0 0.0
  %2123 = vmatpush1.msra.mxu0 0.0
  %2124 = vmatprep.subr.mxu0 0.0
  %2125 = vmatpush1.msra.mxu0 0.0
  %2126 = vmatprep.subr.mxu0 0.0
  %2127 = vmatpush1.msra.mxu0 0.0
  %2128 = vmatprep.subr.mxu0 0.0
  %2129 = vmatpush1.msra.mxu0 0.0
  %2130 = vmatprep.subr.mxu0 0.0
  %2131 = vmatpush1.msra.mxu0 %v1986
  %2132 = vmatprep.subr.mxu0 0.0
  %2133 = vmatpush1.msra.mxu0 %v1985
  %2134 = vmatprep.subr.mxu0 0.0
  %2135 = vmatpush1.msra.mxu0 %v1984
  %2136 = vmatprep.subr.mxu0 0.0
  %2137 = vmatpush1.msra.mxu0 %v1983
  %2138 = vmatprep.subr.mxu0 0.0
  %2139 = vmatpush1.msra.mxu0 %v1982
  %2140 = vmatprep.subr.mxu0 0.0
  %2141 = vmatpush1.msra.mxu0 %v1981
  %2142 = vmatprep.subr.mxu0 0.0
  %2143 = vmatpush1.msra.mxu0 %v1980
  %2144 = vmatprep.subr.mxu0 0.0
  %2145 = vmatpush1.msra.mxu0 %v1979
  %2146 = vmatprep.subr.mxu0 0.0
  %2147 = vmatpush1.msra.mxu0 %v1978
  %2148 = vmatprep.subr.mxu0 0.0
  %2149 = vmatpush1.msra.mxu0 %v1977
  %2150 = vmatprep.subr.mxu0 0.0
  %2151 = vmatpush1.msra.mxu0 %v1976
  %2152 = vmatprep.subr.mxu0 0.0
  %2153 = vmatpush1.msra.mxu0 %v1975
  %2154 = vmatprep.subr.mxu0 0.0
  %2155 = vmatpush2.msra.mxu0 0.0
  %2156 = vmatprep.subr.mxu0 0.0
  %2157 = vmatpush2.msra.mxu0 0.0
  %2158 = vmatprep.subr.mxu0 0.0
  %2159 = vmatpush2.msra.mxu0 0.0
  %2160 = vmatprep.subr.mxu0 0.0
  %2161 = vmatpush2.msra.mxu0 0.0
  %2162 = vmatprep.subr.mxu0 0.0
  %2163 = vmatpush2.msra.mxu0 0.0
  %2164 = vmatprep.subr.mxu0 0.0
  %2165 = vmatpush2.msra.mxu0 0.0
  %2166 = vmatprep.subr.mxu0 0.0
  %2167 = vmatpush2.msra.mxu0 0.0
  %2168 = vmatprep.subr.mxu0 0.0
  %2169 = vmatpush2.msra.mxu0 0.0
  %2170 = vmatprep.subr.mxu0 0.0
  %2171 = vmatpush2.msra.mxu0 0.0
  %2172 = vmatprep.subr.mxu0 0.0
  %2173 = vmatpush2.msra.mxu0 0.0
  %2174 = vmatprep.subr.mxu0 0.0
  %2175 = vmatpush2.msra.mxu0 0.0
  %2176 = vmatprep.subr.mxu0 0.0
  %2177 = vmatpush2.msra.mxu0 0.0
  %2178 = vmatprep.subr.mxu0 0.0
  %2179 = vmatpush2.msra.mxu0 0.0
  %2180 = vmatprep.subr.mxu0 0.0
  %2181 = vmatpush2.msra.mxu0 0.0
  %2182 = vmatprep.subr.mxu0 0.0
  %2183 = vmatpush2.msra.mxu0 0.0
  %2184 = vmatprep.subr.mxu0 0.0
  %2185 = vmatpush2.msra.mxu0 0.0
  %2186 = vmatprep.mubr.f32.mxu0 0.0
  %2187 = vmatmul.mubr.f32.gmra.mxu0 %v2114
  %v2188 = vpop.f32.mrf.mxu0
  %v2189 = vadd.f32 %v2111, %v2188
  %v2190 = vpop.f32.mrf.mxu0
  %2191 = vmatprep.mubr.f32.mxu0 0.0
  %2192 = vmatmul.mubr.f32.gmra.mxu0 %v2117
  %v2193 = vpop.f32.mrf.mxu0
  %v2194 = vadd.f32 %v2111, %v2193
  %v2195 = vpop.f32.mrf.mxu0
  %2196 = vmatprep.mubr.f32.mxu0 0.0
  %2197 = vmatmul.mubr.f32.gmra.mxu0 %v2120
  %v2198 = vpop.f32.mrf.mxu0
  %v2199 = vadd.f32 %v2111, %v2198
  %v2200 = vpop.f32.mrf.mxu0
  %2201 = vdwg.mxu0
  %v2202 = vadd.f32 %v1910, %v2189
  %v2203 = vadd.f32 %v1911, %v2194
  %v2204 = vadd.f32 %v1912, %v2199
  %v2205 = vld [vmem:[%s7 + $0x210] sm:$0xff]
  %v2206 = vld [vmem:[%s7 + $0x218] sm:$0xff]
  %v2207 = vld [vmem:[%s7 + $0x220] sm:$0xff]
  %v2208 = vld [vmem:[%s7 + $0x228] sm:$0xff]
  %v2209 = vld [vmem:[%s7 + $0x230] sm:$0xff]
  %v2210 = vld [vmem:[%s7 + $0x238] sm:$0xff]
  %v2211 = vld [vmem:[%s8 + $0xc] sm:$0x1]
  %v2212 = vlaneseq
  %v2213 = vshrl.u32 %v2212, 7
  %v2214 = vsub.s32 0, %v2213
  %v2215 = vrot.slane %v2211, %v2214
  %v2217 = vsel %vm157, %v2202, 0
  %v2220 = vsel %vm157, %v2203, 0
  %v2223 = vsel %vm157, %v2204, 0
  %2225 = vmatprep.subr.mxu0 0.0
  %2226 = vmatpush1.msra.mxu0 0.0
  %2227 = vmatprep.subr.mxu0 0.0
  %2228 = vmatpush1.msra.mxu0 0.0
  %2229 = vmatprep.subr.mxu0 0.0
  %2230 = vmatpush1.msra.mxu0 0.0
  %2231 = vmatprep.subr.mxu0 0.0
  %2232 = vmatpush1.msra.mxu0 0.0
  %2233 = vmatprep.subr.mxu0 0.0
  %2234 = vmatpush1.msra.mxu0 0.0
  %2235 = vmatprep.subr.mxu0 0.0
  %2236 = vmatpush1.msra.mxu0 0.0
  %2237 = vmatprep.subr.mxu0 0.0
  %2238 = vmatpush1.msra.mxu0 0.0
  %2239 = vmatprep.subr.mxu0 0.0
  %2240 = vmatpush1.msra.mxu0 0.0
  %2241 = vmatprep.subr.mxu0 0.0
  %2242 = vmatpush1.msra.mxu0 0.0
  %2243 = vmatprep.subr.mxu0 0.0
  %2244 = vmatpush1.msra.mxu0 0.0
  %2245 = vmatprep.subr.mxu0 0.0
  %2246 = vmatpush1.msra.mxu0 %v2210
  %2247 = vmatprep.subr.mxu0 0.0
  %2248 = vmatpush1.msra.mxu0 %v2209
  %2249 = vmatprep.subr.mxu0 0.0
  %2250 = vmatpush1.msra.mxu0 %v2208
  %2251 = vmatprep.subr.mxu0 0.0
  %2252 = vmatpush1.msra.mxu0 %v2207
  %2253 = vmatprep.subr.mxu0 0.0
  %2254 = vmatpush1.msra.mxu0 %v2206
  %2255 = vmatprep.subr.mxu0 0.0
  %2256 = vmatpush1.msra.mxu0 %v2205
  %2257 = vmatprep.subr.mxu0 0.0
  %2258 = vmatpush2.msra.mxu0 0.0
  %2259 = vmatprep.subr.mxu0 0.0
  %2260 = vmatpush2.msra.mxu0 0.0
  %2261 = vmatprep.subr.mxu0 0.0
  %2262 = vmatpush2.msra.mxu0 0.0
  %2263 = vmatprep.subr.mxu0 0.0
  %2264 = vmatpush2.msra.mxu0 0.0
  %2265 = vmatprep.subr.mxu0 0.0
  %2266 = vmatpush2.msra.mxu0 0.0
  %2267 = vmatprep.subr.mxu0 0.0
  %2268 = vmatpush2.msra.mxu0 0.0
  %2269 = vmatprep.subr.mxu0 0.0
  %2270 = vmatpush2.msra.mxu0 0.0
  %2271 = vmatprep.subr.mxu0 0.0
  %2272 = vmatpush2.msra.mxu0 0.0
  %2273 = vmatprep.subr.mxu0 0.0
  %2274 = vmatpush2.msra.mxu0 0.0
  %2275 = vmatprep.subr.mxu0 0.0
  %2276 = vmatpush2.msra.mxu0 0.0
  %2277 = vmatprep.subr.mxu0 0.0
  %2278 = vmatpush2.msra.mxu0 0.0
  %2279 = vmatprep.subr.mxu0 0.0
  %2280 = vmatpush2.msra.mxu0 0.0
  %2281 = vmatprep.subr.mxu0 0.0
  %2282 = vmatpush2.msra.mxu0 0.0
  %2283 = vmatprep.subr.mxu0 0.0
  %2284 = vmatpush2.msra.mxu0 0.0
  %2285 = vmatprep.subr.mxu0 0.0
  %2286 = vmatpush2.msra.mxu0 0.0
  %2287 = vmatprep.subr.mxu0 0.0
  %2288 = vmatpush2.msra.mxu0 0.0
  %2289 = vmatprep.mubr.f32.mxu0 0.0
  %2290 = vmatmul.mubr.f32.gmra.mxu0 %v2217
  %v2291 = vpop.f32.mrf.mxu0
  %v2292 = vadd.f32 %v2215, %v2291
  %v2293 = vpop.f32.mrf.mxu0
  %2294 = vmatprep.mubr.f32.mxu0 0.0
  %2295 = vmatmul.mubr.f32.gmra.mxu0 %v2220
  %v2296 = vpop.f32.mrf.mxu0
  %v2297 = vadd.f32 %v2215, %v2296
  %v2298 = vpop.f32.mrf.mxu0
  %2299 = vmatprep.mubr.f32.mxu0 0.0
  %2300 = vmatmul.mubr.f32.gmra.mxu0 %v2223
  %v2301 = vpop.f32.mrf.mxu0
  %v2302 = vadd.f32 %v2215, %v2301
  %v2303 = vpop.f32.mrf.mxu0
  %2304 = vdwg.mxu0
  %v2305 = vld [vmem:[%s8 + $0xd] sm:$0x1]
  %v2306 = vld [vmem:[%s8 + $0xe] sm:$0x1]
  %vm2307 = vcmask 261120
  %v2308 = vsel %vm2307, %v2292, 0.0
  %2309 = vadd.xlane.f32.xlu0 %v2308
  %v2310 = vpop.xlane.xlu0 %2309
  %v2311 = vsel %vm2307, %v2297, 0.0
  %2312 = vadd.xlane.f32.xlu0 %v2311
  %v2313 = vpop.xlane.xlu0 %2312
  %vm2314 = vcmask 257024
  %v2315 = vsel %vm2314, %v2302, 0.0
  %2316 = vadd.xlane.f32.xlu0 %v2315
  %v2317 = vpop.xlane.xlu0 %2316
  %v2318 = vrcp.pop 32.0
  %v2319 = vmul.f32 %v2310, %v2318
  %v2320 = vmul.f32 %v2313, %v2318
  %v2321 = vmul.f32 %v2317, %v2318
  %v2322 = vsub.f32 %v2292, %v2319
  %v2323 = vsub.f32 %v2297, %v2320
  %v2324 = vsub.f32 %v2302, %v2321
  %v2325 = vmul.f32 %v2322, %v2322
  %v2326 = vmul.f32 %v2323, %v2323
  %v2327 = vmul.f32 %v2324, %v2324
  %v2328 = vsel %vm2307, %v2325, 0.0
  %2329 = vadd.xlane.f32.xlu0 %v2328
  %v2330 = vpop.xlane.xlu0 %2329
  %v2331 = vsel %vm2307, %v2326, 0.0
  %2332 = vadd.xlane.f32.xlu0 %v2331
  %v2333 = vpop.xlane.xlu0 %2332
  %v2334 = vsel %vm2314, %v2327, 0.0
  %2335 = vadd.xlane.f32.xlu0 %v2334
  %v2336 = vpop.xlane.xlu0 %2335
  %v2337 = vmul.f32 %v2330, %v2318
  %v2338 = vmul.f32 %v2333, %v2318
  %v2339 = vmul.f32 %v2336, %v2318
  %v2340 = vadd.f32 %v2337, 1e-12
  %v2341 = vadd.f32 %v2338, 1e-12
  %v2342 = vadd.f32 %v2339, 1e-12
  %v2343 = vrsqrt.pop %v2340
  %v2344 = vrsqrt.pop %v2341
  %v2345 = vrsqrt.pop %v2342
  %v2346 = vmul.f32 %v2322, %v2343
  %v2347 = vmul.f32 %v2323, %v2344
  %v2348 = vmul.f32 %v2324, %v2345
  %v2349 = vlaneseq
  %v2350 = vshrl.u32 %v2349, 7
  %v2351 = vsub.s32 0, %v2350
  %v2352 = vrot.slane %v2305, %v2351
  %v2353 = vmul.f32 %v2346, %v2352
  %v2354 = vmul.f32 %v2347, %v2352
  %v2355 = vmul.f32 %v2348, %v2352
  %v2356 = vlaneseq
  %v2357 = vshrl.u32 %v2356, 7
  %v2358 = vsub.s32 0, %v2357
  %v2359 = vrot.slane %v2306, %v2358
  %v2360 = vadd.f32 %v2353, %v2359
  %v2361 = vadd.f32 %v2354, %v2359
  %v2362 = vadd.f32 %v2355, %v2359
  %v2363 = vld [vmem:[%s5] sm:$0xff]
  %v2364 = vld [vmem:[%s5 + $0x8] sm:$0xff]
  %v2365 = vld [vmem:[%s2] sm:$0xff]
  %v2366 = vld [vmem:[%s2 + $0x8] sm:$0xff]
  %v2367 = vld [vmem:[%s8 + $0xf] sm:$0x1]
  %v2368 = vld [vmem:[%s8 + $0x10] sm:$0x1]
  %v2369 = vsel %vm2307, %v2365, 0.0
  %2370 = vadd.xlane.f32.xlu0 %v2369
  %v2371 = vpop.xlane.xlu0 %2370
  %v2372 = vsel %vm2307, %v2366, 0.0
  %2373 = vadd.xlane.f32.xlu0 %v2372
  %v2374 = vpop.xlane.xlu0 %2373
  %v2375 = vmul.f32 %v2371, %v2318
  %v2376 = vmul.f32 %v2374, %v2318
  %v2377 = vsub.f32 %v2365, %v2375
  %v2378 = vsub.f32 %v2366, %v2376
  %v2379 = vmul.f32 %v2377, %v2377
  %v2380 = vmul.f32 %v2378, %v2378
  %v2381 = vsel %vm2307, %v2379, 0.0
  %2382 = vadd.xlane.f32.xlu0 %v2381
  %v2383 = vpop.xlane.xlu0 %2382
  %v2384 = vsel %vm2307, %v2380, 0.0
  %2385 = vadd.xlane.f32.xlu0 %v2384
  %v2386 = vpop.xlane.xlu0 %2385
  %v2387 = vmul.f32 %v2383, %v2318
  %v2388 = vmul.f32 %v2386, %v2318
  %v2389 = vadd.f32 %v2387, 1e-12
  %v2390 = vadd.f32 %v2388, 1e-12
  %v2391 = vrsqrt.pop %v2389
  %v2392 = vrsqrt.pop %v2390
  %v2393 = vmul.f32 %v2377, %v2391
  %v2394 = vmul.f32 %v2378, %v2392
  %v2395 = vlaneseq
  %v2396 = vshrl.u32 %v2395, 7
  %v2397 = vsub.s32 0, %v2396
  %v2398 = vrot.slane %v2367, %v2397
  %v2399 = vmul.f32 %v2393, %v2398
  %v2400 = vmul.f32 %v2394, %v2398
  %v2401 = vlaneseq
  %v2402 = vshrl.u32 %v2401, 7
  %v2403 = vsub.s32 0, %v2402
  %v2404 = vrot.slane %v2368, %v2403
  %v2405 = vadd.f32 %v2399, %v2404
  %v2406 = vadd.f32 %v2400, %v2404
  %v2407 = vld [vmem:[%s7 + $0x240] sm:$0xff]
  %v2408 = vld [vmem:[%s7 + $0x248] sm:$0xff]
  %v2409 = vld [vmem:[%s7 + $0x250] sm:$0xff]
  %v2410 = vld [vmem:[%s7 + $0x258] sm:$0xff]
  %v2411 = vld [vmem:[%s8 + $0x11] sm:$0x1]
  %v2412 = vlaneseq
  %v2413 = vshrl.u32 %v2412, 7
  %v2414 = vsub.s32 0, %v2413
  %v2415 = vrot.slane %v2411, %v2414
  %v2417 = vsel %vm2307, %v2405, 0
  %v2420 = vsel %vm2307, %v2406, 0
  %2422 = vmatprep.subr.mxu0 0.0
  %2423 = vmatpush1.msra.mxu0 0.0
  %2424 = vmatprep.subr.mxu0 0.0
  %2425 = vmatpush1.msra.mxu0 0.0
  %2426 = vmatprep.subr.mxu0 0.0
  %2427 = vmatpush1.msra.mxu0 0.0
  %2428 = vmatprep.subr.mxu0 0.0
  %2429 = vmatpush1.msra.mxu0 0.0
  %2430 = vmatprep.subr.mxu0 0.0
  %2431 = vmatpush1.msra.mxu0 0.0
  %2432 = vmatprep.subr.mxu0 0.0
  %2433 = vmatpush1.msra.mxu0 0.0
  %2434 = vmatprep.subr.mxu0 0.0
  %2435 = vmatpush1.msra.mxu0 0.0
  %2436 = vmatprep.subr.mxu0 0.0
  %2437 = vmatpush1.msra.mxu0 0.0
  %2438 = vmatprep.subr.mxu0 0.0
  %2439 = vmatpush1.msra.mxu0 0.0
  %2440 = vmatprep.subr.mxu0 0.0
  %2441 = vmatpush1.msra.mxu0 0.0
  %2442 = vmatprep.subr.mxu0 0.0
  %2443 = vmatpush1.msra.mxu0 0.0
  %2444 = vmatprep.subr.mxu0 0.0
  %2445 = vmatpush1.msra.mxu0 0.0
  %2446 = vmatprep.subr.mxu0 0.0
  %2447 = vmatpush1.msra.mxu0 %v2410
  %2448 = vmatprep.subr.mxu0 0.0
  %2449 = vmatpush1.msra.mxu0 %v2409
  %2450 = vmatprep.subr.mxu0 0.0
  %2451 = vmatpush1.msra.mxu0 %v2408
  %2452 = vmatprep.subr.mxu0 0.0
  %2453 = vmatpush1.msra.mxu0 %v2407
  %2454 = vmatprep.subr.mxu0 0.0
  %2455 = vmatpush2.msra.mxu0 0.0
  %2456 = vmatprep.subr.mxu0 0.0
  %2457 = vmatpush2.msra.mxu0 0.0
  %2458 = vmatprep.subr.mxu0 0.0
  %2459 = vmatpush2.msra.mxu0 0.0
  %2460 = vmatprep.subr.mxu0 0.0
  %2461 = vmatpush2.msra.mxu0 0.0
  %2462 = vmatprep.subr.mxu0 0.0
  %2463 = vmatpush2.msra.mxu0 0.0
  %2464 = vmatprep.subr.mxu0 0.0
  %2465 = vmatpush2.msra.mxu0 0.0
  %2466 = vmatprep.subr.mxu0 0.0
  %2467 = vmatpush2.msra.mxu0 0.0
  %2468 = vmatprep.subr.mxu0 0.0
  %2469 = vmatpush2.msra.mxu0 0.0
  %2470 = vmatprep.subr.mxu0 0.0
  %2471 = vmatpush2.msra.mxu0 0.0
  %2472 = vmatprep.subr.mxu0 0.0
  %2473 = vmatpush2.msra.mxu0 0.0
  %2474 = vmatprep.subr.mxu0 0.0
  %2475 = vmatpush2.msra.mxu0 0.0
  %2476 = vmatprep.subr.mxu0 0.0
  %2477 = vmatpush2.msra.mxu0 0.0
  %2478 = vmatprep.subr.mxu0 0.0
  %2479 = vmatpush2.msra.mxu0 0.0
  %2480 = vmatprep.subr.mxu0 0.0
  %2481 = vmatpush2.msra.mxu0 0.0
  %2482 = vmatprep.subr.mxu0 0.0
  %2483 = vmatpush2.msra.mxu0 0.0
  %2484 = vmatprep.subr.mxu0 0.0
  %2485 = vmatpush2.msra.mxu0 0.0
  %2486 = vmatprep.mubr.f32.mxu0 0.0
  %2487 = vmatmul.mubr.f32.gmra.mxu0 %v2417
  %v2488 = vpop.f32.mrf.mxu0
  %v2489 = vadd.f32 %v2415, %v2488
  %v2490 = vpop.f32.mrf.mxu0
  %2491 = vmatprep.mubr.f32.mxu0 0.0
  %2492 = vmatmul.mubr.f32.gmra.mxu0 %v2420
  %v2493 = vpop.f32.mrf.mxu0
  %v2494 = vadd.f32 %v2415, %v2493
  %v2495 = vpop.f32.mrf.mxu0
  %2496 = vdwg.mxu0
  %v2497 = vld [vmem:[%s7 + $0x260] sm:$0xff]
  %v2498 = vld [vmem:[%s7 + $0x268] sm:$0xff]
  %v2499 = vld [vmem:[%s7 + $0x270] sm:$0xff]
  %v2500 = vld [vmem:[%s7 + $0x278] sm:$0xff]
  %v2501 = vld [vmem:[%s8 + $0x12] sm:$0x1]
  %2504 = vrot.lane.b32.xlu0 %v2489, 96
  %v2505 = vpop.permute.xlu0 %2504
  %2506 = vrot.lane.b32.xlu0 %v2494, 96
  %v2507 = vpop.permute.xlu0 %2506
  %vm2508 = vcmask 64512
  %v2509 = vsel %vm2508, %v2489, 0
  %v2511 = vsel %vm2508, %v2494, 0
  %v2513 = vsel %vm2508, %v2505, 0
  %v2515 = vsel %vm2508, %v2507, 0
  %2517 = vmatprep.subr.mxu0 0.0
  %2518 = vmatpush1.xpose.msra.mxu0 0.0
  %2519 = vmatprep.subr.mxu0 0.0
  %2520 = vmatpush1.xpose.msra.mxu0 0.0
  %2521 = vmatprep.subr.mxu0 0.0
  %2522 = vmatpush1.xpose.msra.mxu0 0.0
  %2523 = vmatprep.subr.mxu0 0.0
  %2524 = vmatpush1.xpose.msra.mxu0 0.0
  %2525 = vmatprep.subr.mxu0 0.0
  %2526 = vmatpush1.xpose.msra.mxu0 0.0
  %2527 = vmatprep.subr.mxu0 0.0
  %2528 = vmatpush1.xpose.msra.mxu0 0.0
  %2529 = vmatprep.subr.mxu0 0.0
  %2530 = vmatpush1.xpose.msra.mxu0 0.0
  %2531 = vmatprep.subr.mxu0 0.0
  %2532 = vmatpush1.xpose.msra.mxu0 0.0
  %2533 = vmatprep.subr.mxu0 0.0
  %2534 = vmatpush1.xpose.msra.mxu0 0.0
  %2535 = vmatprep.subr.mxu0 0.0
  %2536 = vmatpush1.xpose.msra.mxu0 0.0
  %2537 = vmatprep.subr.mxu0 0.0
  %2538 = vmatpush1.xpose.msra.mxu0 0.0
  %2539 = vmatprep.subr.mxu0 0.0
  %2540 = vmatpush1.xpose.msra.mxu0 0.0
  %2541 = vmatprep.subr.mxu0 0.0
  %2542 = vmatpush1.xpose.msra.mxu0 0.0
  %2543 = vmatprep.subr.mxu0 0.0
  %2544 = vmatpush1.xpose.msra.mxu0 0.0
  %2545 = vmatprep.subr.mxu0 0.0
  %2546 = vmatpush1.xpose.msra.mxu0 %v2515
  %2547 = vmatprep.subr.mxu0 0.0
  %2548 = vmatpush1.xpose.msra.mxu0 %v2513
  %2549 = vmatprep.subr.mxu0 0.0
  %2550 = vmatpush2.xpose.msra.mxu0 0.0
  %2551 = vmatprep.subr.mxu0 0.0
  %2552 = vmatpush2.xpose.msra.mxu0 0.0
  %2553 = vmatprep.subr.mxu0 0.0
  %2554 = vmatpush2.xpose.msra.mxu0 0.0
  %2555 = vmatprep.subr.mxu0 0.0
  %2556 = vmatpush2.xpose.msra.mxu0 0.0
  %2557 = vmatprep.subr.mxu0 0.0
  %2558 = vmatpush2.xpose.msra.mxu0 0.0
  %2559 = vmatprep.subr.mxu0 0.0
  %2560 = vmatpush2.xpose.msra.mxu0 0.0
  %2561 = vmatprep.subr.mxu0 0.0
  %2562 = vmatpush2.xpose.msra.mxu0 0.0
  %2563 = vmatprep.subr.mxu0 0.0
  %2564 = vmatpush2.xpose.msra.mxu0 0.0
  %2565 = vmatprep.subr.mxu0 0.0
  %2566 = vmatpush2.xpose.msra.mxu0 0.0
  %2567 = vmatprep.subr.mxu0 0.0
  %2568 = vmatpush2.xpose.msra.mxu0 0.0
  %2569 = vmatprep.subr.mxu0 0.0
  %2570 = vmatpush2.xpose.msra.mxu0 0.0
  %2571 = vmatprep.subr.mxu0 0.0
  %2572 = vmatpush2.xpose.msra.mxu0 0.0
  %2573 = vmatprep.subr.mxu0 0.0
  %2574 = vmatpush2.xpose.msra.mxu0 0.0
  %2575 = vmatprep.subr.mxu0 0.0
  %2576 = vmatpush2.xpose.msra.mxu0 0.0
  %2577 = vmatprep.subr.mxu0 0.0
  %2578 = vmatpush2.xpose.msra.mxu0 0.0
  %2579 = vmatprep.subr.mxu0 0.0
  %2580 = vmatpush2.xpose.msra.mxu0 0.0
  %2581 = vmatprep.mubr.f32.mxu0 0.0
  %2582 = vmatmul.mubr.f32.gmra.mxu0 %v2509
  %v2583 = vpop.f32.mrf.mxu0
  %v2584 = vadd.f32 0.0, %v2583
  %v2585 = vpop.f32.mrf.mxu0
  %2586 = vmatprep.mubr.f32.mxu0 0.0
  %2587 = vmatmul.mubr.f32.gmra.mxu0 %v2511
  %v2588 = vpop.f32.mrf.mxu0
  %v2589 = vadd.f32 0.0, %v2588
  %v2590 = vpop.f32.mrf.mxu0
  %2591 = vdwg.mxu0
  %v2592 = vmul.f32 %v2584, 0.35355338
  %v2593 = vmul.f32 %v2589, 0.35355338
  %v2594 = vadd.f32 %v2592, %v2363
  %v2595 = vadd.f32 %v2593, %v2364
  %vm2596 = vcmask 130048
  %v2597 = vsel %vm2596, %v2594, -inf
  %2598 = vmax.xlane.f32.xlu0 %v2597
  %v2599 = vpop.xlane.xlu0 %2598
  %v2600 = vsel %vm2596, %v2595, -inf
  %2601 = vmax.xlane.f32.xlu0 %v2600
  %v2602 = vpop.xlane.xlu0 %2601
  %v2603 = vsub.f32 %v2594, %v2599
  %v2604 = vsub.f32 %v2595, %v2602
  %v2605 = vmul.f32 %v2603, 1.442695
  %v2606 = vpow.pop %v2605
  %v2607 = vmul.f32 %v2604, 1.442695
  %v2608 = vpow.pop %v2607
  %v2609 = vsel %vm2596, %v2606, 0.0
  %2610 = vadd.xlane.f32.xlu0 %v2609
  %v2611 = vpop.xlane.xlu0 %2610
  %v2612 = vsel %vm2596, %v2608, 0.0
  %2613 = vadd.xlane.f32.xlu0 %v2612
  %v2614 = vpop.xlane.xlu0 %2613
  %v2615 = vrcp.pop %v2611
  %v2616 = vrcp.pop %v2614
  %v2617 = vmul.f32 %v2606, %v2615
  %v2618 = vmul.f32 %v2608, %v2616
  %2619 = vrot.lane.b32.xlu0 %v2489, 64
  %v2620 = vpop.permute.xlu0 %2619
  %2621 = vrot.lane.b32.xlu0 %v2494, 64
  %v2622 = vpop.permute.xlu0 %2621
  %v2626 = vsel %vm2596, %v2617, 0
  %v2629 = vsel %vm2596, %v2618, 0
  %2631 = vmatprep.subr.mxu0 0.0
  %2632 = vmatpush1.msra.mxu0 0.0
  %2633 = vmatprep.subr.mxu0 0.0
  %2634 = vmatpush1.msra.mxu0 0.0
  %2635 = vmatprep.subr.mxu0 0.0
  %2636 = vmatpush1.msra.mxu0 0.0
  %2637 = vmatprep.subr.mxu0 0.0
  %2638 = vmatpush1.msra.mxu0 0.0
  %2639 = vmatprep.subr.mxu0 0.0
  %2640 = vmatpush1.msra.mxu0 0.0
  %2641 = vmatprep.subr.mxu0 0.0
  %2642 = vmatpush1.msra.mxu0 0.0
  %2643 = vmatprep.subr.mxu0 0.0
  %2644 = vmatpush1.msra.mxu0 0.0
  %2645 = vmatprep.subr.mxu0 0.0
  %2646 = vmatpush1.msra.mxu0 0.0
  %2647 = vmatprep.subr.mxu0 0.0
  %2648 = vmatpush1.msra.mxu0 0.0
  %2649 = vmatprep.subr.mxu0 0.0
  %2650 = vmatpush1.msra.mxu0 0.0
  %2651 = vmatprep.subr.mxu0 0.0
  %2652 = vmatpush1.msra.mxu0 0.0
  %2653 = vmatprep.subr.mxu0 0.0
  %2654 = vmatpush1.msra.mxu0 0.0
  %2655 = vmatprep.subr.mxu0 0.0
  %2656 = vmatpush1.msra.mxu0 0.0
  %2657 = vmatprep.subr.mxu0 0.0
  %2658 = vmatpush1.msra.mxu0 0.0
  %2659 = vmatprep.subr.mxu0 0.0
  %2660 = vmatpush1.msra.mxu0 %v2622
  %2661 = vmatprep.subr.mxu0 0.0
  %2662 = vmatpush1.msra.mxu0 %v2620
  %2663 = vmatprep.subr.mxu0 0.0
  %2664 = vmatpush2.msra.mxu0 0.0
  %2665 = vmatprep.subr.mxu0 0.0
  %2666 = vmatpush2.msra.mxu0 0.0
  %2667 = vmatprep.subr.mxu0 0.0
  %2668 = vmatpush2.msra.mxu0 0.0
  %2669 = vmatprep.subr.mxu0 0.0
  %2670 = vmatpush2.msra.mxu0 0.0
  %2671 = vmatprep.subr.mxu0 0.0
  %2672 = vmatpush2.msra.mxu0 0.0
  %2673 = vmatprep.subr.mxu0 0.0
  %2674 = vmatpush2.msra.mxu0 0.0
  %2675 = vmatprep.subr.mxu0 0.0
  %2676 = vmatpush2.msra.mxu0 0.0
  %2677 = vmatprep.subr.mxu0 0.0
  %2678 = vmatpush2.msra.mxu0 0.0
  %2679 = vmatprep.subr.mxu0 0.0
  %2680 = vmatpush2.msra.mxu0 0.0
  %2681 = vmatprep.subr.mxu0 0.0
  %2682 = vmatpush2.msra.mxu0 0.0
  %2683 = vmatprep.subr.mxu0 0.0
  %2684 = vmatpush2.msra.mxu0 0.0
  %2685 = vmatprep.subr.mxu0 0.0
  %2686 = vmatpush2.msra.mxu0 0.0
  %2687 = vmatprep.subr.mxu0 0.0
  %2688 = vmatpush2.msra.mxu0 0.0
  %2689 = vmatprep.subr.mxu0 0.0
  %2690 = vmatpush2.msra.mxu0 0.0
  %2691 = vmatprep.subr.mxu0 0.0
  %2692 = vmatpush2.msra.mxu0 0.0
  %2693 = vmatprep.subr.mxu0 0.0
  %2694 = vmatpush2.msra.mxu0 0.0
  %2695 = vmatprep.mubr.f32.mxu0 0.0
  %2696 = vmatmul.mubr.f32.gmra.mxu0 %v2626
  %v2697 = vpop.f32.mrf.mxu0
  %v2698 = vadd.f32 0.0, %v2697
  %v2699 = vpop.f32.mrf.mxu0
  %2700 = vmatprep.mubr.f32.mxu0 0.0
  %2701 = vmatmul.mubr.f32.gmra.mxu0 %v2629
  %v2702 = vpop.f32.mrf.mxu0
  %v2703 = vadd.f32 0.0, %v2702
  %v2704 = vpop.f32.mrf.mxu0
  %2705 = vdwg.mxu0
  %2706 = vrot.lane.b32.xlu0 %v2489, 120
  %v2707 = vpop.permute.xlu0 %2706
  %2708 = vrot.lane.b32.xlu0 %v2494, 120
  %v2709 = vpop.permute.xlu0 %2708
  %2710 = vrot.lane.b32.xlu0 %v2489, 88
  %v2711 = vpop.permute.xlu0 %2710
  %2712 = vrot.lane.b32.xlu0 %v2494, 88
  %v2713 = vpop.permute.xlu0 %2712
  %v2714 = vsel %vm2508, %v2707, 0
  %v2716 = vsel %vm2508, %v2709, 0
  %v2718 = vsel %vm2508, %v2711, 0
  %v2720 = vsel %vm2508, %v2713, 0
  %2722 = vmatprep.subr.mxu0 0.0
  %2723 = vmatpush1.xpose.msra.mxu0 0.0
  %2724 = vmatprep.subr.mxu0 0.0
  %2725 = vmatpush1.xpose.msra.mxu0 0.0
  %2726 = vmatprep.subr.mxu0 0.0
  %2727 = vmatpush1.xpose.msra.mxu0 0.0
  %2728 = vmatprep.subr.mxu0 0.0
  %2729 = vmatpush1.xpose.msra.mxu0 0.0
  %2730 = vmatprep.subr.mxu0 0.0
  %2731 = vmatpush1.xpose.msra.mxu0 0.0
  %2732 = vmatprep.subr.mxu0 0.0
  %2733 = vmatpush1.xpose.msra.mxu0 0.0
  %2734 = vmatprep.subr.mxu0 0.0
  %2735 = vmatpush1.xpose.msra.mxu0 0.0
  %2736 = vmatprep.subr.mxu0 0.0
  %2737 = vmatpush1.xpose.msra.mxu0 0.0
  %2738 = vmatprep.subr.mxu0 0.0
  %2739 = vmatpush1.xpose.msra.mxu0 0.0
  %2740 = vmatprep.subr.mxu0 0.0
  %2741 = vmatpush1.xpose.msra.mxu0 0.0
  %2742 = vmatprep.subr.mxu0 0.0
  %2743 = vmatpush1.xpose.msra.mxu0 0.0
  %2744 = vmatprep.subr.mxu0 0.0
  %2745 = vmatpush1.xpose.msra.mxu0 0.0
  %2746 = vmatprep.subr.mxu0 0.0
  %2747 = vmatpush1.xpose.msra.mxu0 0.0
  %2748 = vmatprep.subr.mxu0 0.0
  %2749 = vmatpush1.xpose.msra.mxu0 0.0
  %2750 = vmatprep.subr.mxu0 0.0
  %2751 = vmatpush1.xpose.msra.mxu0 %v2720
  %2752 = vmatprep.subr.mxu0 0.0
  %2753 = vmatpush1.xpose.msra.mxu0 %v2718
  %2754 = vmatprep.subr.mxu0 0.0
  %2755 = vmatpush2.xpose.msra.mxu0 0.0
  %2756 = vmatprep.subr.mxu0 0.0
  %2757 = vmatpush2.xpose.msra.mxu0 0.0
  %2758 = vmatprep.subr.mxu0 0.0
  %2759 = vmatpush2.xpose.msra.mxu0 0.0
  %2760 = vmatprep.subr.mxu0 0.0
  %2761 = vmatpush2.xpose.msra.mxu0 0.0
  %2762 = vmatprep.subr.mxu0 0.0
  %2763 = vmatpush2.xpose.msra.mxu0 0.0
  %2764 = vmatprep.subr.mxu0 0.0
  %2765 = vmatpush2.xpose.msra.mxu0 0.0
  %2766 = vmatprep.subr.mxu0 0.0
  %2767 = vmatpush2.xpose.msra.mxu0 0.0
  %2768 = vmatprep.subr.mxu0 0.0
  %2769 = vmatpush2.xpose.msra.mxu0 0.0
  %2770 = vmatprep.subr.mxu0 0.0
  %2771 = vmatpush2.xpose.msra.mxu0 0.0
  %2772 = vmatprep.subr.mxu0 0.0
  %2773 = vmatpush2.xpose.msra.mxu0 0.0
  %2774 = vmatprep.subr.mxu0 0.0
  %2775 = vmatpush2.xpose.msra.mxu0 0.0
  %2776 = vmatprep.subr.mxu0 0.0
  %2777 = vmatpush2.xpose.msra.mxu0 0.0
  %2778 = vmatprep.subr.mxu0 0.0
  %2779 = vmatpush2.xpose.msra.mxu0 0.0
  %2780 = vmatprep.subr.mxu0 0.0
  %2781 = vmatpush2.xpose.msra.mxu0 0.0
  %2782 = vmatprep.subr.mxu0 0.0
  %2783 = vmatpush2.xpose.msra.mxu0 0.0
  %2784 = vmatprep.subr.mxu0 0.0
  %2785 = vmatpush2.xpose.msra.mxu0 0.0
  %2786 = vmatprep.mubr.f32.mxu0 0.0
  %2787 = vmatmul.mubr.f32.gmra.mxu0 %v2714
  %v2788 = vpop.f32.mrf.mxu0
  %v2789 = vadd.f32 0.0, %v2788
  %v2790 = vpop.f32.mrf.mxu0
  %2791 = vmatprep.mubr.f32.mxu0 0.0
  %2792 = vmatmul.mubr.f32.gmra.mxu0 %v2716
  %v2793 = vpop.f32.mrf.mxu0
  %v2794 = vadd.f32 0.0, %v2793
  %v2795 = vpop.f32.mrf.mxu0
  %2796 = vdwg.mxu0
  %v2797 = vmul.f32 %v2789, 0.35355338
  %v2798 = vmul.f32 %v2794, 0.35355338
  %v2799 = vadd.f32 %v2797, %v2363
  %v2800 = vadd.f32 %v2798, %v2364
  %v2801 = vsel %vm2596, %v2799, -inf
  %2802 = vmax.xlane.f32.xlu0 %v2801
  %v2803 = vpop.xlane.xlu0 %2802
  %v2804 = vsel %vm2596, %v2800, -inf
  %2805 = vmax.xlane.f32.xlu0 %v2804
  %v2806 = vpop.xlane.xlu0 %2805
  %v2807 = vsub.f32 %v2799, %v2803
  %v2808 = vsub.f32 %v2800, %v2806
  %v2809 = vmul.f32 %v2807, 1.442695
  %v2810 = vpow.pop %v2809
  %v2811 = vmul.f32 %v2808, 1.442695
  %v2812 = vpow.pop %v2811
  %v2813 = vsel %vm2596, %v2810, 0.0
  %2814 = vadd.xlane.f32.xlu0 %v2813
  %v2815 = vpop.xlane.xlu0 %2814
  %v2816 = vsel %vm2596, %v2812, 0.0
  %2817 = vadd.xlane.f32.xlu0 %v2816
  %v2818 = vpop.xlane.xlu0 %2817
  %v2819 = vrcp.pop %v2815
  %v2820 = vrcp.pop %v2818
  %v2821 = vmul.f32 %v2810, %v2819
  %v2822 = vmul.f32 %v2812, %v2820
  %2823 = vrot.lane.b32.xlu0 %v2489, 56
  %v2824 = vpop.permute.xlu0 %2823
  %2825 = vrot.lane.b32.xlu0 %v2494, 56
  %v2826 = vpop.permute.xlu0 %2825
  %v2830 = vsel %vm2596, %v2821, 0
  %v2833 = vsel %vm2596, %v2822, 0
  %2835 = vmatprep.subr.mxu0 0.0
  %2836 = vmatpush1.msra.mxu0 0.0
  %2837 = vmatprep.subr.mxu0 0.0
  %2838 = vmatpush1.msra.mxu0 0.0
  %2839 = vmatprep.subr.mxu0 0.0
  %2840 = vmatpush1.msra.mxu0 0.0
  %2841 = vmatprep.subr.mxu0 0.0
  %2842 = vmatpush1.msra.mxu0 0.0
  %2843 = vmatprep.subr.mxu0 0.0
  %2844 = vmatpush1.msra.mxu0 0.0
  %2845 = vmatprep.subr.mxu0 0.0
  %2846 = vmatpush1.msra.mxu0 0.0
  %2847 = vmatprep.subr.mxu0 0.0
  %2848 = vmatpush1.msra.mxu0 0.0
  %2849 = vmatprep.subr.mxu0 0.0
  %2850 = vmatpush1.msra.mxu0 0.0
  %2851 = vmatprep.subr.mxu0 0.0
  %2852 = vmatpush1.msra.mxu0 0.0
  %2853 = vmatprep.subr.mxu0 0.0
  %2854 = vmatpush1.msra.mxu0 0.0
  %2855 = vmatprep.subr.mxu0 0.0
  %2856 = vmatpush1.msra.mxu0 0.0
  %2857 = vmatprep.subr.mxu0 0.0
  %2858 = vmatpush1.msra.mxu0 0.0
  %2859 = vmatprep.subr.mxu0 0.0
  %2860 = vmatpush1.msra.mxu0 0.0
  %2861 = vmatprep.subr.mxu0 0.0
  %2862 = vmatpush1.msra.mxu0 0.0
  %2863 = vmatprep.subr.mxu0 0.0
  %2864 = vmatpush1.msra.mxu0 %v2826
  %2865 = vmatprep.subr.mxu0 0.0
  %2866 = vmatpush1.msra.mxu0 %v2824
  %2867 = vmatprep.subr.mxu0 0.0
  %2868 = vmatpush2.msra.mxu0 0.0
  %2869 = vmatprep.subr.mxu0 0.0
  %2870 = vmatpush2.msra.mxu0 0.0
  %2871 = vmatprep.subr.mxu0 0.0
  %2872 = vmatpush2.msra.mxu0 0.0
  %2873 = vmatprep.subr.mxu0 0.0
  %2874 = vmatpush2.msra.mxu0 0.0
  %2875 = vmatprep.subr.mxu0 0.0
  %2876 = vmatpush2.msra.mxu0 0.0
  %2877 = vmatprep.subr.mxu0 0.0
  %2878 = vmatpush2.msra.mxu0 0.0
  %2879 = vmatprep.subr.mxu0 0.0
  %2880 = vmatpush2.msra.mxu0 0.0
  %2881 = vmatprep.subr.mxu0 0.0
  %2882 = vmatpush2.msra.mxu0 0.0
  %2883 = vmatprep.subr.mxu0 0.0
  %2884 = vmatpush2.msra.mxu0 0.0
  %2885 = vmatprep.subr.mxu0 0.0
  %2886 = vmatpush2.msra.mxu0 0.0
  %2887 = vmatprep.subr.mxu0 0.0
  %2888 = vmatpush2.msra.mxu0 0.0
  %2889 = vmatprep.subr.mxu0 0.0
  %2890 = vmatpush2.msra.mxu0 0.0
  %2891 = vmatprep.subr.mxu0 0.0
  %2892 = vmatpush2.msra.mxu0 0.0
  %2893 = vmatprep.subr.mxu0 0.0
  %2894 = vmatpush2.msra.mxu0 0.0
  %2895 = vmatprep.subr.mxu0 0.0
  %2896 = vmatpush2.msra.mxu0 0.0
  %2897 = vmatprep.subr.mxu0 0.0
  %2898 = vmatpush2.msra.mxu0 0.0
  %2899 = vmatprep.mubr.f32.mxu0 0.0
  %2900 = vmatmul.mubr.f32.gmra.mxu0 %v2830
  %v2901 = vpop.f32.mrf.mxu0
  %v2902 = vadd.f32 0.0, %v2901
  %v2903 = vpop.f32.mrf.mxu0
  %2904 = vmatprep.mubr.f32.mxu0 0.0
  %2905 = vmatmul.mubr.f32.gmra.mxu0 %v2833
  %v2906 = vpop.f32.mrf.mxu0
  %v2907 = vadd.f32 0.0, %v2906
  %v2908 = vpop.f32.mrf.mxu0
  %2909 = vdwg.mxu0
  %v2911 = vsel %vm2508, %v2902, 0
  %v2914 = vsel %vm2508, %v2907, 0
  %2916 = vmatprep.subr.mxu0 0.0
  %2917 = vmatpush1.msra.mxu0 0.0
  %2918 = vmatprep.subr.mxu0 0.0
  %2919 = vmatpush1.msra.mxu0 0.0
  %2920 = vmatprep.subr.mxu0 0.0
  %2921 = vmatpush1.msra.mxu0 0.0
  %2922 = vmatprep.subr.mxu0 0.0
  %2923 = vmatpush1.msra.mxu0 0.0
  %2924 = vmatprep.subr.mxu0 0.0
  %2925 = vmatpush1.msra.mxu0 0.0
  %2926 = vmatprep.subr.mxu0 0.0
  %2927 = vmatpush1.msra.mxu0 0.0
  %2928 = vmatprep.subr.mxu0 0.0
  %2929 = vmatpush1.msra.mxu0 0.0
  %2930 = vmatprep.subr.mxu0 0.0
  %2931 = vmatpush1.msra.mxu0 0.0
  %2932 = vmatprep.subr.mxu0 0.0
  %2933 = vmatpush1.msra.mxu0 0.0
  %2934 = vmatprep.subr.mxu0 0.0
  %2935 = vmatpush1.msra.mxu0 0.0
  %2936 = vmatprep.subr.mxu0 0.0
  %2937 = vmatpush1.msra.mxu0 0.0
  %2938 = vmatprep.subr.mxu0 0.0
  %2939 = vmatpush1.msra.mxu0 0.0
  %2940 = vmatprep.subr.mxu0 0.0
  %2941 = vmatpush1.msra.mxu0 0.0
  %2942 = vmatprep.subr.mxu0 0.0
  %2943 = vmatpush1.msra.mxu0 0.0
  %2944 = vmatprep.subr.mxu0 0.0
  %2945 = vmatpush1.msra.mxu0 0.0
  %2946 = vmatprep.subr.mxu0 0.0
  %2947 = vmatpush1.msra.mxu0 %v2498
  %2948 = vmatprep.subr.mxu0 0.0
  %2949 = vmatpush2.msra.mxu0 0.0
  %2950 = vmatprep.subr.mxu0 0.0
  %2951 = vmatpush2.msra.mxu0 0.0
  %2952 = vmatprep.subr.mxu0 0.0
  %2953 = vmatpush2.msra.mxu0 0.0
  %2954 = vmatprep.subr.mxu0 0.0
  %2955 = vmatpush2.msra.mxu0 0.0
  %2956 = vmatprep.subr.mxu0 0.0
  %2957 = vmatpush2.msra.mxu0 0.0
  %2958 = vmatprep.subr.mxu0 0.0
  %2959 = vmatpush2.msra.mxu0 0.0
  %2960 = vmatprep.subr.mxu0 0.0
  %2961 = vmatpush2.msra.mxu0 0.0
  %2962 = vmatprep.subr.mxu0 0.0
  %2963 = vmatpush2.msra.mxu0 0.0
  %2964 = vmatprep.subr.mxu0 0.0
  %2965 = vmatpush2.msra.mxu0 0.0
  %2966 = vmatprep.subr.mxu0 0.0
  %2967 = vmatpush2.msra.mxu0 0.0
  %2968 = vmatprep.subr.mxu0 0.0
  %2969 = vmatpush2.msra.mxu0 0.0
  %2970 = vmatprep.subr.mxu0 0.0
  %2971 = vmatpush2.msra.mxu0 0.0
  %2972 = vmatprep.subr.mxu0 0.0
  %2973 = vmatpush2.msra.mxu0 0.0
  %2974 = vmatprep.subr.mxu0 0.0
  %2975 = vmatpush2.msra.mxu0 0.0
  %2976 = vmatprep.subr.mxu0 0.0
  %2977 = vmatpush2.msra.mxu0 0.0
  %2978 = vmatprep.subr.mxu0 0.0
  %2979 = vmatpush2.msra.mxu0 0.0
  %2980 = vmatprep.mubr.f32.mxu0 0.0
  %2981 = vmatmul.mubr.f32.gmra.mxu0 %v2911
  %v2982 = vpop.f32.mrf.mxu0
  %v2983 = vadd.f32 0.0, %v2982
  %v2984 = vpop.f32.mrf.mxu0
  %2985 = vmatprep.mubr.f32.mxu0 0.0
  %2986 = vmatmul.mubr.f32.gmra.mxu0 %v2914
  %v2987 = vpop.f32.mrf.mxu0
  %v2988 = vadd.f32 0.0, %v2987
  %v2989 = vpop.f32.mrf.mxu0
  %2990 = vdwg.mxu0
  %v2992 = vsel %vm2508, %v2698, 0
  %v2995 = vsel %vm2508, %v2703, 0
  %2997 = vmatprep.subr.mxu0 0.0
  %2998 = vmatpush1.msra.mxu0 0.0
  %2999 = vmatprep.subr.mxu0 0.0
  %3000 = vmatpush1.msra.mxu0 0.0
  %3001 = vmatprep.subr.mxu0 0.0
  %3002 = vmatpush1.msra.mxu0 0.0
  %3003 = vmatprep.subr.mxu0 0.0
  %3004 = vmatpush1.msra.mxu0 0.0
  %3005 = vmatprep.subr.mxu0 0.0
  %3006 = vmatpush1.msra.mxu0 0.0
  %3007 = vmatprep.subr.mxu0 0.0
  %3008 = vmatpush1.msra.mxu0 0.0
  %3009 = vmatprep.subr.mxu0 0.0
  %3010 = vmatpush1.msra.mxu0 0.0
  %3011 = vmatprep.subr.mxu0 0.0
  %3012 = vmatpush1.msra.mxu0 0.0
  %3013 = vmatprep.subr.mxu0 0.0
  %3014 = vmatpush1.msra.mxu0 0.0
  %3015 = vmatprep.subr.mxu0 0.0
  %3016 = vmatpush1.msra.mxu0 0.0
  %3017 = vmatprep.subr.mxu0 0.0
  %3018 = vmatpush1.msra.mxu0 0.0
  %3019 = vmatprep.subr.mxu0 0.0
  %3020 = vmatpush1.msra.mxu0 0.0
  %3021 = vmatprep.subr.mxu0 0.0
  %3022 = vmatpush1.msra.mxu0 0.0
  %3023 = vmatprep.subr.mxu0 0.0
  %3024 = vmatpush1.msra.mxu0 0.0
  %3025 = vmatprep.subr.mxu0 0.0
  %3026 = vmatpush1.msra.mxu0 0.0
  %3027 = vmatprep.subr.mxu0 0.0
  %3028 = vmatpush1.msra.mxu0 %v2497
  %3029 = vmatprep.subr.mxu0 0.0
  %3030 = vmatpush2.msra.mxu0 0.0
  %3031 = vmatprep.subr.mxu0 0.0
  %3032 = vmatpush2.msra.mxu0 0.0
  %3033 = vmatprep.subr.mxu0 0.0
  %3034 = vmatpush2.msra.mxu0 0.0
  %3035 = vmatprep.subr.mxu0 0.0
  %3036 = vmatpush2.msra.mxu0 0.0
  %3037 = vmatprep.subr.mxu0 0.0
  %3038 = vmatpush2.msra.mxu0 0.0
  %3039 = vmatprep.subr.mxu0 0.0
  %3040 = vmatpush2.msra.mxu0 0.0
  %3041 = vmatprep.subr.mxu0 0.0
  %3042 = vmatpush2.msra.mxu0 0.0
  %3043 = vmatprep.subr.mxu0 0.0
  %3044 = vmatpush2.msra.mxu0 0.0
  %3045 = vmatprep.subr.mxu0 0.0
  %3046 = vmatpush2.msra.mxu0 0.0
  %3047 = vmatprep.subr.mxu0 0.0
  %3048 = vmatpush2.msra.mxu0 0.0
  %3049 = vmatprep.subr.mxu0 0.0
  %3050 = vmatpush2.msra.mxu0 0.0
  %3051 = vmatprep.subr.mxu0 0.0
  %3052 = vmatpush2.msra.mxu0 0.0
  %3053 = vmatprep.subr.mxu0 0.0
  %3054 = vmatpush2.msra.mxu0 0.0
  %3055 = vmatprep.subr.mxu0 0.0
  %3056 = vmatpush2.msra.mxu0 0.0
  %3057 = vmatprep.subr.mxu0 0.0
  %3058 = vmatpush2.msra.mxu0 0.0
  %3059 = vmatprep.subr.mxu0 0.0
  %3060 = vmatpush2.msra.mxu0 0.0
  %3061 = vmatprep.mubr.f32.mxu0 0.0
  %3062 = vmatmul.mubr.f32.gmra.mxu0 %v2992
  %v3063 = vpop.f32.mrf.mxu0
  %v3064 = vadd.f32 %v2983, %v3063
  %v3065 = vpop.f32.mrf.mxu0
  %3066 = vmatprep.mubr.f32.mxu0 0.0
  %3067 = vmatmul.mubr.f32.gmra.mxu0 %v2995
  %v3068 = vpop.f32.mrf.mxu0
  %v3069 = vadd.f32 %v2988, %v3068
  %v3070 = vpop.f32.mrf.mxu0
  %3071 = vdwg.mxu0
  %3072 = vrot.lane.b32.xlu0 %v2489, 112
  %v3073 = vpop.permute.xlu0 %3072
  %3074 = vrot.lane.b32.xlu0 %v2494, 112
  %v3075 = vpop.permute.xlu0 %3074
  %3076 = vrot.lane.b32.xlu0 %v2489, 80
  %v3077 = vpop.permute.xlu0 %3076
  %3078 = vrot.lane.b32.xlu0 %v2494, 80
  %v3079 = vpop.permute.xlu0 %3078
  %v3080 = vsel %vm2508, %v3073, 0
  %v3082 = vsel %vm2508, %v3075, 0
  %v3084 = vsel %vm2508, %v3077, 0
  %v3086 = vsel %vm2508, %v3079, 0
  %3088 = vmatprep.subr.mxu0 0.0
  %3089 = vmatpush1.xpose.msra.mxu0 0.0
  %3090 = vmatprep.subr.mxu0 0.0
  %3091 = vmatpush1.xpose.msra.mxu0 0.0
  %3092 = vmatprep.subr.mxu0 0.0
  %3093 = vmatpush1.xpose.msra.mxu0 0.0
  %3094 = vmatprep.subr.mxu0 0.0
  %3095 = vmatpush1.xpose.msra.mxu0 0.0
  %3096 = vmatprep.subr.mxu0 0.0
  %3097 = vmatpush1.xpose.msra.mxu0 0.0
  %3098 = vmatprep.subr.mxu0 0.0
  %3099 = vmatpush1.xpose.msra.mxu0 0.0
  %3100 = vmatprep.subr.mxu0 0.0
  %3101 = vmatpush1.xpose.msra.mxu0 0.0
  %3102 = vmatprep.subr.mxu0 0.0
  %3103 = vmatpush1.xpose.msra.mxu0 0.0
  %3104 = vmatprep.subr.mxu0 0.0
  %3105 = vmatpush1.xpose.msra.mxu0 0.0
  %3106 = vmatprep.subr.mxu0 0.0
  %3107 = vmatpush1.xpose.msra.mxu0 0.0
  %3108 = vmatprep.subr.mxu0 0.0
  %3109 = vmatpush1.xpose.msra.mxu0 0.0
  %3110 = vmatprep.subr.mxu0 0.0
  %3111 = vmatpush1.xpose.msra.mxu0 0.0
  %3112 = vmatprep.subr.mxu0 0.0
  %3113 = vmatpush1.xpose.msra.mxu0 0.0
  %3114 = vmatprep.subr.mxu0 0.0
  %3115 = vmatpush1.xpose.msra.mxu0 0.0
  %3116 = vmatprep.subr.mxu0 0.0
  %3117 = vmatpush1.xpose.msra.mxu0 %v3086
  %3118 = vmatprep.subr.mxu0 0.0
  %3119 = vmatpush1.xpose.msra.mxu0 %v3084
  %3120 = vmatprep.subr.mxu0 0.0
  %3121 = vmatpush2.xpose.msra.mxu0 0.0
  %3122 = vmatprep.subr.mxu0 0.0
  %3123 = vmatpush2.xpose.msra.mxu0 0.0
  %3124 = vmatprep.subr.mxu0 0.0
  %3125 = vmatpush2.xpose.msra.mxu0 0.0
  %3126 = vmatprep.subr.mxu0 0.0
  %3127 = vmatpush2.xpose.msra.mxu0 0.0
  %3128 = vmatprep.subr.mxu0 0.0
  %3129 = vmatpush2.xpose.msra.mxu0 0.0
  %3130 = vmatprep.subr.mxu0 0.0
  %3131 = vmatpush2.xpose.msra.mxu0 0.0
  %3132 = vmatprep.subr.mxu0 0.0
  %3133 = vmatpush2.xpose.msra.mxu0 0.0
  %3134 = vmatprep.subr.mxu0 0.0
  %3135 = vmatpush2.xpose.msra.mxu0 0.0
  %3136 = vmatprep.subr.mxu0 0.0
  %3137 = vmatpush2.xpose.msra.mxu0 0.0
  %3138 = vmatprep.subr.mxu0 0.0
  %3139 = vmatpush2.xpose.msra.mxu0 0.0
  %3140 = vmatprep.subr.mxu0 0.0
  %3141 = vmatpush2.xpose.msra.mxu0 0.0
  %3142 = vmatprep.subr.mxu0 0.0
  %3143 = vmatpush2.xpose.msra.mxu0 0.0
  %3144 = vmatprep.subr.mxu0 0.0
  %3145 = vmatpush2.xpose.msra.mxu0 0.0
  %3146 = vmatprep.subr.mxu0 0.0
  %3147 = vmatpush2.xpose.msra.mxu0 0.0
  %3148 = vmatprep.subr.mxu0 0.0
  %3149 = vmatpush2.xpose.msra.mxu0 0.0
  %3150 = vmatprep.subr.mxu0 0.0
  %3151 = vmatpush2.xpose.msra.mxu0 0.0
  %3152 = vmatprep.mubr.f32.mxu0 0.0
  %3153 = vmatmul.mubr.f32.gmra.mxu0 %v3080
  %v3154 = vpop.f32.mrf.mxu0
  %v3155 = vadd.f32 0.0, %v3154
  %v3156 = vpop.f32.mrf.mxu0
  %3157 = vmatprep.mubr.f32.mxu0 0.0
  %3158 = vmatmul.mubr.f32.gmra.mxu0 %v3082
  %v3159 = vpop.f32.mrf.mxu0
  %v3160 = vadd.f32 0.0, %v3159
  %v3161 = vpop.f32.mrf.mxu0
  %3162 = vdwg.mxu0
  %v3163 = vmul.f32 %v3155, 0.35355338
  %v3164 = vmul.f32 %v3160, 0.35355338
  %v3165 = vadd.f32 %v3163, %v2363
  %v3166 = vadd.f32 %v3164, %v2364
  %v3167 = vsel %vm2596, %v3165, -inf
  %3168 = vmax.xlane.f32.xlu0 %v3167
  %v3169 = vpop.xlane.xlu0 %3168
  %v3170 = vsel %vm2596, %v3166, -inf
  %3171 = vmax.xlane.f32.xlu0 %v3170
  %v3172 = vpop.xlane.xlu0 %3171
  %v3173 = vsub.f32 %v3165, %v3169
  %v3174 = vsub.f32 %v3166, %v3172
  %v3175 = vmul.f32 %v3173, 1.442695
  %v3176 = vpow.pop %v3175
  %v3177 = vmul.f32 %v3174, 1.442695
  %v3178 = vpow.pop %v3177
  %v3179 = vsel %vm2596, %v3176, 0.0
  %3180 = vadd.xlane.f32.xlu0 %v3179
  %v3181 = vpop.xlane.xlu0 %3180
  %v3182 = vsel %vm2596, %v3178, 0.0
  %3183 = vadd.xlane.f32.xlu0 %v3182
  %v3184 = vpop.xlane.xlu0 %3183
  %v3185 = vrcp.pop %v3181
  %v3186 = vrcp.pop %v3184
  %v3187 = vmul.f32 %v3176, %v3185
  %v3188 = vmul.f32 %v3178, %v3186
  %3189 = vrot.lane.b32.xlu0 %v2489, 48
  %v3190 = vpop.permute.xlu0 %3189
  %3191 = vrot.lane.b32.xlu0 %v2494, 48
  %v3192 = vpop.permute.xlu0 %3191
  %v3196 = vsel %vm2596, %v3187, 0
  %v3199 = vsel %vm2596, %v3188, 0
  %3201 = vmatprep.subr.mxu0 0.0
  %3202 = vmatpush1.msra.mxu0 0.0
  %3203 = vmatprep.subr.mxu0 0.0
  %3204 = vmatpush1.msra.mxu0 0.0
  %3205 = vmatprep.subr.mxu0 0.0
  %3206 = vmatpush1.msra.mxu0 0.0
  %3207 = vmatprep.subr.mxu0 0.0
  %3208 = vmatpush1.msra.mxu0 0.0
  %3209 = vmatprep.subr.mxu0 0.0
  %3210 = vmatpush1.msra.mxu0 0.0
  %3211 = vmatprep.subr.mxu0 0.0
  %3212 = vmatpush1.msra.mxu0 0.0
  %3213 = vmatprep.subr.mxu0 0.0
  %3214 = vmatpush1.msra.mxu0 0.0
  %3215 = vmatprep.subr.mxu0 0.0
  %3216 = vmatpush1.msra.mxu0 0.0
  %3217 = vmatprep.subr.mxu0 0.0
  %3218 = vmatpush1.msra.mxu0 0.0
  %3219 = vmatprep.subr.mxu0 0.0
  %3220 = vmatpush1.msra.mxu0 0.0
  %3221 = vmatprep.subr.mxu0 0.0
  %3222 = vmatpush1.msra.mxu0 0.0
  %3223 = vmatprep.subr.mxu0 0.0
  %3224 = vmatpush1.msra.mxu0 0.0
  %3225 = vmatprep.subr.mxu0 0.0
  %3226 = vmatpush1.msra.mxu0 0.0
  %3227 = vmatprep.subr.mxu0 0.0
  %3228 = vmatpush1.msra.mxu0 0.0
  %3229 = vmatprep.subr.mxu0 0.0
  %3230 = vmatpush1.msra.mxu0 %v3192
  %3231 = vmatprep.subr.mxu0 0.0
  %3232 = vmatpush1.msra.mxu0 %v3190
  %3233 = vmatprep.subr.mxu0 0.0
  %3234 = vmatpush2.msra.mxu0 0.0
  %3235 = vmatprep.subr.mxu0 0.0
  %3236 = vmatpush2.msra.mxu0 0.0
  %3237 = vmatprep.subr.mxu0 0.0
  %3238 = vmatpush2.msra.mxu0 0.0
  %3239 = vmatprep.subr.mxu0 0.0
  %3240 = vmatpush2.msra.mxu0 0.0
  %3241 = vmatprep.subr.mxu0 0.0
  %3242 = vmatpush2.msra.mxu0 0.0
  %3243 = vmatprep.subr.mxu0 0.0
  %3244 = vmatpush2.msra.mxu0 0.0
  %3245 = vmatprep.subr.mxu0 0.0
  %3246 = vmatpush2.msra.mxu0 0.0
  %3247 = vmatprep.subr.mxu0 0.0
  %3248 = vmatpush2.msra.mxu0 0.0
  %3249 = vmatprep.subr.mxu0 0.0
  %3250 = vmatpush2.msra.mxu0 0.0
  %3251 = vmatprep.subr.mxu0 0.0
  %3252 = vmatpush2.msra.mxu0 0.0
  %3253 = vmatprep.subr.mxu0 0.0
  %3254 = vmatpush2.msra.mxu0 0.0
  %3255 = vmatprep.subr.mxu0 0.0
  %3256 = vmatpush2.msra.mxu0 0.0
  %3257 = vmatprep.subr.mxu0 0.0
  %3258 = vmatpush2.msra.mxu0 0.0
  %3259 = vmatprep.subr.mxu0 0.0
  %3260 = vmatpush2.msra.mxu0 0.0
  %3261 = vmatprep.subr.mxu0 0.0
  %3262 = vmatpush2.msra.mxu0 0.0
  %3263 = vmatprep.subr.mxu0 0.0
  %3264 = vmatpush2.msra.mxu0 0.0
  %3265 = vmatprep.mubr.f32.mxu0 0.0
  %3266 = vmatmul.mubr.f32.gmra.mxu0 %v3196
  %v3267 = vpop.f32.mrf.mxu0
  %v3268 = vadd.f32 0.0, %v3267
  %v3269 = vpop.f32.mrf.mxu0
  %3270 = vmatprep.mubr.f32.mxu0 0.0
  %3271 = vmatmul.mubr.f32.gmra.mxu0 %v3199
  %v3272 = vpop.f32.mrf.mxu0
  %v3273 = vadd.f32 0.0, %v3272
  %v3274 = vpop.f32.mrf.mxu0
  %3275 = vdwg.mxu0
  %v3277 = vsel %vm2508, %v3268, 0
  %v3280 = vsel %vm2508, %v3273, 0
  %3282 = vmatprep.subr.mxu0 0.0
  %3283 = vmatpush1.msra.mxu0 0.0
  %3284 = vmatprep.subr.mxu0 0.0
  %3285 = vmatpush1.msra.mxu0 0.0
  %3286 = vmatprep.subr.mxu0 0.0
  %3287 = vmatpush1.msra.mxu0 0.0
  %3288 = vmatprep.subr.mxu0 0.0
  %3289 = vmatpush1.msra.mxu0 0.0
  %3290 = vmatprep.subr.mxu0 0.0
  %3291 = vmatpush1.msra.mxu0 0.0
  %3292 = vmatprep.subr.mxu0 0.0
  %3293 = vmatpush1.msra.mxu0 0.0
  %3294 = vmatprep.subr.mxu0 0.0
  %3295 = vmatpush1.msra.mxu0 0.0
  %3296 = vmatprep.subr.mxu0 0.0
  %3297 = vmatpush1.msra.mxu0 0.0
  %3298 = vmatprep.subr.mxu0 0.0
  %3299 = vmatpush1.msra.mxu0 0.0
  %3300 = vmatprep.subr.mxu0 0.0
  %3301 = vmatpush1.msra.mxu0 0.0
  %3302 = vmatprep.subr.mxu0 0.0
  %3303 = vmatpush1.msra.mxu0 0.0
  %3304 = vmatprep.subr.mxu0 0.0
  %3305 = vmatpush1.msra.mxu0 0.0
  %3306 = vmatprep.subr.mxu0 0.0
  %3307 = vmatpush1.msra.mxu0 0.0
  %3308 = vmatprep.subr.mxu0 0.0
  %3309 = vmatpush1.msra.mxu0 0.0
  %3310 = vmatprep.subr.mxu0 0.0
  %3311 = vmatpush1.msra.mxu0 0.0
  %3312 = vmatprep.subr.mxu0 0.0
  %3313 = vmatpush1.msra.mxu0 %v2499
  %3314 = vmatprep.subr.mxu0 0.0
  %3315 = vmatpush2.msra.mxu0 0.0
  %3316 = vmatprep.subr.mxu0 0.0
  %3317 = vmatpush2.msra.mxu0 0.0
  %3318 = vmatprep.subr.mxu0 0.0
  %3319 = vmatpush2.msra.mxu0 0.0
  %3320 = vmatprep.subr.mxu0 0.0
  %3321 = vmatpush2.msra.mxu0 0.0
  %3322 = vmatprep.subr.mxu0 0.0
  %3323 = vmatpush2.msra.mxu0 0.0
  %3324 = vmatprep.subr.mxu0 0.0
  %3325 = vmatpush2.msra.mxu0 0.0
  %3326 = vmatprep.subr.mxu0 0.0
  %3327 = vmatpush2.msra.mxu0 0.0
  %3328 = vmatprep.subr.mxu0 0.0
  %3329 = vmatpush2.msra.mxu0 0.0
  %3330 = vmatprep.subr.mxu0 0.0
  %3331 = vmatpush2.msra.mxu0 0.0
  %3332 = vmatprep.subr.mxu0 0.0
  %3333 = vmatpush2.msra.mxu0 0.0
  %3334 = vmatprep.subr.mxu0 0.0
  %3335 = vmatpush2.msra.mxu0 0.0
  %3336 = vmatprep.subr.mxu0 0.0
  %3337 = vmatpush2.msra.mxu0 0.0
  %3338 = vmatprep.subr.mxu0 0.0
  %3339 = vmatpush2.msra.mxu0 0.0
  %3340 = vmatprep.subr.mxu0 0.0
  %3341 = vmatpush2.msra.mxu0 0.0
  %3342 = vmatprep.subr.mxu0 0.0
  %3343 = vmatpush2.msra.mxu0 0.0
  %3344 = vmatprep.subr.mxu0 0.0
  %3345 = vmatpush2.msra.mxu0 0.0
  %3346 = vmatprep.mubr.f32.mxu0 0.0
  %3347 = vmatmul.mubr.f32.gmra.mxu0 %v3277
  %v3348 = vpop.f32.mrf.mxu0
  %v3349 = vadd.f32 0.0, %v3348
  %v3350 = vpop.f32.mrf.mxu0
  %3351 = vmatprep.mubr.f32.mxu0 0.0
  %3352 = vmatmul.mubr.f32.gmra.mxu0 %v3280
  %v3353 = vpop.f32.mrf.mxu0
  %v3354 = vadd.f32 0.0, %v3353
  %v3355 = vpop.f32.mrf.mxu0
  %3356 = vdwg.mxu0
  %v3357 = vadd.f32 %v3064, %v3349
  %v3358 = vadd.f32 %v3069, %v3354
  %3359 = vrot.lane.b32.xlu0 %v2489, 104
  %v3360 = vpop.permute.xlu0 %3359
  %3361 = vrot.lane.b32.xlu0 %v2494, 104
  %v3362 = vpop.permute.xlu0 %3361
  %3363 = vrot.lane.b32.xlu0 %v2489, 72
  %v3364 = vpop.permute.xlu0 %3363
  %3365 = vrot.lane.b32.xlu0 %v2494, 72
  %v3366 = vpop.permute.xlu0 %3365
  %v3367 = vsel %vm2508, %v3360, 0
  %v3369 = vsel %vm2508, %v3362, 0
  %v3371 = vsel %vm2508, %v3364, 0
  %v3373 = vsel %vm2508, %v3366, 0
  %3375 = vmatprep.subr.mxu0 0.0
  %3376 = vmatpush1.xpose.msra.mxu0 0.0
  %3377 = vmatprep.subr.mxu0 0.0
  %3378 = vmatpush1.xpose.msra.mxu0 0.0
  %3379 = vmatprep.subr.mxu0 0.0
  %3380 = vmatpush1.xpose.msra.mxu0 0.0
  %3381 = vmatprep.subr.mxu0 0.0
  %3382 = vmatpush1.xpose.msra.mxu0 0.0
  %3383 = vmatprep.subr.mxu0 0.0
  %3384 = vmatpush1.xpose.msra.mxu0 0.0
  %3385 = vmatprep.subr.mxu0 0.0
  %3386 = vmatpush1.xpose.msra.mxu0 0.0
  %3387 = vmatprep.subr.mxu0 0.0
  %3388 = vmatpush1.xpose.msra.mxu0 0.0
  %3389 = vmatprep.subr.mxu0 0.0
  %3390 = vmatpush1.xpose.msra.mxu0 0.0
  %3391 = vmatprep.subr.mxu0 0.0
  %3392 = vmatpush1.xpose.msra.mxu0 0.0
  %3393 = vmatprep.subr.mxu0 0.0
  %3394 = vmatpush1.xpose.msra.mxu0 0.0
  %3395 = vmatprep.subr.mxu0 0.0
  %3396 = vmatpush1.xpose.msra.mxu0 0.0
  %3397 = vmatprep.subr.mxu0 0.0
  %3398 = vmatpush1.xpose.msra.mxu0 0.0
  %3399 = vmatprep.subr.mxu0 0.0
  %3400 = vmatpush1.xpose.msra.mxu0 0.0
  %3401 = vmatprep.subr.mxu0 0.0
  %3402 = vmatpush1.xpose.msra.mxu0 0.0
  %3403 = vmatprep.subr.mxu0 0.0
  %3404 = vmatpush1.xpose.msra.mxu0 %v3373
  %3405 = vmatprep.subr.mxu0 0.0
  %3406 = vmatpush1.xpose.msra.mxu0 %v3371
  %3407 = vmatprep.subr.mxu0 0.0
  %3408 = vmatpush2.xpose.msra.mxu0 0.0
  %3409 = vmatprep.subr.mxu0 0.0
  %3410 = vmatpush2.xpose.msra.mxu0 0.0
  %3411 = vmatprep.subr.mxu0 0.0
  %3412 = vmatpush2.xpose.msra.mxu0 0.0
  %3413 = vmatprep.subr.mxu0 0.0
  %3414 = vmatpush2.xpose.msra.mxu0 0.0
  %3415 = vmatprep.subr.mxu0 0.0
  %3416 = vmatpush2.xpose.msra.mxu0 0.0
  %3417 = vmatprep.subr.mxu0 0.0
  %3418 = vmatpush2.xpose.msra.mxu0 0.0
  %3419 = vmatprep.subr.mxu0 0.0
  %3420 = vmatpush2.xpose.msra.mxu0 0.0
  %3421 = vmatprep.subr.mxu0 0.0
  %3422 = vmatpush2.xpose.msra.mxu0 0.0
  %3423 = vmatprep.subr.mxu0 0.0
  %3424 = vmatpush2.xpose.msra.mxu0 0.0
  %3425 = vmatprep.subr.mxu0 0.0
  %3426 = vmatpush2.xpose.msra.mxu0 0.0
  %3427 = vmatprep.subr.mxu0 0.0
  %3428 = vmatpush2.xpose.msra.mxu0 0.0
  %3429 = vmatprep.subr.mxu0 0.0
  %3430 = vmatpush2.xpose.msra.mxu0 0.0
  %3431 = vmatprep.subr.mxu0 0.0
  %3432 = vmatpush2.xpose.msra.mxu0 0.0
  %3433 = vmatprep.subr.mxu0 0.0
  %3434 = vmatpush2.xpose.msra.mxu0 0.0
  %3435 = vmatprep.subr.mxu0 0.0
  %3436 = vmatpush2.xpose.msra.mxu0 0.0
  %3437 = vmatprep.subr.mxu0 0.0
  %3438 = vmatpush2.xpose.msra.mxu0 0.0
  %3439 = vmatprep.mubr.f32.mxu0 0.0
  %3440 = vmatmul.mubr.f32.gmra.mxu0 %v3367
  %v3441 = vpop.f32.mrf.mxu0
  %v3442 = vadd.f32 0.0, %v3441
  %v3443 = vpop.f32.mrf.mxu0
  %3444 = vmatprep.mubr.f32.mxu0 0.0
  %3445 = vmatmul.mubr.f32.gmra.mxu0 %v3369
  %v3446 = vpop.f32.mrf.mxu0
  %v3447 = vadd.f32 0.0, %v3446
  %v3448 = vpop.f32.mrf.mxu0
  %3449 = vdwg.mxu0
  %v3450 = vmul.f32 %v3442, 0.35355338
  %v3451 = vmul.f32 %v3447, 0.35355338
  %v3452 = vadd.f32 %v3450, %v2363
  %v3453 = vadd.f32 %v3451, %v2364
  %v3454 = vsel %vm2596, %v3452, -inf
  %3455 = vmax.xlane.f32.xlu0 %v3454
  %v3456 = vpop.xlane.xlu0 %3455
  %v3457 = vsel %vm2596, %v3453, -inf
  %3458 = vmax.xlane.f32.xlu0 %v3457
  %v3459 = vpop.xlane.xlu0 %3458
  %v3460 = vsub.f32 %v3452, %v3456
  %v3461 = vsub.f32 %v3453, %v3459
  %v3462 = vmul.f32 %v3460, 1.442695
  %v3463 = vpow.pop %v3462
  %v3464 = vmul.f32 %v3461, 1.442695
  %v3465 = vpow.pop %v3464
  %v3466 = vsel %vm2596, %v3463, 0.0
  %3467 = vadd.xlane.f32.xlu0 %v3466
  %v3468 = vpop.xlane.xlu0 %3467
  %v3469 = vsel %vm2596, %v3465, 0.0
  %3470 = vadd.xlane.f32.xlu0 %v3469
  %v3471 = vpop.xlane.xlu0 %3470
  %v3472 = vrcp.pop %v3468
  %v3473 = vrcp.pop %v3471
  %v3474 = vmul.f32 %v3463, %v3472
  %v3475 = vmul.f32 %v3465, %v3473
  %3476 = vrot.lane.b32.xlu0 %v2489, 40
  %v3477 = vpop.permute.xlu0 %3476
  %3478 = vrot.lane.b32.xlu0 %v2494, 40
  %v3479 = vpop.permute.xlu0 %3478
  %v3483 = vsel %vm2596, %v3474, 0
  %v3486 = vsel %vm2596, %v3475, 0
  %3488 = vmatprep.subr.mxu0 0.0
  %3489 = vmatpush1.msra.mxu0 0.0
  %3490 = vmatprep.subr.mxu0 0.0
  %3491 = vmatpush1.msra.mxu0 0.0
  %3492 = vmatprep.subr.mxu0 0.0
  %3493 = vmatpush1.msra.mxu0 0.0
  %3494 = vmatprep.subr.mxu0 0.0
  %3495 = vmatpush1.msra.mxu0 0.0
  %3496 = vmatprep.subr.mxu0 0.0
  %3497 = vmatpush1.msra.mxu0 0.0
  %3498 = vmatprep.subr.mxu0 0.0
  %3499 = vmatpush1.msra.mxu0 0.0
  %3500 = vmatprep.subr.mxu0 0.0
  %3501 = vmatpush1.msra.mxu0 0.0
  %3502 = vmatprep.subr.mxu0 0.0
  %3503 = vmatpush1.msra.mxu0 0.0
  %3504 = vmatprep.subr.mxu0 0.0
  %3505 = vmatpush1.msra.mxu0 0.0
  %3506 = vmatprep.subr.mxu0 0.0
  %3507 = vmatpush1.msra.mxu0 0.0
  %3508 = vmatprep.subr.mxu0 0.0
  %3509 = vmatpush1.msra.mxu0 0.0
  %3510 = vmatprep.subr.mxu0 0.0
  %3511 = vmatpush1.msra.mxu0 0.0
  %3512 = vmatprep.subr.mxu0 0.0
  %3513 = vmatpush1.msra.mxu0 0.0
  %3514 = vmatprep.subr.mxu0 0.0
  %3515 = vmatpush1.msra.mxu0 0.0
  %3516 = vmatprep.subr.mxu0 0.0
  %3517 = vmatpush1.msra.mxu0 %v3479
  %3518 = vmatprep.subr.mxu0 0.0
  %3519 = vmatpush1.msra.mxu0 %v3477
  %3520 = vmatprep.subr.mxu0 0.0
  %3521 = vmatpush2.msra.mxu0 0.0
  %3522 = vmatprep.subr.mxu0 0.0
  %3523 = vmatpush2.msra.mxu0 0.0
  %3524 = vmatprep.subr.mxu0 0.0
  %3525 = vmatpush2.msra.mxu0 0.0
  %3526 = vmatprep.subr.mxu0 0.0
  %3527 = vmatpush2.msra.mxu0 0.0
  %3528 = vmatprep.subr.mxu0 0.0
  %3529 = vmatpush2.msra.mxu0 0.0
  %3530 = vmatprep.subr.mxu0 0.0
  %3531 = vmatpush2.msra.mxu0 0.0
  %3532 = vmatprep.subr.mxu0 0.0
  %3533 = vmatpush2.msra.mxu0 0.0
  %3534 = vmatprep.subr.mxu0 0.0
  %3535 = vmatpush2.msra.mxu0 0.0
  %3536 = vmatprep.subr.mxu0 0.0
  %3537 = vmatpush2.msra.mxu0 0.0
  %3538 = vmatprep.subr.mxu0 0.0
  %3539 = vmatpush2.msra.mxu0 0.0
  %3540 = vmatprep.subr.mxu0 0.0
  %3541 = vmatpush2.msra.mxu0 0.0
  %3542 = vmatprep.subr.mxu0 0.0
  %3543 = vmatpush2.msra.mxu0 0.0
  %3544 = vmatprep.subr.mxu0 0.0
  %3545 = vmatpush2.msra.mxu0 0.0
  %3546 = vmatprep.subr.mxu0 0.0
  %3547 = vmatpush2.msra.mxu0 0.0
  %3548 = vmatprep.subr.mxu0 0.0
  %3549 = vmatpush2.msra.mxu0 0.0
  %3550 = vmatprep.subr.mxu0 0.0
  %3551 = vmatpush2.msra.mxu0 0.0
  %3552 = vmatprep.mubr.f32.mxu0 0.0
  %3553 = vmatmul.mubr.f32.gmra.mxu0 %v3483
  %v3554 = vpop.f32.mrf.mxu0
  %v3555 = vadd.f32 0.0, %v3554
  %v3556 = vpop.f32.mrf.mxu0
  %3557 = vmatprep.mubr.f32.mxu0 0.0
  %3558 = vmatmul.mubr.f32.gmra.mxu0 %v3486
  %v3559 = vpop.f32.mrf.mxu0
  %v3560 = vadd.f32 0.0, %v3559
  %v3561 = vpop.f32.mrf.mxu0
  %3562 = vdwg.mxu0
  %v3564 = vsel %vm2508, %v3555, 0
  %v3567 = vsel %vm2508, %v3560, 0
  %3569 = vmatprep.subr.mxu0 0.0
  %3570 = vmatpush1.msra.mxu0 0.0
  %3571 = vmatprep.subr.mxu0 0.0
  %3572 = vmatpush1.msra.mxu0 0.0
  %3573 = vmatprep.subr.mxu0 0.0
  %3574 = vmatpush1.msra.mxu0 0.0
  %3575 = vmatprep.subr.mxu0 0.0
  %3576 = vmatpush1.msra.mxu0 0.0
  %3577 = vmatprep.subr.mxu0 0.0
  %3578 = vmatpush1.msra.mxu0 0.0
  %3579 = vmatprep.subr.mxu0 0.0
  %3580 = vmatpush1.msra.mxu0 0.0
  %3581 = vmatprep.subr.mxu0 0.0
  %3582 = vmatpush1.msra.mxu0 0.0
  %3583 = vmatprep.subr.mxu0 0.0
  %3584 = vmatpush1.msra.mxu0 0.0
  %3585 = vmatprep.subr.mxu0 0.0
  %3586 = vmatpush1.msra.mxu0 0.0
  %3587 = vmatprep.subr.mxu0 0.0
  %3588 = vmatpush1.msra.mxu0 0.0
  %3589 = vmatprep.subr.mxu0 0.0
  %3590 = vmatpush1.msra.mxu0 0.0
  %3591 = vmatprep.subr.mxu0 0.0
  %3592 = vmatpush1.msra.mxu0 0.0
  %3593 = vmatprep.subr.mxu0 0.0
  %3594 = vmatpush1.msra.mxu0 0.0
  %3595 = vmatprep.subr.mxu0 0.0
  %3596 = vmatpush1.msra.mxu0 0.0
  %3597 = vmatprep.subr.mxu0 0.0
  %3598 = vmatpush1.msra.mxu0 0.0
  %3599 = vmatprep.subr.mxu0 0.0
  %3600 = vmatpush1.msra.mxu0 %v2500
  %3601 = vmatprep.subr.mxu0 0.0
  %3602 = vmatpush2.msra.mxu0 0.0
  %3603 = vmatprep.subr.mxu0 0.0
  %3604 = vmatpush2.msra.mxu0 0.0
  %3605 = vmatprep.subr.mxu0 0.0
  %3606 = vmatpush2.msra.mxu0 0.0
  %3607 = vmatprep.subr.mxu0 0.0
  %3608 = vmatpush2.msra.mxu0 0.0
  %3609 = vmatprep.subr.mxu0 0.0
  %3610 = vmatpush2.msra.mxu0 0.0
  %3611 = vmatprep.subr.mxu0 0.0
  %3612 = vmatpush2.msra.mxu0 0.0
  %3613 = vmatprep.subr.mxu0 0.0
  %3614 = vmatpush2.msra.mxu0 0.0
  %3615 = vmatprep.subr.mxu0 0.0
  %3616 = vmatpush2.msra.mxu0 0.0
  %3617 = vmatprep.subr.mxu0 0.0
  %3618 = vmatpush2.msra.mxu0 0.0
  %3619 = vmatprep.subr.mxu0 0.0
  %3620 = vmatpush2.msra.mxu0 0.0
  %3621 = vmatprep.subr.mxu0 0.0
  %3622 = vmatpush2.msra.mxu0 0.0
  %3623 = vmatprep.subr.mxu0 0.0
  %3624 = vmatpush2.msra.mxu0 0.0
  %3625 = vmatprep.subr.mxu0 0.0
  %3626 = vmatpush2.msra.mxu0 0.0
  %3627 = vmatprep.subr.mxu0 0.0
  %3628 = vmatpush2.msra.mxu0 0.0
  %3629 = vmatprep.subr.mxu0 0.0
  %3630 = vmatpush2.msra.mxu0 0.0
  %3631 = vmatprep.subr.mxu0 0.0
  %3632 = vmatpush2.msra.mxu0 0.0
  %3633 = vmatprep.mubr.f32.mxu0 0.0
  %3634 = vmatmul.mubr.f32.gmra.mxu0 %v3564
  %v3635 = vpop.f32.mrf.mxu0
  %v3636 = vadd.f32 0.0, %v3635
  %v3637 = vpop.f32.mrf.mxu0
  %3638 = vmatprep.mubr.f32.mxu0 0.0
  %3639 = vmatmul.mubr.f32.gmra.mxu0 %v3567
  %v3640 = vpop.f32.mrf.mxu0
  %v3641 = vadd.f32 0.0, %v3640
  %v3642 = vpop.f32.mrf.mxu0
  %3643 = vdwg.mxu0
  %v3644 = vadd.f32 %v3357, %v3636
  %v3645 = vadd.f32 %v3358, %v3641
  %v3646 = vlaneseq
  %v3647 = vshrl.u32 %v3646, 7
  %v3648 = vsub.s32 0, %v3647
  %v3649 = vrot.slane %v2501, %v3648
  %v3650 = vadd.f32 %v3644, %v3649
  %v3651 = vadd.f32 %v3645, %v3649
  %v3652 = vadd.f32 %v2405, %v3650
  %v3653 = vadd.f32 %v2406, %v3651
  %v3654 = vld [vmem:[%s8 + $0x13] sm:$0x1]
  %v3655 = vld [vmem:[%s8 + $0x14] sm:$0x1]
  %v3656 = vsel %vm2307, %v3652, 0.0
  %3657 = vadd.xlane.f32.xlu0 %v3656
  %v3658 = vpop.xlane.xlu0 %3657
  %v3659 = vsel %vm2307, %v3653, 0.0
  %3660 = vadd.xlane.f32.xlu0 %v3659
  %v3661 = vpop.xlane.xlu0 %3660
  %v3662 = vmul.f32 %v3658, %v2318
  %v3663 = vmul.f32 %v3661, %v2318
  %v3664 = vsub.f32 %v3652, %v3662
  %v3665 = vsub.f32 %v3653, %v3663
  %v3666 = vmul.f32 %v3664, %v3664
  %v3667 = vmul.f32 %v3665, %v3665
  %v3668 = vsel %vm2307, %v3666, 0.0
  %3669 = vadd.xlane.f32.xlu0 %v3668
  %v3670 = vpop.xlane.xlu0 %3669
  %v3671 = vsel %vm2307, %v3667, 0.0
  %3672 = vadd.xlane.f32.xlu0 %v3671
  %v3673 = vpop.xlane.xlu0 %3672
  %v3674 = vmul.f32 %v3670, %v2318
  %v3675 = vmul.f32 %v3673, %v2318
  %v3676 = vadd.f32 %v3674, 1e-12
  %v3677 = vadd.f32 %v3675, 1e-12
  %v3678 = vrsqrt.pop %v3676
  %v3679 = vrsqrt.pop %v3677
  %v3680 = vmul.f32 %v3664, %v3678
  %v3681 = vmul.f32 %v3665, %v3679
  %v3682 = vlaneseq
  %v3683 = vshrl.u32 %v3682, 7
  %v3684 = vsub.s32 0, %v3683
  %v3685 = vrot.slane %v3654, %v3684
  %v3686 = vmul.f32 %v3680, %v3685
  %v3687 = vmul.f32 %v3681, %v3685
  %v3688 = vlaneseq
  %v3689 = vshrl.u32 %v3688, 7
  %v3690 = vsub.s32 0, %v3689
  %v3691 = vrot.slane %v3655, %v3690
  %v3692 = vadd.f32 %v3686, %v3691
  %v3693 = vadd.f32 %v3687, %v3691
  %v3694 = vld [vmem:[%s7 + $0x280] sm:$0xff]
  %v3695 = vld [vmem:[%s7 + $0x288] sm:$0xff]
  %v3696 = vld [vmem:[%s7 + $0x290] sm:$0xff]
  %v3697 = vld [vmem:[%s7 + $0x298] sm:$0xff]
  %v3698 = vld [vmem:[%s8 + $0x15] sm:$0x1]
  %v3699 = vld [vmem:[%s7 + $0x2a0] sm:$0xff]
  %v3700 = vld [vmem:[%s7 + $0x2a8] sm:$0xff]
  %v3701 = vld [vmem:[%s7 + $0x2b0] sm:$0xff]
  %v3702 = vld [vmem:[%s7 + $0x2b8] sm:$0xff]
  %v3703 = vld [vmem:[%s7 + $0x2c0] sm:$0xff]
  %v3704 = vld [vmem:[%s7 + $0x2c8] sm:$0xff]
  %v3705 = vld [vmem:[%s7 + $0x2d0] sm:$0xff]
  %v3706 = vld [vmem:[%s7 + $0x2d8] sm:$0xff]
  %v3707 = vld [vmem:[%s8 + $0x16] sm:$0x1]
  %v3708 = vlaneseq
  %v3709 = vshrl.u32 %v3708, 7
  %v3710 = vsub.s32 0, %v3709
  %v3711 = vrot.slane %v3698, %v3710
  %v3713 = vsel %vm2307, %v3692, 0
  %v3716 = vsel %vm2307, %v3693, 0
  %3718 = vmatprep.subr.mxu0 0.0
  %3719 = vmatpush1.msra.mxu0 0.0
  %3720 = vmatprep.subr.mxu0 0.0
  %3721 = vmatpush1.msra.mxu0 0.0
  %3722 = vmatprep.subr.mxu0 0.0
  %3723 = vmatpush1.msra.mxu0 0.0
  %3724 = vmatprep.subr.mxu0 0.0
  %3725 = vmatpush1.msra.mxu0 0.0
  %3726 = vmatprep.subr.mxu0 0.0
  %3727 = vmatpush1.msra.mxu0 0.0
  %3728 = vmatprep.subr.mxu0 0.0
  %3729 = vmatpush1.msra.mxu0 0.0
  %3730 = vmatprep.subr.mxu0 0.0
  %3731 = vmatpush1.msra.mxu0 0.0
  %3732 = vmatprep.subr.mxu0 0.0
  %3733 = vmatpush1.msra.mxu0 0.0
  %3734 = vmatprep.subr.mxu0 0.0
  %3735 = vmatpush1.msra.mxu0 0.0
  %3736 = vmatprep.subr.mxu0 0.0
  %3737 = vmatpush1.msra.mxu0 0.0
  %3738 = vmatprep.subr.mxu0 0.0
  %3739 = vmatpush1.msra.mxu0 0.0
  %3740 = vmatprep.subr.mxu0 0.0
  %3741 = vmatpush1.msra.mxu0 0.0
  %3742 = vmatprep.subr.mxu0 0.0
  %3743 = vmatpush1.msra.mxu0 %v3697
  %3744 = vmatprep.subr.mxu0 0.0
  %3745 = vmatpush1.msra.mxu0 %v3696
  %3746 = vmatprep.subr.mxu0 0.0
  %3747 = vmatpush1.msra.mxu0 %v3695
  %3748 = vmatprep.subr.mxu0 0.0
  %3749 = vmatpush1.msra.mxu0 %v3694
  %3750 = vmatprep.subr.mxu0 0.0
  %3751 = vmatpush2.msra.mxu0 0.0
  %3752 = vmatprep.subr.mxu0 0.0
  %3753 = vmatpush2.msra.mxu0 0.0
  %3754 = vmatprep.subr.mxu0 0.0
  %3755 = vmatpush2.msra.mxu0 0.0
  %3756 = vmatprep.subr.mxu0 0.0
  %3757 = vmatpush2.msra.mxu0 0.0
  %3758 = vmatprep.subr.mxu0 0.0
  %3759 = vmatpush2.msra.mxu0 0.0
  %3760 = vmatprep.subr.mxu0 0.0
  %3761 = vmatpush2.msra.mxu0 0.0
  %3762 = vmatprep.subr.mxu0 0.0
  %3763 = vmatpush2.msra.mxu0 0.0
  %3764 = vmatprep.subr.mxu0 0.0
  %3765 = vmatpush2.msra.mxu0 0.0
  %3766 = vmatprep.subr.mxu0 0.0
  %3767 = vmatpush2.msra.mxu0 0.0
  %3768 = vmatprep.subr.mxu0 0.0
  %3769 = vmatpush2.msra.mxu0 0.0
  %3770 = vmatprep.subr.mxu0 0.0
  %3771 = vmatpush2.msra.mxu0 0.0
  %3772 = vmatprep.subr.mxu0 0.0
  %3773 = vmatpush2.msra.mxu0 0.0
  %3774 = vmatprep.subr.mxu0 0.0
  %3775 = vmatpush2.msra.mxu0 0.0
  %3776 = vmatprep.subr.mxu0 0.0
  %3777 = vmatpush2.msra.mxu0 0.0
  %3778 = vmatprep.subr.mxu0 0.0
  %3779 = vmatpush2.msra.mxu0 0.0
  %3780 = vmatprep.subr.mxu0 0.0
  %3781 = vmatpush2.msra.mxu0 0.0
  %3782 = vmatprep.mubr.f32.mxu0 0.0
  %3783 = vmatmul.mubr.f32.gmra.mxu0 %v3713
  %v3784 = vpop.f32.mrf.mxu0
  %v3785 = vadd.f32 %v3711, %v3784
  %v3786 = vpop.f32.mrf.mxu0
  %3787 = vmatprep.mubr.f32.mxu0 0.0
  %3788 = vmatmul.mubr.f32.gmra.mxu0 %v3716
  %v3789 = vpop.f32.mrf.mxu0
  %v3790 = vadd.f32 %v3711, %v3789
  %v3791 = vpop.f32.mrf.mxu0
  %3792 = vdwg.mxu0
  %v3793 = vmul.f32 %v3785, %v3785
  %v3794 = vmul.f32 %v3790, %v3790
  %v3795 = vmul.f32 %v3785, %v3793
  %v3796 = vmul.f32 %v3790, %v3794
  %v3797 = vmul.f32 %v3795, 0.044715
  %v3798 = vmul.f32 %v3796, 0.044715
  %v3799 = vadd.f32 %v3785, %v3797
  %v3800 = vadd.f32 %v3790, %v3798
  %v3801 = vmul.f32 %v3799, 0.7978846
  %v3802 = vmul.f32 %v3800, 0.7978846
  %v3803 = vtanh.pop %v3801
  %v3804 = vtanh.pop %v3802
  %v3805 = vadd.f32 %v3803, 1.0
  %v3806 = vadd.f32 %v3804, 1.0
  %v3807 = vmul.f32 %v3805, 0.5
  %v3808 = vmul.f32 %v3806, 0.5
  %v3809 = vmul.f32 %v3785, %v3807
  %v3810 = vmul.f32 %v3790, %v3808
  %v3811 = vlaneseq
  %v3812 = vshrl.u32 %v3811, 7
  %v3813 = vsub.s32 0, %v3812
  %v3814 = vrot.slane %v3707, %v3813
  %v3816 = vsel %vm65, %v3809, 0
  %v3819 = vsel %vm65, %v3810, 0
  %3821 = vmatprep.subr.mxu0 0.0
  %3822 = vmatpush1.msra.mxu0 0.0
  %3823 = vmatprep.subr.mxu0 0.0
  %3824 = vmatpush1.msra.mxu0 0.0
  %3825 = vmatprep.subr.mxu0 0.0
  %3826 = vmatpush1.msra.mxu0 0.0
  %3827 = vmatprep.subr.mxu0 0.0
  %3828 = vmatpush1.msra.mxu0 0.0
  %3829 = vmatprep.subr.mxu0 0.0
  %3830 = vmatpush1.msra.mxu0 0.0
  %3831 = vmatprep.subr.mxu0 0.0
  %3832 = vmatpush1.msra.mxu0 0.0
  %3833 = vmatprep.subr.mxu0 0.0
  %3834 = vmatpush1.msra.mxu0 0.0
  %3835 = vmatprep.subr.mxu0 0.0
  %3836 = vmatpush1.msra.mxu0 0.0
  %3837 = vmatprep.subr.mxu0 0.0
  %3838 = vmatpush1.msra.mxu0 %v3706
  %3839 = vmatprep.subr.mxu0 0.0
  %3840 = vmatpush1.msra.mxu0 %v3705
  %3841 = vmatprep.subr.mxu0 0.0
  %3842 = vmatpush1.msra.mxu0 %v3704
  %3843 = vmatprep.subr.mxu0 0.0
  %3844 = vmatpush1.msra.mxu0 %v3703
  %3845 = vmatprep.subr.mxu0 0.0
  %3846 = vmatpush1.msra.mxu0 %v3702
  %3847 = vmatprep.subr.mxu0 0.0
  %3848 = vmatpush1.msra.mxu0 %v3701
  %3849 = vmatprep.subr.mxu0 0.0
  %3850 = vmatpush1.msra.mxu0 %v3700
  %3851 = vmatprep.subr.mxu0 0.0
  %3852 = vmatpush1.msra.mxu0 %v3699
  %3853 = vmatprep.subr.mxu0 0.0
  %3854 = vmatpush2.msra.mxu0 0.0
  %3855 = vmatprep.subr.mxu0 0.0
  %3856 = vmatpush2.msra.mxu0 0.0
  %3857 = vmatprep.subr.mxu0 0.0
  %3858 = vmatpush2.msra.mxu0 0.0
  %3859 = vmatprep.subr.mxu0 0.0
  %3860 = vmatpush2.msra.mxu0 0.0
  %3861 = vmatprep.subr.mxu0 0.0
  %3862 = vmatpush2.msra.mxu0 0.0
  %3863 = vmatprep.subr.mxu0 0.0
  %3864 = vmatpush2.msra.mxu0 0.0
  %3865 = vmatprep.subr.mxu0 0.0
  %3866 = vmatpush2.msra.mxu0 0.0
  %3867 = vmatprep.subr.mxu0 0.0
  %3868 = vmatpush2.msra.mxu0 0.0
  %3869 = vmatprep.subr.mxu0 0.0
  %3870 = vmatpush2.msra.mxu0 0.0
  %3871 = vmatprep.subr.mxu0 0.0
  %3872 = vmatpush2.msra.mxu0 0.0
  %3873 = vmatprep.subr.mxu0 0.0
  %3874 = vmatpush2.msra.mxu0 0.0
  %3875 = vmatprep.subr.mxu0 0.0
  %3876 = vmatpush2.msra.mxu0 0.0
  %3877 = vmatprep.subr.mxu0 0.0
  %3878 = vmatpush2.msra.mxu0 0.0
  %3879 = vmatprep.subr.mxu0 0.0
  %3880 = vmatpush2.msra.mxu0 0.0
  %3881 = vmatprep.subr.mxu0 0.0
  %3882 = vmatpush2.msra.mxu0 0.0
  %3883 = vmatprep.subr.mxu0 0.0
  %3884 = vmatpush2.msra.mxu0 0.0
  %3885 = vmatprep.mubr.f32.mxu0 0.0
  %3886 = vmatmul.mubr.f32.gmra.mxu0 %v3816
  %v3887 = vpop.f32.mrf.mxu0
  %v3888 = vadd.f32 %v3814, %v3887
  %v3889 = vpop.f32.mrf.mxu0
  %3890 = vmatprep.mubr.f32.mxu0 0.0
  %3891 = vmatmul.mubr.f32.gmra.mxu0 %v3819
  %v3892 = vpop.f32.mrf.mxu0
  %v3893 = vadd.f32 %v3814, %v3892
  %v3894 = vpop.f32.mrf.mxu0
  %3895 = vdwg.mxu0
  %v3896 = vadd.f32 %v3692, %v3888
  %v3897 = vadd.f32 %v3693, %v3893
  %v3898 = vld [vmem:[%s8 + $0x17] sm:$0x1]
  %v3899 = vld [vmem:[%s8 + $0x18] sm:$0x1]
  %v3900 = vsel %vm2307, %v3896, 0.0
  %3901 = vadd.xlane.f32.xlu0 %v3900
  %v3902 = vpop.xlane.xlu0 %3901
  %v3903 = vsel %vm2307, %v3897, 0.0
  %3904 = vadd.xlane.f32.xlu0 %v3903
  %v3905 = vpop.xlane.xlu0 %3904
  %v3906 = vmul.f32 %v3902, %v2318
  %v3907 = vmul.f32 %v3905, %v2318
  %v3908 = vsub.f32 %v3896, %v3906
  %v3909 = vsub.f32 %v3897, %v3907
  %v3910 = vmul.f32 %v3908, %v3908
  %v3911 = vmul.f32 %v3909, %v3909
  %v3912 = vsel %vm2307, %v3910, 0.0
  %3913 = vadd.xlane.f32.xlu0 %v3912
  %v3914 = vpop.xlane.xlu0 %3913
  %v3915 = vsel %vm2307, %v3911, 0.0
  %3916 = vadd.xlane.f32.xlu0 %v3915
  %v3917 = vpop.xlane.xlu0 %3916
  %v3918 = vmul.f32 %v3914, %v2318
  %v3919 = vmul.f32 %v3917, %v2318
  %v3920 = vadd.f32 %v3918, 1e-12
  %v3921 = vadd.f32 %v3919, 1e-12
  %v3922 = vrsqrt.pop %v3920
  %v3923 = vrsqrt.pop %v3921
  %v3924 = vmul.f32 %v3908, %v3922
  %v3925 = vmul.f32 %v3909, %v3923
  %v3926 = vlaneseq
  %v3927 = vshrl.u32 %v3926, 7
  %v3928 = vsub.s32 0, %v3927
  %v3929 = vrot.slane %v3898, %v3928
  %v3930 = vmul.f32 %v3924, %v3929
  %v3931 = vmul.f32 %v3925, %v3929
  %v3932 = vlaneseq
  %v3933 = vshrl.u32 %v3932, 7
  %v3934 = vsub.s32 0, %v3933
  %v3935 = vrot.slane %v3899, %v3934
  %v3936 = vadd.f32 %v3930, %v3935
  %v3937 = vadd.f32 %v3931, %v3935
  %v3938 = vld [vmem:[%s7 + $0x2e0] sm:$0xff]
  %v3939 = vld [vmem:[%s7 + $0x2e8] sm:$0xff]
  %v3940 = vld [vmem:[%s7 + $0x2f0] sm:$0xff]
  %v3941 = vld [vmem:[%s7 + $0x2f8] sm:$0xff]
  %v3942 = vld [vmem:[%s8 + $0x19] sm:$0x1]
  %v3943 = vlaneseq
  %v3944 = vshrl.u32 %v3943, 7
  %v3945 = vsub.s32 0, %v3944
  %v3946 = vrot.slane %v3942, %v3945
  %v3948 = vsel %vm2307, %v3936, 0
  %v3951 = vsel %vm2307, %v3937, 0
  %3953 = vmatprep.subr.mxu0 0.0
  %3954 = vmatpush1.msra.mxu0 0.0
  %3955 = vmatprep.subr.mxu0 0.0
  %3956 = vmatpush1.msra.mxu0 0.0
  %3957 = vmatprep.subr.mxu0 0.0
  %3958 = vmatpush1.msra.mxu0 0.0
  %3959 = vmatprep.subr.mxu0 0.0
  %3960 = vmatpush1.msra.mxu0 0.0
  %3961 = vmatprep.subr.mxu0 0.0
  %3962 = vmatpush1.msra.mxu0 0.0
  %3963 = vmatprep.subr.mxu0 0.0
  %3964 = vmatpush1.msra.mxu0 0.0
  %3965 = vmatprep.subr.mxu0 0.0
  %3966 = vmatpush1.msra.mxu0 0.0
  %3967 = vmatprep.subr.mxu0 0.0
  %3968 = vmatpush1.msra.mxu0 0.0
  %3969 = vmatprep.subr.mxu0 0.0
  %3970 = vmatpush1.msra.mxu0 0.0
  %3971 = vmatprep.subr.mxu0 0.0
  %3972 = vmatpush1.msra.mxu0 0.0
  %3973 = vmatprep.subr.mxu0 0.0
  %3974 = vmatpush1.msra.mxu0 0.0
  %3975 = vmatprep.subr.mxu0 0.0
  %3976 = vmatpush1.msra.mxu0 0.0
  %3977 = vmatprep.subr.mxu0 0.0
  %3978 = vmatpush1.msra.mxu0 %v3941
  %3979 = vmatprep.subr.mxu0 0.0
  %3980 = vmatpush1.msra.mxu0 %v3940
  %3981 = vmatprep.subr.mxu0 0.0
  %3982 = vmatpush1.msra.mxu0 %v3939
  %3983 = vmatprep.subr.mxu0 0.0
  %3984 = vmatpush1.msra.mxu0 %v3938
  %3985 = vmatprep.subr.mxu0 0.0
  %3986 = vmatpush2.msra.mxu0 0.0
  %3987 = vmatprep.subr.mxu0 0.0
  %3988 = vmatpush2.msra.mxu0 0.0
  %3989 = vmatprep.subr.mxu0 0.0
  %3990 = vmatpush2.msra.mxu0 0.0
  %3991 = vmatprep.subr.mxu0 0.0
  %3992 = vmatpush2.msra.mxu0 0.0
  %3993 = vmatprep.subr.mxu0 0.0
  %3994 = vmatpush2.msra.mxu0 0.0
  %3995 = vmatprep.subr.mxu0 0.0
  %3996 = vmatpush2.msra.mxu0 0.0
  %3997 = vmatprep.subr.mxu0 0.0
  %3998 = vmatpush2.msra.mxu0 0.0
  %3999 = vmatprep.subr.mxu0 0.0
  %4000 = vmatpush2.msra.mxu0 0.0
  %4001 = vmatprep.subr.mxu0 0.0
  %4002 = vmatpush2.msra.mxu0 0.0
  %4003 = vmatprep.subr.mxu0 0.0
  %4004 = vmatpush2.msra.mxu0 0.0
  %4005 = vmatprep.subr.mxu0 0.0
  %4006 = vmatpush2.msra.mxu0 0.0
  %4007 = vmatprep.subr.mxu0 0.0
  %4008 = vmatpush2.msra.mxu0 0.0
  %4009 = vmatprep.subr.mxu0 0.0
  %4010 = vmatpush2.msra.mxu0 0.0
  %4011 = vmatprep.subr.mxu0 0.0
  %4012 = vmatpush2.msra.mxu0 0.0
  %4013 = vmatprep.subr.mxu0 0.0
  %4014 = vmatpush2.msra.mxu0 0.0
  %4015 = vmatprep.subr.mxu0 0.0
  %4016 = vmatpush2.msra.mxu0 0.0
  %4017 = vmatprep.mubr.f32.mxu0 0.0
  %4018 = vmatmul.mubr.f32.gmra.mxu0 %v3948
  %v4019 = vpop.f32.mrf.mxu0
  %v4020 = vadd.f32 %v3946, %v4019
  %v4021 = vpop.f32.mrf.mxu0
  %4022 = vmatprep.mubr.f32.mxu0 0.0
  %4023 = vmatmul.mubr.f32.gmra.mxu0 %v3951
  %v4024 = vpop.f32.mrf.mxu0
  %v4025 = vadd.f32 %v3946, %v4024
  %v4026 = vpop.f32.mrf.mxu0
  %4027 = vdwg.mxu0
  %v4028 = vld [vmem:[%s7 + $0x300] sm:$0xff]
  %v4029 = vld [vmem:[%s7 + $0x308] sm:$0xff]
  %v4030 = vld [vmem:[%s7 + $0x310] sm:$0xff]
  %v4031 = vld [vmem:[%s7 + $0x318] sm:$0xff]
  %v4032 = vld [vmem:[%s8 + $0x1a] sm:$0x1]
  %4035 = vrot.lane.b32.xlu0 %v4020, 96
  %v4036 = vpop.permute.xlu0 %4035
  %4037 = vrot.lane.b32.xlu0 %v4025, 96
  %v4038 = vpop.permute.xlu0 %4037
  %v4039 = vsel %vm2508, %v4020, 0
  %v4041 = vsel %vm2508, %v4025, 0
  %v4043 = vsel %vm2508, %v4036, 0
  %v4045 = vsel %vm2508, %v4038, 0
  %4047 = vmatprep.subr.mxu0 0.0
  %4048 = vmatpush1.xpose.msra.mxu0 0.0
  %4049 = vmatprep.subr.mxu0 0.0
  %4050 = vmatpush1.xpose.msra.mxu0 0.0
  %4051 = vmatprep.subr.mxu0 0.0
  %4052 = vmatpush1.xpose.msra.mxu0 0.0
  %4053 = vmatprep.subr.mxu0 0.0
  %4054 = vmatpush1.xpose.msra.mxu0 0.0
  %4055 = vmatprep.subr.mxu0 0.0
  %4056 = vmatpush1.xpose.msra.mxu0 0.0
  %4057 = vmatprep.subr.mxu0 0.0
  %4058 = vmatpush1.xpose.msra.mxu0 0.0
  %4059 = vmatprep.subr.mxu0 0.0
  %4060 = vmatpush1.xpose.msra.mxu0 0.0
  %4061 = vmatprep.subr.mxu0 0.0
  %4062 = vmatpush1.xpose.msra.mxu0 0.0
  %4063 = vmatprep.subr.mxu0 0.0
  %4064 = vmatpush1.xpose.msra.mxu0 0.0
  %4065 = vmatprep.subr.mxu0 0.0
  %4066 = vmatpush1.xpose.msra.mxu0 0.0
  %4067 = vmatprep.subr.mxu0 0.0
  %4068 = vmatpush1.xpose.msra.mxu0 0.0
  %4069 = vmatprep.subr.mxu0 0.0
  %4070 = vmatpush1.xpose.msra.mxu0 0.0
  %4071 = vmatprep.subr.mxu0 0.0
  %4072 = vmatpush1.xpose.msra.mxu0 0.0
  %4073 = vmatprep.subr.mxu0 0.0
  %4074 = vmatpush1.xpose.msra.mxu0 0.0
  %4075 = vmatprep.subr.mxu0 0.0
  %4076 = vmatpush1.xpose.msra.mxu0 %v4045
  %4077 = vmatprep.subr.mxu0 0.0
  %4078 = vmatpush1.xpose.msra.mxu0 %v4043
  %4079 = vmatprep.subr.mxu0 0.0
  %4080 = vmatpush2.xpose.msra.mxu0 0.0
  %4081 = vmatprep.subr.mxu0 0.0
  %4082 = vmatpush2.xpose.msra.mxu0 0.0
  %4083 = vmatprep.subr.mxu0 0.0
  %4084 = vmatpush2.xpose.msra.mxu0 0.0
  %4085 = vmatprep.subr.mxu0 0.0
  %4086 = vmatpush2.xpose.msra.mxu0 0.0
  %4087 = vmatprep.subr.mxu0 0.0
  %4088 = vmatpush2.xpose.msra.mxu0 0.0
  %4089 = vmatprep.subr.mxu0 0.0
  %4090 = vmatpush2.xpose.msra.mxu0 0.0
  %4091 = vmatprep.subr.mxu0 0.0
  %4092 = vmatpush2.xpose.msra.mxu0 0.0
  %4093 = vmatprep.subr.mxu0 0.0
  %4094 = vmatpush2.xpose.msra.mxu0 0.0
  %4095 = vmatprep.subr.mxu0 0.0
  %4096 = vmatpush2.xpose.msra.mxu0 0.0
  %4097 = vmatprep.subr.mxu0 0.0
  %4098 = vmatpush2.xpose.msra.mxu0 0.0
  %4099 = vmatprep.subr.mxu0 0.0
  %4100 = vmatpush2.xpose.msra.mxu0 0.0
  %4101 = vmatprep.subr.mxu0 0.0
  %4102 = vmatpush2.xpose.msra.mxu0 0.0
  %4103 = vmatprep.subr.mxu0 0.0
  %4104 = vmatpush2.xpose.msra.mxu0 0.0
  %4105 = vmatprep.subr.mxu0 0.0
  %4106 = vmatpush2.xpose.msra.mxu0 0.0
  %4107 = vmatprep.subr.mxu0 0.0
  %4108 = vmatpush2.xpose.msra.mxu0 0.0
  %4109 = vmatprep.subr.mxu0 0.0
  %4110 = vmatpush2.xpose.msra.mxu0 0.0
  %4111 = vmatprep.mubr.f32.mxu0 0.0
  %4112 = vmatmul.mubr.f32.gmra.mxu0 %v4039
  %v4113 = vpop.f32.mrf.mxu0
  %v4114 = vadd.f32 0.0, %v4113
  %v4115 = vpop.f32.mrf.mxu0
  %4116 = vmatprep.mubr.f32.mxu0 0.0
  %4117 = vmatmul.mubr.f32.gmra.mxu0 %v4041
  %v4118 = vpop.f32.mrf.mxu0
  %v4119 = vadd.f32 0.0, %v4118
  %v4120 = vpop.f32.mrf.mxu0
  %4121 = vdwg.mxu0
  %v4122 = vmul.f32 %v4114, 0.35355338
  %v4123 = vmul.f32 %v4119, 0.35355338
  %v4124 = vadd.f32 %v4122, %v2363
  %v4125 = vadd.f32 %v4123, %v2364
  %v4126 = vsel %vm2596, %v4124, -inf
  %4127 = vmax.xlane.f32.xlu0 %v4126
  %v4128 = vpop.xlane.xlu0 %4127
  %v4129 = vsel %vm2596, %v4125, -inf
  %4130 = vmax.xlane.f32.xlu0 %v4129
  %v4131 = vpop.xlane.xlu0 %4130
  %v4132 = vsub.f32 %v4124, %v4128
  %v4133 = vsub.f32 %v4125, %v4131
  %v4134 = vmul.f32 %v4132, 1.442695
  %v4135 = vpow.pop %v4134
  %v4136 = vmul.f32 %v4133, 1.442695
  %v4137 = vpow.pop %v4136
  %v4138 = vsel %vm2596, %v4135, 0.0
  %4139 = vadd.xlane.f32.xlu0 %v4138
  %v4140 = vpop.xlane.xlu0 %4139
  %v4141 = vsel %vm2596, %v4137, 0.0
  %4142 = vadd.xlane.f32.xlu0 %v4141
  %v4143 = vpop.xlane.xlu0 %4142
  %v4144 = vrcp.pop %v4140
  %v4145 = vrcp.pop %v4143
  %v4146 = vmul.f32 %v4135, %v4144
  %v4147 = vmul.f32 %v4137, %v4145
  %4148 = vrot.lane.b32.xlu0 %v4020, 64
  %v4149 = vpop.permute.xlu0 %4148
  %4150 = vrot.lane.b32.xlu0 %v4025, 64
  %v4151 = vpop.permute.xlu0 %4150
  %v4155 = vsel %vm2596, %v4146, 0
  %v4158 = vsel %vm2596, %v4147, 0
  %4160 = vmatprep.subr.mxu0 0.0
  %4161 = vmatpush1.msra.mxu0 0.0
  %4162 = vmatprep.subr.mxu0 0.0
  %4163 = vmatpush1.msra.mxu0 0.0
  %4164 = vmatprep.subr.mxu0 0.0
  %4165 = vmatpush1.msra.mxu0 0.0
  %4166 = vmatprep.subr.mxu0 0.0
  %4167 = vmatpush1.msra.mxu0 0.0
  %4168 = vmatprep.subr.mxu0 0.0
  %4169 = vmatpush1.msra.mxu0 0.0
  %4170 = vmatprep.subr.mxu0 0.0
  %4171 = vmatpush1.msra.mxu0 0.0
  %4172 = vmatprep.subr.mxu0 0.0
  %4173 = vmatpush1.msra.mxu0 0.0
  %4174 = vmatprep.subr.mxu0 0.0
  %4175 = vmatpush1.msra.mxu0 0.0
  %4176 = vmatprep.subr.mxu0 0.0
  %4177 = vmatpush1.msra.mxu0 0.0
  %4178 = vmatprep.subr.mxu0 0.0
  %4179 = vmatpush1.msra.mxu0 0.0
  %4180 = vmatprep.subr.mxu0 0.0
  %4181 = vmatpush1.msra.mxu0 0.0
  %4182 = vmatprep.subr.mxu0 0.0
  %4183 = vmatpush1.msra.mxu0 0.0
  %4184 = vmatprep.subr.mxu0 0.0
  %4185 = vmatpush1.msra.mxu0 0.0
  %4186 = vmatprep.subr.mxu0 0.0
  %4187 = vmatpush1.msra.mxu0 0.0
  %4188 = vmatprep.subr.mxu0 0.0
  %4189 = vmatpush1.msra.mxu0 %v4151
  %4190 = vmatprep.subr.mxu0 0.0
  %4191 = vmatpush1.msra.mxu0 %v4149
  %4192 = vmatprep.subr.mxu0 0.0
  %4193 = vmatpush2.msra.mxu0 0.0
  %4194 = vmatprep.subr.mxu0 0.0
  %4195 = vmatpush2.msra.mxu0 0.0
  %4196 = vmatprep.subr.mxu0 0.0
  %4197 = vmatpush2.msra.mxu0 0.0
  %4198 = vmatprep.subr.mxu0 0.0
  %4199 = vmatpush2.msra.mxu0 0.0
  %4200 = vmatprep.subr.mxu0 0.0
  %4201 = vmatpush2.msra.mxu0 0.0
  %4202 = vmatprep.subr.mxu0 0.0
  %4203 = vmatpush2.msra.mxu0 0.0
  %4204 = vmatprep.subr.mxu0 0.0
  %4205 = vmatpush2.msra.mxu0 0.0
  %4206 = vmatprep.subr.mxu0 0.0
  %4207 = vmatpush2.msra.mxu0 0.0
  %4208 = vmatprep.subr.mxu0 0.0
  %4209 = vmatpush2.msra.mxu0 0.0
  %4210 = vmatprep.subr.mxu0 0.0
  %4211 = vmatpush2.msra.mxu0 0.0
  %4212 = vmatprep.subr.mxu0 0.0
  %4213 = vmatpush2.msra.mxu0 0.0
  %4214 = vmatprep.subr.mxu0 0.0
  %4215 = vmatpush2.msra.mxu0 0.0
  %4216 = vmatprep.subr.mxu0 0.0
  %4217 = vmatpush2.msra.mxu0 0.0
  %4218 = vmatprep.subr.mxu0 0.0
  %4219 = vmatpush2.msra.mxu0 0.0
  %4220 = vmatprep.subr.mxu0 0.0
  %4221 = vmatpush2.msra.mxu0 0.0
  %4222 = vmatprep.subr.mxu0 0.0
  %4223 = vmatpush2.msra.mxu0 0.0
  %4224 = vmatprep.mubr.f32.mxu0 0.0
  %4225 = vmatmul.mubr.f32.gmra.mxu0 %v4155
  %v4226 = vpop.f32.mrf.mxu0
  %v4227 = vadd.f32 0.0, %v4226
  %v4228 = vpop.f32.mrf.mxu0
  %4229 = vmatprep.mubr.f32.mxu0 0.0
  %4230 = vmatmul.mubr.f32.gmra.mxu0 %v4158
  %v4231 = vpop.f32.mrf.mxu0
  %v4232 = vadd.f32 0.0, %v4231
  %v4233 = vpop.f32.mrf.mxu0
  %4234 = vdwg.mxu0
  %4235 = vrot.lane.b32.xlu0 %v4020, 120
  %v4236 = vpop.permute.xlu0 %4235
  %4237 = vrot.lane.b32.xlu0 %v4025, 120
  %v4238 = vpop.permute.xlu0 %4237
  %4239 = vrot.lane.b32.xlu0 %v4020, 88
  %v4240 = vpop.permute.xlu0 %4239
  %4241 = vrot.lane.b32.xlu0 %v4025, 88
  %v4242 = vpop.permute.xlu0 %4241
  %v4243 = vsel %vm2508, %v4236, 0
  %v4245 = vsel %vm2508, %v4238, 0
  %v4247 = vsel %vm2508, %v4240, 0
  %v4249 = vsel %vm2508, %v4242, 0
  %4251 = vmatprep.subr.mxu0 0.0
  %4252 = vmatpush1.xpose.msra.mxu0 0.0
  %4253 = vmatprep.subr.mxu0 0.0
  %4254 = vmatpush1.xpose.msra.mxu0 0.0
  %4255 = vmatprep.subr.mxu0 0.0
  %4256 = vmatpush1.xpose.msra.mxu0 0.0
  %4257 = vmatprep.subr.mxu0 0.0
  %4258 = vmatpush1.xpose.msra.mxu0 0.0
  %4259 = vmatprep.subr.mxu0 0.0
  %4260 = vmatpush1.xpose.msra.mxu0 0.0
  %4261 = vmatprep.subr.mxu0 0.0
  %4262 = vmatpush1.xpose.msra.mxu0 0.0
  %4263 = vmatprep.subr.mxu0 0.0
  %4264 = vmatpush1.xpose.msra.mxu0 0.0
  %4265 = vmatprep.subr.mxu0 0.0
  %4266 = vmatpush1.xpose.msra.mxu0 0.0
  %4267 = vmatprep.subr.mxu0 0.0
  %4268 = vmatpush1.xpose.msra.mxu0 0.0
  %4269 = vmatprep.subr.mxu0 0.0
  %4270 = vmatpush1.xpose.msra.mxu0 0.0
  %4271 = vmatprep.subr.mxu0 0.0
  %4272 = vmatpush1.xpose.msra.mxu0 0.0
  %4273 = vmatprep.subr.mxu0 0.0
  %4274 = vmatpush1.xpose.msra.mxu0 0.0
  %4275 = vmatprep.subr.mxu0 0.0
  %4276 = vmatpush1.xpose.msra.mxu0 0.0
  %4277 = vmatprep.subr.mxu0 0.0
  %4278 = vmatpush1.xpose.msra.mxu0 0.0
  %4279 = vmatprep.subr.mxu0 0.0
  %4280 = vmatpush1.xpose.msra.mxu0 %v4249
  %4281 = vmatprep.subr.mxu0 0.0
  %4282 = vmatpush1.xpose.msra.mxu0 %v4247
  %4283 = vmatprep.subr.mxu0 0.0
  %4284 = vmatpush2.xpose.msra.mxu0 0.0
  %4285 = vmatprep.subr.mxu0 0.0
  %4286 = vmatpush2.xpose.msra.mxu0 0.0
  %4287 = vmatprep.subr.mxu0 0.0
  %4288 = vmatpush2.xpose.msra.mxu0 0.0
  %4289 = vmatprep.subr.mxu0 0.0
  %4290 = vmatpush2.xpose.msra.mxu0 0.0
  %4291 = vmatprep.subr.mxu0 0.0
  %4292 = vmatpush2.xpose.msra.mxu0 0.0
  %4293 = vmatprep.subr.mxu0 0.0
  %4294 = vmatpush2.xpose.msra.mxu0 0.0
  %4295 = vmatprep.subr.mxu0 0.0
  %4296 = vmatpush2.xpose.msra.mxu0 0.0
  %4297 = vmatprep.subr.mxu0 0.0
  %4298 = vmatpush2.xpose.msra.mxu0 0.0
  %4299 = vmatprep.subr.mxu0 0.0
  %4300 = vmatpush2.xpose.msra.mxu0 0.0
  %4301 = vmatprep.subr.mxu0 0.0
  %4302 = vmatpush2.xpose.msra.mxu0 0.0
  %4303 = vmatprep.subr.mxu0 0.0
  %4304 = vmatpush2.xpose.msra.mxu0 0.0
  %4305 = vmatprep.subr.mxu0 0.0
  %4306 = vmatpush2.xpose.msra.mxu0 0.0
  %4307 = vmatprep.subr.mxu0 0.0
  %4308 = vmatpush2.xpose.msra.mxu0 0.0
  %4309 = vmatprep.subr.mxu0 0.0
  %4310 = vmatpush2.xpose.msra.mxu0 0.0
  %4311 = vmatprep.subr.mxu0 0.0
  %4312 = vmatpush2.xpose.msra.mxu0 0.0
  %4313 = vmatprep.subr.mxu0 0.0
  %4314 = vmatpush2.xpose.msra.mxu0 0.0
  %4315 = vmatprep.mubr.f32.mxu0 0.0
  %4316 = vmatmul.mubr.f32.gmra.mxu0 %v4243
  %v4317 = vpop.f32.mrf.mxu0
  %v4318 = vadd.f32 0.0, %v4317
  %v4319 = vpop.f32.mrf.mxu0
  %4320 = vmatprep.mubr.f32.mxu0 0.0
  %4321 = vmatmul.mubr.f32.gmra.mxu0 %v4245
  %v4322 = vpop.f32.mrf.mxu0
  %v4323 = vadd.f32 0.0, %v4322
  %v4324 = vpop.f32.mrf.mxu0
  %4325 = vdwg.mxu0
  %v4326 = vmul.f32 %v4318, 0.35355338
  %v4327 = vmul.f32 %v4323, 0.35355338
  %v4328 = vadd.f32 %v4326, %v2363
  %v4329 = vadd.f32 %v4327, %v2364
  %v4330 = vsel %vm2596, %v4328, -inf
  %4331 = vmax.xlane.f32.xlu0 %v4330
  %v4332 = vpop.xlane.xlu0 %4331
  %v4333 = vsel %vm2596, %v4329, -inf
  %4334 = vmax.xlane.f32.xlu0 %v4333
  %v4335 = vpop.xlane.xlu0 %4334
  %v4336 = vsub.f32 %v4328, %v4332
  %v4337 = vsub.f32 %v4329, %v4335
  %v4338 = vmul.f32 %v4336, 1.442695
  %v4339 = vpow.pop %v4338
  %v4340 = vmul.f32 %v4337, 1.442695
  %v4341 = vpow.pop %v4340
  %v4342 = vsel %vm2596, %v4339, 0.0
  %4343 = vadd.xlane.f32.xlu0 %v4342
  %v4344 = vpop.xlane.xlu0 %4343
  %v4345 = vsel %vm2596, %v4341, 0.0
  %4346 = vadd.xlane.f32.xlu0 %v4345
  %v4347 = vpop.xlane.xlu0 %4346
  %v4348 = vrcp.pop %v4344
  %v4349 = vrcp.pop %v4347
  %v4350 = vmul.f32 %v4339, %v4348
  %v4351 = vmul.f32 %v4341, %v4349
  %4352 = vrot.lane.b32.xlu0 %v4020, 56
  %v4353 = vpop.permute.xlu0 %4352
  %4354 = vrot.lane.b32.xlu0 %v4025, 56
  %v4355 = vpop.permute.xlu0 %4354
  %v4359 = vsel %vm2596, %v4350, 0
  %v4362 = vsel %vm2596, %v4351, 0
  %4364 = vmatprep.subr.mxu0 0.0
  %4365 = vmatpush1.msra.mxu0 0.0
  %4366 = vmatprep.subr.mxu0 0.0
  %4367 = vmatpush1.msra.mxu0 0.0
  %4368 = vmatprep.subr.mxu0 0.0
  %4369 = vmatpush1.msra.mxu0 0.0
  %4370 = vmatprep.subr.mxu0 0.0
  %4371 = vmatpush1.msra.mxu0 0.0
  %4372 = vmatprep.subr.mxu0 0.0
  %4373 = vmatpush1.msra.mxu0 0.0
  %4374 = vmatprep.subr.mxu0 0.0
  %4375 = vmatpush1.msra.mxu0 0.0
  %4376 = vmatprep.subr.mxu0 0.0
  %4377 = vmatpush1.msra.mxu0 0.0
  %4378 = vmatprep.subr.mxu0 0.0
  %4379 = vmatpush1.msra.mxu0 0.0
  %4380 = vmatprep.subr.mxu0 0.0
  %4381 = vmatpush1.msra.mxu0 0.0
  %4382 = vmatprep.subr.mxu0 0.0
  %4383 = vmatpush1.msra.mxu0 0.0
  %4384 = vmatprep.subr.mxu0 0.0
  %4385 = vmatpush1.msra.mxu0 0.0
  %4386 = vmatprep.subr.mxu0 0.0
  %4387 = vmatpush1.msra.mxu0 0.0
  %4388 = vmatprep.subr.mxu0 0.0
  %4389 = vmatpush1.msra.mxu0 0.0
  %4390 = vmatprep.subr.mxu0 0.0
  %4391 = vmatpush1.msra.mxu0 0.0
  %4392 = vmatprep.subr.mxu0 0.0
  %4393 = vmatpush1.msra.mxu0 %v4355
  %4394 = vmatprep.subr.mxu0 0.0
  %4395 = vmatpush1.msra.mxu0 %v4353
  %4396 = vmatprep.subr.mxu0 0.0
  %4397 = vmatpush2.msra.mxu0 0.0
  %4398 = vmatprep.subr.mxu0 0.0
  %4399 = vmatpush2.msra.mxu0 0.0
  %4400 = vmatprep.subr.mxu0 0.0
  %4401 = vmatpush2.msra.mxu0 0.0
  %4402 = vmatprep.subr.mxu0 0.0
  %4403 = vmatpush2.msra.mxu0 0.0
  %4404 = vmatprep.subr.mxu0 0.0
  %4405 = vmatpush2.msra.mxu0 0.0
  %4406 = vmatprep.subr.mxu0 0.0
  %4407 = vmatpush2.msra.mxu0 0.0
  %4408 = vmatprep.subr.mxu0 0.0
  %4409 = vmatpush2.msra.mxu0 0.0
  %4410 = vmatprep.subr.mxu0 0.0
  %4411 = vmatpush2.msra.mxu0 0.0
  %4412 = vmatprep.subr.mxu0 0.0
  %4413 = vmatpush2.msra.mxu0 0.0
  %4414 = vmatprep.subr.mxu0 0.0
  %4415 = vmatpush2.msra.mxu0 0.0
  %4416 = vmatprep.subr.mxu0 0.0
  %4417 = vmatpush2.msra.mxu0 0.0
  %4418 = vmatprep.subr.mxu0 0.0
  %4419 = vmatpush2.msra.mxu0 0.0
  %4420 = vmatprep.subr.mxu0 0.0
  %4421 = vmatpush2.msra.mxu0 0.0
  %4422 = vmatprep.subr.mxu0 0.0
  %4423 = vmatpush2.msra.mxu0 0.0
  %4424 = vmatprep.subr.mxu0 0.0
  %4425 = vmatpush2.msra.mxu0 0.0
  %4426 = vmatprep.subr.mxu0 0.0
  %4427 = vmatpush2.msra.mxu0 0.0
  %4428 = vmatprep.mubr.f32.mxu0 0.0
  %4429 = vmatmul.mubr.f32.gmra.mxu0 %v4359
  %v4430 = vpop.f32.mrf.mxu0
  %v4431 = vadd.f32 0.0, %v4430
  %v4432 = vpop.f32.mrf.mxu0
  %4433 = vmatprep.mubr.f32.mxu0 0.0
  %4434 = vmatmul.mubr.f32.gmra.mxu0 %v4362
  %v4435 = vpop.f32.mrf.mxu0
  %v4436 = vadd.f32 0.0, %v4435
  %v4437 = vpop.f32.mrf.mxu0
  %4438 = vdwg.mxu0
  %v4440 = vsel %vm2508, %v4431, 0
  %v4443 = vsel %vm2508, %v4436, 0
  %4445 = vmatprep.subr.mxu0 0.0
  %4446 = vmatpush1.msra.mxu0 0.0
  %4447 = vmatprep.subr.mxu0 0.0
  %4448 = vmatpush1.msra.mxu0 0.0
  %4449 = vmatprep.subr.mxu0 0.0
  %4450 = vmatpush1.msra.mxu0 0.0
  %4451 = vmatprep.subr.mxu0 0.0
  %4452 = vmatpush1.msra.mxu0 0.0
  %4453 = vmatprep.subr.mxu0 0.0
  %4454 = vmatpush1.msra.mxu0 0.0
  %4455 = vmatprep.subr.mxu0 0.0
  %4456 = vmatpush1.msra.mxu0 0.0
  %4457 = vmatprep.subr.mxu0 0.0
  %4458 = vmatpush1.msra.mxu0 0.0
  %4459 = vmatprep.subr.mxu0 0.0
  %4460 = vmatpush1.msra.mxu0 0.0
  %4461 = vmatprep.subr.mxu0 0.0
  %4462 = vmatpush1.msra.mxu0 0.0
  %4463 = vmatprep.subr.mxu0 0.0
  %4464 = vmatpush1.msra.mxu0 0.0
  %4465 = vmatprep.subr.mxu0 0.0
  %4466 = vmatpush1.msra.mxu0 0.0
  %4467 = vmatprep.subr.mxu0 0.0
  %4468 = vmatpush1.msra.mxu0 0.0
  %4469 = vmatprep.subr.mxu0 0.0
  %4470 = vmatpush1.msra.mxu0 0.0
  %4471 = vmatprep.subr.mxu0 0.0
  %4472 = vmatpush1.msra.mxu0 0.0
  %4473 = vmatprep.subr.mxu0 0.0
  %4474 = vmatpush1.msra.mxu0 0.0
  %4475 = vmatprep.subr.mxu0 0.0
  %4476 = vmatpush1.msra.mxu0 %v4029
  %4477 = vmatprep.subr.mxu0 0.0
  %4478 = vmatpush2.msra.mxu0 0.0
  %4479 = vmatprep.subr.mxu0 0.0
  %4480 = vmatpush2.msra.mxu0 0.0
  %4481 = vmatprep.subr.mxu0 0.0
  %4482 = vmatpush2.msra.mxu0 0.0
  %4483 = vmatprep.subr.mxu0 0.0
  %4484 = vmatpush2.msra.mxu0 0.0
  %4485 = vmatprep.subr.mxu0 0.0
  %4486 = vmatpush2.msra.mxu0 0.0
  %4487 = vmatprep.subr.mxu0 0.0
  %4488 = vmatpush2.msra.mxu0 0.0
  %4489 = vmatprep.subr.mxu0 0.0
  %4490 = vmatpush2.msra.mxu0 0.0
  %4491 = vmatprep.subr.mxu0 0.0
  %4492 = vmatpush2.msra.mxu0 0.0
  %4493 = vmatprep.subr.mxu0 0.0
  %4494 = vmatpush2.msra.mxu0 0.0
  %4495 = vmatprep.subr.mxu0 0.0
  %4496 = vmatpush2.msra.mxu0 0.0
  %4497 = vmatprep.subr.mxu0 0.0
  %4498 = vmatpush2.msra.mxu0 0.0
  %4499 = vmatprep.subr.mxu0 0.0
  %4500 = vmatpush2.msra.mxu0 0.0
  %4501 = vmatprep.subr.mxu0 0.0
  %4502 = vmatpush2.msra.mxu0 0.0
  %4503 = vmatprep.subr.mxu0 0.0
  %4504 = vmatpush2.msra.mxu0 0.0
  %4505 = vmatprep.subr.mxu0 0.0
  %4506 = vmatpush2.msra.mxu0 0.0
  %4507 = vmatprep.subr.mxu0 0.0
  %4508 = vmatpush2.msra.mxu0 0.0
  %4509 = vmatprep.mubr.f32.mxu0 0.0
  %4510 = vmatmul.mubr.f32.gmra.mxu0 %v4440
  %v4511 = vpop.f32.mrf.mxu0
  %v4512 = vadd.f32 0.0, %v4511
  %v4513 = vpop.f32.mrf.mxu0
  %4514 = vmatprep.mubr.f32.mxu0 0.0
  %4515 = vmatmul.mubr.f32.gmra.mxu0 %v4443
  %v4516 = vpop.f32.mrf.mxu0
  %v4517 = vadd.f32 0.0, %v4516
  %v4518 = vpop.f32.mrf.mxu0
  %4519 = vdwg.mxu0
  %v4521 = vsel %vm2508, %v4227, 0
  %v4524 = vsel %vm2508, %v4232, 0
  %4526 = vmatprep.subr.mxu0 0.0
  %4527 = vmatpush1.msra.mxu0 0.0
  %4528 = vmatprep.subr.mxu0 0.0
  %4529 = vmatpush1.msra.mxu0 0.0
  %4530 = vmatprep.subr.mxu0 0.0
  %4531 = vmatpush1.msra.mxu0 0.0
  %4532 = vmatprep.subr.mxu0 0.0
  %4533 = vmatpush1.msra.mxu0 0.0
  %4534 = vmatprep.subr.mxu0 0.0
  %4535 = vmatpush1.msra.mxu0 0.0
  %4536 = vmatprep.subr.mxu0 0.0
  %4537 = vmatpush1.msra.mxu0 0.0
  %4538 = vmatprep.subr.mxu0 0.0
  %4539 = vmatpush1.msra.mxu0 0.0
  %4540 = vmatprep.subr.mxu0 0.0
  %4541 = vmatpush1.msra.mxu0 0.0
  %4542 = vmatprep.subr.mxu0 0.0
  %4543 = vmatpush1.msra.mxu0 0.0
  %4544 = vmatprep.subr.mxu0 0.0
  %4545 = vmatpush1.msra.mxu0 0.0
  %4546 = vmatprep.subr.mxu0 0.0
  %4547 = vmatpush1.msra.mxu0 0.0
  %4548 = vmatprep.subr.mxu0 0.0
  %4549 = vmatpush1.msra.mxu0 0.0
  %4550 = vmatprep.subr.mxu0 0.0
  %4551 = vmatpush1.msra.mxu0 0.0
  %4552 = vmatprep.subr.mxu0 0.0
  %4553 = vmatpush1.msra.mxu0 0.0
  %4554 = vmatprep.subr.mxu0 0.0
  %4555 = vmatpush1.msra.mxu0 0.0
  %4556 = vmatprep.subr.mxu0 0.0
  %4557 = vmatpush1.msra.mxu0 %v4028
  %4558 = vmatprep.subr.mxu0 0.0
  %4559 = vmatpush2.msra.mxu0 0.0
  %4560 = vmatprep.subr.mxu0 0.0
  %4561 = vmatpush2.msra.mxu0 0.0
  %4562 = vmatprep.subr.mxu0 0.0
  %4563 = vmatpush2.msra.mxu0 0.0
  %4564 = vmatprep.subr.mxu0 0.0
  %4565 = vmatpush2.msra.mxu0 0.0
  %4566 = vmatprep.subr.mxu0 0.0
  %4567 = vmatpush2.msra.mxu0 0.0
  %4568 = vmatprep.subr.mxu0 0.0
  %4569 = vmatpush2.msra.mxu0 0.0
  %4570 = vmatprep.subr.mxu0 0.0
  %4571 = vmatpush2.msra.mxu0 0.0
  %4572 = vmatprep.subr.mxu0 0.0
  %4573 = vmatpush2.msra.mxu0 0.0
  %4574 = vmatprep.subr.mxu0 0.0
  %4575 = vmatpush2.msra.mxu0 0.0
  %4576 = vmatprep.subr.mxu0 0.0
  %4577 = vmatpush2.msra.mxu0 0.0
  %4578 = vmatprep.subr.mxu0 0.0
  %4579 = vmatpush2.msra.mxu0 0.0
  %4580 = vmatprep.subr.mxu0 0.0
  %4581 = vmatpush2.msra.mxu0 0.0
  %4582 = vmatprep.subr.mxu0 0.0
  %4583 = vmatpush2.msra.mxu0 0.0
  %4584 = vmatprep.subr.mxu0 0.0
  %4585 = vmatpush2.msra.mxu0 0.0
  %4586 = vmatprep.subr.mxu0 0.0
  %4587 = vmatpush2.msra.mxu0 0.0
  %4588 = vmatprep.subr.mxu0 0.0
  %4589 = vmatpush2.msra.mxu0 0.0
  %4590 = vmatprep.mubr.f32.mxu0 0.0
  %4591 = vmatmul.mubr.f32.gmra.mxu0 %v4521
  %v4592 = vpop.f32.mrf.mxu0
  %v4593 = vadd.f32 %v4512, %v4592
  %v4594 = vpop.f32.mrf.mxu0
  %4595 = vmatprep.mubr.f32.mxu0 0.0
  %4596 = vmatmul.mubr.f32.gmra.mxu0 %v4524
  %v4597 = vpop.f32.mrf.mxu0
  %v4598 = vadd.f32 %v4517, %v4597
  %v4599 = vpop.f32.mrf.mxu0
  %4600 = vdwg.mxu0
  %4601 = vrot.lane.b32.xlu0 %v4020, 112
  %v4602 = vpop.permute.xlu0 %4601
  %4603 = vrot.lane.b32.xlu0 %v4025, 112
  %v4604 = vpop.permute.xlu0 %4603
  %4605 = vrot.lane.b32.xlu0 %v4020, 80
  %v4606 = vpop.permute.xlu0 %4605
  %4607 = vrot.lane.b32.xlu0 %v4025, 80
  %v4608 = vpop.permute.xlu0 %4607
  %v4609 = vsel %vm2508, %v4602, 0
  %v4611 = vsel %vm2508, %v4604, 0
  %v4613 = vsel %vm2508, %v4606, 0
  %v4615 = vsel %vm2508, %v4608, 0
  %4617 = vmatprep.subr.mxu0 0.0
  %4618 = vmatpush1.xpose.msra.mxu0 0.0
  %4619 = vmatprep.subr.mxu0 0.0
  %4620 = vmatpush1.xpose.msra.mxu0 0.0
  %4621 = vmatprep.subr.mxu0 0.0
  %4622 = vmatpush1.xpose.msra.mxu0 0.0
  %4623 = vmatprep.subr.mxu0 0.0
  %4624 = vmatpush1.xpose.msra.mxu0 0.0
  %4625 = vmatprep.subr.mxu0 0.0
  %4626 = vmatpush1.xpose.msra.mxu0 0.0
  %4627 = vmatprep.subr.mxu0 0.0
  %4628 = vmatpush1.xpose.msra.mxu0 0.0
  %4629 = vmatprep.subr.mxu0 0.0
  %4630 = vmatpush1.xpose.msra.mxu0 0.0
  %4631 = vmatprep.subr.mxu0 0.0
  %4632 = vmatpush1.xpose.msra.mxu0 0.0
  %4633 = vmatprep.subr.mxu0 0.0
  %4634 = vmatpush1.xpose.msra.mxu0 0.0
  %4635 = vmatprep.subr.mxu0 0.0
  %4636 = vmatpush1.xpose.msra.mxu0 0.0
  %4637 = vmatprep.subr.mxu0 0.0
  %4638 = vmatpush1.xpose.msra.mxu0 0.0
  %4639 = vmatprep.subr.mxu0 0.0
  %4640 = vmatpush1.xpose.msra.mxu0 0.0
  %4641 = vmatprep.subr.mxu0 0.0
  %4642 = vmatpush1.xpose.msra.mxu0 0.0
  %4643 = vmatprep.subr.mxu0 0.0
  %4644 = vmatpush1.xpose.msra.mxu0 0.0
  %4645 = vmatprep.subr.mxu0 0.0
  %4646 = vmatpush1.xpose.msra.mxu0 %v4615
  %4647 = vmatprep.subr.mxu0 0.0
  %4648 = vmatpush1.xpose.msra.mxu0 %v4613
  %4649 = vmatprep.subr.mxu0 0.0
  %4650 = vmatpush2.xpose.msra.mxu0 0.0
  %4651 = vmatprep.subr.mxu0 0.0
  %4652 = vmatpush2.xpose.msra.mxu0 0.0
  %4653 = vmatprep.subr.mxu0 0.0
  %4654 = vmatpush2.xpose.msra.mxu0 0.0
  %4655 = vmatprep.subr.mxu0 0.0
  %4656 = vmatpush2.xpose.msra.mxu0 0.0
  %4657 = vmatprep.subr.mxu0 0.0
  %4658 = vmatpush2.xpose.msra.mxu0 0.0
  %4659 = vmatprep.subr.mxu0 0.0
  %4660 = vmatpush2.xpose.msra.mxu0 0.0
  %4661 = vmatprep.subr.mxu0 0.0
  %4662 = vmatpush2.xpose.msra.mxu0 0.0
  %4663 = vmatprep.subr.mxu0 0.0
  %4664 = vmatpush2.xpose.msra.mxu0 0.0
  %4665 = vmatprep.subr.mxu0 0.0
  %4666 = vmatpush2.xpose.msra.mxu0 0.0
  %4667 = vmatprep.subr.mxu0 0.0
  %4668 = vmatpush2.xpose.msra.mxu0 0.0
  %4669 = vmatprep.subr.mxu0 0.0
  %4670 = vmatpush2.xpose.msra.mxu0 0.0
  %4671 = vmatprep.subr.mxu0 0.0
  %4672 = vmatpush2.xpose.msra.mxu0 0.0
  %4673 = vmatprep.subr.mxu0 0.0
  %4674 = vmatpush2.xpose.msra.mxu0 0.0
  %4675 = vmatprep.subr.mxu0 0.0
  %4676 = vmatpush2.xpose.msra.mxu0 0.0
  %4677 = vmatprep.subr.mxu0 0.0
  %4678 = vmatpush2.xpose.msra.mxu0 0.0
  %4679 = vmatprep.subr.mxu0 0.0
  %4680 = vmatpush2.xpose.msra.mxu0 0.0
  %4681 = vmatprep.mubr.f32.mxu0 0.0
  %4682 = vmatmul.mubr.f32.gmra.mxu0 %v4609
  %v4683 = vpop.f32.mrf.mxu0
  %v4684 = vadd.f32 0.0, %v4683
  %v4685 = vpop.f32.mrf.mxu0
  %4686 = vmatprep.mubr.f32.mxu0 0.0
  %4687 = vmatmul.mubr.f32.gmra.mxu0 %v4611
  %v4688 = vpop.f32.mrf.mxu0
  %v4689 = vadd.f32 0.0, %v4688
  %v4690 = vpop.f32.mrf.mxu0
  %4691 = vdwg.mxu0
  %v4692 = vmul.f32 %v4684, 0.35355338
  %v4693 = vmul.f32 %v4689, 0.35355338
  %v4694 = vadd.f32 %v4692, %v2363
  %v4695 = vadd.f32 %v4693, %v2364
  %v4696 = vsel %vm2596, %v4694, -inf
  %4697 = vmax.xlane.f32.xlu0 %v4696
  %v4698 = vpop.xlane.xlu0 %4697
  %v4699 = vsel %vm2596, %v4695, -inf
  %4700 = vmax.xlane.f32.xlu0 %v4699
  %v4701 = vpop.xlane.xlu0 %4700
  %v4702 = vsub.f32 %v4694, %v4698
  %v4703 = vsub.f32 %v4695, %v4701
  %v4704 = vmul.f32 %v4702, 1.442695
  %v4705 = vpow.pop %v4704
  %v4706 = vmul.f32 %v4703, 1.442695
  %v4707 = vpow.pop %v4706
  %v4708 = vsel %vm2596, %v4705, 0.0
  %4709 = vadd.xlane.f32.xlu0 %v4708
  %v4710 = vpop.xlane.xlu0 %4709
  %v4711 = vsel %vm2596, %v4707, 0.0
  %4712 = vadd.xlane.f32.xlu0 %v4711
  %v4713 = vpop.xlane.xlu0 %4712
  %v4714 = vrcp.pop %v4710
  %v4715 = vrcp.pop %v4713
  %v4716 = vmul.f32 %v4705, %v4714
  %v4717 = vmul.f32 %v4707, %v4715
  %4718 = vrot.lane.b32.xlu0 %v4020, 48
  %v4719 = vpop.permute.xlu0 %4718
  %4720 = vrot.lane.b32.xlu0 %v4025, 48
  %v4721 = vpop.permute.xlu0 %4720
  %v4725 = vsel %vm2596, %v4716, 0
  %v4728 = vsel %vm2596, %v4717, 0
  %4730 = vmatprep.subr.mxu0 0.0
  %4731 = vmatpush1.msra.mxu0 0.0
  %4732 = vmatprep.subr.mxu0 0.0
  %4733 = vmatpush1.msra.mxu0 0.0
  %4734 = vmatprep.subr.mxu0 0.0
  %4735 = vmatpush1.msra.mxu0 0.0
  %4736 = vmatprep.subr.mxu0 0.0
  %4737 = vmatpush1.msra.mxu0 0.0
  %4738 = vmatprep.subr.mxu0 0.0
  %4739 = vmatpush1.msra.mxu0 0.0
  %4740 = vmatprep.subr.mxu0 0.0
  %4741 = vmatpush1.msra.mxu0 0.0
  %4742 = vmatprep.subr.mxu0 0.0
  %4743 = vmatpush1.msra.mxu0 0.0
  %4744 = vmatprep.subr.mxu0 0.0
  %4745 = vmatpush1.msra.mxu0 0.0
  %4746 = vmatprep.subr.mxu0 0.0
  %4747 = vmatpush1.msra.mxu0 0.0
  %4748 = vmatprep.subr.mxu0 0.0
  %4749 = vmatpush1.msra.mxu0 0.0
  %4750 = vmatprep.subr.mxu0 0.0
  %4751 = vmatpush1.msra.mxu0 0.0
  %4752 = vmatprep.subr.mxu0 0.0
  %4753 = vmatpush1.msra.mxu0 0.0
  %4754 = vmatprep.subr.mxu0 0.0
  %4755 = vmatpush1.msra.mxu0 0.0
  %4756 = vmatprep.subr.mxu0 0.0
  %4757 = vmatpush1.msra.mxu0 0.0
  %4758 = vmatprep.subr.mxu0 0.0
  %4759 = vmatpush1.msra.mxu0 %v4721
  %4760 = vmatprep.subr.mxu0 0.0
  %4761 = vmatpush1.msra.mxu0 %v4719
  %4762 = vmatprep.subr.mxu0 0.0
  %4763 = vmatpush2.msra.mxu0 0.0
  %4764 = vmatprep.subr.mxu0 0.0
  %4765 = vmatpush2.msra.mxu0 0.0
  %4766 = vmatprep.subr.mxu0 0.0
  %4767 = vmatpush2.msra.mxu0 0.0
  %4768 = vmatprep.subr.mxu0 0.0
  %4769 = vmatpush2.msra.mxu0 0.0
  %4770 = vmatprep.subr.mxu0 0.0
  %4771 = vmatpush2.msra.mxu0 0.0
  %4772 = vmatprep.subr.mxu0 0.0
  %4773 = vmatpush2.msra.mxu0 0.0
  %4774 = vmatprep.subr.mxu0 0.0
  %4775 = vmatpush2.msra.mxu0 0.0
  %4776 = vmatprep.subr.mxu0 0.0
  %4777 = vmatpush2.msra.mxu0 0.0
  %4778 = vmatprep.subr.mxu0 0.0
  %4779 = vmatpush2.msra.mxu0 0.0
  %4780 = vmatprep.subr.mxu0 0.0
  %4781 = vmatpush2.msra.mxu0 0.0
  %4782 = vmatprep.subr.mxu0 0.0
  %4783 = vmatpush2.msra.mxu0 0.0
  %4784 = vmatprep.subr.mxu0 0.0
  %4785 = vmatpush2.msra.mxu0 0.0
  %4786 = vmatprep.subr.mxu0 0.0
  %4787 = vmatpush2.msra.mxu0 0.0
  %4788 = vmatprep.subr.mxu0 0.0
  %4789 = vmatpush2.msra.mxu0 0.0
  %4790 = vmatprep.subr.mxu0 0.0
  %4791 = vmatpush2.msra.mxu0 0.0
  %4792 = vmatprep.subr.mxu0 0.0
  %4793 = vmatpush2.msra.mxu0 0.0
  %4794 = vmatprep.mubr.f32.mxu0 0.0
  %4795 = vmatmul.mubr.f32.gmra.mxu0 %v4725
  %v4796 = vpop.f32.mrf.mxu0
  %v4797 = vadd.f32 0.0, %v4796
  %v4798 = vpop.f32.mrf.mxu0
  %4799 = vmatprep.mubr.f32.mxu0 0.0
  %4800 = vmatmul.mubr.f32.gmra.mxu0 %v4728
  %v4801 = vpop.f32.mrf.mxu0
  %v4802 = vadd.f32 0.0, %v4801
  %v4803 = vpop.f32.mrf.mxu0
  %4804 = vdwg.mxu0
  %v4806 = vsel %vm2508, %v4797, 0
  %v4809 = vsel %vm2508, %v4802, 0
  %4811 = vmatprep.subr.mxu0 0.0
  %4812 = vmatpush1.msra.mxu0 0.0
  %4813 = vmatprep.subr.mxu0 0.0
  %4814 = vmatpush1.msra.mxu0 0.0
  %4815 = vmatprep.subr.mxu0 0.0
  %4816 = vmatpush1.msra.mxu0 0.0
  %4817 = vmatprep.subr.mxu0 0.0
  %4818 = vmatpush1.msra.mxu0 0.0
  %4819 = vmatprep.subr.mxu0 0.0
  %4820 = vmatpush1.msra.mxu0 0.0
  %4821 = vmatprep.subr.mxu0 0.0
  %4822 = vmatpush1.msra.mxu0 0.0
  %4823 = vmatprep.subr.mxu0 0.0
  %4824 = vmatpush1.msra.mxu0 0.0
  %4825 = vmatprep.subr.mxu0 0.0
  %4826 = vmatpush1.msra.mxu0 0.0
  %4827 = vmatprep.subr.mxu0 0.0
  %4828 = vmatpush1.msra.mxu0 0.0
  %4829 = vmatprep.subr.mxu0 0.0
  %4830 = vmatpush1.msra.mxu0 0.0
  %4831 = vmatprep.subr.mxu0 0.0
  %4832 = vmatpush1.msra.mxu0 0.0
  %4833 = vmatprep.subr.mxu0 0.0
  %4834 = vmatpush1.msra.mxu0 0.0
  %4835 = vmatprep.subr.mxu0 0.0
  %4836 = vmatpush1.msra.mxu0 0.0
  %4837 = vmatprep.subr.mxu0 0.0
  %4838 = vmatpush1.msra.mxu0 0.0
  %4839 = vmatprep.subr.mxu0 0.0
  %4840 = vmatpush1.msra.mxu0 0.0
  %4841 = vmatprep.subr.mxu0 0.0
  %4842 = vmatpush1.msra.mxu0 %v4030
  %4843 = vmatprep.subr.mxu0 0.0
  %4844 = vmatpush2.msra.mxu0 0.0
  %4845 = vmatprep.subr.mxu0 0.0
  %4846 = vmatpush2.msra.mxu0 0.0
  %4847 = vmatprep.subr.mxu0 0.0
  %4848 = vmatpush2.msra.mxu0 0.0
  %4849 = vmatprep.subr.mxu0 0.0
  %4850 = vmatpush2.msra.mxu0 0.0
  %4851 = vmatprep.subr.mxu0 0.0
  %4852 = vmatpush2.msra.mxu0 0.0
  %4853 = vmatprep.subr.mxu0 0.0
  %4854 = vmatpush2.msra.mxu0 0.0
  %4855 = vmatprep.subr.mxu0 0.0
  %4856 = vmatpush2.msra.mxu0 0.0
  %4857 = vmatprep.subr.mxu0 0.0
  %4858 = vmatpush2.msra.mxu0 0.0
  %4859 = vmatprep.subr.mxu0 0.0
  %4860 = vmatpush2.msra.mxu0 0.0
  %4861 = vmatprep.subr.mxu0 0.0
  %4862 = vmatpush2.msra.mxu0 0.0
  %4863 = vmatprep.subr.mxu0 0.0
  %4864 = vmatpush2.msra.mxu0 0.0
  %4865 = vmatprep.subr.mxu0 0.0
  %4866 = vmatpush2.msra.mxu0 0.0
  %4867 = vmatprep.subr.mxu0 0.0
  %4868 = vmatpush2.msra.mxu0 0.0
  %4869 = vmatprep.subr.mxu0 0.0
  %4870 = vmatpush2.msra.mxu0 0.0
  %4871 = vmatprep.subr.mxu0 0.0
  %4872 = vmatpush2.msra.mxu0 0.0
  %4873 = vmatprep.subr.mxu0 0.0
  %4874 = vmatpush2.msra.mxu0 0.0
  %4875 = vmatprep.mubr.f32.mxu0 0.0
  %4876 = vmatmul.mubr.f32.gmra.mxu0 %v4806
  %v4877 = vpop.f32.mrf.mxu0
  %v4878 = vadd.f32 0.0, %v4877
  %v4879 = vpop.f32.mrf.mxu0
  %4880 = vmatprep.mubr.f32.mxu0 0.0
  %4881 = vmatmul.mubr.f32.gmra.mxu0 %v4809
  %v4882 = vpop.f32.mrf.mxu0
  %v4883 = vadd.f32 0.0, %v4882
  %v4884 = vpop.f32.mrf.mxu0
  %4885 = vdwg.mxu0
  %v4886 = vadd.f32 %v4593, %v4878
  %v4887 = vadd.f32 %v4598, %v4883
  %4888 = vrot.lane.b32.xlu0 %v4020, 104
  %v4889 = vpop.permute.xlu0 %4888
  %4890 = vrot.lane.b32.xlu0 %v4025, 104
  %v4891 = vpop.permute.xlu0 %4890
  %4892 = vrot.lane.b32.xlu0 %v4020, 72
  %v4893 = vpop.permute.xlu0 %4892
  %4894 = vrot.lane.b32.xlu0 %v4025, 72
  %v4895 = vpop.permute.xlu0 %4894
  %v4896 = vsel %vm2508, %v4889, 0
  %v4898 = vsel %vm2508, %v4891, 0
  %v4900 = vsel %vm2508, %v4893, 0
  %v4902 = vsel %vm2508, %v4895, 0
  %4904 = vmatprep.subr.mxu0 0.0
  %4905 = vmatpush1.xpose.msra.mxu0 0.0
  %4906 = vmatprep.subr.mxu0 0.0
  %4907 = vmatpush1.xpose.msra.mxu0 0.0
  %4908 = vmatprep.subr.mxu0 0.0
  %4909 = vmatpush1.xpose.msra.mxu0 0.0
  %4910 = vmatprep.subr.mxu0 0.0
  %4911 = vmatpush1.xpose.msra.mxu0 0.0
  %4912 = vmatprep.subr.mxu0 0.0
  %4913 = vmatpush1.xpose.msra.mxu0 0.0
  %4914 = vmatprep.subr.mxu0 0.0
  %4915 = vmatpush1.xpose.msra.mxu0 0.0
  %4916 = vmatprep.subr.mxu0 0.0
  %4917 = vmatpush1.xpose.msra.mxu0 0.0
  %4918 = vmatprep.subr.mxu0 0.0
  %4919 = vmatpush1.xpose.msra.mxu0 0.0
  %4920 = vmatprep.subr.mxu0 0.0
  %4921 = vmatpush1.xpose.msra.mxu0 0.0
  %4922 = vmatprep.subr.mxu0 0.0
  %4923 = vmatpush1.xpose.msra.mxu0 0.0
  %4924 = vmatprep.subr.mxu0 0.0
  %4925 = vmatpush1.xpose.msra.mxu0 0.0
  %4926 = vmatprep.subr.mxu0 0.0
  %4927 = vmatpush1.xpose.msra.mxu0 0.0
  %4928 = vmatprep.subr.mxu0 0.0
  %4929 = vmatpush1.xpose.msra.mxu0 0.0
  %4930 = vmatprep.subr.mxu0 0.0
  %4931 = vmatpush1.xpose.msra.mxu0 0.0
  %4932 = vmatprep.subr.mxu0 0.0
  %4933 = vmatpush1.xpose.msra.mxu0 %v4902
  %4934 = vmatprep.subr.mxu0 0.0
  %4935 = vmatpush1.xpose.msra.mxu0 %v4900
  %4936 = vmatprep.subr.mxu0 0.0
  %4937 = vmatpush2.xpose.msra.mxu0 0.0
  %4938 = vmatprep.subr.mxu0 0.0
  %4939 = vmatpush2.xpose.msra.mxu0 0.0
  %4940 = vmatprep.subr.mxu0 0.0
  %4941 = vmatpush2.xpose.msra.mxu0 0.0
  %4942 = vmatprep.subr.mxu0 0.0
  %4943 = vmatpush2.xpose.msra.mxu0 0.0
  %4944 = vmatprep.subr.mxu0 0.0
  %4945 = vmatpush2.xpose.msra.mxu0 0.0
  %4946 = vmatprep.subr.mxu0 0.0
  %4947 = vmatpush2.xpose.msra.mxu0 0.0
  %4948 = vmatprep.subr.mxu0 0.0
  %4949 = vmatpush2.xpose.msra.mxu0 0.0
  %4950 = vmatprep.subr.mxu0 0.0
  %4951 = vmatpush2.xpose.msra.mxu0 0.0
  %4952 = vmatprep.subr.mxu0 0.0
  %4953 = vmatpush2.xpose.msra.mxu0 0.0
  %4954 = vmatprep.subr.mxu0 0.0
  %4955 = vmatpush2.xpose.msra.mxu0 0.0
  %4956 = vmatprep.subr.mxu0 0.0
  %4957 = vmatpush2.xpose.msra.mxu0 0.0
  %4958 = vmatprep.subr.mxu0 0.0
  %4959 = vmatpush2.xpose.msra.mxu0 0.0
  %4960 = vmatprep.subr.mxu0 0.0
  %4961 = vmatpush2.xpose.msra.mxu0 0.0
  %4962 = vmatprep.subr.mxu0 0.0
  %4963 = vmatpush2.xpose.msra.mxu0 0.0
  %4964 = vmatprep.subr.mxu0 0.0
  %4965 = vmatpush2.xpose.msra.mxu0 0.0
  %4966 = vmatprep.subr.mxu0 0.0
  %4967 = vmatpush2.xpose.msra.mxu0 0.0
  %4968 = vmatprep.mubr.f32.mxu0 0.0
  %4969 = vmatmul.mubr.f32.gmra.mxu0 %v4896
  %v4970 = vpop.f32.mrf.mxu0
  %v4971 = vadd.f32 0.0, %v4970
  %v4972 = vpop.f32.mrf.mxu0
  %4973 = vmatprep.mubr.f32.mxu0 0.0
  %4974 = vmatmul.mubr.f32.gmra.mxu0 %v4898
  %v4975 = vpop.f32.mrf.mxu0
  %v4976 = vadd.f32 0.0, %v4975
  %v4977 = vpop.f32.mrf.mxu0
  %4978 = vdwg.mxu0
  %v4979 = vmul.f32 %v4971, 0.35355338
  %v4980 = vmul.f32 %v4976, 0.35355338
  %v4981 = vadd.f32 %v4979, %v2363
  %v4982 = vadd.f32 %v4980, %v2364
  %v4983 = vsel %vm2596, %v4981, -inf
  %4984 = vmax.xlane.f32.xlu0 %v4983
  %v4985 = vpop.xlane.xlu0 %4984
  %v4986 = vsel %vm2596, %v4982, -inf
  %4987 = vmax.xlane.f32.xlu0 %v4986
  %v4988 = vpop.xlane.xlu0 %4987
  %v4989 = vsub.f32 %v4981, %v4985
  %v4990 = vsub.f32 %v4982, %v4988
  %v4991 = vmul.f32 %v4989, 1.442695
  %v4992 = vpow.pop %v4991
  %v4993 = vmul.f32 %v4990, 1.442695
  %v4994 = vpow.pop %v4993
  %v4995 = vsel %vm2596, %v4992, 0.0
  %4996 = vadd.xlane.f32.xlu0 %v4995
  %v4997 = vpop.xlane.xlu0 %4996
  %v4998 = vsel %vm2596, %v4994, 0.0
  %4999 = vadd.xlane.f32.xlu0 %v4998
  %v5000 = vpop.xlane.xlu0 %4999
  %v5001 = vrcp.pop %v4997
  %v5002 = vrcp.pop %v5000
  %v5003 = vmul.f32 %v4992, %v5001
  %v5004 = vmul.f32 %v4994, %v5002
  %5005 = vrot.lane.b32.xlu0 %v4020, 40
  %v5006 = vpop.permute.xlu0 %5005
  %5007 = vrot.lane.b32.xlu0 %v4025, 40
  %v5008 = vpop.permute.xlu0 %5007
  %v5012 = vsel %vm2596, %v5003, 0
  %v5015 = vsel %vm2596, %v5004, 0
  %5017 = vmatprep.subr.mxu0 0.0
  %5018 = vmatpush1.msra.mxu0 0.0
  %5019 = vmatprep.subr.mxu0 0.0
  %5020 = vmatpush1.msra.mxu0 0.0
  %5021 = vmatprep.subr.mxu0 0.0
  %5022 = vmatpush1.msra.mxu0 0.0
  %5023 = vmatprep.subr.mxu0 0.0
  %5024 = vmatpush1.msra.mxu0 0.0
  %5025 = vmatprep.subr.mxu0 0.0
  %5026 = vmatpush1.msra.mxu0 0.0
  %5027 = vmatprep.subr.mxu0 0.0
  %5028 = vmatpush1.msra.mxu0 0.0
  %5029 = vmatprep.subr.mxu0 0.0
  %5030 = vmatpush1.msra.mxu0 0.0
  %5031 = vmatprep.subr.mxu0 0.0
  %5032 = vmatpush1.msra.mxu0 0.0
  %5033 = vmatprep.subr.mxu0 0.0
  %5034 = vmatpush1.msra.mxu0 0.0
  %5035 = vmatprep.subr.mxu0 0.0
  %5036 = vmatpush1.msra.mxu0 0.0
  %5037 = vmatprep.subr.mxu0 0.0
  %5038 = vmatpush1.msra.mxu0 0.0
  %5039 = vmatprep.subr.mxu0 0.0
  %5040 = vmatpush1.msra.mxu0 0.0
  %5041 = vmatprep.subr.mxu0 0.0
  %5042 = vmatpush1.msra.mxu0 0.0
  %5043 = vmatprep.subr.mxu0 0.0
  %5044 = vmatpush1.msra.mxu0 0.0
  %5045 = vmatprep.subr.mxu0 0.0
  %5046 = vmatpush1.msra.mxu0 %v5008
  %5047 = vmatprep.subr.mxu0 0.0
  %5048 = vmatpush1.msra.mxu0 %v5006
  %5049 = vmatprep.subr.mxu0 0.0
  %5050 = vmatpush2.msra.mxu0 0.0
  %5051 = vmatprep.subr.mxu0 0.0
  %5052 = vmatpush2.msra.mxu0 0.0
  %5053 = vmatprep.subr.mxu0 0.0
  %5054 = vmatpush2.msra.mxu0 0.0
  %5055 = vmatprep.subr.mxu0 0.0
  %5056 = vmatpush2.msra.mxu0 0.0
  %5057 = vmatprep.subr.mxu0 0.0
  %5058 = vmatpush2.msra.mxu0 0.0
  %5059 = vmatprep.subr.mxu0 0.0
  %5060 = vmatpush2.msra.mxu0 0.0
  %5061 = vmatprep.subr.mxu0 0.0
  %5062 = vmatpush2.msra.mxu0 0.0
  %5063 = vmatprep.subr.mxu0 0.0
  %5064 = vmatpush2.msra.mxu0 0.0
  %5065 = vmatprep.subr.mxu0 0.0
  %5066 = vmatpush2.msra.mxu0 0.0
  %5067 = vmatprep.subr.mxu0 0.0
  %5068 = vmatpush2.msra.mxu0 0.0
  %5069 = vmatprep.subr.mxu0 0.0
  %5070 = vmatpush2.msra.mxu0 0.0
  %5071 = vmatprep.subr.mxu0 0.0
  %5072 = vmatpush2.msra.mxu0 0.0
  %5073 = vmatprep.subr.mxu0 0.0
  %5074 = vmatpush2.msra.mxu0 0.0
  %5075 = vmatprep.subr.mxu0 0.0
  %5076 = vmatpush2.msra.mxu0 0.0
  %5077 = vmatprep.subr.mxu0 0.0
  %5078 = vmatpush2.msra.mxu0 0.0
  %5079 = vmatprep.subr.mxu0 0.0
  %5080 = vmatpush2.msra.mxu0 0.0
  %5081 = vmatprep.mubr.f32.mxu0 0.0
  %5082 = vmatmul.mubr.f32.gmra.mxu0 %v5012
  %v5083 = vpop.f32.mrf.mxu0
  %v5084 = vadd.f32 0.0, %v5083
  %v5085 = vpop.f32.mrf.mxu0
  %5086 = vmatprep.mubr.f32.mxu0 0.0
  %5087 = vmatmul.mubr.f32.gmra.mxu0 %v5015
  %v5088 = vpop.f32.mrf.mxu0
  %v5089 = vadd.f32 0.0, %v5088
  %v5090 = vpop.f32.mrf.mxu0
  %5091 = vdwg.mxu0
  %v5093 = vsel %vm2508, %v5084, 0
  %v5096 = vsel %vm2508, %v5089, 0
  %5098 = vmatprep.subr.mxu0 0.0
  %5099 = vmatpush1.msra.mxu0 0.0
  %5100 = vmatprep.subr.mxu0 0.0
  %5101 = vmatpush1.msra.mxu0 0.0
  %5102 = vmatprep.subr.mxu0 0.0
  %5103 = vmatpush1.msra.mxu0 0.0
  %5104 = vmatprep.subr.mxu0 0.0
  %5105 = vmatpush1.msra.mxu0 0.0
  %5106 = vmatprep.subr.mxu0 0.0
  %5107 = vmatpush1.msra.mxu0 0.0
  %5108 = vmatprep.subr.mxu0 0.0
  %5109 = vmatpush1.msra.mxu0 0.0
  %5110 = vmatprep.subr.mxu0 0.0
  %5111 = vmatpush1.msra.mxu0 0.0
  %5112 = vmatprep.subr.mxu0 0.0
  %5113 = vmatpush1.msra.mxu0 0.0
  %5114 = vmatprep.subr.mxu0 0.0
  %5115 = vmatpush1.msra.mxu0 0.0
  %5116 = vmatprep.subr.mxu0 0.0
  %5117 = vmatpush1.msra.mxu0 0.0
  %5118 = vmatprep.subr.mxu0 0.0
  %5119 = vmatpush1.msra.mxu0 0.0
  %5120 = vmatprep.subr.mxu0 0.0
  %5121 = vmatpush1.msra.mxu0 0.0
  %5122 = vmatprep.subr.mxu0 0.0
  %5123 = vmatpush1.msra.mxu0 0.0
  %5124 = vmatprep.subr.mxu0 0.0
  %5125 = vmatpush1.msra.mxu0 0.0
  %5126 = vmatprep.subr.mxu0 0.0
  %5127 = vmatpush1.msra.mxu0 0.0
  %5128 = vmatprep.subr.mxu0 0.0
  %5129 = vmatpush1.msra.mxu0 %v4031
  %5130 = vmatprep.subr.mxu0 0.0
  %5131 = vmatpush2.msra.mxu0 0.0
  %5132 = vmatprep.subr.mxu0 0.0
  %5133 = vmatpush2.msra.mxu0 0.0
  %5134 = vmatprep.subr.mxu0 0.0
  %5135 = vmatpush2.msra.mxu0 0.0
  %5136 = vmatprep.subr.mxu0 0.0
  %5137 = vmatpush2.msra.mxu0 0.0
  %5138 = vmatprep.subr.mxu0 0.0
  %5139 = vmatpush2.msra.mxu0 0.0
  %5140 = vmatprep.subr.mxu0 0.0
  %5141 = vmatpush2.msra.mxu0 0.0
  %5142 = vmatprep.subr.mxu0 0.0
  %5143 = vmatpush2.msra.mxu0 0.0
  %5144 = vmatprep.subr.mxu0 0.0
  %5145 = vmatpush2.msra.mxu0 0.0
  %5146 = vmatprep.subr.mxu0 0.0
  %5147 = vmatpush2.msra.mxu0 0.0
  %5148 = vmatprep.subr.mxu0 0.0
  %5149 = vmatpush2.msra.mxu0 0.0
  %5150 = vmatprep.subr.mxu0 0.0
  %5151 = vmatpush2.msra.mxu0 0.0
  %5152 = vmatprep.subr.mxu0 0.0
  %5153 = vmatpush2.msra.mxu0 0.0
  %5154 = vmatprep.subr.mxu0 0.0
  %5155 = vmatpush2.msra.mxu0 0.0
  %5156 = vmatprep.subr.mxu0 0.0
  %5157 = vmatpush2.msra.mxu0 0.0
  %5158 = vmatprep.subr.mxu0 0.0
  %5159 = vmatpush2.msra.mxu0 0.0
  %5160 = vmatprep.subr.mxu0 0.0
  %5161 = vmatpush2.msra.mxu0 0.0
  %5162 = vmatprep.mubr.f32.mxu0 0.0
  %5163 = vmatmul.mubr.f32.gmra.mxu0 %v5093
  %v5164 = vpop.f32.mrf.mxu0
  %v5165 = vadd.f32 0.0, %v5164
  %v5166 = vpop.f32.mrf.mxu0
  %5167 = vmatprep.mubr.f32.mxu0 0.0
  %5168 = vmatmul.mubr.f32.gmra.mxu0 %v5096
  %v5169 = vpop.f32.mrf.mxu0
  %v5170 = vadd.f32 0.0, %v5169
  %v5171 = vpop.f32.mrf.mxu0
  %5172 = vdwg.mxu0
  %v5173 = vadd.f32 %v4886, %v5165
  %v5174 = vadd.f32 %v4887, %v5170
  %v5175 = vlaneseq
  %v5176 = vshrl.u32 %v5175, 7
  %v5177 = vsub.s32 0, %v5176
  %v5178 = vrot.slane %v4032, %v5177
  %v5179 = vadd.f32 %v5173, %v5178
  %v5180 = vadd.f32 %v5174, %v5178
  %v5181 = vadd.f32 %v3936, %v5179
  %v5182 = vadd.f32 %v3937, %v5180
  %v5183 = vld [vmem:[%s8 + $0x1b] sm:$0x1]
  %v5184 = vld [vmem:[%s8 + $0x1c] sm:$0x1]
  %v5185 = vsel %vm2307, %v5181, 0.0
  %5186 = vadd.xlane.f32.xlu0 %v5185
  %v5187 = vpop.xlane.xlu0 %5186
  %v5188 = vsel %vm2307, %v5182, 0.0
  %5189 = vadd.xlane.f32.xlu0 %v5188
  %v5190 = vpop.xlane.xlu0 %5189
  %v5191 = vmul.f32 %v5187, %v2318
  %v5192 = vmul.f32 %v5190, %v2318
  %v5193 = vsub.f32 %v5181, %v5191
  %v5194 = vsub.f32 %v5182, %v5192
  %v5195 = vmul.f32 %v5193, %v5193
  %v5196 = vmul.f32 %v5194, %v5194
  %v5197 = vsel %vm2307, %v5195, 0.0
  %5198 = vadd.xlane.f32.xlu0 %v5197
  %v5199 = vpop.xlane.xlu0 %5198
  %v5200 = vsel %vm2307, %v5196, 0.0
  %5201 = vadd.xlane.f32.xlu0 %v5200
  %v5202 = vpop.xlane.xlu0 %5201
  %v5203 = vmul.f32 %v5199, %v2318
  %v5204 = vmul.f32 %v5202, %v2318
  %v5205 = vadd.f32 %v5203, 1e-12
  %v5206 = vadd.f32 %v5204, 1e-12
  %v5207 = vrsqrt.pop %v5205
  %v5208 = vrsqrt.pop %v5206
  %v5209 = vmul.f32 %v5193, %v5207
  %v5210 = vmul.f32 %v5194, %v5208
  %v5211 = vlaneseq
  %v5212 = vshrl.u32 %v5211, 7
  %v5213 = vsub.s32 0, %v5212
  %v5214 = vrot.slane %v5183, %v5213
  %v5215 = vmul.f32 %v5209, %v5214
  %v5216 = vmul.f32 %v5210, %v5214
  %v5217 = vlaneseq
  %v5218 = vshrl.u32 %v5217, 7
  %v5219 = vsub.s32 0, %v5218
  %v5220 = vrot.slane %v5184, %v5219
  %v5221 = vadd.f32 %v5215, %v5220
  %v5222 = vadd.f32 %v5216, %v5220
  %v5223 = vld [vmem:[%s7 + $0x320] sm:$0xff]
  %v5224 = vld [vmem:[%s7 + $0x328] sm:$0xff]
  %v5225 = vld [vmem:[%s7 + $0x330] sm:$0xff]
  %v5226 = vld [vmem:[%s7 + $0x338] sm:$0xff]
  %v5227 = vld [vmem:[%s8 + $0x1d] sm:$0x1]
  %v5228 = vlaneseq
  %v5229 = vshrl.u32 %v5228, 7
  %v5230 = vsub.s32 0, %v5229
  %v5231 = vrot.slane %v5227, %v5230
  %v5233 = vsel %vm2307, %v5221, 0
  %v5236 = vsel %vm2307, %v5222, 0
  %5238 = vmatprep.subr.mxu0 0.0
  %5239 = vmatpush1.msra.mxu0 0.0
  %5240 = vmatprep.subr.mxu0 0.0
  %5241 = vmatpush1.msra.mxu0 0.0
  %5242 = vmatprep.subr.mxu0 0.0
  %5243 = vmatpush1.msra.mxu0 0.0
  %5244 = vmatprep.subr.mxu0 0.0
  %5245 = vmatpush1.msra.mxu0 0.0
  %5246 = vmatprep.subr.mxu0 0.0
  %5247 = vmatpush1.msra.mxu0 0.0
  %5248 = vmatprep.subr.mxu0 0.0
  %5249 = vmatpush1.msra.mxu0 0.0
  %5250 = vmatprep.subr.mxu0 0.0
  %5251 = vmatpush1.msra.mxu0 0.0
  %5252 = vmatprep.subr.mxu0 0.0
  %5253 = vmatpush1.msra.mxu0 0.0
  %5254 = vmatprep.subr.mxu0 0.0
  %5255 = vmatpush1.msra.mxu0 0.0
  %5256 = vmatprep.subr.mxu0 0.0
  %5257 = vmatpush1.msra.mxu0 0.0
  %5258 = vmatprep.subr.mxu0 0.0
  %5259 = vmatpush1.msra.mxu0 0.0
  %5260 = vmatprep.subr.mxu0 0.0
  %5261 = vmatpush1.msra.mxu0 0.0
  %5262 = vmatprep.subr.mxu0 0.0
  %5263 = vmatpush1.msra.mxu0 %v5226
  %5264 = vmatprep.subr.mxu0 0.0
  %5265 = vmatpush1.msra.mxu0 %v5225
  %5266 = vmatprep.subr.mxu0 0.0
  %5267 = vmatpush1.msra.mxu0 %v5224
  %5268 = vmatprep.subr.mxu0 0.0
  %5269 = vmatpush1.msra.mxu0 %v5223
  %5270 = vmatprep.subr.mxu0 0.0
  %5271 = vmatpush2.msra.mxu0 0.0
  %5272 = vmatprep.subr.mxu0 0.0
  %5273 = vmatpush2.msra.mxu0 0.0
  %5274 = vmatprep.subr.mxu0 0.0
  %5275 = vmatpush2.msra.mxu0 0.0
  %5276 = vmatprep.subr.mxu0 0.0
  %5277 = vmatpush2.msra.mxu0 0.0
  %5278 = vmatprep.subr.mxu0 0.0
  %5279 = vmatpush2.msra.mxu0 0.0
  %5280 = vmatprep.subr.mxu0 0.0
  %5281 = vmatpush2.msra.mxu0 0.0
  %5282 = vmatprep.subr.mxu0 0.0
  %5283 = vmatpush2.msra.mxu0 0.0
  %5284 = vmatprep.subr.mxu0 0.0
  %5285 = vmatpush2.msra.mxu0 0.0
  %5286 = vmatprep.subr.mxu0 0.0
  %5287 = vmatpush2.msra.mxu0 0.0
  %5288 = vmatprep.subr.mxu0 0.0
  %5289 = vmatpush2.msra.mxu0 0.0
  %5290 = vmatprep.subr.mxu0 0.0
  %5291 = vmatpush2.msra.mxu0 0.0
  %5292 = vmatprep.subr.mxu0 0.0
  %5293 = vmatpush2.msra.mxu0 0.0
  %5294 = vmatprep.subr.mxu0 0.0
  %5295 = vmatpush2.msra.mxu0 0.0
  %5296 = vmatprep.subr.mxu0 0.0
  %5297 = vmatpush2.msra.mxu0 0.0
  %5298 = vmatprep.subr.mxu0 0.0
  %5299 = vmatpush2.msra.mxu0 0.0
  %5300 = vmatprep.subr.mxu0 0.0
  %5301 = vmatpush2.msra.mxu0 0.0
  %5302 = vmatprep.mubr.f32.mxu0 0.0
  %5303 = vmatmul.mubr.f32.gmra.mxu0 %v5233
  %v5304 = vpop.f32.mrf.mxu0
  %v5305 = vadd.f32 %v5231, %v5304
  %v5306 = vpop.f32.mrf.mxu0
  %5307 = vmatprep.mubr.f32.mxu0 0.0
  %5308 = vmatmul.mubr.f32.gmra.mxu0 %v5236
  %v5309 = vpop.f32.mrf.mxu0
  %v5310 = vadd.f32 %v5231, %v5309
  %v5311 = vpop.f32.mrf.mxu0
  %5312 = vdwg.mxu0
  %v5313 = vld [vmem:[%s7 + $0x340] sm:$0xff]
  %v5314 = vld [vmem:[%s7 + $0x348] sm:$0xff]
  %v5315 = vld [vmem:[%s7 + $0x350] sm:$0xff]
  %v5316 = vld [vmem:[%s7 + $0x358] sm:$0xff]
  %v5317 = vld [vmem:[%s8 + $0x1e] sm:$0x1]
  %v5318 = vlaneseq
  %v5319 = vshrl.u32 %v5318, 7
  %v5320 = vsub.s32 0, %v5319
  %v5321 = vrot.slane %v5317, %v5320
  %v5323 = vsel %vm2307, %v2360, 0
  %v5326 = vsel %vm2307, %v2361, 0
  %v5329 = vsel %vm2307, %v2362, 0
  %5331 = vmatprep.subr.mxu0 0.0
  %5332 = vmatpush1.msra.mxu0 0.0
  %5333 = vmatprep.subr.mxu0 0.0
  %5334 = vmatpush1.msra.mxu0 0.0
  %5335 = vmatprep.subr.mxu0 0.0
  %5336 = vmatpush1.msra.mxu0 0.0
  %5337 = vmatprep.subr.mxu0 0.0
  %5338 = vmatpush1.msra.mxu0 0.0
  %5339 = vmatprep.subr.mxu0 0.0
  %5340 = vmatpush1.msra.mxu0 0.0
  %5341 = vmatprep.subr.mxu0 0.0
  %5342 = vmatpush1.msra.mxu0 0.0
  %5343 = vmatprep.subr.mxu0 0.0
  %5344 = vmatpush1.msra.mxu0 0.0
  %5345 = vmatprep.subr.mxu0 0.0
  %5346 = vmatpush1.msra.mxu0 0.0
  %5347 = vmatprep.subr.mxu0 0.0
  %5348 = vmatpush1.msra.mxu0 0.0
  %5349 = vmatprep.subr.mxu0 0.0
  %5350 = vmatpush1.msra.mxu0 0.0
  %5351 = vmatprep.subr.mxu0 0.0
  %5352 = vmatpush1.msra.mxu0 0.0
  %5353 = vmatprep.subr.mxu0 0.0
  %5354 = vmatpush1.msra.mxu0 0.0
  %5355 = vmatprep.subr.mxu0 0.0
  %5356 = vmatpush1.msra.mxu0 %v5316
  %5357 = vmatprep.subr.mxu0 0.0
  %5358 = vmatpush1.msra.mxu0 %v5315
  %5359 = vmatprep.subr.mxu0 0.0
  %5360 = vmatpush1.msra.mxu0 %v5314
  %5361 = vmatprep.subr.mxu0 0.0
  %5362 = vmatpush1.msra.mxu0 %v5313
  %5363 = vmatprep.subr.mxu0 0.0
  %5364 = vmatpush2.msra.mxu0 0.0
  %5365 = vmatprep.subr.mxu0 0.0
  %5366 = vmatpush2.msra.mxu0 0.0
  %5367 = vmatprep.subr.mxu0 0.0
  %5368 = vmatpush2.msra.mxu0 0.0
  %5369 = vmatprep.subr.mxu0 0.0
  %5370 = vmatpush2.msra.mxu0 0.0
  %5371 = vmatprep.subr.mxu0 0.0
  %5372 = vmatpush2.msra.mxu0 0.0
  %5373 = vmatprep.subr.mxu0 0.0
  %5374 = vmatpush2.msra.mxu0 0.0
  %5375 = vmatprep.subr.mxu0 0.0
  %5376 = vmatpush2.msra.mxu0 0.0
  %5377 = vmatprep.subr.mxu0 0.0
  %5378 = vmatpush2.msra.mxu0 0.0
  %5379 = vmatprep.subr.mxu0 0.0
  %5380 = vmatpush2.msra.mxu0 0.0
  %5381 = vmatprep.subr.mxu0 0.0
  %5382 = vmatpush2.msra.mxu0 0.0
  %5383 = vmatprep.subr.mxu0 0.0
  %5384 = vmatpush2.msra.mxu0 0.0
  %5385 = vmatprep.subr.mxu0 0.0
  %5386 = vmatpush2.msra.mxu0 0.0
  %5387 = vmatprep.subr.mxu0 0.0
  %5388 = vmatpush2.msra.mxu0 0.0
  %5389 = vmatprep.subr.mxu0 0.0
  %5390 = vmatpush2.msra.mxu0 0.0
  %5391 = vmatprep.subr.mxu0 0.0
  %5392 = vmatpush2.msra.mxu0 0.0
  %5393 = vmatprep.subr.mxu0 0.0
  %5394 = vmatpush2.msra.mxu0 0.0
  %5395 = vmatprep.mubr.f32.mxu0 0.0
  %5396 = vmatmul.mubr.f32.gmra.mxu0 %v5323
  %v5397 = vpop.f32.mrf.mxu0
  %v5398 = vadd.f32 %v5321, %v5397
  %v5399 = vpop.f32.mrf.mxu0
  %5400 = vmatprep.mubr.f32.mxu0 0.0
  %5401 = vmatmul.mubr.f32.gmra.mxu0 %v5326
  %v5402 = vpop.f32.mrf.mxu0
  %v5403 = vadd.f32 %v5321, %v5402
  %v5404 = vpop.f32.mrf.mxu0
  %5405 = vmatprep.mubr.f32.mxu0 0.0
  %5406 = vmatmul.mubr.f32.gmra.mxu0 %v5329
  %v5407 = vpop.f32.mrf.mxu0
  %v5408 = vadd.f32 %v5321, %v5407
  %v5409 = vpop.f32.mrf.mxu0
  %5410 = vdwg.mxu0
  %v5411 = vld [vmem:[%s7 + $0x360] sm:$0xff]
  %v5412 = vld [vmem:[%s7 + $0x368] sm:$0xff]
  %v5413 = vld [vmem:[%s7 + $0x370] sm:$0xff]
  %v5414 = vld [vmem:[%s7 + $0x378] sm:$0xff]
  %v5415 = vld [vmem:[%s8 + $0x1f] sm:$0x1]
  %v5416 = vld [vmem:[%s6] sm:$0xff]
  %v5417 = vld [vmem:[%s6 + $0x8] sm:$0xff]
  %v5419 = vsel %vm2508, %v5305, 0
  %v5422 = vsel %vm2508, %v5310, 0
  %v5425 = vsel %vm2508, %v5398, 0
  %v5428 = vsel %vm2508, %v5403, 0
  %v5431 = vsel %vm2508, %v5408, 0
  %5433 = vmatprep.subr.mxu0 0.0
  %5434 = vmatpush1.xpose.msra.mxu0 0.0
  %5435 = vmatprep.subr.mxu0 0.0
  %5436 = vmatpush1.xpose.msra.mxu0 0.0
  %5437 = vmatprep.subr.mxu0 0.0
  %5438 = vmatpush1.xpose.msra.mxu0 0.0
  %5439 = vmatprep.subr.mxu0 0.0
  %5440 = vmatpush1.xpose.msra.mxu0 0.0
  %5441 = vmatprep.subr.mxu0 0.0
  %5442 = vmatpush1.xpose.msra.mxu0 0.0
  %5443 = vmatprep.subr.mxu0 0.0
  %5444 = vmatpush1.xpose.msra.mxu0 0.0
  %5445 = vmatprep.subr.mxu0 0.0
  %5446 = vmatpush1.xpose.msra.mxu0 0.0
  %5447 = vmatprep.subr.mxu0 0.0
  %5448 = vmatpush1.xpose.msra.mxu0 0.0
  %5449 = vmatprep.subr.mxu0 0.0
  %5450 = vmatpush1.xpose.msra.mxu0 0.0
  %5451 = vmatprep.subr.mxu0 0.0
  %5452 = vmatpush1.xpose.msra.mxu0 0.0
  %5453 = vmatprep.subr.mxu0 0.0
  %5454 = vmatpush1.xpose.msra.mxu0 0.0
  %5455 = vmatprep.subr.mxu0 0.0
  %5456 = vmatpush1.xpose.msra.mxu0 0.0
  %5457 = vmatprep.subr.mxu0 0.0
  %5458 = vmatpush1.xpose.msra.mxu0 0.0
  %5459 = vmatprep.subr.mxu0 0.0
  %5460 = vmatpush1.xpose.msra.mxu0 %v5431
  %5461 = vmatprep.subr.mxu0 0.0
  %5462 = vmatpush1.xpose.msra.mxu0 %v5428
  %5463 = vmatprep.subr.mxu0 0.0
  %5464 = vmatpush1.xpose.msra.mxu0 %v5425
  %5465 = vmatprep.subr.mxu0 0.0
  %5466 = vmatpush2.xpose.msra.mxu0 0.0
  %5467 = vmatprep.subr.mxu0 0.0
  %5468 = vmatpush2.xpose.msra.mxu0 0.0
  %5469 = vmatprep.subr.mxu0 0.0
  %5470 = vmatpush2.xpose.msra.mxu0 0.0
  %5471 = vmatprep.subr.mxu0 0.0
  %5472 = vmatpush2.xpose.msra.mxu0 0.0
  %5473 = vmatprep.subr.mxu0 0.0
  %5474 = vmatpush2.xpose.msra.mxu0 0.0
  %5475 = vmatprep.subr.mxu0 0.0
  %5476 = vmatpush2.xpose.msra.mxu0 0.0
  %5477 = vmatprep.subr.mxu0 0.0
  %5478 = vmatpush2.xpose.msra.mxu0 0.0
  %5479 = vmatprep.subr.mxu0 0.0
  %5480 = vmatpush2.xpose.msra.mxu0 0.0
  %5481 = vmatprep.subr.mxu0 0.0
  %5482 = vmatpush2.xpose.msra.mxu0 0.0
  %5483 = vmatprep.subr.mxu0 0.0
  %5484 = vmatpush2.xpose.msra.mxu0 0.0
  %5485 = vmatprep.subr.mxu0 0.0
  %5486 = vmatpush2.xpose.msra.mxu0 0.0
  %5487 = vmatprep.subr.mxu0 0.0
  %5488 = vmatpush2.xpose.msra.mxu0 0.0
  %5489 = vmatprep.subr.mxu0 0.0
  %5490 = vmatpush2.xpose.msra.mxu0 0.0
  %5491 = vmatprep.subr.mxu0 0.0
  %5492 = vmatpush2.xpose.msra.mxu0 0.0
  %5493 = vmatprep.subr.mxu0 0.0
  %5494 = vmatpush2.xpose.msra.mxu0 0.0
  %5495 = vmatprep.subr.mxu0 0.0
  %5496 = vmatpush2.xpose.msra.mxu0 0.0
  %5497 = vmatprep.mubr.f32.mxu0 0.0
  %5498 = vmatmul.mubr.f32.gmra.mxu0 %v5419
  %v5499 = vpop.f32.mrf.mxu0
  %v5500 = vadd.f32 0.0, %v5499
  %v5501 = vpop.f32.mrf.mxu0
  %5502 = vmatprep.mubr.f32.mxu0 0.0
  %5503 = vmatmul.mubr.f32.gmra.mxu0 %v5422
  %v5504 = vpop.f32.mrf.mxu0
  %v5505 = vadd.f32 0.0, %v5504
  %v5506 = vpop.f32.mrf.mxu0
  %5507 = vdwg.mxu0
  %v5508 = vmul.f32 %v5500, 0.35355338
  %v5509 = vmul.f32 %v5505, 0.35355338
  %v5510 = vadd.f32 %v5508, %v5416
  %v5511 = vadd.f32 %v5509, %v5417
  %v5512 = vsel %vm665, %v5510, -inf
  %5513 = vmax.xlane.f32.xlu0 %v5512
  %v5514 = vpop.xlane.xlu0 %5513
  %v5515 = vsel %vm665, %v5511, -inf
  %5516 = vmax.xlane.f32.xlu0 %v5515
  %v5517 = vpop.xlane.xlu0 %5516
  %v5518 = vsub.f32 %v5510, %v5514
  %v5519 = vsub.f32 %v5511, %v5517
  %v5520 = vmul.f32 %v5518, 1.442695
  %v5521 = vpow.pop %v5520
  %v5522 = vmul.f32 %v5519, 1.442695
  %v5523 = vpow.pop %v5522
  %v5524 = vsel %vm665, %v5521, 0.0
  %5525 = vadd.xlane.f32.xlu0 %v5524
  %v5526 = vpop.xlane.xlu0 %5525
  %v5527 = vsel %vm665, %v5523, 0.0
  %5528 = vadd.xlane.f32.xlu0 %v5527
  %v5529 = vpop.xlane.xlu0 %5528
  %v5530 = vrcp.pop %v5526
  %v5531 = vrcp.pop %v5529
  %v5532 = vmul.f32 %v5521, %v5530
  %v5533 = vmul.f32 %v5523, %v5531
  %5534 = vrot.lane.b32.xlu0 %v5398, 96
  %v5535 = vpop.permute.xlu0 %5534
  %5536 = vrot.lane.b32.xlu0 %v5403, 96
  %v5537 = vpop.permute.xlu0 %5536
  %5538 = vrot.lane.b32.xlu0 %v5408, 96
  %v5539 = vpop.permute.xlu0 %5538
  %v5543 = vsel %vm665, %v5532, 0
  %v5546 = vsel %vm665, %v5533, 0
  %v5548 = vsel %vm709, %v5539, 0
  %5550 = vmatprep.subr.mxu0 0.0
  %5551 = vmatpush1.msra.mxu0 0.0
  %5552 = vmatprep.subr.mxu0 0.0
  %5553 = vmatpush1.msra.mxu0 0.0
  %5554 = vmatprep.subr.mxu0 0.0
  %5555 = vmatpush1.msra.mxu0 0.0
  %5556 = vmatprep.subr.mxu0 0.0
  %5557 = vmatpush1.msra.mxu0 0.0
  %5558 = vmatprep.subr.mxu0 0.0
  %5559 = vmatpush1.msra.mxu0 0.0
  %5560 = vmatprep.subr.mxu0 0.0
  %5561 = vmatpush1.msra.mxu0 0.0
  %5562 = vmatprep.subr.mxu0 0.0
  %5563 = vmatpush1.msra.mxu0 0.0
  %5564 = vmatprep.subr.mxu0 0.0
  %5565 = vmatpush1.msra.mxu0 0.0
  %5566 = vmatprep.subr.mxu0 0.0
  %5567 = vmatpush1.msra.mxu0 0.0
  %5568 = vmatprep.subr.mxu0 0.0
  %5569 = vmatpush1.msra.mxu0 0.0
  %5570 = vmatprep.subr.mxu0 0.0
  %5571 = vmatpush1.msra.mxu0 0.0
  %5572 = vmatprep.subr.mxu0 0.0
  %5573 = vmatpush1.msra.mxu0 0.0
  %5574 = vmatprep.subr.mxu0 0.0
  %5575 = vmatpush1.msra.mxu0 0.0
  %5576 = vmatprep.subr.mxu0 0.0
  %5577 = vmatpush1.msra.mxu0 %v5548
  %5578 = vmatprep.subr.mxu0 0.0
  %5579 = vmatpush1.msra.mxu0 %v5537
  %5580 = vmatprep.subr.mxu0 0.0
  %5581 = vmatpush1.msra.mxu0 %v5535
  %5582 = vmatprep.subr.mxu0 0.0
  %5583 = vmatpush2.msra.mxu0 0.0
  %5584 = vmatprep.subr.mxu0 0.0
  %5585 = vmatpush2.msra.mxu0 0.0
  %5586 = vmatprep.subr.mxu0 0.0
  %5587 = vmatpush2.msra.mxu0 0.0
  %5588 = vmatprep.subr.mxu0 0.0
  %5589 = vmatpush2.msra.mxu0 0.0
  %5590 = vmatprep.subr.mxu0 0.0
  %5591 = vmatpush2.msra.mxu0 0.0
  %5592 = vmatprep.subr.mxu0 0.0
  %5593 = vmatpush2.msra.mxu0 0.0
  %5594 = vmatprep.subr.mxu0 0.0
  %5595 = vmatpush2.msra.mxu0 0.0
  %5596 = vmatprep.subr.mxu0 0.0
  %5597 = vmatpush2.msra.mxu0 0.0
  %5598 = vmatprep.subr.mxu0 0.0
  %5599 = vmatpush2.msra.mxu0 0.0
  %5600 = vmatprep.subr.mxu0 0.0
  %5601 = vmatpush2.msra.mxu0 0.0
  %5602 = vmatprep.subr.mxu0 0.0
  %5603 = vmatpush2.msra.mxu0 0.0
  %5604 = vmatprep.subr.mxu0 0.0
  %5605 = vmatpush2.msra.mxu0 0.0
  %5606 = vmatprep.subr.mxu0 0.0
  %5607 = vmatpush2.msra.mxu0 0.0
  %5608 = vmatprep.subr.mxu0 0.0
  %5609 = vmatpush2.msra.mxu0 0.0
  %5610 = vmatprep.subr.mxu0 0.0
  %5611 = vmatpush2.msra.mxu0 0.0
  %5612 = vmatprep.subr.mxu0 0.0
  %5613 = vmatpush2.msra.mxu0 0.0
  %5614 = vmatprep.mubr.f32.mxu0 0.0
  %5615 = vmatmul.mubr.f32.gmra.mxu0 %v5543
  %v5616 = vpop.f32.mrf.mxu0
  %v5617 = vadd.f32 0.0, %v5616
  %v5618 = vpop.f32.mrf.mxu0
  %5619 = vmatprep.mubr.f32.mxu0 0.0
  %5620 = vmatmul.mubr.f32.gmra.mxu0 %v5546
  %v5621 = vpop.f32.mrf.mxu0
  %v5622 = vadd.f32 0.0, %v5621
  %v5623 = vpop.f32.mrf.mxu0
  %5624 = vdwg.mxu0
  %5625 = vrot.lane.b32.xlu0 %v5305, 120
  %v5626 = vpop.permute.xlu0 %5625
  %5627 = vrot.lane.b32.xlu0 %v5310, 120
  %v5628 = vpop.permute.xlu0 %5627
  %5629 = vrot.lane.b32.xlu0 %v5398, 120
  %v5630 = vpop.permute.xlu0 %5629
  %5631 = vrot.lane.b32.xlu0 %v5403, 120
  %v5632 = vpop.permute.xlu0 %5631
  %5633 = vrot.lane.b32.xlu0 %v5408, 120
  %v5634 = vpop.permute.xlu0 %5633
  %v5635 = vsel %vm2508, %v5626, 0
  %v5637 = vsel %vm2508, %v5628, 0
  %v5639 = vsel %vm2508, %v5630, 0
  %v5641 = vsel %vm2508, %v5632, 0
  %v5643 = vsel %vm2508, %v5634, 0
  %5645 = vmatprep.subr.mxu0 0.0
  %5646 = vmatpush1.xpose.msra.mxu0 0.0
  %5647 = vmatprep.subr.mxu0 0.0
  %5648 = vmatpush1.xpose.msra.mxu0 0.0
  %5649 = vmatprep.subr.mxu0 0.0
  %5650 = vmatpush1.xpose.msra.mxu0 0.0
  %5651 = vmatprep.subr.mxu0 0.0
  %5652 = vmatpush1.xpose.msra.mxu0 0.0
  %5653 = vmatprep.subr.mxu0 0.0
  %5654 = vmatpush1.xpose.msra.mxu0 0.0
  %5655 = vmatprep.subr.mxu0 0.0
  %5656 = vmatpush1.xpose.msra.mxu0 0.0
  %5657 = vmatprep.subr.mxu0 0.0
  %5658 = vmatpush1.xpose.msra.mxu0 0.0
  %5659 = vmatprep.subr.mxu0 0.0
  %5660 = vmatpush1.xpose.msra.mxu0 0.0
  %5661 = vmatprep.subr.mxu0 0.0
  %5662 = vmatpush1.xpose.msra.mxu0 0.0
  %5663 = vmatprep.subr.mxu0 0.0
  %5664 = vmatpush1.xpose.msra.mxu0 0.0
  %5665 = vmatprep.subr.mxu0 0.0
  %5666 = vmatpush1.xpose.msra.mxu0 0.0
  %5667 = vmatprep.subr.mxu0 0.0
  %5668 = vmatpush1.xpose.msra.mxu0 0.0
  %5669 = vmatprep.subr.mxu0 0.0
  %5670 = vmatpush1.xpose.msra.mxu0 0.0
  %5671 = vmatprep.subr.mxu0 0.0
  %5672 = vmatpush1.xpose.msra.mxu0 %v5643
  %5673 = vmatprep.subr.mxu0 0.0
  %5674 = vmatpush1.xpose.msra.mxu0 %v5641
  %5675 = vmatprep.subr.mxu0 0.0
  %5676 = vmatpush1.xpose.msra.mxu0 %v5639
  %5677 = vmatprep.subr.mxu0 0.0
  %5678 = vmatpush2.xpose.msra.mxu0 0.0
  %5679 = vmatprep.subr.mxu0 0.0
  %5680 = vmatpush2.xpose.msra.mxu0 0.0
  %5681 = vmatprep.subr.mxu0 0.0
  %5682 = vmatpush2.xpose.msra.mxu0 0.0
  %5683 = vmatprep.subr.mxu0 0.0
  %5684 = vmatpush2.xpose.msra.mxu0 0.0
  %5685 = vmatprep.subr.mxu0 0.0
  %5686 = vmatpush2.xpose.msra.mxu0 0.0
  %5687 = vmatprep.subr.mxu0 0.0
  %5688 = vmatpush2.xpose.msra.mxu0 0.0
  %5689 = vmatprep.subr.mxu0 0.0
  %5690 = vmatpush2.xpose.msra.mxu0 0.0
  %5691 = vmatprep.subr.mxu0 0.0
  %5692 = vmatpush2.xpose.msra.mxu0 0.0
  %5693 = vmatprep.subr.mxu0 0.0
  %5694 = vmatpush2.xpose.msra.mxu0 0.0
  %5695 = vmatprep.subr.mxu0 0.0
  %5696 = vmatpush2.xpose.msra.mxu0 0.0
  %5697 = vmatprep.subr.mxu0 0.0
  %5698 = vmatpush2.xpose.msra.mxu0 0.0
  %5699 = vmatprep.subr.mxu0 0.0
  %5700 = vmatpush2.xpose.msra.mxu0 0.0
  %5701 = vmatprep.subr.mxu0 0.0
  %5702 = vmatpush2.xpose.msra.mxu0 0.0
  %5703 = vmatprep.subr.mxu0 0.0
  %5704 = vmatpush2.xpose.msra.mxu0 0.0
  %5705 = vmatprep.subr.mxu0 0.0
  %5706 = vmatpush2.xpose.msra.mxu0 0.0
  %5707 = vmatprep.subr.mxu0 0.0
  %5708 = vmatpush2.xpose.msra.mxu0 0.0
  %5709 = vmatprep.mubr.f32.mxu0 0.0
  %5710 = vmatmul.mubr.f32.gmra.mxu0 %v5635
  %v5711 = vpop.f32.mrf.mxu0
  %v5712 = vadd.f32 0.0, %v5711
  %v5713 = vpop.f32.mrf.mxu0
  %5714 = vmatprep.mubr.f32.mxu0 0.0
  %5715 = vmatmul.mubr.f32.gmra.mxu0 %v5637
  %v5716 = vpop.f32.mrf.mxu0
  %v5717 = vadd.f32 0.0, %v5716
  %v5718 = vpop.f32.mrf.mxu0
  %5719 = vdwg.mxu0
  %v5720 = vmul.f32 %v5712, 0.35355338
  %v5721 = vmul.f32 %v5717, 0.35355338
  %v5722 = vadd.f32 %v5720, %v5416
  %v5723 = vadd.f32 %v5721, %v5417
  %v5724 = vsel %vm665, %v5722, -inf
  %5725 = vmax.xlane.f32.xlu0 %v5724
  %v5726 = vpop.xlane.xlu0 %5725
  %v5727 = vsel %vm665, %v5723, -inf
  %5728 = vmax.xlane.f32.xlu0 %v5727
  %v5729 = vpop.xlane.xlu0 %5728
  %v5730 = vsub.f32 %v5722, %v5726
  %v5731 = vsub.f32 %v5723, %v5729
  %v5732 = vmul.f32 %v5730, 1.442695
  %v5733 = vpow.pop %v5732
  %v5734 = vmul.f32 %v5731, 1.442695
  %v5735 = vpow.pop %v5734
  %v5736 = vsel %vm665, %v5733, 0.0
  %5737 = vadd.xlane.f32.xlu0 %v5736
  %v5738 = vpop.xlane.xlu0 %5737
  %v5739 = vsel %vm665, %v5735, 0.0
  %5740 = vadd.xlane.f32.xlu0 %v5739
  %v5741 = vpop.xlane.xlu0 %5740
  %v5742 = vrcp.pop %v5738
  %v5743 = vrcp.pop %v5741
  %v5744 = vmul.f32 %v5733, %v5742
  %v5745 = vmul.f32 %v5735, %v5743
  %5746 = vrot.lane.b32.xlu0 %v5398, 88
  %v5747 = vpop.permute.xlu0 %5746
  %5748 = vrot.lane.b32.xlu0 %v5403, 88
  %v5749 = vpop.permute.xlu0 %5748
  %5750 = vrot.lane.b32.xlu0 %v5408, 88
  %v5751 = vpop.permute.xlu0 %5750
  %v5755 = vsel %vm665, %v5744, 0
  %v5758 = vsel %vm665, %v5745, 0
  %v5760 = vsel %vm709, %v5751, 0
  %5762 = vmatprep.subr.mxu0 0.0
  %5763 = vmatpush1.msra.mxu0 0.0
  %5764 = vmatprep.subr.mxu0 0.0
  %5765 = vmatpush1.msra.mxu0 0.0
  %5766 = vmatprep.subr.mxu0 0.0
  %5767 = vmatpush1.msra.mxu0 0.0
  %5768 = vmatprep.subr.mxu0 0.0
  %5769 = vmatpush1.msra.mxu0 0.0
  %5770 = vmatprep.subr.mxu0 0.0
  %5771 = vmatpush1.msra.mxu0 0.0
  %5772 = vmatprep.subr.mxu0 0.0
  %5773 = vmatpush1.msra.mxu0 0.0
  %5774 = vmatprep.subr.mxu0 0.0
  %5775 = vmatpush1.msra.mxu0 0.0
  %5776 = vmatprep.subr.mxu0 0.0
  %5777 = vmatpush1.msra.mxu0 0.0
  %5778 = vmatprep.subr.mxu0 0.0
  %5779 = vmatpush1.msra.mxu0 0.0
  %5780 = vmatprep.subr.mxu0 0.0
  %5781 = vmatpush1.msra.mxu0 0.0
  %5782 = vmatprep.subr.mxu0 0.0
  %5783 = vmatpush1.msra.mxu0 0.0
  %5784 = vmatprep.subr.mxu0 0.0
  %5785 = vmatpush1.msra.mxu0 0.0
  %5786 = vmatprep.subr.mxu0 0.0
  %5787 = vmatpush1.msra.mxu0 0.0
  %5788 = vmatprep.subr.mxu0 0.0
  %5789 = vmatpush1.msra.mxu0 %v5760
  %5790 = vmatprep.subr.mxu0 0.0
  %5791 = vmatpush1.msra.mxu0 %v5749
  %5792 = vmatprep.subr.mxu0 0.0
  %5793 = vmatpush1.msra.mxu0 %v5747
  %5794 = vmatprep.subr.mxu0 0.0
  %5795 = vmatpush2.msra.mxu0 0.0
  %5796 = vmatprep.subr.mxu0 0.0
  %5797 = vmatpush2.msra.mxu0 0.0
  %5798 = vmatprep.subr.mxu0 0.0
  %5799 = vmatpush2.msra.mxu0 0.0
  %5800 = vmatprep.subr.mxu0 0.0
  %5801 = vmatpush2.msra.mxu0 0.0
  %5802 = vmatprep.subr.mxu0 0.0
  %5803 = vmatpush2.msra.mxu0 0.0
  %5804 = vmatprep.subr.mxu0 0.0
  %5805 = vmatpush2.msra.mxu0 0.0
  %5806 = vmatprep.subr.mxu0 0.0
  %5807 = vmatpush2.msra.mxu0 0.0
  %5808 = vmatprep.subr.mxu0 0.0
  %5809 = vmatpush2.msra.mxu0 0.0
  %5810 = vmatprep.subr.mxu0 0.0
  %5811 = vmatpush2.msra.mxu0 0.0
  %5812 = vmatprep.subr.mxu0 0.0
  %5813 = vmatpush2.msra.mxu0 0.0
  %5814 = vmatprep.subr.mxu0 0.0
  %5815 = vmatpush2.msra.mxu0 0.0
  %5816 = vmatprep.subr.mxu0 0.0
  %5817 = vmatpush2.msra.mxu0 0.0
  %5818 = vmatprep.subr.mxu0 0.0
  %5819 = vmatpush2.msra.mxu0 0.0
  %5820 = vmatprep.subr.mxu0 0.0
  %5821 = vmatpush2.msra.mxu0 0.0
  %5822 = vmatprep.subr.mxu0 0.0
  %5823 = vmatpush2.msra.mxu0 0.0
  %5824 = vmatprep.subr.mxu0 0.0
  %5825 = vmatpush2.msra.mxu0 0.0
  %5826 = vmatprep.mubr.f32.mxu0 0.0
  %5827 = vmatmul.mubr.f32.gmra.mxu0 %v5755
  %v5828 = vpop.f32.mrf.mxu0
  %v5829 = vadd.f32 0.0, %v5828
  %v5830 = vpop.f32.mrf.mxu0
  %5831 = vmatprep.mubr.f32.mxu0 0.0
  %5832 = vmatmul.mubr.f32.gmra.mxu0 %v5758
  %v5833 = vpop.f32.mrf.mxu0
  %v5834 = vadd.f32 0.0, %v5833
  %v5835 = vpop.f32.mrf.mxu0
  %5836 = vdwg.mxu0
  %v5838 = vsel %vm2508, %v5829, 0
  %v5841 = vsel %vm2508, %v5834, 0
  %5843 = vmatprep.subr.mxu0 0.0
  %5844 = vmatpush1.msra.mxu0 0.0
  %5845 = vmatprep.subr.mxu0 0.0
  %5846 = vmatpush1.msra.mxu0 0.0
  %5847 = vmatprep.subr.mxu0 0.0
  %5848 = vmatpush1.msra.mxu0 0.0
  %5849 = vmatprep.subr.mxu0 0.0
  %5850 = vmatpush1.msra.mxu0 0.0
  %5851 = vmatprep.subr.mxu0 0.0
  %5852 = vmatpush1.msra.mxu0 0.0
  %5853 = vmatprep.subr.mxu0 0.0
  %5854 = vmatpush1.msra.mxu0 0.0
  %5855 = vmatprep.subr.mxu0 0.0
  %5856 = vmatpush1.msra.mxu0 0.0
  %5857 = vmatprep.subr.mxu0 0.0
  %5858 = vmatpush1.msra.mxu0 0.0
  %5859 = vmatprep.subr.mxu0 0.0
  %5860 = vmatpush1.msra.mxu0 0.0
  %5861 = vmatprep.subr.mxu0 0.0
  %5862 = vmatpush1.msra.mxu0 0.0
  %5863 = vmatprep.subr.mxu0 0.0
  %5864 = vmatpush1.msra.mxu0 0.0
  %5865 = vmatprep.subr.mxu0 0.0
  %5866 = vmatpush1.msra.mxu0 0.0
  %5867 = vmatprep.subr.mxu0 0.0
  %5868 = vmatpush1.msra.mxu0 0.0
  %5869 = vmatprep.subr.mxu0 0.0
  %5870 = vmatpush1.msra.mxu0 0.0
  %5871 = vmatprep.subr.mxu0 0.0
  %5872 = vmatpush1.msra.mxu0 0.0
  %5873 = vmatprep.subr.mxu0 0.0
  %5874 = vmatpush1.msra.mxu0 %v5412
  %5875 = vmatprep.subr.mxu0 0.0
  %5876 = vmatpush2.msra.mxu0 0.0
  %5877 = vmatprep.subr.mxu0 0.0
  %5878 = vmatpush2.msra.mxu0 0.0
  %5879 = vmatprep.subr.mxu0 0.0
  %5880 = vmatpush2.msra.mxu0 0.0
  %5881 = vmatprep.subr.mxu0 0.0
  %5882 = vmatpush2.msra.mxu0 0.0
  %5883 = vmatprep.subr.mxu0 0.0
  %5884 = vmatpush2.msra.mxu0 0.0
  %5885 = vmatprep.subr.mxu0 0.0
  %5886 = vmatpush2.msra.mxu0 0.0
  %5887 = vmatprep.subr.mxu0 0.0
  %5888 = vmatpush2.msra.mxu0 0.0
  %5889 = vmatprep.subr.mxu0 0.0
  %5890 = vmatpush2.msra.mxu0 0.0
  %5891 = vmatprep.subr.mxu0 0.0
  %5892 = vmatpush2.msra.mxu0 0.0
  %5893 = vmatprep.subr.mxu0 0.0
  %5894 = vmatpush2.msra.mxu0 0.0
  %5895 = vmatprep.subr.mxu0 0.0
  %5896 = vmatpush2.msra.mxu0 0.0
  %5897 = vmatprep.subr.mxu0 0.0
  %5898 = vmatpush2.msra.mxu0 0.0
  %5899 = vmatprep.subr.mxu0 0.0
  %5900 = vmatpush2.msra.mxu0 0.0
  %5901 = vmatprep.subr.mxu0 0.0
  %5902 = vmatpush2.msra.mxu0 0.0
  %5903 = vmatprep.subr.mxu0 0.0
  %5904 = vmatpush2.msra.mxu0 0.0
  %5905 = vmatprep.subr.mxu0 0.0
  %5906 = vmatpush2.msra.mxu0 0.0
  %5907 = vmatprep.mubr.f32.mxu0 0.0
  %5908 = vmatmul.mubr.f32.gmra.mxu0 %v5838
  %v5909 = vpop.f32.mrf.mxu0
  %v5910 = vadd.f32 0.0, %v5909
  %v5911 = vpop.f32.mrf.mxu0
  %5912 = vmatprep.mubr.f32.mxu0 0.0
  %5913 = vmatmul.mubr.f32.gmra.mxu0 %v5841
  %v5914 = vpop.f32.mrf.mxu0
  %v5915 = vadd.f32 0.0, %v5914
  %v5916 = vpop.f32.mrf.mxu0
  %5917 = vdwg.mxu0
  %v5919 = vsel %vm2508, %v5617, 0
  %v5922 = vsel %vm2508, %v5622, 0
  %5924 = vmatprep.subr.mxu0 0.0
  %5925 = vmatpush1.msra.mxu0 0.0
  %5926 = vmatprep.subr.mxu0 0.0
  %5927 = vmatpush1.msra.mxu0 0.0
  %5928 = vmatprep.subr.mxu0 0.0
  %5929 = vmatpush1.msra.mxu0 0.0
  %5930 = vmatprep.subr.mxu0 0.0
  %5931 = vmatpush1.msra.mxu0 0.0
  %5932 = vmatprep.subr.mxu0 0.0
  %5933 = vmatpush1.msra.mxu0 0.0
  %5934 = vmatprep.subr.mxu0 0.0
  %5935 = vmatpush1.msra.mxu0 0.0
  %5936 = vmatprep.subr.mxu0 0.0
  %5937 = vmatpush1.msra.mxu0 0.0
  %5938 = vmatprep.subr.mxu0 0.0
  %5939 = vmatpush1.msra.mxu0 0.0
  %5940 = vmatprep.subr.mxu0 0.0
  %5941 = vmatpush1.msra.mxu0 0.0
  %5942 = vmatprep.subr.mxu0 0.0
  %5943 = vmatpush1.msra.mxu0 0.0
  %5944 = vmatprep.subr.mxu0 0.0
  %5945 = vmatpush1.msra.mxu0 0.0
  %5946 = vmatprep.subr.mxu0 0.0
  %5947 = vmatpush1.msra.mxu0 0.0
  %5948 = vmatprep.subr.mxu0 0.0
  %5949 = vmatpush1.msra.mxu0 0.0
  %5950 = vmatprep.subr.mxu0 0.0
  %5951 = vmatpush1.msra.mxu0 0.0
  %5952 = vmatprep.subr.mxu0 0.0
  %5953 = vmatpush1.msra.mxu0 0.0
  %5954 = vmatprep.subr.mxu0 0.0
  %5955 = vmatpush1.msra.mxu0 %v5411
  %5956 = vmatprep.subr.mxu0 0.0
  %5957 = vmatpush2.msra.mxu0 0.0
  %5958 = vmatprep.subr.mxu0 0.0
  %5959 = vmatpush2.msra.mxu0 0.0
  %5960 = vmatprep.subr.mxu0 0.0
  %5961 = vmatpush2.msra.mxu0 0.0
  %5962 = vmatprep.subr.mxu0 0.0
  %5963 = vmatpush2.msra.mxu0 0.0
  %5964 = vmatprep.subr.mxu0 0.0
  %5965 = vmatpush2.msra.mxu0 0.0
  %5966 = vmatprep.subr.mxu0 0.0
  %5967 = vmatpush2.msra.mxu0 0.0
  %5968 = vmatprep.subr.mxu0 0.0
  %5969 = vmatpush2.msra.mxu0 0.0
  %5970 = vmatprep.subr.mxu0 0.0
  %5971 = vmatpush2.msra.mxu0 0.0
  %5972 = vmatprep.subr.mxu0 0.0
  %5973 = vmatpush2.msra.mxu0 0.0
  %5974 = vmatprep.subr.mxu0 0.0
  %5975 = vmatpush2.msra.mxu0 0.0
  %5976 = vmatprep.subr.mxu0 0.0
  %5977 = vmatpush2.msra.mxu0 0.0
  %5978 = vmatprep.subr.mxu0 0.0
  %5979 = vmatpush2.msra.mxu0 0.0
  %5980 = vmatprep.subr.mxu0 0.0
  %5981 = vmatpush2.msra.mxu0 0.0
  %5982 = vmatprep.subr.mxu0 0.0
  %5983 = vmatpush2.msra.mxu0 0.0
  %5984 = vmatprep.subr.mxu0 0.0
  %5985 = vmatpush2.msra.mxu0 0.0
  %5986 = vmatprep.subr.mxu0 0.0
  %5987 = vmatpush2.msra.mxu0 0.0
  %5988 = vmatprep.mubr.f32.mxu0 0.0
  %5989 = vmatmul.mubr.f32.gmra.mxu0 %v5919
  %v5990 = vpop.f32.mrf.mxu0
  %v5991 = vadd.f32 %v5910, %v5990
  %v5992 = vpop.f32.mrf.mxu0
  %5993 = vmatprep.mubr.f32.mxu0 0.0
  %5994 = vmatmul.mubr.f32.gmra.mxu0 %v5922
  %v5995 = vpop.f32.mrf.mxu0
  %v5996 = vadd.f32 %v5915, %v5995
  %v5997 = vpop.f32.mrf.mxu0
  %5998 = vdwg.mxu0
  %5999 = vrot.lane.b32.xlu0 %v5305, 112
  %v6000 = vpop.permute.xlu0 %5999
  %6001 = vrot.lane.b32.xlu0 %v5310, 112
  %v6002 = vpop.permute.xlu0 %6001
  %6003 = vrot.lane.b32.xlu0 %v5398, 112
  %v6004 = vpop.permute.xlu0 %6003
  %6005 = vrot.lane.b32.xlu0 %v5403, 112
  %v6006 = vpop.permute.xlu0 %6005
  %6007 = vrot.lane.b32.xlu0 %v5408, 112
  %v6008 = vpop.permute.xlu0 %6007
  %v6009 = vsel %vm2508, %v6000, 0
  %v6011 = vsel %vm2508, %v6002, 0
  %v6013 = vsel %vm2508, %v6004, 0
  %v6015 = vsel %vm2508, %v6006, 0
  %v6017 = vsel %vm2508, %v6008, 0
  %6019 = vmatprep.subr.mxu0 0.0
  %6020 = vmatpush1.xpose.msra.mxu0 0.0
  %6021 = vmatprep.subr.mxu0 0.0
  %6022 = vmatpush1.xpose.msra.mxu0 0.0
  %6023 = vmatprep.subr.mxu0 0.0
  %6024 = vmatpush1.xpose.msra.mxu0 0.0
  %6025 = vmatprep.subr.mxu0 0.0
  %6026 = vmatpush1.xpose.msra.mxu0 0.0
  %6027 = vmatprep.subr.mxu0 0.0
  %6028 = vmatpush1.xpose.msra.mxu0 0.0
  %6029 = vmatprep.subr.mxu0 0.0
  %6030 = vmatpush1.xpose.msra.mxu0 0.0
  %6031 = vmatprep.subr.mxu0 0.0
  %6032 = vmatpush1.xpose.msra.mxu0 0.0
  %6033 = vmatprep.subr.mxu0 0.0
  %6034 = vmatpush1.xpose.msra.mxu0 0.0
  %6035 = vmatprep.subr.mxu0 0.0
  %6036 = vmatpush1.xpose.msra.mxu0 0.0
  %6037 = vmatprep.subr.mxu0 0.0
  %6038 = vmatpush1.xpose.msra.mxu0 0.0
  %6039 = vmatprep.subr.mxu0 0.0
  %6040 = vmatpush1.xpose.msra.mxu0 0.0
  %6041 = vmatprep.subr.mxu0 0.0
  %6042 = vmatpush1.xpose.msra.mxu0 0.0
  %6043 = vmatprep.subr.mxu0 0.0
  %6044 = vmatpush1.xpose.msra.mxu0 0.0
  %6045 = vmatprep.subr.mxu0 0.0
  %6046 = vmatpush1.xpose.msra.mxu0 %v6017
  %6047 = vmatprep.subr.mxu0 0.0
  %6048 = vmatpush1.xpose.msra.mxu0 %v6015
  %6049 = vmatprep.subr.mxu0 0.0
  %6050 = vmatpush1.xpose.msra.mxu0 %v6013
  %6051 = vmatprep.subr.mxu0 0.0
  %6052 = vmatpush2.xpose.msra.mxu0 0.0
  %6053 = vmatprep.subr.mxu0 0.0
  %6054 = vmatpush2.xpose.msra.mxu0 0.0
  %6055 = vmatprep.subr.mxu0 0.0
  %6056 = vmatpush2.xpose.msra.mxu0 0.0
  %6057 = vmatprep.subr.mxu0 0.0
  %6058 = vmatpush2.xpose.msra.mxu0 0.0
  %6059 = vmatprep.subr.mxu0 0.0
  %6060 = vmatpush2.xpose.msra.mxu0 0.0
  %6061 = vmatprep.subr.mxu0 0.0
  %6062 = vmatpush2.xpose.msra.mxu0 0.0
  %6063 = vmatprep.subr.mxu0 0.0
  %6064 = vmatpush2.xpose.msra.mxu0 0.0
  %6065 = vmatprep.subr.mxu0 0.0
  %6066 = vmatpush2.xpose.msra.mxu0 0.0
  %6067 = vmatprep.subr.mxu0 0.0
  %6068 = vmatpush2.xpose.msra.mxu0 0.0
  %6069 = vmatprep.subr.mxu0 0.0
  %6070 = vmatpush2.xpose.msra.mxu0 0.0
  %6071 = vmatprep.subr.mxu0 0.0
  %6072 = vmatpush2.xpose.msra.mxu0 0.0
  %6073 = vmatprep.subr.mxu0 0.0
  %6074 = vmatpush2.xpose.msra.mxu0 0.0
  %6075 = vmatprep.subr.mxu0 0.0
  %6076 = vmatpush2.xpose.msra.mxu0 0.0
  %6077 = vmatprep.subr.mxu0 0.0
  %6078 = vmatpush2.xpose.msra.mxu0 0.0
  %6079 = vmatprep.subr.mxu0 0.0
  %6080 = vmatpush2.xpose.msra.mxu0 0.0
  %6081 = vmatprep.subr.mxu0 0.0
  %6082 = vmatpush2.xpose.msra.mxu0 0.0
  %6083 = vmatprep.mubr.f32.mxu0 0.0
  %6084 = vmatmul.mubr.f32.gmra.mxu0 %v6009
  %v6085 = vpop.f32.mrf.mxu0
  %v6086 = vadd.f32 0.0, %v6085
  %v6087 = vpop.f32.mrf.mxu0
  %6088 = vmatprep.mubr.f32.mxu0 0.0
  %6089 = vmatmul.mubr.f32.gmra.mxu0 %v6011
  %v6090 = vpop.f32.mrf.mxu0
  %v6091 = vadd.f32 0.0, %v6090
  %v6092 = vpop.f32.mrf.mxu0
  %6093 = vdwg.mxu0
  %v6094 = vmul.f32 %v6086, 0.35355338
  %v6095 = vmul.f32 %v6091, 0.35355338
  %v6096 = vadd.f32 %v6094, %v5416
  %v6097 = vadd.f32 %v6095, %v5417
  %v6098 = vsel %vm665, %v6096, -inf
  %6099 = vmax.xlane.f32.xlu0 %v6098
  %v6100 = vpop.xlane.xlu0 %6099
  %v6101 = vsel %vm665, %v6097, -inf
  %6102 = vmax.xlane.f32.xlu0 %v6101
  %v6103 = vpop.xlane.xlu0 %6102
  %v6104 = vsub.f32 %v6096, %v6100
  %v6105 = vsub.f32 %v6097, %v6103
  %v6106 = vmul.f32 %v6104, 1.442695
  %v6107 = vpow.pop %v6106
  %v6108 = vmul.f32 %v6105, 1.442695
  %v6109 = vpow.pop %v6108
  %v6110 = vsel %vm665, %v6107, 0.0
  %6111 = vadd.xlane.f32.xlu0 %v6110
  %v6112 = vpop.xlane.xlu0 %6111
  %v6113 = vsel %vm665, %v6109, 0.0
  %6114 = vadd.xlane.f32.xlu0 %v6113
  %v6115 = vpop.xlane.xlu0 %6114
  %v6116 = vrcp.pop %v6112
  %v6117 = vrcp.pop %v6115
  %v6118 = vmul.f32 %v6107, %v6116
  %v6119 = vmul.f32 %v6109, %v6117
  %6120 = vrot.lane.b32.xlu0 %v5398, 80
  %v6121 = vpop.permute.xlu0 %6120
  %6122 = vrot.lane.b32.xlu0 %v5403, 80
  %v6123 = vpop.permute.xlu0 %6122
  %6124 = vrot.lane.b32.xlu0 %v5408, 80
  %v6125 = vpop.permute.xlu0 %6124
  %v6129 = vsel %vm665, %v6118, 0
  %v6132 = vsel %vm665, %v6119, 0
  %v6134 = vsel %vm709, %v6125, 0
  %6136 = vmatprep.subr.mxu0 0.0
  %6137 = vmatpush1.msra.mxu0 0.0
  %6138 = vmatprep.subr.mxu0 0.0
  %6139 = vmatpush1.msra.mxu0 0.0
  %6140 = vmatprep.subr.mxu0 0.0
  %6141 = vmatpush1.msra.mxu0 0.0
  %6142 = vmatprep.subr.mxu0 0.0
  %6143 = vmatpush1.msra.mxu0 0.0
  %6144 = vmatprep.subr.mxu0 0.0
  %6145 = vmatpush1.msra.mxu0 0.0
  %6146 = vmatprep.subr.mxu0 0.0
  %6147 = vmatpush1.msra.mxu0 0.0
  %6148 = vmatprep.subr.mxu0 0.0
  %6149 = vmatpush1.msra.mxu0 0.0
  %6150 = vmatprep.subr.mxu0 0.0
  %6151 = vmatpush1.msra.mxu0 0.0
  %6152 = vmatprep.subr.mxu0 0.0
  %6153 = vmatpush1.msra.mxu0 0.0
  %6154 = vmatprep.subr.mxu0 0.0
  %6155 = vmatpush1.msra.mxu0 0.0
  %6156 = vmatprep.subr.mxu0 0.0
  %6157 = vmatpush1.msra.mxu0 0.0
  %6158 = vmatprep.subr.mxu0 0.0
  %6159 = vmatpush1.msra.mxu0 0.0
  %6160 = vmatprep.subr.mxu0 0.0
  %6161 = vmatpush1.msra.mxu0 0.0
  %6162 = vmatprep.subr.mxu0 0.0
  %6163 = vmatpush1.msra.mxu0 %v6134
  %6164 = vmatprep.subr.mxu0 0.0
  %6165 = vmatpush1.msra.mxu0 %v6123
  %6166 = vmatprep.subr.mxu0 0.0
  %6167 = vmatpush1.msra.mxu0 %v6121
  %6168 = vmatprep.subr.mxu0 0.0
  %6169 = vmatpush2.msra.mxu0 0.0
  %6170 = vmatprep.subr.mxu0 0.0
  %6171 = vmatpush2.msra.mxu0 0.0
  %6172 = vmatprep.subr.mxu0 0.0
  %6173 = vmatpush2.msra.mxu0 0.0
  %6174 = vmatprep.subr.mxu0 0.0
  %6175 = vmatpush2.msra.mxu0 0.0
  %6176 = vmatprep.subr.mxu0 0.0
  %6177 = vmatpush2.msra.mxu0 0.0
  %6178 = vmatprep.subr.mxu0 0.0
  %6179 = vmatpush2.msra.mxu0 0.0
  %6180 = vmatprep.subr.mxu0 0.0
  %6181 = vmatpush2.msra.mxu0 0.0
  %6182 = vmatprep.subr.mxu0 0.0
  %6183 = vmatpush2.msra.mxu0 0.0
  %6184 = vmatprep.subr.mxu0 0.0
  %6185 = vmatpush2.msra.mxu0 0.0
  %6186 = vmatprep.subr.mxu0 0.0
  %6187 = vmatpush2.msra.mxu0 0.0
  %6188 = vmatprep.subr.mxu0 0.0
  %6189 = vmatpush2.msra.mxu0 0.0
  %6190 = vmatprep.subr.mxu0 0.0
  %6191 = vmatpush2.msra.mxu0 0.0
  %6192 = vmatprep.subr.mxu0 0.0
  %6193 = vmatpush2.msra.mxu0 0.0
  %6194 = vmatprep.subr.mxu0 0.0
  %6195 = vmatpush2.msra.mxu0 0.0
  %6196 = vmatprep.subr.mxu0 0.0
  %6197 = vmatpush2.msra.mxu0 0.0
  %6198 = vmatprep.subr.mxu0 0.0
  %6199 = vmatpush2.msra.mxu0 0.0
  %6200 = vmatprep.mubr.f32.mxu0 0.0
  %6201 = vmatmul.mubr.f32.gmra.mxu0 %v6129
  %v6202 = vpop.f32.mrf.mxu0
  %v6203 = vadd.f32 0.0, %v6202
  %v6204 = vpop.f32.mrf.mxu0
  %6205 = vmatprep.mubr.f32.mxu0 0.0
  %6206 = vmatmul.mubr.f32.gmra.mxu0 %v6132
  %v6207 = vpop.f32.mrf.mxu0
  %v6208 = vadd.f32 0.0, %v6207
  %v6209 = vpop.f32.mrf.mxu0
  %6210 = vdwg.mxu0
  %v6212 = vsel %vm2508, %v6203, 0
  %v6215 = vsel %vm2508, %v6208, 0
  %6217 = vmatprep.subr.mxu0 0.0
  %6218 = vmatpush1.msra.mxu0 0.0
  %6219 = vmatprep.subr.mxu0 0.0
  %6220 = vmatpush1.msra.mxu0 0.0
  %6221 = vmatprep.subr.mxu0 0.0
  %6222 = vmatpush1.msra.mxu0 0.0
  %6223 = vmatprep.subr.mxu0 0.0
  %6224 = vmatpush1.msra.mxu0 0.0
  %6225 = vmatprep.subr.mxu0 0.0
  %6226 = vmatpush1.msra.mxu0 0.0
  %6227 = vmatprep.subr.mxu0 0.0
  %6228 = vmatpush1.msra.mxu0 0.0
  %6229 = vmatprep.subr.mxu0 0.0
  %6230 = vmatpush1.msra.mxu0 0.0
  %6231 = vmatprep.subr.mxu0 0.0
  %6232 = vmatpush1.msra.mxu0 0.0
  %6233 = vmatprep.subr.mxu0 0.0
  %6234 = vmatpush1.msra.mxu0 0.0
  %6235 = vmatprep.subr.mxu0 0.0
  %6236 = vmatpush1.msra.mxu0 0.0
  %6237 = vmatprep.subr.mxu0 0.0
  %6238 = vmatpush1.msra.mxu0 0.0
  %6239 = vmatprep.subr.mxu0 0.0
  %6240 = vmatpush1.msra.mxu0 0.0
  %6241 = vmatprep.subr.mxu0 0.0
  %6242 = vmatpush1.msra.mxu0 0.0
  %6243 = vmatprep.subr.mxu0 0.0
  %6244 = vmatpush1.msra.mxu0 0.0
  %6245 = vmatprep.subr.mxu0 0.0
  %6246 = vmatpush1.msra.mxu0 0.0
  %6247 = vmatprep.subr.mxu0 0.0
  %6248 = vmatpush1.msra.mxu0 %v5413
  %6249 = vmatprep.subr.mxu0 0.0
  %6250 = vmatpush2.msra.mxu0 0.0
  %6251 = vmatprep.subr.mxu0 0.0
  %6252 = vmatpush2.msra.mxu0 0.0
  %6253 = vmatprep.subr.mxu0 0.0
  %6254 = vmatpush2.msra.mxu0 0.0
  %6255 = vmatprep.subr.mxu0 0.0
  %6256 = vmatpush2.msra.mxu0 0.0
  %6257 = vmatprep.subr.mxu0 0.0
  %6258 = vmatpush2.msra.mxu0 0.0
  %6259 = vmatprep.subr.mxu0 0.0
  %6260 = vmatpush2.msra.mxu0 0.0
  %6261 = vmatprep.subr.mxu0 0.0
  %6262 = vmatpush2.msra.mxu0 0.0
  %6263 = vmatprep.subr.mxu0 0.0
  %6264 = vmatpush2.msra.mxu0 0.0
  %6265 = vmatprep.subr.mxu0 0.0
  %6266 = vmatpush2.msra.mxu0 0.0
  %6267 = vmatprep.subr.mxu0 0.0
  %6268 = vmatpush2.msra.mxu0 0.0
  %6269 = vmatprep.subr.mxu0 0.0
  %6270 = vmatpush2.msra.mxu0 0.0
  %6271 = vmatprep.subr.mxu0 0.0
  %6272 = vmatpush2.msra.mxu0 0.0
  %6273 = vmatprep.subr.mxu0 0.0
  %6274 = vmatpush2.msra.mxu0 0.0
  %6275 = vmatprep.subr.mxu0 0.0
  %6276 = vmatpush2.msra.mxu0 0.0
  %6277 = vmatprep.subr.mxu0 0.0
  %6278 = vmatpush2.msra.mxu0 0.0
  %6279 = vmatprep.subr.mxu0 0.0
  %6280 = vmatpush2.msra.mxu0 0.0
  %6281 = vmatprep.mubr.f32.mxu0 0.0
  %6282 = vmatmul.mubr.f32.gmra.mxu0 %v6212
  %v6283 = vpop.f32.mrf.mxu0
  %v6284 = vadd.f32 0.0, %v6283
  %v6285 = vpop.f32.mrf.mxu0
  %6286 = vmatprep.mubr.f32.mxu0 0.0
  %6287 = vmatmul.mubr.f32.gmra.mxu0 %v6215
  %v6288 = vpop.f32.mrf.mxu0
  %v6289 = vadd.f32 0.0, %v6288
  %v6290 = vpop.f32.mrf.mxu0
  %6291 = vdwg.mxu0
  %v6292 = vadd.f32 %v5991, %v6284
  %v6293 = vadd.f32 %v5996, %v6289
  %6294 = vrot.lane.b32.xlu0 %v5305, 104
  %v6295 = vpop.permute.xlu0 %6294
  %6296 = vrot.lane.b32.xlu0 %v5310, 104
  %v6297 = vpop.permute.xlu0 %6296
  %6298 = vrot.lane.b32.xlu0 %v5398, 104
  %v6299 = vpop.permute.xlu0 %6298
  %6300 = vrot.lane.b32.xlu0 %v5403, 104
  %v6301 = vpop.permute.xlu0 %6300
  %6302 = vrot.lane.b32.xlu0 %v5408, 104
  %v6303 = vpop.permute.xlu0 %6302
  %v6304 = vsel %vm2508, %v6295, 0
  %v6306 = vsel %vm2508, %v6297, 0
  %v6308 = vsel %vm2508, %v6299, 0
  %v6310 = vsel %vm2508, %v6301, 0
  %v6312 = vsel %vm2508, %v6303, 0
  %6314 = vmatprep.subr.mxu0 0.0
  %6315 = vmatpush1.xpose.msra.mxu0 0.0
  %6316 = vmatprep.subr.mxu0 0.0
  %6317 = vmatpush1.xpose.msra.mxu0 0.0
  %6318 = vmatprep.subr.mxu0 0.0
  %6319 = vmatpush1.xpose.msra.mxu0 0.0
  %6320 = vmatprep.subr.mxu0 0.0
  %6321 = vmatpush1.xpose.msra.mxu0 0.0
  %6322 = vmatprep.subr.mxu0 0.0
  %6323 = vmatpush1.xpose.msra.mxu0 0.0
  %6324 = vmatprep.subr.mxu0 0.0
  %6325 = vmatpush1.xpose.msra.mxu0 0.0
  %6326 = vmatprep.subr.mxu0 0.0
  %6327 = vmatpush1.xpose.msra.mxu0 0.0
  %6328 = vmatprep.subr.mxu0 0.0
  %6329 = vmatpush1.xpose.msra.mxu0 0.0
  %6330 = vmatprep.subr.mxu0 0.0
  %6331 = vmatpush1.xpose.msra.mxu0 0.0
  %6332 = vmatprep.subr.mxu0 0.0
  %6333 = vmatpush1.xpose.msra.mxu0 0.0
  %6334 = vmatprep.subr.mxu0 0.0
  %6335 = vmatpush1.xpose.msra.mxu0 0.0
  %6336 = vmatprep.subr.mxu0 0.0
  %6337 = vmatpush1.xpose.msra.mxu0 0.0
  %6338 = vmatprep.subr.mxu0 0.0
  %6339 = vmatpush1.xpose.msra.mxu0 0.0
  %6340 = vmatprep.subr.mxu0 0.0
  %6341 = vmatpush1.xpose.msra.mxu0 %v6312
  %6342 = vmatprep.subr.mxu0 0.0
  %6343 = vmatpush1.xpose.msra.mxu0 %v6310
  %6344 = vmatprep.subr.mxu0 0.0
  %6345 = vmatpush1.xpose.msra.mxu0 %v6308
  %6346 = vmatprep.subr.mxu0 0.0
  %6347 = vmatpush2.xpose.msra.mxu0 0.0
  %6348 = vmatprep.subr.mxu0 0.0
  %6349 = vmatpush2.xpose.msra.mxu0 0.0
  %6350 = vmatprep.subr.mxu0 0.0
  %6351 = vmatpush2.xpose.msra.mxu0 0.0
  %6352 = vmatprep.subr.mxu0 0.0
  %6353 = vmatpush2.xpose.msra.mxu0 0.0
  %6354 = vmatprep.subr.mxu0 0.0
  %6355 = vmatpush2.xpose.msra.mxu0 0.0
  %6356 = vmatprep.subr.mxu0 0.0
  %6357 = vmatpush2.xpose.msra.mxu0 0.0
  %6358 = vmatprep.subr.mxu0 0.0
  %6359 = vmatpush2.xpose.msra.mxu0 0.0
  %6360 = vmatprep.subr.mxu0 0.0
  %6361 = vmatpush2.xpose.msra.mxu0 0.0
  %6362 = vmatprep.subr.mxu0 0.0
  %6363 = vmatpush2.xpose.msra.mxu0 0.0
  %6364 = vmatprep.subr.mxu0 0.0
  %6365 = vmatpush2.xpose.msra.mxu0 0.0
  %6366 = vmatprep.subr.mxu0 0.0
  %6367 = vmatpush2.xpose.msra.mxu0 0.0
  %6368 = vmatprep.subr.mxu0 0.0
  %6369 = vmatpush2.xpose.msra.mxu0 0.0
  %6370 = vmatprep.subr.mxu0 0.0
  %6371 = vmatpush2.xpose.msra.mxu0 0.0
  %6372 = vmatprep.subr.mxu0 0.0
  %6373 = vmatpush2.xpose.msra.mxu0 0.0
  %6374 = vmatprep.subr.mxu0 0.0
  %6375 = vmatpush2.xpose.msra.mxu0 0.0
  %6376 = vmatprep.subr.mxu0 0.0
  %6377 = vmatpush2.xpose.msra.mxu0 0.0
  %6378 = vmatprep.mubr.f32.mxu0 0.0
  %6379 = vmatmul.mubr.f32.gmra.mxu0 %v6304
  %v6380 = vpop.f32.mrf.mxu0
  %v6381 = vadd.f32 0.0, %v6380
  %v6382 = vpop.f32.mrf.mxu0
  %6383 = vmatprep.mubr.f32.mxu0 0.0
  %6384 = vmatmul.mubr.f32.gmra.mxu0 %v6306
  %v6385 = vpop.f32.mrf.mxu0
  %v6386 = vadd.f32 0.0, %v6385
  %v6387 = vpop.f32.mrf.mxu0
  %6388 = vdwg.mxu0
  %v6389 = vmul.f32 %v6381, 0.35355338
  %v6390 = vmul.f32 %v6386, 0.35355338
  %v6391 = vadd.f32 %v6389, %v5416
  %v6392 = vadd.f32 %v6390, %v5417
  %v6393 = vsel %vm665, %v6391, -inf
  %6394 = vmax.xlane.f32.xlu0 %v6393
  %v6395 = vpop.xlane.xlu0 %6394
  %v6396 = vsel %vm665, %v6392, -inf
  %6397 = vmax.xlane.f32.xlu0 %v6396
  %v6398 = vpop.xlane.xlu0 %6397
  %v6399 = vsub.f32 %v6391, %v6395
  %v6400 = vsub.f32 %v6392, %v6398
  %v6401 = vmul.f32 %v6399, 1.442695
  %v6402 = vpow.pop %v6401
  %v6403 = vmul.f32 %v6400, 1.442695
  %v6404 = vpow.pop %v6403
  %v6405 = vsel %vm665, %v6402, 0.0
  %6406 = vadd.xlane.f32.xlu0 %v6405
  %v6407 = vpop.xlane.xlu0 %6406
  %v6408 = vsel %vm665, %v6404, 0.0
  %6409 = vadd.xlane.f32.xlu0 %v6408
  %v6410 = vpop.xlane.xlu0 %6409
  %v6411 = vrcp.pop %v6407
  %v6412 = vrcp.pop %v6410
  %v6413 = vmul.f32 %v6402, %v6411
  %v6414 = vmul.f32 %v6404, %v6412
  %6415 = vrot.lane.b32.xlu0 %v5398, 72
  %v6416 = vpop.permute.xlu0 %6415
  %6417 = vrot.lane.b32.xlu0 %v5403, 72
  %v6418 = vpop.permute.xlu0 %6417
  %6419 = vrot.lane.b32.xlu0 %v5408, 72
  %v6420 = vpop.permute.xlu0 %6419
  %v6424 = vsel %vm665, %v6413, 0
  %v6427 = vsel %vm665, %v6414, 0
  %v6429 = vsel %vm709, %v6420, 0
  %6431 = vmatprep.subr.mxu0 0.0
  %6432 = vmatpush1.msra.mxu0 0.0
  %6433 = vmatprep.subr.mxu0 0.0
  %6434 = vmatpush1.msra.mxu0 0.0
  %6435 = vmatprep.subr.mxu0 0.0
  %6436 = vmatpush1.msra.mxu0 0.0
  %6437 = vmatprep.subr.mxu0 0.0
  %6438 = vmatpush1.msra.mxu0 0.0
  %6439 = vmatprep.subr.mxu0 0.0
  %6440 = vmatpush1.msra.mxu0 0.0
  %6441 = vmatprep.subr.mxu0 0.0
  %6442 = vmatpush1.msra.mxu0 0.0
  %6443 = vmatprep.subr.mxu0 0.0
  %6444 = vmatpush1.msra.mxu0 0.0
  %6445 = vmatprep.subr.mxu0 0.0
  %6446 = vmatpush1.msra.mxu0 0.0
  %6447 = vmatprep.subr.mxu0 0.0
  %6448 = vmatpush1.msra.mxu0 0.0
  %6449 = vmatprep.subr.mxu0 0.0
  %6450 = vmatpush1.msra.mxu0 0.0
  %6451 = vmatprep.subr.mxu0 0.0
  %6452 = vmatpush1.msra.mxu0 0.0
  %6453 = vmatprep.subr.mxu0 0.0
  %6454 = vmatpush1.msra.mxu0 0.0
  %6455 = vmatprep.subr.mxu0 0.0
  %6456 = vmatpush1.msra.mxu0 0.0
  %6457 = vmatprep.subr.mxu0 0.0
  %6458 = vmatpush1.msra.mxu0 %v6429
  %6459 = vmatprep.subr.mxu0 0.0
  %6460 = vmatpush1.msra.mxu0 %v6418
  %6461 = vmatprep.subr.mxu0 0.0
  %6462 = vmatpush1.msra.mxu0 %v6416
  %6463 = vmatprep.subr.mxu0 0.0
  %6464 = vmatpush2.msra.mxu0 0.0
  %6465 = vmatprep.subr.mxu0 0.0
  %6466 = vmatpush2.msra.mxu0 0.0
  %6467 = vmatprep.subr.mxu0 0.0
  %6468 = vmatpush2.msra.mxu0 0.0
  %6469 = vmatprep.subr.mxu0 0.0
  %6470 = vmatpush2.msra.mxu0 0.0
  %6471 = vmatprep.subr.mxu0 0.0
  %6472 = vmatpush2.msra.mxu0 0.0
  %6473 = vmatprep.subr.mxu0 0.0
  %6474 = vmatpush2.msra.mxu0 0.0
  %6475 = vmatprep.subr.mxu0 0.0
  %6476 = vmatpush2.msra.mxu0 0.0
  %6477 = vmatprep.subr.mxu0 0.0
  %6478 = vmatpush2.msra.mxu0 0.0
  %6479 = vmatprep.subr.mxu0 0.0
  %6480 = vmatpush2.msra.mxu0 0.0
  %6481 = vmatprep.subr.mxu0 0.0
  %6482 = vmatpush2.msra.mxu0 0.0
  %6483 = vmatprep.subr.mxu0 0.0
  %6484 = vmatpush2.msra.mxu0 0.0
  %6485 = vmatprep.subr.mxu0 0.0
  %6486 = vmatpush2.msra.mxu0 0.0
  %6487 = vmatprep.subr.mxu0 0.0
  %6488 = vmatpush2.msra.mxu0 0.0
  %6489 = vmatprep.subr.mxu0 0.0
  %6490 = vmatpush2.msra.mxu0 0.0
  %6491 = vmatprep.subr.mxu0 0.0
  %6492 = vmatpush2.msra.mxu0 0.0
  %6493 = vmatprep.subr.mxu0 0.0
  %6494 = vmatpush2.msra.mxu0 0.0
  %6495 = vmatprep.mubr.f32.mxu0 0.0
  %6496 = vmatmul.mubr.f32.gmra.mxu0 %v6424
  %v6497 = vpop.f32.mrf.mxu0
  %v6498 = vadd.f32 0.0, %v6497
  %v6499 = vpop.f32.mrf.mxu0
  %6500 = vmatprep.mubr.f32.mxu0 0.0
  %6501 = vmatmul.mubr.f32.gmra.mxu0 %v6427
  %v6502 = vpop.f32.mrf.mxu0
  %v6503 = vadd.f32 0.0, %v6502
  %v6504 = vpop.f32.mrf.mxu0
  %6505 = vdwg.mxu0
  %v6507 = vsel %vm2508, %v6498, 0
  %v6510 = vsel %vm2508, %v6503, 0
  %6512 = vmatprep.subr.mxu0 0.0
  %6513 = vmatpush1.msra.mxu0 0.0
  %6514 = vmatprep.subr.mxu0 0.0
  %6515 = vmatpush1.msra.mxu0 0.0
  %6516 = vmatprep.subr.mxu0 0.0
  %6517 = vmatpush1.msra.mxu0 0.0
  %6518 = vmatprep.subr.mxu0 0.0
  %6519 = vmatpush1.msra.mxu0 0.0
  %6520 = vmatprep.subr.mxu0 0.0
  %6521 = vmatpush1.msra.mxu0 0.0
  %6522 = vmatprep.subr.mxu0 0.0
  %6523 = vmatpush1.msra.mxu0 0.0
  %6524 = vmatprep.subr.mxu0 0.0
  %6525 = vmatpush1.msra.mxu0 0.0
  %6526 = vmatprep.subr.mxu0 0.0
  %6527 = vmatpush1.msra.mxu0 0.0
  %6528 = vmatprep.subr.mxu0 0.0
  %6529 = vmatpush1.msra.mxu0 0.0
  %6530 = vmatprep.subr.mxu0 0.0
  %6531 = vmatpush1.msra.mxu0 0.0
  %6532 = vmatprep.subr.mxu0 0.0
  %6533 = vmatpush1.msra.mxu0 0.0
  %6534 = vmatprep.subr.mxu0 0.0
  %6535 = vmatpush1.msra.mxu0 0.0
  %6536 = vmatprep.subr.mxu0 0.0
  %6537 = vmatpush1.msra.mxu0 0.0
  %6538 = vmatprep.subr.mxu0 0.0
  %6539 = vmatpush1.msra.mxu0 0.0
  %6540 = vmatprep.subr.mxu0 0.0
  %6541 = vmatpush1.msra.mxu0 0.0
  %6542 = vmatprep.subr.mxu0 0.0
  %6543 = vmatpush1.msra.mxu0 %v5414
  %6544 = vmatprep.subr.mxu0 0.0
  %6545 = vmatpush2.msra.mxu0 0.0
  %6546 = vmatprep.subr.mxu0 0.0
  %6547 = vmatpush2.msra.mxu0 0.0
  %6548 = vmatprep.subr.mxu0 0.0
  %6549 = vmatpush2.msra.mxu0 0.0
  %6550 = vmatprep.subr.mxu0 0.0
  %6551 = vmatpush2.msra.mxu0 0.0
  %6552 = vmatprep.subr.mxu0 0.0
  %6553 = vmatpush2.msra.mxu0 0.0
  %6554 = vmatprep.subr.mxu0 0.0
  %6555 = vmatpush2.msra.mxu0 0.0
  %6556 = vmatprep.subr.mxu0 0.0
  %6557 = vmatpush2.msra.mxu0 0.0
  %6558 = vmatprep.subr.mxu0 0.0
  %6559 = vmatpush2.msra.mxu0 0.0
  %6560 = vmatprep.subr.mxu0 0.0
  %6561 = vmatpush2.msra.mxu0 0.0
  %6562 = vmatprep.subr.mxu0 0.0
  %6563 = vmatpush2.msra.mxu0 0.0
  %6564 = vmatprep.subr.mxu0 0.0
  %6565 = vmatpush2.msra.mxu0 0.0
  %6566 = vmatprep.subr.mxu0 0.0
  %6567 = vmatpush2.msra.mxu0 0.0
  %6568 = vmatprep.subr.mxu0 0.0
  %6569 = vmatpush2.msra.mxu0 0.0
  %6570 = vmatprep.subr.mxu0 0.0
  %6571 = vmatpush2.msra.mxu0 0.0
  %6572 = vmatprep.subr.mxu0 0.0
  %6573 = vmatpush2.msra.mxu0 0.0
  %6574 = vmatprep.subr.mxu0 0.0
  %6575 = vmatpush2.msra.mxu0 0.0
  %6576 = vmatprep.mubr.f32.mxu0 0.0
  %6577 = vmatmul.mubr.f32.gmra.mxu0 %v6507
  %v6578 = vpop.f32.mrf.mxu0
  %v6579 = vadd.f32 0.0, %v6578
  %v6580 = vpop.f32.mrf.mxu0
  %6581 = vmatprep.mubr.f32.mxu0 0.0
  %6582 = vmatmul.mubr.f32.gmra.mxu0 %v6510
  %v6583 = vpop.f32.mrf.mxu0
  %v6584 = vadd.f32 0.0, %v6583
  %v6585 = vpop.f32.mrf.mxu0
  %6586 = vdwg.mxu0
  %v6587 = vadd.f32 %v6292, %v6579
  %v6588 = vadd.f32 %v6293, %v6584
  %v6589 = vlaneseq
  %v6590 = vshrl.u32 %v6589, 7
  %v6591 = vsub.s32 0, %v6590
  %v6592 = vrot.slane %v5415, %v6591
  %v6593 = vadd.f32 %v6587, %v6592
  %v6594 = vadd.f32 %v6588, %v6592
  %v6595 = vadd.f32 %v5221, %v6593
  %v6596 = vadd.f32 %v5222, %v6594
  %v6597 = vld [vmem:[%s8 + $0x20] sm:$0x1]
  %v6598 = vld [vmem:[%s8 + $0x21] sm:$0x1]
  %v6599 = vsel %vm2307, %v6595, 0.0
  %6600 = vadd.xlane.f32.xlu0 %v6599
  %v6601 = vpop.xlane.xlu0 %6600
  %v6602 = vsel %vm2307, %v6596, 0.0
  %6603 = vadd.xlane.f32.xlu0 %v6602
  %v6604 = vpop.xlane.xlu0 %6603
  %v6605 = vmul.f32 %v6601, %v2318
  %v6606 = vmul.f32 %v6604, %v2318
  %v6607 = vsub.f32 %v6595, %v6605
  %v6608 = vsub.f32 %v6596, %v6606
  %v6609 = vmul.f32 %v6607, %v6607
  %v6610 = vmul.f32 %v6608, %v6608
  %v6611 = vsel %vm2307, %v6609, 0.0
  %6612 = vadd.xlane.f32.xlu0 %v6611
  %v6613 = vpop.xlane.xlu0 %6612
  %v6614 = vsel %vm2307, %v6610, 0.0
  %6615 = vadd.xlane.f32.xlu0 %v6614
  %v6616 = vpop.xlane.xlu0 %6615
  %v6617 = vmul.f32 %v6613, %v2318
  %v6618 = vmul.f32 %v6616, %v2318
  %v6619 = vadd.f32 %v6617, 1e-12
  %v6620 = vadd.f32 %v6618, 1e-12
  %v6621 = vrsqrt.pop %v6619
  %v6622 = vrsqrt.pop %v6620
  %v6623 = vmul.f32 %v6607, %v6621
  %v6624 = vmul.f32 %v6608, %v6622
  %v6625 = vlaneseq
  %v6626 = vshrl.u32 %v6625, 7
  %v6627 = vsub.s32 0, %v6626
  %v6628 = vrot.slane %v6597, %v6627
  %v6629 = vmul.f32 %v6623, %v6628
  %v6630 = vmul.f32 %v6624, %v6628
  %v6631 = vlaneseq
  %v6632 = vshrl.u32 %v6631, 7
  %v6633 = vsub.s32 0, %v6632
  %v6634 = vrot.slane %v6598, %v6633
  %v6635 = vadd.f32 %v6629, %v6634
  %v6636 = vadd.f32 %v6630, %v6634
  %v6637 = vld [vmem:[%s7 + $0x380] sm:$0xff]
  %v6638 = vld [vmem:[%s7 + $0x388] sm:$0xff]
  %v6639 = vld [vmem:[%s7 + $0x390] sm:$0xff]
  %v6640 = vld [vmem:[%s7 + $0x398] sm:$0xff]
  %v6641 = vld [vmem:[%s8 + $0x22] sm:$0x1]
  %v6642 = vld [vmem:[%s7 + $0x3a0] sm:$0xff]
  %v6643 = vld [vmem:[%s7 + $0x3a8] sm:$0xff]
  %v6644 = vld [vmem:[%s7 + $0x3b0] sm:$0xff]
  %v6645 = vld [vmem:[%s7 + $0x3b8] sm:$0xff]
  %v6646 = vld [vmem:[%s7 + $0x3c0] sm:$0xff]
  %v6647 = vld [vmem:[%s7 + $0x3c8] sm:$0xff]
  %v6648 = vld [vmem:[%s7 + $0x3d0] sm:$0xff]
  %v6649 = vld [vmem:[%s7 + $0x3d8] sm:$0xff]
  %v6650 = vld [vmem:[%s8 + $0x23] sm:$0x1]
  %v6651 = vlaneseq
  %v6652 = vshrl.u32 %v6651, 7
  %v6653 = vsub.s32 0, %v6652
  %v6654 = vrot.slane %v6641, %v6653
  %v6656 = vsel %vm2307, %v6635, 0
  %v6659 = vsel %vm2307, %v6636, 0
  %6661 = vmatprep.subr.mxu0 0.0
  %6662 = vmatpush1.msra.mxu0 0.0
  %6663 = vmatprep.subr.mxu0 0.0
  %6664 = vmatpush1.msra.mxu0 0.0
  %6665 = vmatprep.subr.mxu0 0.0
  %6666 = vmatpush1.msra.mxu0 0.0
  %6667 = vmatprep.subr.mxu0 0.0
  %6668 = vmatpush1.msra.mxu0 0.0
  %6669 = vmatprep.subr.mxu0 0.0
  %6670 = vmatpush1.msra.mxu0 0.0
  %6671 = vmatprep.subr.mxu0 0.0
  %6672 = vmatpush1.msra.mxu0 0.0
  %6673 = vmatprep.subr.mxu0 0.0
  %6674 = vmatpush1.msra.mxu0 0.0
  %6675 = vmatprep.subr.mxu0 0.0
  %6676 = vmatpush1.msra.mxu0 0.0
  %6677 = vmatprep.subr.mxu0 0.0
  %6678 = vmatpush1.msra.mxu0 0.0
  %6679 = vmatprep.subr.mxu0 0.0
  %6680 = vmatpush1.msra.mxu0 0.0
  %6681 = vmatprep.subr.mxu0 0.0
  %6682 = vmatpush1.msra.mxu0 0.0
  %6683 = vmatprep.subr.mxu0 0.0
  %6684 = vmatpush1.msra.mxu0 0.0
  %6685 = vmatprep.subr.mxu0 0.0
  %6686 = vmatpush1.msra.mxu0 %v6640
  %6687 = vmatprep.subr.mxu0 0.0
  %6688 = vmatpush1.msra.mxu0 %v6639
  %6689 = vmatprep.subr.mxu0 0.0
  %6690 = vmatpush1.msra.mxu0 %v6638
  %6691 = vmatprep.subr.mxu0 0.0
  %6692 = vmatpush1.msra.mxu0 %v6637
  %6693 = vmatprep.subr.mxu0 0.0
  %6694 = vmatpush2.msra.mxu0 0.0
  %6695 = vmatprep.subr.mxu0 0.0
  %6696 = vmatpush2.msra.mxu0 0.0
  %6697 = vmatprep.subr.mxu0 0.0
  %6698 = vmatpush2.msra.mxu0 0.0
  %6699 = vmatprep.subr.mxu0 0.0
  %6700 = vmatpush2.msra.mxu0 0.0
  %6701 = vmatprep.subr.mxu0 0.0
  %6702 = vmatpush2.msra.mxu0 0.0
  %6703 = vmatprep.subr.mxu0 0.0
  %6704 = vmatpush2.msra.mxu0 0.0
  %6705 = vmatprep.subr.mxu0 0.0
  %6706 = vmatpush2.msra.mxu0 0.0
  %6707 = vmatprep.subr.mxu0 0.0
  %6708 = vmatpush2.msra.mxu0 0.0
  %6709 = vmatprep.subr.mxu0 0.0
  %6710 = vmatpush2.msra.mxu0 0.0
  %6711 = vmatprep.subr.mxu0 0.0
  %6712 = vmatpush2.msra.mxu0 0.0
  %6713 = vmatprep.subr.mxu0 0.0
  %6714 = vmatpush2.msra.mxu0 0.0
  %6715 = vmatprep.subr.mxu0 0.0
  %6716 = vmatpush2.msra.mxu0 0.0
  %6717 = vmatprep.subr.mxu0 0.0
  %6718 = vmatpush2.msra.mxu0 0.0
  %6719 = vmatprep.subr.mxu0 0.0
  %6720 = vmatpush2.msra.mxu0 0.0
  %6721 = vmatprep.subr.mxu0 0.0
  %6722 = vmatpush2.msra.mxu0 0.0
  %6723 = vmatprep.subr.mxu0 0.0
  %6724 = vmatpush2.msra.mxu0 0.0
  %6725 = vmatprep.mubr.f32.mxu0 0.0
  %6726 = vmatmul.mubr.f32.gmra.mxu0 %v6656
  %v6727 = vpop.f32.mrf.mxu0
  %v6728 = vadd.f32 %v6654, %v6727
  %v6729 = vpop.f32.mrf.mxu0
  %6730 = vmatprep.mubr.f32.mxu0 0.0
  %6731 = vmatmul.mubr.f32.gmra.mxu0 %v6659
  %v6732 = vpop.f32.mrf.mxu0
  %v6733 = vadd.f32 %v6654, %v6732
  %v6734 = vpop.f32.mrf.mxu0
  %6735 = vdwg.mxu0
  %v6736 = vmul.f32 %v6728, %v6728
  %v6737 = vmul.f32 %v6733, %v6733
  %v6738 = vmul.f32 %v6728, %v6736
  %v6739 = vmul.f32 %v6733, %v6737
  %v6740 = vmul.f32 %v6738, 0.044715
  %v6741 = vmul.f32 %v6739, 0.044715
  %v6742 = vadd.f32 %v6728, %v6740
  %v6743 = vadd.f32 %v6733, %v6741
  %v6744 = vmul.f32 %v6742, 0.7978846
  %v6745 = vmul.f32 %v6743, 0.7978846
  %v6746 = vtanh.pop %v6744
  %v6747 = vtanh.pop %v6745
  %v6748 = vadd.f32 %v6746, 1.0
  %v6749 = vadd.f32 %v6747, 1.0
  %v6750 = vmul.f32 %v6748, 0.5
  %v6751 = vmul.f32 %v6749, 0.5
  %v6752 = vmul.f32 %v6728, %v6750
  %v6753 = vmul.f32 %v6733, %v6751
  %v6754 = vlaneseq
  %v6755 = vshrl.u32 %v6754, 7
  %v6756 = vsub.s32 0, %v6755
  %v6757 = vrot.slane %v6650, %v6756
  %v6759 = vsel %vm65, %v6752, 0
  %v6762 = vsel %vm65, %v6753, 0
  %6764 = vmatprep.subr.mxu0 0.0
  %6765 = vmatpush1.msra.mxu0 0.0
  %6766 = vmatprep.subr.mxu0 0.0
  %6767 = vmatpush1.msra.mxu0 0.0
  %6768 = vmatprep.subr.mxu0 0.0
  %6769 = vmatpush1.msra.mxu0 0.0
  %6770 = vmatprep.subr.mxu0 0.0
  %6771 = vmatpush1.msra.mxu0 0.0
  %6772 = vmatprep.subr.mxu0 0.0
  %6773 = vmatpush1.msra.mxu0 0.0
  %6774 = vmatprep.subr.mxu0 0.0
  %6775 = vmatpush1.msra.mxu0 0.0
  %6776 = vmatprep.subr.mxu0 0.0
  %6777 = vmatpush1.msra.mxu0 0.0
  %6778 = vmatprep.subr.mxu0 0.0
  %6779 = vmatpush1.msra.mxu0 0.0
  %6780 = vmatprep.subr.mxu0 0.0
  %6781 = vmatpush1.msra.mxu0 %v6649
  %6782 = vmatprep.subr.mxu0 0.0
  %6783 = vmatpush1.msra.mxu0 %v6648
  %6784 = vmatprep.subr.mxu0 0.0
  %6785 = vmatpush1.msra.mxu0 %v6647
  %6786 = vmatprep.subr.mxu0 0.0
  %6787 = vmatpush1.msra.mxu0 %v6646
  %6788 = vmatprep.subr.mxu0 0.0
  %6789 = vmatpush1.msra.mxu0 %v6645
  %6790 = vmatprep.subr.mxu0 0.0
  %6791 = vmatpush1.msra.mxu0 %v6644
  %6792 = vmatprep.subr.mxu0 0.0
  %6793 = vmatpush1.msra.mxu0 %v6643
  %6794 = vmatprep.subr.mxu0 0.0
  %6795 = vmatpush1.msra.mxu0 %v6642
  %6796 = vmatprep.subr.mxu0 0.0
  %6797 = vmatpush2.msra.mxu0 0.0
  %6798 = vmatprep.subr.mxu0 0.0
  %6799 = vmatpush2.msra.mxu0 0.0
  %6800 = vmatprep.subr.mxu0 0.0
  %6801 = vmatpush2.msra.mxu0 0.0
  %6802 = vmatprep.subr.mxu0 0.0
  %6803 = vmatpush2.msra.mxu0 0.0
  %6804 = vmatprep.subr.mxu0 0.0
  %6805 = vmatpush2.msra.mxu0 0.0
  %6806 = vmatprep.subr.mxu0 0.0
  %6807 = vmatpush2.msra.mxu0 0.0
  %6808 = vmatprep.subr.mxu0 0.0
  %6809 = vmatpush2.msra.mxu0 0.0
  %6810 = vmatprep.subr.mxu0 0.0
  %6811 = vmatpush2.msra.mxu0 0.0
  %6812 = vmatprep.subr.mxu0 0.0
  %6813 = vmatpush2.msra.mxu0 0.0
  %6814 = vmatprep.subr.mxu0 0.0
  %6815 = vmatpush2.msra.mxu0 0.0
  %6816 = vmatprep.subr.mxu0 0.0
  %6817 = vmatpush2.msra.mxu0 0.0
  %6818 = vmatprep.subr.mxu0 0.0
  %6819 = vmatpush2.msra.mxu0 0.0
  %6820 = vmatprep.subr.mxu0 0.0
  %6821 = vmatpush2.msra.mxu0 0.0
  %6822 = vmatprep.subr.mxu0 0.0
  %6823 = vmatpush2.msra.mxu0 0.0
  %6824 = vmatprep.subr.mxu0 0.0
  %6825 = vmatpush2.msra.mxu0 0.0
  %6826 = vmatprep.subr.mxu0 0.0
  %6827 = vmatpush2.msra.mxu0 0.0
  %6828 = vmatprep.mubr.f32.mxu0 0.0
  %6829 = vmatmul.mubr.f32.gmra.mxu0 %v6759
  %v6830 = vpop.f32.mrf.mxu0
  %v6831 = vadd.f32 %v6757, %v6830
  %v6832 = vpop.f32.mrf.mxu0
  %6833 = vmatprep.mubr.f32.mxu0 0.0
  %6834 = vmatmul.mubr.f32.gmra.mxu0 %v6762
  %v6835 = vpop.f32.mrf.mxu0
  %v6836 = vadd.f32 %v6757, %v6835
  %v6837 = vpop.f32.mrf.mxu0
  %6838 = vdwg.mxu0
  %v6839 = vadd.f32 %v6635, %v6831
  %v6840 = vadd.f32 %v6636, %v6836
  %v6841 = vld [vmem:[%s8 + $0x24] sm:$0x1]
  %v6842 = vld [vmem:[%s8 + $0x25] sm:$0x1]
  %v6843 = vsel %vm2307, %v6839, 0.0
  %6844 = vadd.xlane.f32.xlu0 %v6843
  %v6845 = vpop.xlane.xlu0 %6844
  %v6846 = vsel %vm2307, %v6840, 0.0
  %6847 = vadd.xlane.f32.xlu0 %v6846
  %v6848 = vpop.xlane.xlu0 %6847
  %v6849 = vmul.f32 %v6845, %v2318
  %v6850 = vmul.f32 %v6848, %v2318
  %v6851 = vsub.f32 %v6839, %v6849
  %v6852 = vsub.f32 %v6840, %v6850
  %v6853 = vmul.f32 %v6851, %v6851
  %v6854 = vmul.f32 %v6852, %v6852
  %v6855 = vsel %vm2307, %v6853, 0.0
  %6856 = vadd.xlane.f32.xlu0 %v6855
  %v6857 = vpop.xlane.xlu0 %6856
  %v6858 = vsel %vm2307, %v6854, 0.0
  %6859 = vadd.xlane.f32.xlu0 %v6858
  %v6860 = vpop.xlane.xlu0 %6859
  %v6861 = vmul.f32 %v6857, %v2318
  %v6862 = vmul.f32 %v6860, %v2318
  %v6863 = vadd.f32 %v6861, 1e-12
  %v6864 = vadd.f32 %v6862, 1e-12
  %v6865 = vrsqrt.pop %v6863
  %v6866 = vrsqrt.pop %v6864
  %v6867 = vmul.f32 %v6851, %v6865
  %v6868 = vmul.f32 %v6852, %v6866
  %v6869 = vlaneseq
  %v6870 = vshrl.u32 %v6869, 7
  %v6871 = vsub.s32 0, %v6870
  %v6872 = vrot.slane %v6841, %v6871
  %v6873 = vmul.f32 %v6867, %v6872
  %v6874 = vmul.f32 %v6868, %v6872
  %v6875 = vlaneseq
  %v6876 = vshrl.u32 %v6875, 7
  %v6877 = vsub.s32 0, %v6876
  %v6878 = vrot.slane %v6842, %v6877
  %v6879 = vadd.f32 %v6873, %v6878
  %v6880 = vadd.f32 %v6874, %v6878
  %v6881 = vld [vmem:[%s7 + $0x3e0] sm:$0xff]
  %v6882 = vld [vmem:[%s7 + $0x3e8] sm:$0xff]
  %v6883 = vld [vmem:[%s7 + $0x3f0] sm:$0xff]
  %v6884 = vld [vmem:[%s7 + $0x3f8] sm:$0xff]
  %v6885 = vld [vmem:[%s8 + $0x26] sm:$0x1]
  %v6886 = vlaneseq
  %v6887 = vshrl.u32 %v6886, 7
  %v6888 = vsub.s32 0, %v6887
  %v6889 = vrot.slane %v6885, %v6888
  %v6891 = vsel %vm2307, %v6879, 0
  %v6894 = vsel %vm2307, %v6880, 0
  %6896 = vmatprep.subr.mxu0 0.0
  %6897 = vmatpush1.msra.mxu0 0.0
  %6898 = vmatprep.subr.mxu0 0.0
  %6899 = vmatpush1.msra.mxu0 0.0
  %6900 = vmatprep.subr.mxu0 0.0
  %6901 = vmatpush1.msra.mxu0 0.0
  %6902 = vmatprep.subr.mxu0 0.0
  %6903 = vmatpush1.msra.mxu0 0.0
  %6904 = vmatprep.subr.mxu0 0.0
  %6905 = vmatpush1.msra.mxu0 0.0
  %6906 = vmatprep.subr.mxu0 0.0
  %6907 = vmatpush1.msra.mxu0 0.0
  %6908 = vmatprep.subr.mxu0 0.0
  %6909 = vmatpush1.msra.mxu0 0.0
  %6910 = vmatprep.subr.mxu0 0.0
  %6911 = vmatpush1.msra.mxu0 0.0
  %6912 = vmatprep.subr.mxu0 0.0
  %6913 = vmatpush1.msra.mxu0 0.0
  %6914 = vmatprep.subr.mxu0 0.0
  %6915 = vmatpush1.msra.mxu0 0.0
  %6916 = vmatprep.subr.mxu0 0.0
  %6917 = vmatpush1.msra.mxu0 0.0
  %6918 = vmatprep.subr.mxu0 0.0
  %6919 = vmatpush1.msra.mxu0 0.0
  %6920 = vmatprep.subr.mxu0 0.0
  %6921 = vmatpush1.msra.mxu0 %v6884
  %6922 = vmatprep.subr.mxu0 0.0
  %6923 = vmatpush1.msra.mxu0 %v6883
  %6924 = vmatprep.subr.mxu0 0.0
  %6925 = vmatpush1.msra.mxu0 %v6882
  %6926 = vmatprep.subr.mxu0 0.0
  %6927 = vmatpush1.msra.mxu0 %v6881
  %6928 = vmatprep.subr.mxu0 0.0
  %6929 = vmatpush2.msra.mxu0 0.0
  %6930 = vmatprep.subr.mxu0 0.0
  %6931 = vmatpush2.msra.mxu0 0.0
  %6932 = vmatprep.subr.mxu0 0.0
  %6933 = vmatpush2.msra.mxu0 0.0
  %6934 = vmatprep.subr.mxu0 0.0
  %6935 = vmatpush2.msra.mxu0 0.0
  %6936 = vmatprep.subr.mxu0 0.0
  %6937 = vmatpush2.msra.mxu0 0.0
  %6938 = vmatprep.subr.mxu0 0.0
  %6939 = vmatpush2.msra.mxu0 0.0
  %6940 = vmatprep.subr.mxu0 0.0
  %6941 = vmatpush2.msra.mxu0 0.0
  %6942 = vmatprep.subr.mxu0 0.0
  %6943 = vmatpush2.msra.mxu0 0.0
  %6944 = vmatprep.subr.mxu0 0.0
  %6945 = vmatpush2.msra.mxu0 0.0
  %6946 = vmatprep.subr.mxu0 0.0
  %6947 = vmatpush2.msra.mxu0 0.0
  %6948 = vmatprep.subr.mxu0 0.0
  %6949 = vmatpush2.msra.mxu0 0.0
  %6950 = vmatprep.subr.mxu0 0.0
  %6951 = vmatpush2.msra.mxu0 0.0
  %6952 = vmatprep.subr.mxu0 0.0
  %6953 = vmatpush2.msra.mxu0 0.0
  %6954 = vmatprep.subr.mxu0 0.0
  %6955 = vmatpush2.msra.mxu0 0.0
  %6956 = vmatprep.subr.mxu0 0.0
  %6957 = vmatpush2.msra.mxu0 0.0
  %6958 = vmatprep.subr.mxu0 0.0
  %6959 = vmatpush2.msra.mxu0 0.0
  %6960 = vmatprep.mubr.f32.mxu0 0.0
  %6961 = vmatmul.mubr.f32.gmra.mxu0 %v6891
  %v6962 = vpop.f32.mrf.mxu0
  %v6963 = vadd.f32 %v6889, %v6962
  %v6964 = vpop.f32.mrf.mxu0
  %6965 = vmatprep.mubr.f32.mxu0 0.0
  %6966 = vmatmul.mubr.f32.gmra.mxu0 %v6894
  %v6967 = vpop.f32.mrf.mxu0
  %v6968 = vadd.f32 %v6889, %v6967
  %v6969 = vpop.f32.mrf.mxu0
  %6970 = vdwg.mxu0
  %v6971 = vmax.f32 %v6963, 0.0
  %v6972 = vmax.f32 %v6968, 0.0
  %v6973 = vld [vmem:[%s7 + $0x400] sm:$0xff]
  %v6974 = vld [vmem:[%s7 + $0x408] sm:$0xff]
  %v6975 = vld [vmem:[%s7 + $0x410] sm:$0xff]
  %v6976 = vld [vmem:[%s7 + $0x418] sm:$0xff]
  %v6977 = vld [vmem:[%s8 + $0x27] sm:$0x1]
  %v6978 = vlaneseq
  %v6979 = vshrl.u32 %v6978, 7
  %v6980 = vsub.s32 0, %v6979
  %v6981 = vrot.slane %v6977, %v6980
  %v6983 = vsel %vm2307, %v6971, 0
  %v6986 = vsel %vm2307, %v6972, 0
  %6988 = vmatprep.subr.mxu0 0.0
  %6989 = vmatpush1.msra.mxu0 0.0
  %6990 = vmatprep.subr.mxu0 0.0
  %6991 = vmatpush1.msra.mxu0 0.0
  %6992 = vmatprep.subr.mxu0 0.0
  %6993 = vmatpush1.msra.mxu0 0.0
  %6994 = vmatprep.subr.mxu0 0.0
  %6995 = vmatpush1.msra.mxu0 0.0
  %6996 = vmatprep.subr.mxu0 0.0
  %6997 = vmatpush1.msra.mxu0 0.0
  %6998 = vmatprep.subr.mxu0 0.0
  %6999 = vmatpush1.msra.mxu0 0.0
  %7000 = vmatprep.subr.mxu0 0.0
  %7001 = vmatpush1.msra.mxu0 0.0
  %7002 = vmatprep.subr.mxu0 0.0
  %7003 = vmatpush1.msra.mxu0 0.0
  %7004 = vmatprep.subr.mxu0 0.0
  %7005 = vmatpush1.msra.mxu0 0.0
  %7006 = vmatprep.subr.mxu0 0.0
  %7007 = vmatpush1.msra.mxu0 0.0
  %7008 = vmatprep.subr.mxu0 0.0
  %7009 = vmatpush1.msra.mxu0 0.0
  %7010 = vmatprep.subr.mxu0 0.0
  %7011 = vmatpush1.msra.mxu0 0.0
  %7012 = vmatprep.subr.mxu0 0.0
  %7013 = vmatpush1.msra.mxu0 %v6976
  %7014 = vmatprep.subr.mxu0 0.0
  %7015 = vmatpush1.msra.mxu0 %v6975
  %7016 = vmatprep.subr.mxu0 0.0
  %7017 = vmatpush1.msra.mxu0 %v6974
  %7018 = vmatprep.subr.mxu0 0.0
  %7019 = vmatpush1.msra.mxu0 %v6973
  %7020 = vmatprep.subr.mxu0 0.0
  %7021 = vmatpush2.msra.mxu0 0.0
  %7022 = vmatprep.subr.mxu0 0.0
  %7023 = vmatpush2.msra.mxu0 0.0
  %7024 = vmatprep.subr.mxu0 0.0
  %7025 = vmatpush2.msra.mxu0 0.0
  %7026 = vmatprep.subr.mxu0 0.0
  %7027 = vmatpush2.msra.mxu0 0.0
  %7028 = vmatprep.subr.mxu0 0.0
  %7029 = vmatpush2.msra.mxu0 0.0
  %7030 = vmatprep.subr.mxu0 0.0
  %7031 = vmatpush2.msra.mxu0 0.0
  %7032 = vmatprep.subr.mxu0 0.0
  %7033 = vmatpush2.msra.mxu0 0.0
  %7034 = vmatprep.subr.mxu0 0.0
  %7035 = vmatpush2.msra.mxu0 0.0
  %7036 = vmatprep.subr.mxu0 0.0
  %7037 = vmatpush2.msra.mxu0 0.0
  %7038 = vmatprep.subr.mxu0 0.0
  %7039 = vmatpush2.msra.mxu0 0.0
  %7040 = vmatprep.subr.mxu0 0.0
  %7041 = vmatpush2.msra.mxu0 0.0
  %7042 = vmatprep.subr.mxu0 0.0
  %7043 = vmatpush2.msra.mxu0 0.0
  %7044 = vmatprep.subr.mxu0 0.0
  %7045 = vmatpush2.msra.mxu0 0.0
  %7046 = vmatprep.subr.mxu0 0.0
  %7047 = vmatpush2.msra.mxu0 0.0
  %7048 = vmatprep.subr.mxu0 0.0
  %7049 = vmatpush2.msra.mxu0 0.0
  %7050 = vmatprep.subr.mxu0 0.0
  %7051 = vmatpush2.msra.mxu0 0.0
  %7052 = vmatprep.mubr.f32.mxu0 0.0
  %7053 = vmatmul.mubr.f32.gmra.mxu0 %v6983
  %v7054 = vpop.f32.mrf.mxu0
  %v7055 = vadd.f32 %v6981, %v7054
  %v7056 = vpop.f32.mrf.mxu0
  %7057 = vmatprep.mubr.f32.mxu0 0.0
  %7058 = vmatmul.mubr.f32.gmra.mxu0 %v6986
  %v7059 = vpop.f32.mrf.mxu0
  %v7060 = vadd.f32 %v6981, %v7059
  %v7061 = vpop.f32.mrf.mxu0
  %7062 = vdwg.mxu0
  %vm7063 = vcmask 15360
  %v7064 = vsel %vm7063, %v7055, -inf
  %7065 = vmax.xlane.f32.xlu0 %v7064
  %v7066 = vpop.xlane.xlu0 %7065
  %v7067 = vsel %vm7063, %v7060, -inf
  %7068 = vmax.xlane.f32.xlu0 %v7067
  %v7069 = vpop.xlane.xlu0 %7068
  %v7070 = vsub.f32 %v7055, %v7066
  %v7071 = vsub.f32 %v7060, %v7069
  %v7072 = vmul.f32 %v7070, 1.442695
  %v7073 = vpow.pop %v7072
  %v7074 = vmul.f32 %v7071, 1.442695
  %v7075 = vpow.pop %v7074
  %v7076 = vsel %vm7063, %v7073, 0.0
  %7077 = vadd.xlane.f32.xlu0 %v7076
  %v7078 = vpop.xlane.xlu0 %7077
  %v7079 = vsel %vm7063, %v7075, 0.0
  %7080 = vadd.xlane.f32.xlu0 %v7079
  %v7081 = vpop.xlane.xlu0 %7080
  %v7082 = vlog2.pop %v7078
  %v7083 = vmul.f32 %v7082, 0.6931472
  %v7084 = vlog2.pop %v7081
  %v7085 = vmul.f32 %v7084, 0.6931472
  %v7086 = vadd.f32 %v7083, %v7066
  %v7087 = vadd.f32 %v7085, %v7069
  %v7088 = vld [vmem:[%s3] sm:$0xff]
  %v7089 = vld [vmem:[%s3 + $0x8] sm:$0xff]
  %7090 = vadd.xlane.f32.xlu0 %v7088
  %v7091 = vpop.xlane.xlu0 %7090
  %7092 = vadd.xlane.f32.xlu0 %v7089
  %v7093 = vpop.xlane.xlu0 %7092
  %v7094 = vmul.f32 %v7091, %v7086
  %v7095 = vmul.f32 %v7093, %v7087
  %v7096 = vmul.f32 %v7088, %v7055
  %v7097 = vmul.f32 %v7089, %v7060
  %7098 = vadd.xlane.f32.xlu0 %v7096
  %v7099 = vpop.xlane.xlu0 %7098
  %7100 = vadd.xlane.f32.xlu0 %v7097
  %v7101 = vpop.xlane.xlu0 %7100
  %v7102 = vsub.f32 %v7094, %v7099
  %v7103 = vsub.f32 %v7095, %v7101
  %v7104 = vadd.f32 %v7102, %v7103
  %v7105 = vrot.slane %v7104, 4
  %v7106 = vadd.f32 %v7104, %v7105
  %v7107 = vrot.slane %v7106, 2
  %v7108 = vadd.f32 %v7106, %v7107
  %v7109 = vrot.slane %v7108, 1
  %v7110 = vadd.f32 %v7108, %v7109
  %v7111 = vmul.f32 %v7110, 0.5
  %v7112 = vlaneseq
  %v7113 = vshrl.u32 %v7112, 7
  %v7114 = vadd.s32 %v7113, 8
  %v7115 = vlaneseq
  %v7116 = vand.u32 %v7115, 127
  %vm7117 = vcmp.eq.s32.totalorder %v7113, 0
  %vm7118 = vcmp.eq.s32.totalorder %v7114, 0
  %vm7119 = vcmp.eq.s32.totalorder %v7116, 2
  %vm7120 = vmand %vm7117, %vm7119
  %vm7121 = vmand %vm7118, %vm7119
  %v7122 = vsel %vm7120, 1, 0
  %v7123 = vsel %vm7121, 1, 0
  %v7124 = vcvt.s32.f32 %v7122
  %v7125 = vcvt.s32.f32 %v7123
  %v7126 = vmul.f32 %v7111, %v7124
  %v7127 = vmul.f32 %v7111, %v7125
  %v7128 = vadd.f32 %v7055, %v7126
  %v7129 = vadd.f32 %v7060, %v7127
  %7130 = vst [vmem:[%s9] sm:$0xff] %v7128
  %7131 = vst [vmem:[%s9 + $0x8] sm:$0xff] %v7129
  // Predicated region
  $region38: #{albef_forward.1} parent=0 // pred_check
    _
  $region39: #{albef_forward.1} parent=0 // pred_check_branch
    %7133 = sbr.rel (0) target = $region41
  $region40: #{albef_forward.1} parent=0 // pred_region
    _
  $region41: #{albef_forward.1} parent=0 // pred_fallthru
    _
  // Predicated region
  $region42: #{albef_forward.1} parent=0 // pred_check
    _
  $region43: #{albef_forward.1} parent=0 // pred_check_branch
    %7135 = sbr.rel (0) target = $region45
  $region44: #{albef_forward.1} parent=0 // pred_region
    _
  $region45: #{albef_forward.1} parent=0 // pred_fallthru
    _

</llo_original>
